<compile_context>
chip_gen: v6e
topology: v6e:2x2x1
jax: 0.10.0
libtpu: 0.0.40
codegen_flags: <defaults>
</compile_context>

<pallas_src>
import functools

import numpy as np

import jax
import jax.numpy as jnp
from jax.experimental import pallas as pl
from jax.experimental.pallas import tpu as pltpu

_LANE = 128   # lane tile (channels)
_TM = 128     # row tile (fallback path)


def _ru(x, m):
    return ((x + m - 1) // m) * m


def _pad2(a, rows, cols):
    return jnp.pad(a, ((0, rows - a.shape[0]), (0, cols - a.shape[1])))


# =============================================================== kernels ====
def _matmul_stats_kernel(a_ref, s_ref, t_ref, b_ref, o_ref, sum_ref, sq_ref,
                         *, relu):
    """o = relu(a*s + t) @ b accumulated over the K grid axis (bf16 MXU).

    On the last K step also emits per-column sum / sum-of-squares of o, i.e.
    the raw statistics the *next* BatchNorm needs — no extra stats pass.
    """
    @pl.when(pl.program_id(0) == 0)
    def _():
        o_ref[...] = jnp.zeros_like(o_ref)

    a = a_ref[...] * s_ref[...] + t_ref[...]
    if relu:
        a = jnp.maximum(a, 0.0)
    o_ref[...] += jnp.dot(a.astype(jnp.bfloat16), b_ref[...],
                          preferred_element_type=jnp.float32)

    @pl.when(pl.program_id(0) == pl.num_programs(0) - 1)
    def _():
        o = o_ref[...]
        sum_ref[...] = jnp.sum(o, axis=0, keepdims=True)
        sq_ref[...] = jnp.sum(o * o, axis=0, keepdims=True)


def _matmul_tiled_kernel(a_ref, s_ref, t_ref, b_ref, o_ref, acc_ref, *, relu):
    """Large-M fallback: tiled o = relu(a*s+t) @ b (stats done separately)."""
    @pl.when(pl.program_id(2) == 0)
    def _():
        acc_ref[...] = jnp.zeros_like(acc_ref)

    a = a_ref[...] * s_ref[...] + t_ref[...]
    if relu:
        a = jnp.maximum(a, 0.0)
    acc_ref[...] += jnp.dot(a.astype(jnp.bfloat16), b_ref[...],
                            preferred_element_type=jnp.float32)

    @pl.when(pl.program_id(2) == pl.num_programs(2) - 1)
    def _():
        o_ref[...] = acc_ref[...]


def _bn_stats_kernel(x_ref, sum_ref, sq_ref):
    """Standalone per-channel sum/sumsq (only used on the large-M fallback)."""
    @pl.when(pl.program_id(0) == 0)
    def _():
        sum_ref[...] = jnp.zeros_like(sum_ref)
        sq_ref[...] = jnp.zeros_like(sq_ref)
    x = x_ref[...]
    sum_ref[...] += jnp.sum(x, axis=0, keepdims=True)
    sq_ref[...] += jnp.sum(x * x, axis=0, keepdims=True)


def _conv3x3_kernel(x_ref, m_ref, om_ref, s_ref, t_ref, w_ref,
                    o_ref, sum_ref, sq_ref, *, offsets, mdense):
    """3x3 stride-1 conv of relu(x*s+t) with zero spatial padding.

    x_ref holds the spatially padded, row-flattened slab (plus zero tail rows);
    each tap is a sublane rotation of the whole VMEM-resident slab -> no HBM
    im2col.  m_ref zeroes the spatial-padding positions after the affine.
    om_ref masks the *valid output* rows so we can emit the statistics of the
    downstream-visible result for the next BatchNorm.
    """
    z = jnp.maximum(x_ref[...] * s_ref[...] + t_ref[...], 0.0) * m_ref[...]
    mbig = x_ref.shape[0]
    acc = jnp.zeros(o_ref.shape, jnp.float32)
    for tap, off in enumerate(offsets):
        if off == 0:
            zs = z[:mdense, :]
        else:
            zs = pltpu.roll(z, mbig - off, axis=0)[:mdense, :]
        acc = acc + jnp.dot(zs.astype(jnp.bfloat16), w_ref[tap],
                            preferred_element_type=jnp.float32)
    o_ref[...] = acc
    masked = acc * om_ref[...]
    sum_ref[...] = jnp.sum(masked, axis=0, keepdims=True)
    sq_ref[...] = jnp.sum(masked * masked, axis=0, keepdims=True)


def _maxpool_kernel(x_ref, m_ref, om_ref, s_ref, t_ref,
                    o_ref, sum_ref, sq_ref, *, offsets, mdense):
    """Dense 3x3 window max of relu(x*s+t) (stride-2 subsample done outside).

    om_ref masks the rows that survive the stride-2 subsample so the emitted
    statistics match the pooled slab exactly.
    """
    z = jnp.maximum(x_ref[...] * s_ref[...] + t_ref[...], 0.0) * m_ref[...]
    mbig = x_ref.shape[0]
    acc = z[:mdense, :]
    for off in offsets[1:]:
        acc = jnp.maximum(acc, pltpu.roll(z, mbig - off, axis=0)[:mdense, :])
    o_ref[...] = acc
    masked = acc * om_ref[...]
    sum_ref[...] = jnp.sum(masked, axis=0, keepdims=True)
    sq_ref[...] = jnp.sum(masked * masked, axis=0, keepdims=True)


def _transition_kernel(x_ref, s_ref, t_ref, p_ref, w_ref,
                       o_ref, sum_ref, sq_ref):
    """Fused transition: avgpool2x2( relu(x*s+t) ) @ w (pool as a matmul).

    Padded output rows of the pooling matrix are exact zeros, so plain column
    sums equal the stats over the valid rows.
    """
    z = jnp.maximum(x_ref[...] * s_ref[...] + t_ref[...], 0.0)
    zp = jnp.dot(p_ref[...], z, preferred_element_type=jnp.float32)
    o = jnp.dot(zp.astype(jnp.bfloat16), w_ref[...],
                preferred_element_type=jnp.float32)
    o_ref[...] = o
    sum_ref[...] = jnp.sum(o, axis=0, keepdims=True)
    sq_ref[...] = jnp.sum(o * o, axis=0, keepdims=True)


def _head_kernel(x_ref, s_ref, t_ref, p_ref, w_ref, b_ref, o_ref):
    """Fused head: global-avg-pool( relu(x*s+t) ) @ Wc + b."""
    z = jnp.maximum(x_ref[...] * s_ref[...] + t_ref[...], 0.0)
    feat = jnp.dot(p_ref[...], z, preferred_element_type=jnp.float32)
    o_ref[...] = jnp.dot(feat.astype(jnp.bfloat16), w_ref[...],
                         preferred_element_type=jnp.float32) + b_ref[...]


# ============================================================== wrappers ====
def _pick_tm(M):
    if M % _TM == 0 and M // _TM >= 2:
        return _TM
    if M % 16 == 0:
        return M // 2
    return M


def bn_stats(x_slab):
    M, Cp = x_slab.shape
    tm = _TM if M % _TM == 0 else M
    return pl.pallas_call(
        _bn_stats_kernel,
        out_shape=(jax.ShapeDtypeStruct((1, Cp), jnp.float32),
                   jax.ShapeDtypeStruct((1, Cp), jnp.float32)),
        grid_spec=pltpu.PrefetchScalarGridSpec(
            num_scalar_prefetch=0, grid=(M // tm,),
            in_specs=[pl.BlockSpec((tm, Cp), lambda i: (i, 0))],
            out_specs=(pl.BlockSpec((1, Cp), lambda i: (0, 0)),
                       pl.BlockSpec((1, Cp), lambda i: (0, 0)))),
        compiler_params=pltpu.CompilerParams(
            dimension_semantics=("arbitrary",)),
    )(x_slab)


def fused_bn_matmul(a, scale, shift, w, *, relu):
    """a:(M,K) f32, scale/shift:(1,K), w:(K,N) bf16 -> (out, colsum, colsumsq)."""
    M, K = a.shape
    N = w.shape[1]
    if M <= 512 and N <= 512:
        tk = K if K <= 512 else _LANE
        return pl.pallas_call(
            functools.partial(_matmul_stats_kernel, relu=relu),
            out_shape=(jax.ShapeDtypeStruct((M, N), jnp.float32),
                       jax.ShapeDtypeStruct((1, N), jnp.float32),
                       jax.ShapeDtypeStruct((1, N), jnp.float32)),
            grid_spec=pltpu.PrefetchScalarGridSpec(
                num_scalar_prefetch=0, grid=(K // tk,),
                in_specs=[pl.BlockSpec((M, tk), lambda k: (0, k)),
                          pl.BlockSpec((1, tk), lambda k: (0, k)),
                          pl.BlockSpec((1, tk), lambda k: (0, k)),
                          pl.BlockSpec((tk, N), lambda k: (k, 0))],
                out_specs=(pl.BlockSpec((M, N), lambda k: (0, 0)),
                           pl.BlockSpec((1, N), lambda k: (0, 0)),
                           pl.BlockSpec((1, N), lambda k: (0, 0)))),
            compiler_params=pltpu.CompilerParams(
                dimension_semantics=("arbitrary",)),
        )(a, scale, shift, w)

    # Large-shape fallback: tiled matmul + separate stats pass.
    tm = _pick_tm(M)
    tn = _LANE if N % _LANE == 0 else N
    tk = K if K <= 512 else _LANE
    grid = (M // tm, N // tn, K // tk)
    out = pl.pallas_call(
        functools.partial(_matmul_tiled_kernel, relu=relu),
        out_shape=jax.ShapeDtypeStruct((M, N), jnp.float32),
        grid_spec=pltpu.PrefetchScalarGridSpec(
            num_scalar_prefetch=0, grid=grid,
            in_specs=[pl.BlockSpec((tm, tk), lambda i, j, k: (i, k)),
                      pl.BlockSpec((1, tk), lambda i, j, k: (0, k)),
                      pl.BlockSpec((1, tk), lambda i, j, k: (0, k)),
                      pl.BlockSpec((tk, tn), lambda i, j, k: (k, j))],
            out_specs=pl.BlockSpec((tm, tn), lambda i, j, k: (i, j)),
            scratch_shapes=[pltpu.VMEM((tm, tn), jnp.float32)]),
        compiler_params=pltpu.CompilerParams(
            dimension_semantics=("parallel", "parallel", "arbitrary")),
    )(a, scale, shift, w)
    ssum, ssq = bn_stats(out)
    return out, ssum, ssq


def bn_from_stats(s, q, m_true, g_pad, b_pad, eps=1e-5):
    """PyTorch training-mode BN (batch mean, biased variance) as scale/shift."""
    mean = s / float(m_true)
    var = q / float(m_true) - mean * mean
    scale = g_pad * jax.lax.rsqrt(var + eps)
    shift = b_pad - mean * scale
    return scale, shift


def _pad_geometry(N, H, W):
    Hp, Wp = H + 2, W + 2
    mpad = N * Hp * Wp
    max_off = 2 * Wp + 2
    mbig = _ru(mpad + max_off, 8)
    mdense = _ru(mpad, 8)
    offsets = tuple(di * Wp + dj for di in range(3) for dj in range(3))
    return Hp, Wp, mpad, mbig, mdense, offsets


def _pad_slab(x_slab, N, H, W, Hp, Wp, mpad, mbig):
    Cp = x_slab.shape[1]
    x4 = x_slab.reshape(N, H, W, Cp)
    xp = jnp.pad(x4, ((0, 0), (1, 1), (1, 1), (0, 0))).reshape(mpad, Cp)
    return jnp.pad(xp, ((0, mbig - mpad), (0, 0)))


def _input_mask(N, H, W, Hp, Wp, mpad, mbig):
    m = np.zeros((N, Hp, Wp, 1), np.float32)
    m[:, 1:H + 1, 1:W + 1, :] = 1.0
    return jnp.asarray(np.pad(m.reshape(mpad, 1), ((0, mbig - mpad), (0, 0))))


def conv3x3_bn_relu(x_slab, scale, shift, w_taps, N, H, W):
    Cp = x_slab.shape[1]
    Coutp = w_taps.shape[2]
    Hp, Wp, mpad, mbig, mdense, offsets = _pad_geometry(N, H, W)
    xbig = _pad_slab(x_slab, N, H, W, Hp, Wp, mpad, mbig)
    imask = _input_mask(N, H, W, Hp, Wp, mpad, mbig)
    om = np.zeros((N, Hp, Wp, 1), np.float32)
    om[:, :H, :W, :] = 1.0                      # rows kept by the [:H,:W] slice
    omask = jnp.asarray(np.pad(om.reshape(mpad, 1),
                               ((0, mdense - mpad), (0, 0))))
    dense, ysum, ysq = pl.pallas_call(
        functools.partial(_conv3x3_kernel, offsets=offsets, mdense=mdense),
        out_shape=(jax.ShapeDtypeStruct((mdense, Coutp), jnp.float32),
                   jax.ShapeDtypeStruct((1, Coutp), jnp.float32),
                   jax.ShapeDtypeStruct((1, Coutp), jnp.float32)),
        grid_spec=pltpu.PrefetchScalarGridSpec(
            num_scalar_prefetch=0, grid=(1,),
            in_specs=[pl.BlockSpec((mbig, Cp), lambda i: (0, 0)),
                      pl.BlockSpec((mbig, 1), lambda i: (0, 0)),
                      pl.BlockSpec((mdense, 1), lambda i: (0, 0)),
                      pl.BlockSpec((1, Cp), lambda i: (0, 0)),
                      pl.BlockSpec((1, Cp), lambda i: (0, 0)),
                      pl.BlockSpec((9, Cp, Coutp), lambda i: (0, 0, 0))],
            out_specs=(pl.BlockSpec((mdense, Coutp), lambda i: (0, 0)),
                       pl.BlockSpec((1, Coutp), lambda i: (0, 0)),
                       pl.BlockSpec((1, Coutp), lambda i: (0, 0)))),
        compiler_params=pltpu.CompilerParams(
            dimension_semantics=("arbitrary",)),
    )(xbig, imask, omask, scale, shift, w_taps)
    out = dense[:mpad].reshape(N, Hp, Wp, Coutp)[:, :H, :W, :]
    return out.reshape(N * H * W, Coutp), ysum, ysq


def maxpool_bn_relu(x_slab, scale, shift, N, H, W):
    """Fused BN-affine + ReLU + MaxPool2d(kernel=3, stride=2, padding=1)."""
    Cp = x_slab.shape[1]
    OH = (H + 2 - 3) // 2 + 1
    OW = (W + 2 - 3) // 2 + 1
    Hp, Wp, mpad, mbig, mdense, offsets = _pad_geometry(N, H, W)
    xbig = _pad_slab(x_slab, N, H, W, Hp, Wp, mpad, mbig)
    imask = _input_mask(N, H, W, Hp, Wp, mpad, mbig)
    om = np.zeros((N, Hp, Wp, 1), np.float32)
    om[:, 0:2 * OH:2, 0:2 * OW:2, :] = 1.0      # rows kept by the subsample
    omask = jnp.asarray(np.pad(om.reshape(mpad, 1),
                               ((0, mdense - mpad), (0, 0))))
    dense, psum, psq = pl.pallas_call(
        functools.partial(_maxpool_kernel, offsets=offsets, mdense=mdense),
        out_shape=(jax.ShapeDtypeStruct((mdense, Cp), jnp.float32),
                   jax.ShapeDtypeStruct((1, Cp), jnp.float32),
                   jax.ShapeDtypeStruct((1, Cp), jnp.float32)),
        grid_spec=pltpu.PrefetchScalarGridSpec(
            num_scalar_prefetch=0, grid=(1,),
            in_specs=[pl.BlockSpec((mbig, Cp), lambda i: (0, 0)),
                      pl.BlockSpec((mbig, 1), lambda i: (0, 0)),
                      pl.BlockSpec((mdense, 1), lambda i: (0, 0)),
                      pl.BlockSpec((1, Cp), lambda i: (0, 0)),
                      pl.BlockSpec((1, Cp), lambda i: (0, 0))],
            out_specs=(pl.BlockSpec((mdense, Cp), lambda i: (0, 0)),
                       pl.BlockSpec((1, Cp), lambda i: (0, 0)),
                       pl.BlockSpec((1, Cp), lambda i: (0, 0)))),
        compiler_params=pltpu.CompilerParams(
            dimension_semantics=("arbitrary",)),
    )(xbig, imask, omask, scale, shift)
    out = dense[:mpad].reshape(N, Hp, Wp, Cp)[:, 0:2 * OH:2, 0:2 * OW:2, :]
    return out.reshape(N * OH * OW, Cp), psum, psq, OH, OW


def _avgpool_matrix(N, H, W, rows_pad):
    OH, OW = H // 2, W // 2
    A = np.zeros((rows_pad, N * H * W), np.float32)
    for n in range(N):
        for oh in range(OH):
            for ow in range(OW):
                o = (n * OH + oh) * OW + ow
                for di in range(2):
                    for dj in range(2):
                        A[o, (n * H + 2 * oh + di) * W + 2 * ow + dj] = 0.25
    return jnp.asarray(A)


def _gap_matrix(N, HW, rows_pad):
    P = np.zeros((rows_pad, N * HW), np.float32)
    for n in range(N):
        P[n, n * HW:(n + 1) * HW] = 1.0 / HW
    return jnp.asarray(P)


def transition_fused(x_slab, scale, shift, w, N, H, W):
    M, Cp = x_slab.shape
    C2p = w.shape[1]
    OH, OW = H // 2, W // 2
    Mo = N * OH * OW
    rows = _ru(max(Mo, 8), 8)
    A = _avgpool_matrix(N, H, W, rows)
    out, tsum, tsq = pl.pallas_call(
        _transition_kernel,
        out_shape=(jax.ShapeDtypeStruct((rows, C2p), jnp.float32),
                   jax.ShapeDtypeStruct((1, C2p), jnp.float32),
                   jax.ShapeDtypeStruct((1, C2p), jnp.float32)),
        grid_spec=pltpu.PrefetchScalarGridSpec(
            num_scalar_prefetch=0, grid=(1,),
            in_specs=[pl.BlockSpec((M, Cp), lambda i: (0, 0)),
                      pl.BlockSpec((1, Cp), lambda i: (0, 0)),
                      pl.BlockSpec((1, Cp), lambda i: (0, 0)),
                      pl.BlockSpec((rows, M), lambda i: (0, 0)),
                      pl.BlockSpec((Cp, C2p), lambda i: (0, 0))],
            out_specs=(pl.BlockSpec((rows, C2p), lambda i: (0, 0)),
                       pl.BlockSpec((1, C2p), lambda i: (0, 0)),
                       pl.BlockSpec((1, C2p), lambda i: (0, 0)))),
        compiler_params=pltpu.CompilerParams(
            dimension_semantics=("arbitrary",)),
    )(x_slab, scale, shift, A, w)
    return out[:Mo], tsum, tsq, OH, OW


def head_fused(x_slab, scale, shift, w, bias, N, H, W):
    M, Cp = x_slab.shape
    nclsp = w.shape[1]
    rows = _ru(max(N, 8), 8)
    P = _gap_matrix(N, H * W, rows)
    return pl.pallas_call(
        _head_kernel,
        out_shape=jax.ShapeDtypeStruct((rows, nclsp), jnp.float32),
        grid_spec=pltpu.PrefetchScalarGridSpec(
            num_scalar_prefetch=0, grid=(1,),
            in_specs=[pl.BlockSpec((M, Cp), lambda i: (0, 0)),
                      pl.BlockSpec((1, Cp), lambda i: (0, 0)),
                      pl.BlockSpec((1, Cp), lambda i: (0, 0)),
                      pl.BlockSpec((rows, M), lambda i: (0, 0)),
                      pl.BlockSpec((Cp, nclsp), lambda i: (0, 0)),
                      pl.BlockSpec((1, nclsp), lambda i: (0, 0))],
            out_specs=pl.BlockSpec((rows, nclsp), lambda i: (0, 0))),
        compiler_params=pltpu.CompilerParams(
            dimension_semantics=("arbitrary",)),
    )(x_slab, scale, shift, P, w, bias)


# ============================================================ XLA glue ======
def _im2col(x, kh, kw, stride, pad):
    """Tiny im2col for conv0 only (Cin=4, built under jit)."""
    N, H, W, C = x.shape
    xp = jnp.pad(x, ((0, 0), (pad, pad), (pad, pad), (0, 0)))
    OH = (H + 2 * pad - kh) // stride + 1
    OW = (W + 2 * pad - kw) // stride + 1
    cols = [xp[:, i:i + stride * OH:stride, j:j + stride * OW:stride, :]
            for i in range(kh) for j in range(kw)]
    patches = jnp.stack(cols, axis=3).reshape(N * OH * OW, kh * kw * C)
    return patches, OH, OW


def concat_channels(x, cx, y, cy):
    """DenseNet channel concat (works for slabs and for (1,C) stats vectors)."""
    c_new = cx + cy
    cp_new = _ru(c_new, _LANE)
    cat = jnp.concatenate([x[:, :cx], y[:, :cy]], axis=1)
    return jnp.pad(cat, ((0, 0), (0, cp_new - c_new)))


# ======================================================== parameters ========
def _prep_conv1x1(w):                      # (Cout, Cin, 1, 1) -> (Cinp, Coutp) bf16
    cout, cin = w.shape[0], w.shape[1]
    m = w.reshape(cout, cin).T
    return _pad2(m, _ru(cin, _LANE), _ru(cout, _LANE)).astype(jnp.bfloat16)


def _prep_conv3x3(w):                      # (Cout, Cin, 3, 3) -> (9, Cinp, Coutp) bf16
    cout, cin = w.shape[0], w.shape[1]
    taps = []
    for di in range(3):
        for dj in range(3):
            taps.append(_pad2(w[:, :, di, dj].T,
                              _ru(cin, _LANE), _ru(cout, _LANE)))
    return jnp.stack(taps).astype(jnp.bfloat16)


def _prep_conv_im2col(w):                  # (Cout, Cin, kh, kw) -> (Kp, Coutp) bf16
    cout, cin, kh, kw = w.shape
    m = jnp.transpose(w, (2, 3, 1, 0)).reshape(kh * kw * cin, cout)
    return _pad2(m, _ru(kh * kw * cin, _LANE), _ru(cout, _LANE)).astype(jnp.bfloat16)


def init_params(key, cfg):
    gr = cfg["growth_rate"]
    bc = cfg["block_config"]
    nif = cfg["num_init_features"]
    bn_size = cfg["bn_size"]
    cin = cfg["num_inchannels"]
    ncls = cfg["num_classes"]

    keys = iter(jax.random.split(key, 4 * sum(bc) + len(bc) + 8))

    def conv_w(k, cout, cin_, kh, kw):
        fan_in = cin_ * kh * kw
        std = (2.0 / fan_in) ** 0.5            # kaiming_normal_
        return std * jax.random.normal(k, (cout, cin_, kh, kw), jnp.float32)

    def bn(c):
        cp = _ru(c, _LANE)
        g = jnp.pad(jnp.ones((c,), jnp.float32), (0, cp - c)).reshape(1, cp)
        b = jnp.zeros((1, cp), jnp.float32)
        return g, b

    params = {}
    params["conv0"] = _prep_conv_im2col(conv_w(next(keys), nif, cin, 7, 7))
    params["norm0_g"], params["norm0_b"] = bn(nif)
    nf = nif
    for i, nl in enumerate(bc):
        block = {}
        for j in range(nl):
            cb = bn_size * gr
            g1, b1 = bn(nf)
            g2, b2 = bn(cb)
            block["denselayer%d" % (j + 1)] = {
                "norm1_g": g1, "norm1_b": b1,
                "conv1": _prep_conv1x1(conv_w(next(keys), cb, nf, 1, 1)),
                "norm2_g": g2, "norm2_b": b2,
                "conv2": _prep_conv3x3(conv_w(next(keys), gr, cb, 3, 3)),
            }
            nf += gr
        params["denseblock%d" % (i + 1)] = block
        if i != len(bc) - 1:
            g, b = bn(nf)
            params["transition%d" % (i + 1)] = {
                "norm_g": g, "norm_b": b,
                "conv": _prep_conv1x1(conv_w(next(keys), nf // 2, nf, 1, 1)),
            }
            nf = nf // 2
    params["norm5_g"], params["norm5_b"] = bn(nf)
    bound = 1.0 / (nf ** 0.5)
    wc = jax.random.uniform(next(keys), (ncls, nf), jnp.float32, -bound, bound)
    params["classifier_w"] = _pad2(wc.T, _ru(nf, _LANE),
                                   _ru(ncls, _LANE)).astype(jnp.bfloat16)
    params["classifier_b"] = jnp.zeros((1, _ru(ncls, _LANE)), jnp.float32)
    return params


# ============================================================== forward =====
def dndqn_forward(params, x_nchw, cfg):
    gr = cfg["growth_rate"]
    bc = cfg["block_config"]
    N = x_nchw.shape[0]
    x = jnp.transpose(x_nchw.astype(jnp.float32), (0, 2, 3, 1))   # NCHW->NHWC

    # conv0 (7x7 / s2 / p3) -- tiny im2col + bf16 MXU matmul (+ norm0 stats).
    patches, H, W = _im2col(x, 7, 7, 2, 3)
    k0p = params["conv0"].shape[0]
    a0 = jnp.pad(patches, ((0, 0), (0, k0p - patches.shape[1])))
    one = jnp.ones((1, k0p), jnp.float32)
    zero = jnp.zeros((1, k0p), jnp.float32)
    slab, ssum, ssq = fused_bn_matmul(a0, one, zero, params["conv0"], relu=False)
    M = N * H * W

    # norm0 + relu0 + pool0(3x3/s2/p1) fused (emits pooled-slab stats).
    s, t = bn_from_stats(ssum, ssq, M, params["norm0_g"], params["norm0_b"])
    slab, ssum, ssq, H, W = maxpool_bn_relu(slab, s, t, N, H, W)
    M = N * H * W

    nf = cfg["num_init_features"]
    for i, nl in enumerate(bc):
        block = params["denseblock%d" % (i + 1)]
        for j in range(nl):
            lp = block["denselayer%d" % (j + 1)]
            # norm1/relu1/conv1 (1x1) fused; emits bottleneck stats for norm2.
            s1, t1 = bn_from_stats(ssum, ssq, M, lp["norm1_g"], lp["norm1_b"])
            btl, bsum, bsq = fused_bn_matmul(slab, s1, t1, lp["conv1"], relu=True)
            # norm2/relu2/conv2 (3x3) fused; emits new-feature stats.
            s2, t2 = bn_from_stats(bsum, bsq, M, lp["norm2_g"], lp["norm2_b"])
            y, ysum, ysq = conv3x3_bn_relu(btl, s2, t2, lp["conv2"], N, H, W)
            # drop_rate = 0 -> dropout is a no-op.
            slab = concat_channels(slab, nf, y, gr)
            ssum = concat_channels(ssum, nf, ysum, gr)   # cached per-channel stats
            ssq = concat_channels(ssq, nf, ysq, gr)
            nf += gr
        if i != len(bc) - 1:
            tp = params["transition%d" % (i + 1)]
            s, t = bn_from_stats(ssum, ssq, M, tp["norm_g"], tp["norm_b"])
            slab, ssum, ssq, H, W = transition_fused(slab, s, t, tp["conv"], N, H, W)
            nf //= 2
            M = N * H * W

    # norm5 + F.relu + adaptive_avg_pool2d((1,1)) + flatten + Linear, fused.
    s5, t5 = bn_from_stats(ssum, ssq, M, params["norm5_g"], params["norm5_b"])
    out = head_fused(slab, s5, t5, params["classifier_w"],
                     params["classifier_b"], N, H, W)
    return out[:N, :cfg["num_classes"]]


# ================================================================= main =====
if __name__ == "__main__":
    # Small but structurally faithful DNDQN config (constructor arguments).
    cfg = dict(growth_rate=8, block_config=(2, 2), num_init_features=16,
               bn_size=2, num_classes=10, num_inchannels=4)

    key = jax.random.PRNGKey(0)
    pkey, xkey = jax.random.split(key)
    params = init_params(pkey, cfg)

    x = jax.random.normal(xkey, (2, cfg["num_inchannels"], 16, 16), jnp.float32)

    fwd = jax.jit(functools.partial(dndqn_forward, cfg=cfg))
    out = jax.block_until_ready(fwd(params, x))

    assert out.shape == (2, cfg["num_classes"]), out.shape
    assert bool(jnp.all(jnp.isfinite(out)))
    print("KERNEL_OK")
</pallas_src>

<mosaic_0001>
module attributes {stable_mosaic.version = 11 : i64} {
  func.func @_matmul_stats_kernel(%arg0: i32, %arg1: memref<128x256xf32, #tpu.memory_space<vmem>>, %arg2: memref<1x256xf32, #tpu.memory_space<vmem>>, %arg3: memref<1x256xf32, #tpu.memory_space<vmem>>, %arg4: memref<256x128xbf16, #tpu.memory_space<vmem>>, %arg5: memref<128x128xf32, #tpu.memory_space<vmem>>, %arg6: memref<1x128xf32, #tpu.memory_space<vmem>>, %arg7: memref<1x128xf32, #tpu.memory_space<vmem>>) attributes {dimension_semantics = [#tpu.dimension_semantics<arbitrary>], iteration_bounds = array<i64: 1>, scalar_prefetch = 0 : i64, scratch_operands = 0 : i64, tpu.core_type = #tpu.core_type<tc>, window_params = [{transform_indices = @transform_0, window_bounds = array<i64: 128, 256>}, {transform_indices = @transform_1, window_bounds = array<i64: 1, 256>}, {transform_indices = @transform_2, window_bounds = array<i64: 1, 256>}, {transform_indices = @transform_3, window_bounds = array<i64: 256, 128>}, {pipeline_mode = #tpu.pipeline_mode<synchronous>, transform_indices = @transform_4, window_bounds = array<i64: 128, 128>}, {pipeline_mode = #tpu.pipeline_mode<synchronous>, transform_indices = @transform_5, window_bounds = array<i64: 1, 128>}, {pipeline_mode = #tpu.pipeline_mode<synchronous>, transform_indices = @transform_6, window_bounds = array<i64: 1, 128>}]} {
    %c0_i32 = arith.constant 0 : i32
    %0 = arith.cmpi eq, %arg0, %c0_i32 : i32
    %1 = arith.extui %0 : i1 to i32
    %c0_i32_0 = arith.constant 0 : i32
    %2 = arith.cmpi ne, %1, %c0_i32_0 : i32
    scf.if %2 {
      %cst_14 = arith.constant 0.000000e+00 : f32
      %19 = vector.broadcast %cst_14 : f32 to vector<128x128xf32>
      %c0_15 = arith.constant 0 : index
      %c0_16 = arith.constant 0 : index
      %20 = vector.load %arg5[%c0_15, %c0_16] : memref<128x128xf32, #tpu.memory_space<vmem>>, vector<128x128xf32>
      tpu.vector_store %arg5[%c0_15, %c0_16], %19 {strides = array<i32>} : memref<128x128xf32, #tpu.memory_space<vmem>>, vector<128x128xf32>,
    } else {
    }
    %c0 = arith.constant 0 : index
    %c0_1 = arith.constant 0 : index
    %3 = vector.load %arg1[%c0, %c0_1] : memref<128x256xf32, #tpu.memory_space<vmem>>, vector<128x256xf32>
    %c0_2 = arith.constant 0 : index
    %c0_3 = arith.constant 0 : index
    %4 = vector.load %arg2[%c0_2, %c0_3] : memref<1x256xf32, #tpu.memory_space<vmem>>, vector<1x256xf32>
    %5 = vector.broadcast %4 : vector<1x256xf32> to vector<128x256xf32>
    %6 = arith.mulf %3, %5 : vector<128x256xf32>
    %c0_4 = arith.constant 0 : index
    %c0_5 = arith.constant 0 : index
    %7 = vector.load %arg3[%c0_4, %c0_5] : memref<1x256xf32, #tpu.memory_space<vmem>>, vector<1x256xf32>
    %8 = vector.broadcast %7 : vector<1x256xf32> to vector<128x256xf32>
    %9 = arith.addf %6, %8 : vector<128x256xf32>
    %c0_6 = arith.constant 0 : index
    %c0_7 = arith.constant 0 : index
    %10 = vector.load %arg5[%c0_6, %c0_7] : memref<128x128xf32, #tpu.memory_space<vmem>>, vector<128x128xf32>
    %11 = arith.truncf %9 : vector<128x256xf32> to vector<128x256xbf16>
    %c0_8 = arith.constant 0 : index
    %c0_9 = arith.constant 0 : index
    %12 = vector.load %arg4[%c0_8, %c0_9] : memref<256x128xbf16, #tpu.memory_space<vmem>>, vector<256x128xbf16>
    %cst = arith.constant dense<0.000000e+00> : vector<128x128xf32>
    %13 = tpu.matmul %11, %12, %cst {dimension_numbers = #tpu.dot_dimension_numbers<[1], [0], [0], [1], [0, 0, 1, 1], [], []>} : vector<128x256xbf16>, vector<256x128xbf16>, vector<128x128xf32> -> vector<128x128xf32>
    %14 = arith.addf %10, %13 : vector<128x128xf32>
    %c0_10 = arith.constant 0 : index
    %c0_11 = arith.constant 0 : index
    %15 = vector.load %arg5[%c0_10, %c0_11] : memref<128x128xf32, #tpu.memory_space<vmem>>, vector<128x128xf32>
    tpu.vector_store %arg5[%c0_10, %c0_11], %14 {strides = array<i32>} : memref<128x128xf32, #tpu.memory_space<vmem>>, vector<128x128xf32>,
    %c0_i32_12 = arith.constant 0 : i32
    %16 = arith.cmpi eq, %arg0, %c0_i32_12 : i32
    %17 = arith.extui %16 : i1 to i32
    %c0_i32_13 = arith.constant 0 : i32
    %18 = arith.cmpi ne, %17, %c0_i32_13 : i32
    scf.if %18 {
      %c0_14 = arith.constant 0 : index
      %c0_15 = arith.constant 0 : index
      %19 = vector.load %arg5[%c0_14, %c0_15] : memref<128x128xf32, #tpu.memory_space<vmem>>, vector<128x128xf32>
      %cst_16 = arith.constant dense<0.000000e+00> : vector<128xf32>
      %20 = vector.multi_reduction <add>, %19, %cst_16 [0] : vector<128x128xf32> to vector<128xf32>
      %21 = vector.shape_cast %20 : vector<128xf32> to vector<1x128xf32>
      %c0_17 = arith.constant 0 : index
      %c0_18 = arith.constant 0 : index
      %22 = vector.load %arg6[%c0_17, %c0_18] : memref<1x128xf32, #tpu.memory_space<vmem>>, vector<1x128xf32>
      tpu.vector_store %arg6[%c0_17, %c0_18], %21 {strides = array<i32>} : memref<1x128xf32, #tpu.memory_space<vmem>>, vector<1x128xf32>,
      %23 = arith.mulf %19, %19 : vector<128x128xf32>
      %cst_19 = arith.constant dense<0.000000e+00> : vector<128xf32>
      %24 = vector.multi_reduction <add>, %23, %cst_19 [0] : vector<128x128xf32> to vector<128xf32>
      %25 = vector.shape_cast %24 : vector<128xf32> to vector<1x128xf32>
      %c0_20 = arith.constant 0 : index
      %c0_21 = arith.constant 0 : index
      %26 = vector.load %arg7[%c0_20, %c0_21] : memref<1x128xf32, #tpu.memory_space<vmem>>, vector<1x128xf32>
      tpu.vector_store %arg7[%c0_20, %c0_21], %25 {strides = array<i32>} : memref<1x128xf32, #tpu.memory_space<vmem>>, vector<1x128xf32>,
    } else {
    }
    return
  }
  func.func @transform_0(%arg0: i32) -> (i32, i32) {
    %c0_i32 = arith.constant 0 : i32
    %c0_i32_0 = arith.constant 0 : i32
    return %c0_i32, %arg0 : i32, i32
  }
  func.func @transform_1(%arg0: i32) -> (i32, i32) {
    %c0_i32 = arith.constant 0 : i32
    %c0_i32_0 = arith.constant 0 : i32
    return %c0_i32, %arg0 : i32, i32
  }
  func.func @transform_2(%arg0: i32) -> (i32, i32) {
    %c0_i32 = arith.constant 0 : i32
    %c0_i32_0 = arith.constant 0 : i32
    return %c0_i32, %arg0 : i32, i32
  }
  func.func @transform_3(%arg0: i32) -> (i32, i32) {
    %c0_i32 = arith.constant 0 : i32
    %c0_i32_0 = arith.constant 0 : i32
    return %arg0, %c0_i32 : i32, i32
  }
  func.func @transform_4(%arg0: i32) -> (i32, i32) {
    %c0_i32 = arith.constant 0 : i32
    %c0_i32_0 = arith.constant 0 : i32
    %c0_i32_1 = arith.constant 0 : i32
    return %c0_i32, %c0_i32_0 : i32, i32
  }
  func.func @transform_5(%arg0: i32) -> (i32, i32) {
    %c0_i32 = arith.constant 0 : i32
    %c0_i32_0 = arith.constant 0 : i32
    %c0_i32_1 = arith.constant 0 : i32
    return %c0_i32, %c0_i32_0 : i32, i32
  }
  func.func @transform_6(%arg0: i32) -> (i32, i32) {
    %c0_i32 = arith.constant 0 : i32
    %c0_i32_0 = arith.constant 0 : i32
    %c0_i32_1 = arith.constant 0 : i32
    return %c0_i32, %c0_i32_0 : i32, i32
  }
}

module attributes {stable_mosaic.version = 11 : i64} {
  func.func @_maxpool_kernel(%arg0: i32, %arg1: memref<224x128xf32, #tpu.memory_space<vmem>>, %arg2: memref<224x1xf32, #tpu.memory_space<vmem>>, %arg3: memref<200x1xf32, #tpu.memory_space<vmem>>, %arg4: memref<1x128xf32, #tpu.memory_space<vmem>>, %arg5: memref<1x128xf32, #tpu.memory_space<vmem>>, %arg6: memref<200x128xf32, #tpu.memory_space<vmem>>, %arg7: memref<1x128xf32, #tpu.memory_space<vmem>>, %arg8: memref<1x128xf32, #tpu.memory_space<vmem>>) attributes {dimension_semantics = [#tpu.dimension_semantics<arbitrary>], iteration_bounds = array<i64: 1>, scalar_prefetch = 0 : i64, scratch_operands = 0 : i64, tpu.core_type = #tpu.core_type<tc>, window_params = [{pipeline_mode = #tpu.pipeline_mode<synchronous>, transform_indices = @transform_0, window_bounds = array<i64: 224, 128>}, {pipeline_mode = #tpu.pipeline_mode<synchronous>, transform_indices = @transform_1, window_bounds = array<i64: 224, 1>}, {pipeline_mode = #tpu.pipeline_mode<synchronous>, transform_indices = @transform_2, window_bounds = array<i64: 200, 1>}, {pipeline_mode = #tpu.pipeline_mode<synchronous>, transform_indices = @transform_3, window_bounds = array<i64: 1, 128>}, {pipeline_mode = #tpu.pipeline_mode<synchronous>, transform_indices = @transform_4, window_bounds = array<i64: 1, 128>}, {pipeline_mode = #tpu.pipeline_mode<synchronous>, transform_indices = @transform_5, window_bounds = array<i64: 200, 128>}, {pipeline_mode = #tpu.pipeline_mode<synchronous>, transform_indices = @transform_6, window_bounds = array<i64: 1, 128>}, {pipeline_mode = #tpu.pipeline_mode<synchronous>, transform_indices = @transform_7, window_bounds = array<i64: 1, 128>}]} {
    %c0 = arith.constant 0 : index
    %c0_0 = arith.constant 0 : index
    %0 = vector.load %arg1[%c0, %c0_0] : memref<224x128xf32, #tpu.memory_space<vmem>>, vector<224x128xf32>
    %c0_1 = arith.constant 0 : index
    %c0_2 = arith.constant 0 : index
    %1 = vector.load %arg4[%c0_1, %c0_2] : memref<1x128xf32, #tpu.memory_space<vmem>>, vector<1x128xf32>
    %2 = vector.broadcast %1 : vector<1x128xf32> to vector<224x128xf32>
    %3 = arith.mulf %0, %2 : vector<224x128xf32>
    %c0_3 = arith.constant 0 : index
    %c0_4 = arith.constant 0 : index
    %4 = vector.load %arg5[%c0_3, %c0_4] : memref<1x128xf32, #tpu.memory_space<vmem>>, vector<1x128xf32>
    %5 = vector.broadcast %4 : vector<1x128xf32> to vector<224x128xf32>
    %6 = arith.addf %3, %5 : vector<224x128xf32>
    %cst = arith.constant 0.000000e+00 : f32
    %7 = vector.broadcast %cst : f32 to vector<224x128xf32>
    %8 = arith.maximumf %6, %7 : vector<224x128xf32>
    %c0_5 = arith.constant 0 : index
    %c0_6 = arith.constant 0 : index
    %9 = vector.load %arg2[%c0_5, %c0_6] : memref<224x1xf32, #tpu.memory_space<vmem>>, vector<224x1xf32>
    %10 = vector.broadcast %9 : vector<224x1xf32> to vector<224x128xf32>
    %11 = arith.mulf %8, %10 : vector<224x128xf32>
    %12 = vector.extract_strided_slice %11 {offsets = [0, 0], sizes = [200, 128], strides = [1, 1]} : vector<224x128xf32> to vector<200x128xf32>
    %c223_i32 = arith.constant 223 : i32
    %13 = tpu.dynamic_rotate %11 by %c223_i32 dim 0 : vector<224x128xf32>, i32 -> vector<224x128xf32>
    %14 = vector.extract_strided_slice %13 {offsets = [0, 0], sizes = [200, 128], strides = [1, 1]} : vector<224x128xf32> to vector<200x128xf32>
    %15 = arith.maximumf %12, %14 : vector<200x128xf32>
    %c222_i32 = arith.constant 222 : i32
    %16 = tpu.dynamic_rotate %11 by %c222_i32 dim 0 : vector<224x128xf32>, i32 -> vector<224x128xf32>
    %17 = vector.extract_strided_slice %16 {offsets = [0, 0], sizes = [200, 128], strides = [1, 1]} : vector<224x128xf32> to vector<200x128xf32>
    %18 = arith.maximumf %15, %17 : vector<200x128xf32>
    %c214_i32 = arith.constant 214 : i32
    %19 = tpu.dynamic_rotate %11 by %c214_i32 dim 0 : vector<224x128xf32>, i32 -> vector<224x128xf32>
    %20 = vector.extract_strided_slice %19 {offsets = [0, 0], sizes = [200, 128], strides = [1, 1]} : vector<224x128xf32> to vector<200x128xf32>
    %21 = arith.maximumf %18, %20 : vector<200x128xf32>
    %c213_i32 = arith.constant 213 : i32
    %22 = tpu.dynamic_rotate %11 by %c213_i32 dim 0 : vector<224x128xf32>, i32 -> vector<224x128xf32>
    %23 = vector.extract_strided_slice %22 {offsets = [0, 0], sizes = [200, 128], strides = [1, 1]} : vector<224x128xf32> to vector<200x128xf32>
    %24 = arith.maximumf %21, %23 : vector<200x128xf32>
    %c212_i32 = arith.constant 212 : i32
    %25 = tpu.dynamic_rotate %11 by %c212_i32 dim 0 : vector<224x128xf32>, i32 -> vector<224x128xf32>
    %26 = vector.extract_strided_slice %25 {offsets = [0, 0], sizes = [200, 128], strides = [1, 1]} : vector<224x128xf32> to vector<200x128xf32>
    %27 = arith.maximumf %24, %26 : vector<200x128xf32>
    %c204_i32 = arith.constant 204 : i32
    %28 = tpu.dynamic_rotate %11 by %c204_i32 dim 0 : vector<224x128xf32>, i32 -> vector<224x128xf32>
    %29 = vector.extract_strided_slice %28 {offsets = [0, 0], sizes = [200, 128], strides = [1, 1]} : vector<224x128xf32> to vector<200x128xf32>
    %30 = arith.maximumf %27, %29 : vector<200x128xf32>
    %c203_i32 = arith.constant 203 : i32
    %31 = tpu.dynamic_rotate %11 by %c203_i32 dim 0 : vector<224x128xf32>, i32 -> vector<224x128xf32>
    %32 = vector.extract_strided_slice %31 {offsets = [0, 0], sizes = [200, 128], strides = [1, 1]} : vector<224x128xf32> to vector<200x128xf32>
    %33 = arith.maximumf %30, %32 : vector<200x128xf32>
    %c202_i32 = arith.constant 202 : i32
    %34 = tpu.dynamic_rotate %11 by %c202_i32 dim 0 : vector<224x128xf32>, i32 -> vector<224x128xf32>
    %35 = vector.extract_strided_slice %34 {offsets = [0, 0], sizes = [200, 128], strides = [1, 1]} : vector<224x128xf32> to vector<200x128xf32>
    %36 = arith.maximumf %33, %35 : vector<200x128xf32>
    %c0_7 = arith.constant 0 : index
    %c0_8 = arith.constant 0 : index
    %37 = vector.load %arg6[%c0_7, %c0_8] : memref<200x128xf32, #tpu.memory_space<vmem>>, vector<200x128xf32>
    tpu.vector_store %arg6[%c0_7, %c0_8], %36 {strides = array<i32>} : memref<200x128xf32, #tpu.memory_space<vmem>>, vector<200x128xf32>,
    %c0_9 = arith.constant 0 : index
    %c0_10 = arith.constant 0 : index
    %38 = vector.load %arg3[%c0_9, %c0_10] : memref<200x1xf32, #tpu.memory_space<vmem>>, vector<200x1xf32>
    %39 = vector.broadcast %38 : vector<200x1xf32> to vector<200x128xf32>
    %40 = arith.mulf %36, %39 : vector<200x128xf32>
    %cst_11 = arith.constant dense<0.000000e+00> : vector<128xf32>
    %41 = vector.multi_reduction <add>, %40, %cst_11 [0] : vector<200x128xf32> to vector<128xf32>
    %42 = vector.shape_cast %41 : vector<128xf32> to vector<1x128xf32>
    %c0_12 = arith.constant 0 : index
    %c0_13 = arith.constant 0 : index
    %43 = vector.load %arg7[%c0_12, %c0_13] : memref<1x128xf32, #tpu.memory_space<vmem>>, vector<1x128xf32>
    tpu.vector_store %arg7[%c0_12, %c0_13], %42 {strides = array<i32>} : memref<1x128xf32, #tpu.memory_space<vmem>>, vector<1x128xf32>,
    %44 = arith.mulf %40, %40 : vector<200x128xf32>
    %cst_14 = arith.constant dense<0.000000e+00> : vector<128xf32>
    %45 = vector.multi_reduction <add>, %44, %cst_14 [0] : vector<200x128xf32> to vector<128xf32>
    %46 = vector.shape_cast %45 : vector<128xf32> to vector<1x128xf32>
    %c0_15 = arith.constant 0 : index
    %c0_16 = arith.constant 0 : index
    %47 = vector.load %arg8[%c0_15, %c0_16] : memref<1x128xf32, #tpu.memory_space<vmem>>, vector<1x128xf32>
    tpu.vector_store %arg8[%c0_15, %c0_16], %46 {strides = array<i32>} : memref<1x128xf32, #tpu.memory_space<vmem>>, vector<1x128xf32>,
    return
  }
  func.func @transform_0(%arg0: i32) -> (i32, i32) {
    %c0_i32 = arith.constant 0 : i32
    %c0_i32_0 = arith.constant 0 : i32
    %c0_i32_1 = arith.constant 0 : i32
    return %c0_i32, %c0_i32_0 : i32, i32
  }
  func.func @transform_1(%arg0: i32) -> (i32, i32) {
    %c0_i32 = arith.constant 0 : i32
    %c0_i32_0 = arith.constant 0 : i32
    %c0_i32_1 = arith.constant 0 : i32
    return %c0_i32, %c0_i32_0 : i32, i32
  }
  func.func @transform_2(%arg0: i32) -> (i32, i32) {
    %c0_i32 = arith.constant 0 : i32
    %c0_i32_0 = arith.constant 0 : i32
    %c0_i32_1 = arith.constant 0 : i32
    return %c0_i32, %c0_i32_0 : i32, i32
  }
  func.func @transform_3(%arg0: i32) -> (i32, i32) {
    %c0_i32 = arith.constant 0 : i32
    %c0_i32_0 = arith.constant 0 : i32
    %c0_i32_1 = arith.constant 0 : i32
    return %c0_i32, %c0_i32_0 : i32, i32
  }
  func.func @transform_4(%arg0: i32) -> (i32, i32) {
    %c0_i32 = arith.constant 0 : i32
    %c0_i32_0 = arith.constant 0 : i32
    %c0_i32_1 = arith.constant 0 : i32
    return %c0_i32, %c0_i32_0 : i32, i32
  }
  func.func @transform_5(%arg0: i32) -> (i32, i32) {
    %c0_i32 = arith.constant 0 : i32
    %c0_i32_0 = arith.constant 0 : i32
    %c0_i32_1 = arith.constant 0 : i32
    return %c0_i32, %c0_i32_0 : i32, i32
  }
  func.func @transform_6(%arg0: i32) -> (i32, i32) {
    %c0_i32 = arith.constant 0 : i32
    %c0_i32_0 = arith.constant 0 : i32
    %c0_i32_1 = arith.constant 0 : i32
    return %c0_i32, %c0_i32_0 : i32, i32
  }
  func.func @transform_7(%arg0: i32) -> (i32, i32) {
    %c0_i32 = arith.constant 0 : i32
    %c0_i32_0 = arith.constant 0 : i32
    %c0_i32_1 = arith.constant 0 : i32
    return %c0_i32, %c0_i32_0 : i32, i32
  }
}

module attributes {stable_mosaic.version = 11 : i64} {
  func.func @_matmul_stats_kernel(%arg0: i32, %arg1: memref<32x128xf32, #tpu.memory_space<vmem>>, %arg2: memref<1x128xf32, #tpu.memory_space<vmem>>, %arg3: memref<1x128xf32, #tpu.memory_space<vmem>>, %arg4: memref<128x128xbf16, #tpu.memory_space<vmem>>, %arg5: memref<32x128xf32, #tpu.memory_space<vmem>>, %arg6: memref<1x128xf32, #tpu.memory_space<vmem>>, %arg7: memref<1x128xf32, #tpu.memory_space<vmem>>) attributes {dimension_semantics = [#tpu.dimension_semantics<arbitrary>], iteration_bounds = array<i64: 1>, scalar_prefetch = 0 : i64, scratch_operands = 0 : i64, tpu.core_type = #tpu.core_type<tc>, window_params = [{transform_indices = @transform_0, window_bounds = array<i64: 32, 128>}, {transform_indices = @transform_1, window_bounds = array<i64: 1, 128>}, {transform_indices = @transform_2, window_bounds = array<i64: 1, 128>}, {transform_indices = @transform_3, window_bounds = array<i64: 128, 128>}, {pipeline_mode = #tpu.pipeline_mode<synchronous>, transform_indices = @transform_4, window_bounds = array<i64: 32, 128>}, {pipeline_mode = #tpu.pipeline_mode<synchronous>, transform_indices = @transform_5, window_bounds = array<i64: 1, 128>}, {pipeline_mode = #tpu.pipeline_mode<synchronous>, transform_indices = @transform_6, window_bounds = array<i64: 1, 128>}]} {
    %c0_i32 = arith.constant 0 : i32
    %0 = arith.cmpi eq, %arg0, %c0_i32 : i32
    %1 = arith.extui %0 : i1 to i32
    %c0_i32_0 = arith.constant 0 : i32
    %2 = arith.cmpi ne, %1, %c0_i32_0 : i32
    scf.if %2 {
      %cst_15 = arith.constant 0.000000e+00 : f32
      %21 = vector.broadcast %cst_15 : f32 to vector<32x128xf32>
      %c0_16 = arith.constant 0 : index
      %c0_17 = arith.constant 0 : index
      %22 = vector.load %arg5[%c0_16, %c0_17] : memref<32x128xf32, #tpu.memory_space<vmem>>, vector<32x128xf32>
      tpu.vector_store %arg5[%c0_16, %c0_17], %21 {strides = array<i32>} : memref<32x128xf32, #tpu.memory_space<vmem>>, vector<32x128xf32>,
    } else {
    }
    %c0 = arith.constant 0 : index
    %c0_1 = arith.constant 0 : index
    %3 = vector.load %arg1[%c0, %c0_1] : memref<32x128xf32, #tpu.memory_space<vmem>>, vector<32x128xf32>
    %c0_2 = arith.constant 0 : index
    %c0_3 = arith.constant 0 : index
    %4 = vector.load %arg2[%c0_2, %c0_3] : memref<1x128xf32, #tpu.memory_space<vmem>>, vector<1x128xf32>
    %5 = vector.broadcast %4 : vector<1x128xf32> to vector<32x128xf32>
    %6 = arith.mulf %3, %5 : vector<32x128xf32>
    %c0_4 = arith.constant 0 : index
    %c0_5 = arith.constant 0 : index
    %7 = vector.load %arg3[%c0_4, %c0_5] : memref<1x128xf32, #tpu.memory_space<vmem>>, vector<1x128xf32>
    %8 = vector.broadcast %7 : vector<1x128xf32> to vector<32x128xf32>
    %9 = arith.addf %6, %8 : vector<32x128xf32>
    %cst = arith.constant 0.000000e+00 : f32
    %10 = vector.broadcast %cst : f32 to vector<32x128xf32>
    %11 = arith.maximumf %9, %10 : vector<32x128xf32>
    %c0_6 = arith.constant 0 : index
    %c0_7 = arith.constant 0 : index
    %12 = vector.load %arg5[%c0_6, %c0_7] : memref<32x128xf32, #tpu.memory_space<vmem>>, vector<32x128xf32>
    %13 = arith.truncf %11 : vector<32x128xf32> to vector<32x128xbf16>
    %c0_8 = arith.constant 0 : index
    %c0_9 = arith.constant 0 : index
    %14 = vector.load %arg4[%c0_8, %c0_9] : memref<128x128xbf16, #tpu.memory_space<vmem>>, vector<128x128xbf16>
    %cst_10 = arith.constant dense<0.000000e+00> : vector<32x128xf32>
    %15 = tpu.matmul %13, %14, %cst_10 {dimension_numbers = #tpu.dot_dimension_numbers<[1], [0], [0], [1], [0, 0, 1, 1], [], []>} : vector<32x128xbf16>, vector<128x128xbf16>, vector<32x128xf32> -> vector<32x128xf32>
    %16 = arith.addf %12, %15 : vector<32x128xf32>
    %c0_11 = arith.constant 0 : index
    %c0_12 = arith.constant 0 : index
    %17 = vector.load %arg5[%c0_11, %c0_12] : memref<32x128xf32, #tpu.memory_space<vmem>>, vector<32x128xf32>
    tpu.vector_store %arg5[%c0_11, %c0_12], %16 {strides = array<i32>} : memref<32x128xf32, #tpu.memory_space<vmem>>, vector<32x128xf32>,
    %c0_i32_13 = arith.constant 0 : i32
    %18 = arith.cmpi eq, %arg0, %c0_i32_13 : i32
    %19 = arith.extui %18 : i1 to i32
    %c0_i32_14 = arith.constant 0 : i32
    %20 = arith.cmpi ne, %19, %c0_i32_14 : i32
    scf.if %20 {
      %c0_15 = arith.constant 0 : index
      %c0_16 = arith.constant 0 : index
      %21 = vector.load %arg5[%c0_15, %c0_16] : memref<32x128xf32, #tpu.memory_space<vmem>>, vector<32x128xf32>
      %cst_17 = arith.constant dense<0.000000e+00> : vector<128xf32>
      %22 = vector.multi_reduction <add>, %21, %cst_17 [0] : vector<32x128xf32> to vector<128xf32>
      %23 = vector.shape_cast %22 : vector<128xf32> to vector<1x128xf32>
      %c0_18 = arith.constant 0 : index
      %c0_19 = arith.constant 0 : index
      %24 = vector.load %arg6[%c0_18, %c0_19] : memref<1x128xf32, #tpu.memory_space<vmem>>, vector<1x128xf32>
      tpu.vector_store %arg6[%c0_18, %c0_19], %23 {strides = array<i32>} : memref<1x128xf32, #tpu.memory_space<vmem>>, vector<1x128xf32>,
      %25 = arith.mulf %21, %21 : vector<32x128xf32>
      %cst_20 = arith.constant dense<0.000000e+00> : vector<128xf32>
      %26 = vector.multi_reduction <add>, %25, %cst_20 [0] : vector<32x128xf32> to vector<128xf32>
      %27 = vector.shape_cast %26 : vector<128xf32> to vector<1x128xf32>
      %c0_21 = arith.constant 0 : index
      %c0_22 = arith.constant 0 : index
      %28 = vector.load %arg7[%c0_21, %c0_22] : memref<1x128xf32, #tpu.memory_space<vmem>>, vector<1x128xf32>
      tpu.vector_store %arg7[%c0_21, %c0_22], %27 {strides = array<i32>} : memref<1x128xf32, #tpu.memory_space<vmem>>, vector<1x128xf32>,
    } else {
    }
    return
  }
  func.func @transform_0(%arg0: i32) -> (i32, i32) {
    %c0_i32 = arith.constant 0 : i32
    %c0_i32_0 = arith.constant 0 : i32
    return %c0_i32, %arg0 : i32, i32
  }
  func.func @transform_1(%arg0: i32) -> (i32, i32) {
    %c0_i32 = arith.constant 0 : i32
    %c0_i32_0 = arith.constant 0 : i32
    return %c0_i32, %arg0 : i32, i32
  }
  func.func @transform_2(%arg0: i32) -> (i32, i32) {
    %c0_i32 = arith.constant 0 : i32
    %c0_i32_0 = arith.constant 0 : i32
    return %c0_i32, %arg0 : i32, i32
  }
  func.func @transform_3(%arg0: i32) -> (i32, i32) {
    %c0_i32 = arith.constant 0 : i32
    %c0_i32_0 = arith.constant 0 : i32
    return %arg0, %c0_i32 : i32, i32
  }
  func.func @transform_4(%arg0: i32) -> (i32, i32) {
    %c0_i32 = arith.constant 0 : i32
    %c0_i32_0 = arith.constant 0 : i32
    %c0_i32_1 = arith.constant 0 : i32
    return %c0_i32, %c0_i32_0 : i32, i32
  }
  func.func @transform_5(%arg0: i32) -> (i32, i32) {
    %c0_i32 = arith.constant 0 : i32
    %c0_i32_0 = arith.constant 0 : i32
    %c0_i32_1 = arith.constant 0 : i32
    return %c0_i32, %c0_i32_0 : i32, i32
  }
  func.func @transform_6(%arg0: i32) -> (i32, i32) {
    %c0_i32 = arith.constant 0 : i32
    %c0_i32_0 = arith.constant 0 : i32
    %c0_i32_1 = arith.constant 0 : i32
    return %c0_i32, %c0_i32_0 : i32, i32
  }
}

module attributes {stable_mosaic.version = 11 : i64} {
  func.func @_conv3x3_kernel(%arg0: i32, %arg1: memref<88x128xf32, #tpu.memory_space<vmem>>, %arg2: memref<88x1xf32, #tpu.memory_space<vmem>>, %arg3: memref<72x1xf32, #tpu.memory_space<vmem>>, %arg4: memref<1x128xf32, #tpu.memory_space<vmem>>, %arg5: memref<1x128xf32, #tpu.memory_space<vmem>>, %arg6: memref<9x128x128xbf16, #tpu.memory_space<vmem>>, %arg7: memref<72x128xf32, #tpu.memory_space<vmem>>, %arg8: memref<1x128xf32, #tpu.memory_space<vmem>>, %arg9: memref<1x128xf32, #tpu.memory_space<vmem>>) attributes {dimension_semantics = [#tpu.dimension_semantics<arbitrary>], iteration_bounds = array<i64: 1>, scalar_prefetch = 0 : i64, scratch_operands = 0 : i64, tpu.core_type = #tpu.core_type<tc>, window_params = [{pipeline_mode = #tpu.pipeline_mode<synchronous>, transform_indices = @transform_0, window_bounds = array<i64: 88, 128>}, {pipeline_mode = #tpu.pipeline_mode<synchronous>, transform_indices = @transform_1, window_bounds = array<i64: 88, 1>}, {pipeline_mode = #tpu.pipeline_mode<synchronous>, transform_indices = @transform_2, window_bounds = array<i64: 72, 1>}, {pipeline_mode = #tpu.pipeline_mode<synchronous>, transform_indices = @transform_3, window_bounds = array<i64: 1, 128>}, {pipeline_mode = #tpu.pipeline_mode<synchronous>, transform_indices = @transform_4, window_bounds = array<i64: 1, 128>}, {pipeline_mode = #tpu.pipeline_mode<synchronous>, transform_indices = @transform_5, window_bounds = array<i64: 9, 128, 128>}, {pipeline_mode = #tpu.pipeline_mode<synchronous>, transform_indices = @transform_6, window_bounds = array<i64: 72, 128>}, {pipeline_mode = #tpu.pipeline_mode<synchronous>, transform_indices = @transform_7, window_bounds = array<i64: 1, 128>}, {pipeline_mode = #tpu.pipeline_mode<synchronous>, transform_indices = @transform_8, window_bounds = array<i64: 1, 128>}]} {
    %c0 = arith.constant 0 : index
    %c0_0 = arith.constant 0 : index
    %0 = vector.load %arg1[%c0, %c0_0] : memref<88x128xf32, #tpu.memory_space<vmem>>, vector<88x128xf32>
    %c0_1 = arith.constant 0 : index
    %c0_2 = arith.constant 0 : index
    %1 = vector.load %arg4[%c0_1, %c0_2] : memref<1x128xf32, #tpu.memory_space<vmem>>, vector<1x128xf32>
    %2 = vector.broadcast %1 : vector<1x128xf32> to vector<88x128xf32>
    %3 = arith.mulf %0, %2 : vector<88x128xf32>
    %c0_3 = arith.constant 0 : index
    %c0_4 = arith.constant 0 : index
    %4 = vector.load %arg5[%c0_3, %c0_4] : memref<1x128xf32, #tpu.memory_space<vmem>>, vector<1x128xf32>
    %5 = vector.broadcast %4 : vector<1x128xf32> to vector<88x128xf32>
    %6 = arith.addf %3, %5 : vector<88x128xf32>
    %cst = arith.constant 0.000000e+00 : f32
    %7 = vector.broadcast %cst : f32 to vector<88x128xf32>
    %8 = arith.maximumf %6, %7 : vector<88x128xf32>
    %c0_5 = arith.constant 0 : index
    %c0_6 = arith.constant 0 : index
    %9 = vector.load %arg2[%c0_5, %c0_6] : memref<88x1xf32, #tpu.memory_space<vmem>>, vector<88x1xf32>
    %10 = vector.broadcast %9 : vector<88x1xf32> to vector<88x128xf32>
    %11 = arith.mulf %8, %10 : vector<88x128xf32>
    %cst_7 = arith.constant 0.000000e+00 : f32
    %12 = vector.broadcast %cst_7 : f32 to vector<72x128xf32>
    %13 = vector.extract_strided_slice %11 {offsets = [0, 0], sizes = [72, 128], strides = [1, 1]} : vector<88x128xf32> to vector<72x128xf32>
    %14 = arith.truncf %13 : vector<72x128xf32> to vector<72x128xbf16>
    %c0_8 = arith.constant 0 : index
    %c0_9 = arith.constant 0 : index
    %c0_10 = arith.constant 0 : index
    %15 = vector.load %arg6[%c0_8, %c0_9, %c0_10] : memref<9x128x128xbf16, #tpu.memory_space<vmem>>, vector<1x128x128xbf16>
    %16 = vector.shape_cast %15 : vector<1x128x128xbf16> to vector<128x128xbf16>
    %cst_11 = arith.constant dense<0.000000e+00> : vector<72x128xf32>
    %17 = tpu.matmul %14, %16, %cst_11 {dimension_numbers = #tpu.dot_dimension_numbers<[1], [0], [0], [1], [0, 0, 1, 1], [], []>} : vector<72x128xbf16>, vector<128x128xbf16>, vector<72x128xf32> -> vector<72x128xf32>
    %18 = arith.addf %12, %17 : vector<72x128xf32>
    %c87_i32 = arith.constant 87 : i32
    %19 = tpu.dynamic_rotate %11 by %c87_i32 dim 0 : vector<88x128xf32>, i32 -> vector<88x128xf32>
    %20 = vector.extract_strided_slice %19 {offsets = [0, 0], sizes = [72, 128], strides = [1, 1]} : vector<88x128xf32> to vector<72x128xf32>
    %21 = arith.truncf %20 : vector<72x128xf32> to vector<72x128xbf16>
    %c1 = arith.constant 1 : index
    %c0_12 = arith.constant 0 : index
    %c0_13 = arith.constant 0 : index
    %22 = vector.load %arg6[%c1, %c0_12, %c0_13] : memref<9x128x128xbf16, #tpu.memory_space<vmem>>, vector<1x128x128xbf16>
    %23 = vector.shape_cast %22 : vector<1x128x128xbf16> to vector<128x128xbf16>
    %cst_14 = arith.constant dense<0.000000e+00> : vector<72x128xf32>
    %24 = tpu.matmul %21, %23, %cst_14 {dimension_numbers = #tpu.dot_dimension_numbers<[1], [0], [0], [1], [0, 0, 1, 1], [], []>} : vector<72x128xbf16>, vector<128x128xbf16>, vector<72x128xf32> -> vector<72x128xf32>
    %25 = arith.addf %18, %24 : vector<72x128xf32>
    %c86_i32 = arith.constant 86 : i32
    %26 = tpu.dynamic_rotate %11 by %c86_i32 dim 0 : vector<88x128xf32>, i32 -> vector<88x128xf32>
    %27 = vector.extract_strided_slice %26 {offsets = [0, 0], sizes = [72, 128], strides = [1, 1]} : vector<88x128xf32> to vector<72x128xf32>
    %28 = arith.truncf %27 : vector<72x128xf32> to vector<72x128xbf16>
    %c2 = arith.constant 2 : index
    %c0_15 = arith.constant 0 : index
    %c0_16 = arith.constant 0 : index
    %29 = vector.load %arg6[%c2, %c0_15, %c0_16] : memref<9x128x128xbf16, #tpu.memory_space<vmem>>, vector<1x128x128xbf16>
    %30 = vector.shape_cast %29 : vector<1x128x128xbf16> to vector<128x128xbf16>
    %cst_17 = arith.constant dense<0.000000e+00> : vector<72x128xf32>
    %31 = tpu.matmul %28, %30, %cst_17 {dimension_numbers = #tpu.dot_dimension_numbers<[1], [0], [0], [1], [0, 0, 1, 1], [], []>} : vector<72x128xbf16>, vector<128x128xbf16>, vector<72x128xf32> -> vector<72x128xf32>
    %32 = arith.addf %25, %31 : vector<72x128xf32>
    %c82_i32 = arith.constant 82 : i32
    %33 = tpu.dynamic_rotate %11 by %c82_i32 dim 0 : vector<88x128xf32>, i32 -> vector<88x128xf32>
    %34 = vector.extract_strided_slice %33 {offsets = [0, 0], sizes = [72, 128], strides = [1, 1]} : vector<88x128xf32> to vector<72x128xf32>
    %35 = arith.truncf %34 : vector<72x128xf32> to vector<72x128xbf16>
    %c3 = arith.constant 3 : index
    %c0_18 = arith.constant 0 : index
    %c0_19 = arith.constant 0 : index
    %36 = vector.load %arg6[%c3, %c0_18, %c0_19] : memref<9x128x128xbf16, #tpu.memory_space<vmem>>, vector<1x128x128xbf16>
    %37 = vector.shape_cast %36 : vector<1x128x128xbf16> to vector<128x128xbf16>
    %cst_20 = arith.constant dense<0.000000e+00> : vector<72x128xf32>
    %38 = tpu.matmul %35, %37, %cst_20 {dimension_numbers = #tpu.dot_dimension_numbers<[1], [0], [0], [1], [0, 0, 1, 1], [], []>} : vector<72x128xbf16>, vector<128x128xbf16>, vector<72x128xf32> -> vector<72x128xf32>
    %39 = arith.addf %32, %38 : vector<72x128xf32>
    %c81_i32 = arith.constant 81 : i32
    %40 = tpu.dynamic_rotate %11 by %c81_i32 dim 0 : vector<88x128xf32>, i32 -> vector<88x128xf32>
    %41 = vector.extract_strided_slice %40 {offsets = [0, 0], sizes = [72, 128], strides = [1, 1]} : vector<88x128xf32> to vector<72x128xf32>
    %42 = arith.truncf %41 : vector<72x128xf32> to vector<72x128xbf16>
    %c4 = arith.constant 4 : index
    %c0_21 = arith.constant 0 : index
    %c0_22 = arith.constant 0 : index
    %43 = vector.load %arg6[%c4, %c0_21, %c0_22] : memref<9x128x128xbf16, #tpu.memory_space<vmem>>, vector<1x128x128xbf16>
    %44 = vector.shape_cast %43 : vector<1x128x128xbf16> to vector<128x128xbf16>
    %cst_23 = arith.constant dense<0.000000e+00> : vector<72x128xf32>
    %45 = tpu.matmul %42, %44, %cst_23 {dimension_numbers = #tpu.dot_dimension_numbers<[1], [0], [0], [1], [0, 0, 1, 1], [], []>} : vector<72x128xbf16>, vector<128x128xbf16>, vector<72x128xf32> -> vector<72x128xf32>
    %46 = arith.addf %39, %45 : vector<72x128xf32>
    %c80_i32 = arith.constant 80 : i32
    %47 = tpu.dynamic_rotate %11 by %c80_i32 dim 0 : vector<88x128xf32>, i32 -> vector<88x128xf32>
    %48 = vector.extract_strided_slice %47 {offsets = [0, 0], sizes = [72, 128], strides = [1, 1]} : vector<88x128xf32> to vector<72x128xf32>
    %49 = arith.truncf %48 : vector<72x128xf32> to vector<72x128xbf16>
    %c5 = arith.constant 5 : index
    %c0_24 = arith.constant 0 : index
    %c0_25 = arith.constant 0 : index
    %50 = vector.load %arg6[%c5, %c0_24, %c0_25] : memref<9x128x128xbf16, #tpu.memory_space<vmem>>, vector<1x128x128xbf16>
    %51 = vector.shape_cast %50 : vector<1x128x128xbf16> to vector<128x128xbf16>
    %cst_26 = arith.constant dense<0.000000e+00> : vector<72x128xf32>
    %52 = tpu.matmul %49, %51, %cst_26 {dimension_numbers = #tpu.dot_dimension_numbers<[1], [0], [0], [1], [0, 0, 1, 1], [], []>} : vector<72x128xbf16>, vector<128x128xbf16>, vector<72x128xf32> -> vector<72x128xf32>
    %53 = arith.addf %46, %52 : vector<72x128xf32>
    %c76_i32 = arith.constant 76 : i32
    %54 = tpu.dynamic_rotate %11 by %c76_i32 dim 0 : vector<88x128xf32>, i32 -> vector<88x128xf32>
    %55 = vector.extract_strided_slice %54 {offsets = [0, 0], sizes = [72, 128], strides = [1, 1]} : vector<88x128xf32> to vector<72x128xf32>
    %56 = arith.truncf %55 : vector<72x128xf32> to vector<72x128xbf16>
    %c6 = arith.constant 6 : index
    %c0_27 = arith.constant 0 : index
    %c0_28 = arith.constant 0 : index
    %57 = vector.load %arg6[%c6, %c0_27, %c0_28] : memref<9x128x128xbf16, #tpu.memory_space<vmem>>, vector<1x128x128xbf16>
    %58 = vector.shape_cast %57 : vector<1x128x128xbf16> to vector<128x128xbf16>
    %cst_29 = arith.constant dense<0.000000e+00> : vector<72x128xf32>
    %59 = tpu.matmul %56, %58, %cst_29 {dimension_numbers = #tpu.dot_dimension_numbers<[1], [0], [0], [1], [0, 0, 1, 1], [], []>} : vector<72x128xbf16>, vector<128x128xbf16>, vector<72x128xf32> -> vector<72x128xf32>
    %60 = arith.addf %53, %59 : vector<72x128xf32>
    %c75_i32 = arith.constant 75 : i32
    %61 = tpu.dynamic_rotate %11 by %c75_i32 dim 0 : vector<88x128xf32>, i32 -> vector<88x128xf32>
    %62 = vector.extract_strided_slice %61 {offsets = [0, 0], sizes = [72, 128], strides = [1, 1]} : vector<88x128xf32> to vector<72x128xf32>
    %63 = arith.truncf %62 : vector<72x128xf32> to vector<72x128xbf16>
    %c7 = arith.constant 7 : index
    %c0_30 = arith.constant 0 : index
    %c0_31 = arith.constant 0 : index
    %64 = vector.load %arg6[%c7, %c0_30, %c0_31] : memref<9x128x128xbf16, #tpu.memory_space<vmem>>, vector<1x128x128xbf16>
    %65 = vector.shape_cast %64 : vector<1x128x128xbf16> to vector<128x128xbf16>
    %cst_32 = arith.constant dense<0.000000e+00> : vector<72x128xf32>
    %66 = tpu.matmul %63, %65, %cst_32 {dimension_numbers = #tpu.dot_dimension_numbers<[1], [0], [0], [1], [0, 0, 1, 1], [], []>} : vector<72x128xbf16>, vector<128x128xbf16>, vector<72x128xf32> -> vector<72x128xf32>
    %67 = arith.addf %60, %66 : vector<72x128xf32>
    %c74_i32 = arith.constant 74 : i32
    %68 = tpu.dynamic_rotate %11 by %c74_i32 dim 0 : vector<88x128xf32>, i32 -> vector<88x128xf32>
    %69 = vector.extract_strided_slice %68 {offsets = [0, 0], sizes = [72, 128], strides = [1, 1]} : vector<88x128xf32> to vector<72x128xf32>
    %70 = arith.truncf %69 : vector<72x128xf32> to vector<72x128xbf16>
    %c8 = arith.constant 8 : index
    %c0_33 = arith.constant 0 : index
    %c0_34 = arith.constant 0 : index
    %71 = vector.load %arg6[%c8, %c0_33, %c0_34] : memref<9x128x128xbf16, #tpu.memory_space<vmem>>, vector<1x128x128xbf16>
    %72 = vector.shape_cast %71 : vector<1x128x128xbf16> to vector<128x128xbf16>
    %cst_35 = arith.constant dense<0.000000e+00> : vector<72x128xf32>
    %73 = tpu.matmul %70, %72, %cst_35 {dimension_numbers = #tpu.dot_dimension_numbers<[1], [0], [0], [1], [0, 0, 1, 1], [], []>} : vector<72x128xbf16>, vector<128x128xbf16>, vector<72x128xf32> -> vector<72x128xf32>
    %74 = arith.addf %67, %73 : vector<72x128xf32>
    %c0_36 = arith.constant 0 : index
    %c0_37 = arith.constant 0 : index
    %75 = vector.load %arg7[%c0_36, %c0_37] : memref<72x128xf32, #tpu.memory_space<vmem>>, vector<72x128xf32>
    tpu.vector_store %arg7[%c0_36, %c0_37], %74 {strides = array<i32>} : memref<72x128xf32, #tpu.memory_space<vmem>>, vector<72x128xf32>,
    %c0_38 = arith.constant 0 : index
    %c0_39 = arith.constant 0 : index
    %76 = vector.load %arg3[%c0_38, %c0_39] : memref<72x1xf32, #tpu.memory_space<vmem>>, vector<72x1xf32>
    %77 = vector.broadcast %76 : vector<72x1xf32> to vector<72x128xf32>
    %78 = arith.mulf %74, %77 : vector<72x128xf32>
    %cst_40 = arith.constant dense<0.000000e+00> : vector<128xf32>
    %79 = vector.multi_reduction <add>, %78, %cst_40 [0] : vector<72x128xf32> to vector<128xf32>
    %80 = vector.shape_cast %79 : vector<128xf32> to vector<1x128xf32>
    %c0_41 = arith.constant 0 : index
    %c0_42 = arith.constant 0 : index
    %81 = vector.load %arg8[%c0_41, %c0_42] : memref<1x128xf32, #tpu.memory_space<vmem>>, vector<1x128xf32>
    tpu.vector_store %arg8[%c0_41, %c0_42], %80 {strides = array<i32>} : memref<1x128xf32, #tpu.memory_space<vmem>>, vector<1x128xf32>,
    %82 = arith.mulf %78, %78 : vector<72x128xf32>
    %cst_43 = arith.constant dense<0.000000e+00> : vector<128xf32>
    %83 = vector.multi_reduction <add>, %82, %cst_43 [0] : vector<72x128xf32> to vector<128xf32>
    %84 = vector.shape_cast %83 : vector<128xf32> to vector<1x128xf32>
    %c0_44 = arith.constant 0 : index
    %c0_45 = arith.constant 0 : index
    %85 = vector.load %arg9[%c0_44, %c0_45] : memref<1x128xf32, #tpu.memory_space<vmem>>, vector<1x128xf32>
    tpu.vector_store %arg9[%c0_44, %c0_45], %84 {strides = array<i32>} : memref<1x128xf32, #tpu.memory_space<vmem>>, vector<1x128xf32>,
    return
  }
  func.func @transform_0(%arg0: i32) -> (i32, i32) {
    %c0_i32 = arith.constant 0 : i32
    %c0_i32_0 = arith.constant 0 : i32
    %c0_i32_1 = arith.constant 0 : i32
    return %c0_i32, %c0_i32_0 : i32, i32
  }
  func.func @transform_1(%arg0: i32) -> (i32, i32) {
    %c0_i32 = arith.constant 0 : i32
    %c0_i32_0 = arith.constant 0 : i32
    %c0_i32_1 = arith.constant 0 : i32
    return %c0_i32, %c0_i32_0 : i32, i32
  }
  func.func @transform_2(%arg0: i32) -> (i32, i32) {
    %c0_i32 = arith.constant 0 : i32
    %c0_i32_0 = arith.constant 0 : i32
    %c0_i32_1 = arith.constant 0 : i32
    return %c0_i32, %c0_i32_0 : i32, i32
  }
  func.func @transform_3(%arg0: i32) -> (i32, i32) {
    %c0_i32 = arith.constant 0 : i32
    %c0_i32_0 = arith.constant 0 : i32
    %c0_i32_1 = arith.constant 0 : i32
    return %c0_i32, %c0_i32_0 : i32, i32
  }
  func.func @transform_4(%arg0: i32) -> (i32, i32) {
    %c0_i32 = arith.constant 0 : i32
    %c0_i32_0 = arith.constant 0 : i32
    %c0_i32_1 = arith.constant 0 : i32
    return %c0_i32, %c0_i32_0 : i32, i32
  }
  func.func @transform_5(%arg0: i32) -> (i32, i32, i32) {
    %c0_i32 = arith.constant 0 : i32
    %c0_i32_0 = arith.constant 0 : i32
    %c0_i32_1 = arith.constant 0 : i32
    %c0_i32_2 = arith.constant 0 : i32
    return %c0_i32, %c0_i32_0, %c0_i32_1 : i32, i32, i32
  }
  func.func @transform_6(%arg0: i32) -> (i32, i32) {
    %c0_i32 = arith.constant 0 : i32
    %c0_i32_0 = arith.constant 0 : i32
    %c0_i32_1 = arith.constant 0 : i32
    return %c0_i32, %c0_i32_0 : i32, i32
  }
  func.func @transform_7(%arg0: i32) -> (i32, i32) {
    %c0_i32 = arith.constant 0 : i32
    %c0_i32_0 = arith.constant 0 : i32
    %c0_i32_1 = arith.constant 0 : i32
    return %c0_i32, %c0_i32_0 : i32, i32
  }
  func.func @transform_8(%arg0: i32) -> (i32, i32) {
    %c0_i32 = arith.constant 0 : i32
    %c0_i32_0 = arith.constant 0 : i32
    %c0_i32_1 = arith.constant 0 : i32
    return %c0_i32, %c0_i32_0 : i32, i32
  }
}

module attributes {stable_mosaic.version = 11 : i64} {
  func.func @_transition_kernel(%arg0: i32, %arg1: memref<32x128xf32, #tpu.memory_space<vmem>>, %arg2: memref<1x128xf32, #tpu.memory_space<vmem>>, %arg3: memref<1x128xf32, #tpu.memory_space<vmem>>, %arg4: memref<8x32xf32, #tpu.memory_space<vmem>>, %arg5: memref<128x128xbf16, #tpu.memory_space<vmem>>, %arg6: memref<8x128xf32, #tpu.memory_space<vmem>>, %arg7: memref<1x128xf32, #tpu.memory_space<vmem>>, %arg8: memref<1x128xf32, #tpu.memory_space<vmem>>) attributes {dimension_semantics = [#tpu.dimension_semantics<arbitrary>], iteration_bounds = array<i64: 1>, scalar_prefetch = 0 : i64, scratch_operands = 0 : i64, tpu.core_type = #tpu.core_type<tc>, window_params = [{pipeline_mode = #tpu.pipeline_mode<synchronous>, transform_indices = @transform_0, window_bounds = array<i64: 32, 128>}, {pipeline_mode = #tpu.pipeline_mode<synchronous>, transform_indices = @transform_1, window_bounds = array<i64: 1, 128>}, {pipeline_mode = #tpu.pipeline_mode<synchronous>, transform_indices = @transform_2, window_bounds = array<i64: 1, 128>}, {pipeline_mode = #tpu.pipeline_mode<synchronous>, transform_indices = @transform_3, window_bounds = array<i64: 8, 32>}, {pipeline_mode = #tpu.pipeline_mode<synchronous>, transform_indices = @transform_4, window_bounds = array<i64: 128, 128>}, {pipeline_mode = #tpu.pipeline_mode<synchronous>, transform_indices = @transform_5, window_bounds = array<i64: 8, 128>}, {pipeline_mode = #tpu.pipeline_mode<synchronous>, transform_indices = @transform_6, window_bounds = array<i64: 1, 128>}, {pipeline_mode = #tpu.pipeline_mode<synchronous>, transform_indices = @transform_7, window_bounds = array<i64: 1, 128>}]} {
    %c0 = arith.constant 0 : index
    %c0_0 = arith.constant 0 : index
    %0 = vector.load %arg1[%c0, %c0_0] : memref<32x128xf32, #tpu.memory_space<vmem>>, vector<32x128xf32>
    %c0_1 = arith.constant 0 : index
    %c0_2 = arith.constant 0 : index
    %1 = vector.load %arg2[%c0_1, %c0_2] : memref<1x128xf32, #tpu.memory_space<vmem>>, vector<1x128xf32>
    %2 = vector.broadcast %1 : vector<1x128xf32> to vector<32x128xf32>
    %3 = arith.mulf %0, %2 : vector<32x128xf32>
    %c0_3 = arith.constant 0 : index
    %c0_4 = arith.constant 0 : index
    %4 = vector.load %arg3[%c0_3, %c0_4] : memref<1x128xf32, #tpu.memory_space<vmem>>, vector<1x128xf32>
    %5 = vector.broadcast %4 : vector<1x128xf32> to vector<32x128xf32>
    %6 = arith.addf %3, %5 : vector<32x128xf32>
    %cst = arith.constant 0.000000e+00 : f32
    %7 = vector.broadcast %cst : f32 to vector<32x128xf32>
    %8 = arith.maximumf %6, %7 : vector<32x128xf32>
    %c0_5 = arith.constant 0 : index
    %c0_6 = arith.constant 0 : index
    %9 = vector.load %arg4[%c0_5, %c0_6] : memref<8x32xf32, #tpu.memory_space<vmem>>, vector<8x32xf32>
    %cst_7 = arith.constant dense<0.000000e+00> : vector<8x128xf32>
    %10 = tpu.matmul %9, %8, %cst_7 {dimension_numbers = #tpu.dot_dimension_numbers<[1], [0], [0], [1], [0, 0, 1, 1], [], []>} : vector<8x32xf32>, vector<32x128xf32>, vector<8x128xf32> -> vector<8x128xf32>
    %11 = arith.truncf %10 : vector<8x128xf32> to vector<8x128xbf16>
    %c0_8 = arith.constant 0 : index
    %c0_9 = arith.constant 0 : index
    %12 = vector.load %arg5[%c0_8, %c0_9] : memref<128x128xbf16, #tpu.memory_space<vmem>>, vector<128x128xbf16>
    %cst_10 = arith.constant dense<0.000000e+00> : vector<8x128xf32>
    %13 = tpu.matmul %11, %12, %cst_10 {dimension_numbers = #tpu.dot_dimension_numbers<[1], [0], [0], [1], [0, 0, 1, 1], [], []>} : vector<8x128xbf16>, vector<128x128xbf16>, vector<8x128xf32> -> vector<8x128xf32>
    %c0_11 = arith.constant 0 : index
    %c0_12 = arith.constant 0 : index
    %14 = vector.load %arg6[%c0_11, %c0_12] : memref<8x128xf32, #tpu.memory_space<vmem>>, vector<8x128xf32>
    tpu.vector_store %arg6[%c0_11, %c0_12], %13 {strides = array<i32>} : memref<8x128xf32, #tpu.memory_space<vmem>>, vector<8x128xf32>,
    %cst_13 = arith.constant dense<0.000000e+00> : vector<128xf32>
    %15 = vector.multi_reduction <add>, %13, %cst_13 [0] : vector<8x128xf32> to vector<128xf32>
    %16 = vector.shape_cast %15 : vector<128xf32> to vector<1x128xf32>
    %c0_14 = arith.constant 0 : index
    %c0_15 = arith.constant 0 : index
    %17 = vector.load %arg7[%c0_14, %c0_15] : memref<1x128xf32, #tpu.memory_space<vmem>>, vector<1x128xf32>
    tpu.vector_store %arg7[%c0_14, %c0_15], %16 {strides = array<i32>} : memref<1x128xf32, #tpu.memory_space<vmem>>, vector<1x128xf32>,
    %18 = arith.mulf %13, %13 : vector<8x128xf32>
    %cst_16 = arith.constant dense<0.000000e+00> : vector<128xf32>
    %19 = vector.multi_reduction <add>, %18, %cst_16 [0] : vector<8x128xf32> to vector<128xf32>
    %20 = vector.shape_cast %19 : vector<128xf32> to vector<1x128xf32>
    %c0_17 = arith.constant 0 : index
    %c0_18 = arith.constant 0 : index
    %21 = vector.load %arg8[%c0_17, %c0_18] : memref<1x128xf32, #tpu.memory_space<vmem>>, vector<1x128xf32>
    tpu.vector_store %arg8[%c0_17, %c0_18], %20 {strides = array<i32>} : memref<1x128xf32, #tpu.memory_space<vmem>>, vector<1x128xf32>,
    return
  }
  func.func @transform_0(%arg0: i32) -> (i32, i32) {
    %c0_i32 = arith.constant 0 : i32
    %c0_i32_0 = arith.constant 0 : i32
    %c0_i32_1 = arith.constant 0 : i32
    return %c0_i32, %c0_i32_0 : i32, i32
  }
  func.func @transform_1(%arg0: i32) -> (i32, i32) {
    %c0_i32 = arith.constant 0 : i32
    %c0_i32_0 = arith.constant 0 : i32
    %c0_i32_1 = arith.constant 0 : i32
    return %c0_i32, %c0_i32_0 : i32, i32
  }
  func.func @transform_2(%arg0: i32) -> (i32, i32) {
    %c0_i32 = arith.constant 0 : i32
    %c0_i32_0 = arith.constant 0 : i32
    %c0_i32_1 = arith.constant 0 : i32
    return %c0_i32, %c0_i32_0 : i32, i32
  }
  func.func @transform_3(%arg0: i32) -> (i32, i32) {
    %c0_i32 = arith.constant 0 : i32
    %c0_i32_0 = arith.constant 0 : i32
    %c0_i32_1 = arith.constant 0 : i32
    return %c0_i32, %c0_i32_0 : i32, i32
  }
  func.func @transform_4(%arg0: i32) -> (i32, i32) {
    %c0_i32 = arith.constant 0 : i32
    %c0_i32_0 = arith.constant 0 : i32
    %c0_i32_1 = arith.constant 0 : i32
    return %c0_i32, %c0_i32_0 : i32, i32
  }
  func.func @transform_5(%arg0: i32) -> (i32, i32) {
    %c0_i32 = arith.constant 0 : i32
    %c0_i32_0 = arith.constant 0 : i32
    %c0_i32_1 = arith.constant 0 : i32
    return %c0_i32, %c0_i32_0 : i32, i32
  }
  func.func @transform_6(%arg0: i32) -> (i32, i32) {
    %c0_i32 = arith.constant 0 : i32
    %c0_i32_0 = arith.constant 0 : i32
    %c0_i32_1 = arith.constant 0 : i32
    return %c0_i32, %c0_i32_0 : i32, i32
  }
  func.func @transform_7(%arg0: i32) -> (i32, i32) {
    %c0_i32 = arith.constant 0 : i32
    %c0_i32_0 = arith.constant 0 : i32
    %c0_i32_1 = arith.constant 0 : i32
    return %c0_i32, %c0_i32_0 : i32, i32
  }
}

module attributes {stable_mosaic.version = 11 : i64} {
  func.func @_matmul_stats_kernel(%arg0: i32, %arg1: memref<8x128xf32, #tpu.memory_space<vmem>>, %arg2: memref<1x128xf32, #tpu.memory_space<vmem>>, %arg3: memref<1x128xf32, #tpu.memory_space<vmem>>, %arg4: memref<128x128xbf16, #tpu.memory_space<vmem>>, %arg5: memref<8x128xf32, #tpu.memory_space<vmem>>, %arg6: memref<1x128xf32, #tpu.memory_space<vmem>>, %arg7: memref<1x128xf32, #tpu.memory_space<vmem>>) attributes {dimension_semantics = [#tpu.dimension_semantics<arbitrary>], iteration_bounds = array<i64: 1>, scalar_prefetch = 0 : i64, scratch_operands = 0 : i64, tpu.core_type = #tpu.core_type<tc>, window_params = [{transform_indices = @transform_0, window_bounds = array<i64: 8, 128>}, {transform_indices = @transform_1, window_bounds = array<i64: 1, 128>}, {transform_indices = @transform_2, window_bounds = array<i64: 1, 128>}, {transform_indices = @transform_3, window_bounds = array<i64: 128, 128>}, {pipeline_mode = #tpu.pipeline_mode<synchronous>, transform_indices = @transform_4, window_bounds = array<i64: 8, 128>}, {pipeline_mode = #tpu.pipeline_mode<synchronous>, transform_indices = @transform_5, window_bounds = array<i64: 1, 128>}, {pipeline_mode = #tpu.pipeline_mode<synchronous>, transform_indices = @transform_6, window_bounds = array<i64: 1, 128>}]} {
    %c0_i32 = arith.constant 0 : i32
    %0 = arith.cmpi eq, %arg0, %c0_i32 : i32
    %1 = arith.extui %0 : i1 to i32
    %c0_i32_0 = arith.constant 0 : i32
    %2 = arith.cmpi ne, %1, %c0_i32_0 : i32
    scf.if %2 {
      %cst_15 = arith.constant 0.000000e+00 : f32
      %21 = vector.broadcast %cst_15 : f32 to vector<8x128xf32>
      %c0_16 = arith.constant 0 : index
      %c0_17 = arith.constant 0 : index
      %22 = vector.load %arg5[%c0_16, %c0_17] : memref<8x128xf32, #tpu.memory_space<vmem>>, vector<8x128xf32>
      tpu.vector_store %arg5[%c0_16, %c0_17], %21 {strides = array<i32>} : memref<8x128xf32, #tpu.memory_space<vmem>>, vector<8x128xf32>,
    } else {
    }
    %c0 = arith.constant 0 : index
    %c0_1 = arith.constant 0 : index
    %3 = vector.load %arg1[%c0, %c0_1] : memref<8x128xf32, #tpu.memory_space<vmem>>, vector<8x128xf32>
    %c0_2 = arith.constant 0 : index
    %c0_3 = arith.constant 0 : index
    %4 = vector.load %arg2[%c0_2, %c0_3] : memref<1x128xf32, #tpu.memory_space<vmem>>, vector<1x128xf32>
    %5 = vector.broadcast %4 : vector<1x128xf32> to vector<8x128xf32>
    %6 = arith.mulf %3, %5 : vector<8x128xf32>
    %c0_4 = arith.constant 0 : index
    %c0_5 = arith.constant 0 : index
    %7 = vector.load %arg3[%c0_4, %c0_5] : memref<1x128xf32, #tpu.memory_space<vmem>>, vector<1x128xf32>
    %8 = vector.broadcast %7 : vector<1x128xf32> to vector<8x128xf32>
    %9 = arith.addf %6, %8 : vector<8x128xf32>
    %cst = arith.constant 0.000000e+00 : f32
    %10 = vector.broadcast %cst : f32 to vector<8x128xf32>
    %11 = arith.maximumf %9, %10 : vector<8x128xf32>
    %c0_6 = arith.constant 0 : index
    %c0_7 = arith.constant 0 : index
    %12 = vector.load %arg5[%c0_6, %c0_7] : memref<8x128xf32, #tpu.memory_space<vmem>>, vector<8x128xf32>
    %13 = arith.truncf %11 : vector<8x128xf32> to vector<8x128xbf16>
    %c0_8 = arith.constant 0 : index
    %c0_9 = arith.constant 0 : index
    %14 = vector.load %arg4[%c0_8, %c0_9] : memref<128x128xbf16, #tpu.memory_space<vmem>>, vector<128x128xbf16>
    %cst_10 = arith.constant dense<0.000000e+00> : vector<8x128xf32>
    %15 = tpu.matmul %13, %14, %cst_10 {dimension_numbers = #tpu.dot_dimension_numbers<[1], [0], [0], [1], [0, 0, 1, 1], [], []>} : vector<8x128xbf16>, vector<128x128xbf16>, vector<8x128xf32> -> vector<8x128xf32>
    %16 = arith.addf %12, %15 : vector<8x128xf32>
    %c0_11 = arith.constant 0 : index
    %c0_12 = arith.constant 0 : index
    %17 = vector.load %arg5[%c0_11, %c0_12] : memref<8x128xf32, #tpu.memory_space<vmem>>, vector<8x128xf32>
    tpu.vector_store %arg5[%c0_11, %c0_12], %16 {strides = array<i32>} : memref<8x128xf32, #tpu.memory_space<vmem>>, vector<8x128xf32>,
    %c0_i32_13 = arith.constant 0 : i32
    %18 = arith.cmpi eq, %arg0, %c0_i32_13 : i32
    %19 = arith.extui %18 : i1 to i32
    %c0_i32_14 = arith.constant 0 : i32
    %20 = arith.cmpi ne, %19, %c0_i32_14 : i32
    scf.if %20 {
      %c0_15 = arith.constant 0 : index
      %c0_16 = arith.constant 0 : index
      %21 = vector.load %arg5[%c0_15, %c0_16] : memref<8x128xf32, #tpu.memory_space<vmem>>, vector<8x128xf32>
      %cst_17 = arith.constant dense<0.000000e+00> : vector<128xf32>
      %22 = vector.multi_reduction <add>, %21, %cst_17 [0] : vector<8x128xf32> to vector<128xf32>
      %23 = vector.shape_cast %22 : vector<128xf32> to vector<1x128xf32>
      %c0_18 = arith.constant 0 : index
      %c0_19 = arith.constant 0 : index
      %24 = vector.load %arg6[%c0_18, %c0_19] : memref<1x128xf32, #tpu.memory_space<vmem>>, vector<1x128xf32>
      tpu.vector_store %arg6[%c0_18, %c0_19], %23 {strides = array<i32>} : memref<1x128xf32, #tpu.memory_space<vmem>>, vector<1x128xf32>,
      %25 = arith.mulf %21, %21 : vector<8x128xf32>
      %cst_20 = arith.constant dense<0.000000e+00> : vector<128xf32>
      %26 = vector.multi_reduction <add>, %25, %cst_20 [0] : vector<8x128xf32> to vector<128xf32>
      %27 = vector.shape_cast %26 : vector<128xf32> to vector<1x128xf32>
      %c0_21 = arith.constant 0 : index
      %c0_22 = arith.constant 0 : index
      %28 = vector.load %arg7[%c0_21, %c0_22] : memref<1x128xf32, #tpu.memory_space<vmem>>, vector<1x128xf32>
      tpu.vector_store %arg7[%c0_21, %c0_22], %27 {strides = array<i32>} : memref<1x128xf32, #tpu.memory_space<vmem>>, vector<1x128xf32>,
    } else {
    }
    return
  }
  func.func @transform_0(%arg0: i32) -> (i32, i32) {
    %c0_i32 = arith.constant 0 : i32
    %c0_i32_0 = arith.constant 0 : i32
    return %c0_i32, %arg0 : i32, i32
  }
  func.func @transform_1(%arg0: i32) -> (i32, i32) {
    %c0_i32 = arith.constant 0 : i32
    %c0_i32_0 = arith.constant 0 : i32
    return %c0_i32, %arg0 : i32, i32
  }
  func.func @transform_2(%arg0: i32) -> (i32, i32) {
    %c0_i32 = arith.constant 0 : i32
    %c0_i32_0 = arith.constant 0 : i32
    return %c0_i32, %arg0 : i32, i32
  }
  func.func @transform_3(%arg0: i32) -> (i32, i32) {
    %c0_i32 = arith.constant 0 : i32
    %c0_i32_0 = arith.constant 0 : i32
    return %arg0, %c0_i32 : i32, i32
  }
  func.func @transform_4(%arg0: i32) -> (i32, i32) {
    %c0_i32 = arith.constant 0 : i32
    %c0_i32_0 = arith.constant 0 : i32
    %c0_i32_1 = arith.constant 0 : i32
    return %c0_i32, %c0_i32_0 : i32, i32
  }
  func.func @transform_5(%arg0: i32) -> (i32, i32) {
    %c0_i32 = arith.constant 0 : i32
    %c0_i32_0 = arith.constant 0 : i32
    %c0_i32_1 = arith.constant 0 : i32
    return %c0_i32, %c0_i32_0 : i32, i32
  }
  func.func @transform_6(%arg0: i32) -> (i32, i32) {
    %c0_i32 = arith.constant 0 : i32
    %c0_i32_0 = arith.constant 0 : i32
    %c0_i32_1 = arith.constant 0 : i32
    return %c0_i32, %c0_i32_0 : i32, i32
  }
}

module attributes {stable_mosaic.version = 11 : i64} {
  func.func @_conv3x3_kernel(%arg0: i32, %arg1: memref<48x128xf32, #tpu.memory_space<vmem>>, %arg2: memref<48x1xf32, #tpu.memory_space<vmem>>, %arg3: memref<32x1xf32, #tpu.memory_space<vmem>>, %arg4: memref<1x128xf32, #tpu.memory_space<vmem>>, %arg5: memref<1x128xf32, #tpu.memory_space<vmem>>, %arg6: memref<9x128x128xbf16, #tpu.memory_space<vmem>>, %arg7: memref<32x128xf32, #tpu.memory_space<vmem>>, %arg8: memref<1x128xf32, #tpu.memory_space<vmem>>, %arg9: memref<1x128xf32, #tpu.memory_space<vmem>>) attributes {dimension_semantics = [#tpu.dimension_semantics<arbitrary>], iteration_bounds = array<i64: 1>, scalar_prefetch = 0 : i64, scratch_operands = 0 : i64, tpu.core_type = #tpu.core_type<tc>, window_params = [{pipeline_mode = #tpu.pipeline_mode<synchronous>, transform_indices = @transform_0, window_bounds = array<i64: 48, 128>}, {pipeline_mode = #tpu.pipeline_mode<synchronous>, transform_indices = @transform_1, window_bounds = array<i64: 48, 1>}, {pipeline_mode = #tpu.pipeline_mode<synchronous>, transform_indices = @transform_2, window_bounds = array<i64: 32, 1>}, {pipeline_mode = #tpu.pipeline_mode<synchronous>, transform_indices = @transform_3, window_bounds = array<i64: 1, 128>}, {pipeline_mode = #tpu.pipeline_mode<synchronous>, transform_indices = @transform_4, window_bounds = array<i64: 1, 128>}, {pipeline_mode = #tpu.pipeline_mode<synchronous>, transform_indices = @transform_5, window_bounds = array<i64: 9, 128, 128>}, {pipeline_mode = #tpu.pipeline_mode<synchronous>, transform_indices = @transform_6, window_bounds = array<i64: 32, 128>}, {pipeline_mode = #tpu.pipeline_mode<synchronous>, transform_indices = @transform_7, window_bounds = array<i64: 1, 128>}, {pipeline_mode = #tpu.pipeline_mode<synchronous>, transform_indices = @transform_8, window_bounds = array<i64: 1, 128>}]} {
    %c0 = arith.constant 0 : index
    %c0_0 = arith.constant 0 : index
    %0 = vector.load %arg1[%c0, %c0_0] : memref<48x128xf32, #tpu.memory_space<vmem>>, vector<48x128xf32>
    %c0_1 = arith.constant 0 : index
    %c0_2 = arith.constant 0 : index
    %1 = vector.load %arg4[%c0_1, %c0_2] : memref<1x128xf32, #tpu.memory_space<vmem>>, vector<1x128xf32>
    %2 = vector.broadcast %1 : vector<1x128xf32> to vector<48x128xf32>
    %3 = arith.mulf %0, %2 : vector<48x128xf32>
    %c0_3 = arith.constant 0 : index
    %c0_4 = arith.constant 0 : index
    %4 = vector.load %arg5[%c0_3, %c0_4] : memref<1x128xf32, #tpu.memory_space<vmem>>, vector<1x128xf32>
    %5 = vector.broadcast %4 : vector<1x128xf32> to vector<48x128xf32>
    %6 = arith.addf %3, %5 : vector<48x128xf32>
    %cst = arith.constant 0.000000e+00 : f32
    %7 = vector.broadcast %cst : f32 to vector<48x128xf32>
    %8 = arith.maximumf %6, %7 : vector<48x128xf32>
    %c0_5 = arith.constant 0 : index
    %c0_6 = arith.constant 0 : index
    %9 = vector.load %arg2[%c0_5, %c0_6] : memref<48x1xf32, #tpu.memory_space<vmem>>, vector<48x1xf32>
    %10 = vector.broadcast %9 : vector<48x1xf32> to vector<48x128xf32>
    %11 = arith.mulf %8, %10 : vector<48x128xf32>
    %cst_7 = arith.constant 0.000000e+00 : f32
    %12 = vector.broadcast %cst_7 : f32 to vector<32x128xf32>
    %13 = vector.extract_strided_slice %11 {offsets = [0, 0], sizes = [32, 128], strides = [1, 1]} : vector<48x128xf32> to vector<32x128xf32>
    %14 = arith.truncf %13 : vector<32x128xf32> to vector<32x128xbf16>
    %c0_8 = arith.constant 0 : index
    %c0_9 = arith.constant 0 : index
    %c0_10 = arith.constant 0 : index
    %15 = vector.load %arg6[%c0_8, %c0_9, %c0_10] : memref<9x128x128xbf16, #tpu.memory_space<vmem>>, vector<1x128x128xbf16>
    %16 = vector.shape_cast %15 : vector<1x128x128xbf16> to vector<128x128xbf16>
    %cst_11 = arith.constant dense<0.000000e+00> : vector<32x128xf32>
    %17 = tpu.matmul %14, %16, %cst_11 {dimension_numbers = #tpu.dot_dimension_numbers<[1], [0], [0], [1], [0, 0, 1, 1], [], []>} : vector<32x128xbf16>, vector<128x128xbf16>, vector<32x128xf32> -> vector<32x128xf32>
    %18 = arith.addf %12, %17 : vector<32x128xf32>
    %c47_i32 = arith.constant 47 : i32
    %19 = tpu.dynamic_rotate %11 by %c47_i32 dim 0 : vector<48x128xf32>, i32 -> vector<48x128xf32>
    %20 = vector.extract_strided_slice %19 {offsets = [0, 0], sizes = [32, 128], strides = [1, 1]} : vector<48x128xf32> to vector<32x128xf32>
    %21 = arith.truncf %20 : vector<32x128xf32> to vector<32x128xbf16>
    %c1 = arith.constant 1 : index
    %c0_12 = arith.constant 0 : index
    %c0_13 = arith.constant 0 : index
    %22 = vector.load %arg6[%c1, %c0_12, %c0_13] : memref<9x128x128xbf16, #tpu.memory_space<vmem>>, vector<1x128x128xbf16>
    %23 = vector.shape_cast %22 : vector<1x128x128xbf16> to vector<128x128xbf16>
    %cst_14 = arith.constant dense<0.000000e+00> : vector<32x128xf32>
    %24 = tpu.matmul %21, %23, %cst_14 {dimension_numbers = #tpu.dot_dimension_numbers<[1], [0], [0], [1], [0, 0, 1, 1], [], []>} : vector<32x128xbf16>, vector<128x128xbf16>, vector<32x128xf32> -> vector<32x128xf32>
    %25 = arith.addf %18, %24 : vector<32x128xf32>
    %c46_i32 = arith.constant 46 : i32
    %26 = tpu.dynamic_rotate %11 by %c46_i32 dim 0 : vector<48x128xf32>, i32 -> vector<48x128xf32>
    %27 = vector.extract_strided_slice %26 {offsets = [0, 0], sizes = [32, 128], strides = [1, 1]} : vector<48x128xf32> to vector<32x128xf32>
    %28 = arith.truncf %27 : vector<32x128xf32> to vector<32x128xbf16>
    %c2 = arith.constant 2 : index
    %c0_15 = arith.constant 0 : index
    %c0_16 = arith.constant 0 : index
    %29 = vector.load %arg6[%c2, %c0_15, %c0_16] : memref<9x128x128xbf16, #tpu.memory_space<vmem>>, vector<1x128x128xbf16>
    %30 = vector.shape_cast %29 : vector<1x128x128xbf16> to vector<128x128xbf16>
    %cst_17 = arith.constant dense<0.000000e+00> : vector<32x128xf32>
    %31 = tpu.matmul %28, %30, %cst_17 {dimension_numbers = #tpu.dot_dimension_numbers<[1], [0], [0], [1], [0, 0, 1, 1], [], []>} : vector<32x128xbf16>, vector<128x128xbf16>, vector<32x128xf32> -> vector<32x128xf32>
    %32 = arith.addf %25, %31 : vector<32x128xf32>
    %c44_i32 = arith.constant 44 : i32
    %33 = tpu.dynamic_rotate %11 by %c44_i32 dim 0 : vector<48x128xf32>, i32 -> vector<48x128xf32>
    %34 = vector.extract_strided_slice %33 {offsets = [0, 0], sizes = [32, 128], strides = [1, 1]} : vector<48x128xf32> to vector<32x128xf32>
    %35 = arith.truncf %34 : vector<32x128xf32> to vector<32x128xbf16>
    %c3 = arith.constant 3 : index
    %c0_18 = arith.constant 0 : index
    %c0_19 = arith.constant 0 : index
    %36 = vector.load %arg6[%c3, %c0_18, %c0_19] : memref<9x128x128xbf16, #tpu.memory_space<vmem>>, vector<1x128x128xbf16>
    %37 = vector.shape_cast %36 : vector<1x128x128xbf16> to vector<128x128xbf16>
    %cst_20 = arith.constant dense<0.000000e+00> : vector<32x128xf32>
    %38 = tpu.matmul %35, %37, %cst_20 {dimension_numbers = #tpu.dot_dimension_numbers<[1], [0], [0], [1], [0, 0, 1, 1], [], []>} : vector<32x128xbf16>, vector<128x128xbf16>, vector<32x128xf32> -> vector<32x128xf32>
    %39 = arith.addf %32, %38 : vector<32x128xf32>
    %c43_i32 = arith.constant 43 : i32
    %40 = tpu.dynamic_rotate %11 by %c43_i32 dim 0 : vector<48x128xf32>, i32 -> vector<48x128xf32>
    %41 = vector.extract_strided_slice %40 {offsets = [0, 0], sizes = [32, 128], strides = [1, 1]} : vector<48x128xf32> to vector<32x128xf32>
    %42 = arith.truncf %41 : vector<32x128xf32> to vector<32x128xbf16>
    %c4 = arith.constant 4 : index
    %c0_21 = arith.constant 0 : index
    %c0_22 = arith.constant 0 : index
    %43 = vector.load %arg6[%c4, %c0_21, %c0_22] : memref<9x128x128xbf16, #tpu.memory_space<vmem>>, vector<1x128x128xbf16>
    %44 = vector.shape_cast %43 : vector<1x128x128xbf16> to vector<128x128xbf16>
    %cst_23 = arith.constant dense<0.000000e+00> : vector<32x128xf32>
    %45 = tpu.matmul %42, %44, %cst_23 {dimension_numbers = #tpu.dot_dimension_numbers<[1], [0], [0], [1], [0, 0, 1, 1], [], []>} : vector<32x128xbf16>, vector<128x128xbf16>, vector<32x128xf32> -> vector<32x128xf32>
    %46 = arith.addf %39, %45 : vector<32x128xf32>
    %c42_i32 = arith.constant 42 : i32
    %47 = tpu.dynamic_rotate %11 by %c42_i32 dim 0 : vector<48x128xf32>, i32 -> vector<48x128xf32>
    %48 = vector.extract_strided_slice %47 {offsets = [0, 0], sizes = [32, 128], strides = [1, 1]} : vector<48x128xf32> to vector<32x128xf32>
    %49 = arith.truncf %48 : vector<32x128xf32> to vector<32x128xbf16>
    %c5 = arith.constant 5 : index
    %c0_24 = arith.constant 0 : index
    %c0_25 = arith.constant 0 : index
    %50 = vector.load %arg6[%c5, %c0_24, %c0_25] : memref<9x128x128xbf16, #tpu.memory_space<vmem>>, vector<1x128x128xbf16>
    %51 = vector.shape_cast %50 : vector<1x128x128xbf16> to vector<128x128xbf16>
    %cst_26 = arith.constant dense<0.000000e+00> : vector<32x128xf32>
    %52 = tpu.matmul %49, %51, %cst_26 {dimension_numbers = #tpu.dot_dimension_numbers<[1], [0], [0], [1], [0, 0, 1, 1], [], []>} : vector<32x128xbf16>, vector<128x128xbf16>, vector<32x128xf32> -> vector<32x128xf32>
    %53 = arith.addf %46, %52 : vector<32x128xf32>
    %c40_i32 = arith.constant 40 : i32
    %54 = tpu.dynamic_rotate %11 by %c40_i32 dim 0 : vector<48x128xf32>, i32 -> vector<48x128xf32>
    %55 = vector.extract_strided_slice %54 {offsets = [0, 0], sizes = [32, 128], strides = [1, 1]} : vector<48x128xf32> to vector<32x128xf32>
    %56 = arith.truncf %55 : vector<32x128xf32> to vector<32x128xbf16>
    %c6 = arith.constant 6 : index
    %c0_27 = arith.constant 0 : index
    %c0_28 = arith.constant 0 : index
    %57 = vector.load %arg6[%c6, %c0_27, %c0_28] : memref<9x128x128xbf16, #tpu.memory_space<vmem>>, vector<1x128x128xbf16>
    %58 = vector.shape_cast %57 : vector<1x128x128xbf16> to vector<128x128xbf16>
    %cst_29 = arith.constant dense<0.000000e+00> : vector<32x128xf32>
    %59 = tpu.matmul %56, %58, %cst_29 {dimension_numbers = #tpu.dot_dimension_numbers<[1], [0], [0], [1], [0, 0, 1, 1], [], []>} : vector<32x128xbf16>, vector<128x128xbf16>, vector<32x128xf32> -> vector<32x128xf32>
    %60 = arith.addf %53, %59 : vector<32x128xf32>
    %c39_i32 = arith.constant 39 : i32
    %61 = tpu.dynamic_rotate %11 by %c39_i32 dim 0 : vector<48x128xf32>, i32 -> vector<48x128xf32>
    %62 = vector.extract_strided_slice %61 {offsets = [0, 0], sizes = [32, 128], strides = [1, 1]} : vector<48x128xf32> to vector<32x128xf32>
    %63 = arith.truncf %62 : vector<32x128xf32> to vector<32x128xbf16>
    %c7 = arith.constant 7 : index
    %c0_30 = arith.constant 0 : index
    %c0_31 = arith.constant 0 : index
    %64 = vector.load %arg6[%c7, %c0_30, %c0_31] : memref<9x128x128xbf16, #tpu.memory_space<vmem>>, vector<1x128x128xbf16>
    %65 = vector.shape_cast %64 : vector<1x128x128xbf16> to vector<128x128xbf16>
    %cst_32 = arith.constant dense<0.000000e+00> : vector<32x128xf32>
    %66 = tpu.matmul %63, %65, %cst_32 {dimension_numbers = #tpu.dot_dimension_numbers<[1], [0], [0], [1], [0, 0, 1, 1], [], []>} : vector<32x128xbf16>, vector<128x128xbf16>, vector<32x128xf32> -> vector<32x128xf32>
    %67 = arith.addf %60, %66 : vector<32x128xf32>
    %c38_i32 = arith.constant 38 : i32
    %68 = tpu.dynamic_rotate %11 by %c38_i32 dim 0 : vector<48x128xf32>, i32 -> vector<48x128xf32>
    %69 = vector.extract_strided_slice %68 {offsets = [0, 0], sizes = [32, 128], strides = [1, 1]} : vector<48x128xf32> to vector<32x128xf32>
    %70 = arith.truncf %69 : vector<32x128xf32> to vector<32x128xbf16>
    %c8 = arith.constant 8 : index
    %c0_33 = arith.constant 0 : index
    %c0_34 = arith.constant 0 : index
    %71 = vector.load %arg6[%c8, %c0_33, %c0_34] : memref<9x128x128xbf16, #tpu.memory_space<vmem>>, vector<1x128x128xbf16>
    %72 = vector.shape_cast %71 : vector<1x128x128xbf16> to vector<128x128xbf16>
    %cst_35 = arith.constant dense<0.000000e+00> : vector<32x128xf32>
    %73 = tpu.matmul %70, %72, %cst_35 {dimension_numbers = #tpu.dot_dimension_numbers<[1], [0], [0], [1], [0, 0, 1, 1], [], []>} : vector<32x128xbf16>, vector<128x128xbf16>, vector<32x128xf32> -> vector<32x128xf32>
    %74 = arith.addf %67, %73 : vector<32x128xf32>
    %c0_36 = arith.constant 0 : index
    %c0_37 = arith.constant 0 : index
    %75 = vector.load %arg7[%c0_36, %c0_37] : memref<32x128xf32, #tpu.memory_space<vmem>>, vector<32x128xf32>
    tpu.vector_store %arg7[%c0_36, %c0_37], %74 {strides = array<i32>} : memref<32x128xf32, #tpu.memory_space<vmem>>, vector<32x128xf32>,
    %c0_38 = arith.constant 0 : index
    %c0_39 = arith.constant 0 : index
    %76 = vector.load %arg3[%c0_38, %c0_39] : memref<32x1xf32, #tpu.memory_space<vmem>>, vector<32x1xf32>
    %77 = vector.broadcast %76 : vector<32x1xf32> to vector<32x128xf32>
    %78 = arith.mulf %74, %77 : vector<32x128xf32>
    %cst_40 = arith.constant dense<0.000000e+00> : vector<128xf32>
    %79 = vector.multi_reduction <add>, %78, %cst_40 [0] : vector<32x128xf32> to vector<128xf32>
    %80 = vector.shape_cast %79 : vector<128xf32> to vector<1x128xf32>
    %c0_41 = arith.constant 0 : index
    %c0_42 = arith.constant 0 : index
    %81 = vector.load %arg8[%c0_41, %c0_42] : memref<1x128xf32, #tpu.memory_space<vmem>>, vector<1x128xf32>
    tpu.vector_store %arg8[%c0_41, %c0_42], %80 {strides = array<i32>} : memref<1x128xf32, #tpu.memory_space<vmem>>, vector<1x128xf32>,
    %82 = arith.mulf %78, %78 : vector<32x128xf32>
    %cst_43 = arith.constant dense<0.000000e+00> : vector<128xf32>
    %83 = vector.multi_reduction <add>, %82, %cst_43 [0] : vector<32x128xf32> to vector<128xf32>
    %84 = vector.shape_cast %83 : vector<128xf32> to vector<1x128xf32>
    %c0_44 = arith.constant 0 : index
    %c0_45 = arith.constant 0 : index
    %85 = vector.load %arg9[%c0_44, %c0_45] : memref<1x128xf32, #tpu.memory_space<vmem>>, vector<1x128xf32>
    tpu.vector_store %arg9[%c0_44, %c0_45], %84 {strides = array<i32>} : memref<1x128xf32, #tpu.memory_space<vmem>>, vector<1x128xf32>,
    return
  }
  func.func @transform_0(%arg0: i32) -> (i32, i32) {
    %c0_i32 = arith.constant 0 : i32
    %c0_i32_0 = arith.constant 0 : i32
    %c0_i32_1 = arith.constant 0 : i32
    return %c0_i32, %c0_i32_0 : i32, i32
  }
  func.func @transform_1(%arg0: i32) -> (i32, i32) {
    %c0_i32 = arith.constant 0 : i32
    %c0_i32_0 = arith.constant 0 : i32
    %c0_i32_1 = arith.constant 0 : i32
    return %c0_i32, %c0_i32_0 : i32, i32
  }
  func.func @transform_2(%arg0: i32) -> (i32, i32) {
    %c0_i32 = arith.constant 0 : i32
    %c0_i32_0 = arith.constant 0 : i32
    %c0_i32_1 = arith.constant 0 : i32
    return %c0_i32, %c0_i32_0 : i32, i32
  }
  func.func @transform_3(%arg0: i32) -> (i32, i32) {
    %c0_i32 = arith.constant 0 : i32
    %c0_i32_0 = arith.constant 0 : i32
    %c0_i32_1 = arith.constant 0 : i32
    return %c0_i32, %c0_i32_0 : i32, i32
  }
  func.func @transform_4(%arg0: i32) -> (i32, i32) {
    %c0_i32 = arith.constant 0 : i32
    %c0_i32_0 = arith.constant 0 : i32
    %c0_i32_1 = arith.constant 0 : i32
    return %c0_i32, %c0_i32_0 : i32, i32
  }
  func.func @transform_5(%arg0: i32) -> (i32, i32, i32) {
    %c0_i32 = arith.constant 0 : i32
    %c0_i32_0 = arith.constant 0 : i32
    %c0_i32_1 = arith.constant 0 : i32
    %c0_i32_2 = arith.constant 0 : i32
    return %c0_i32, %c0_i32_0, %c0_i32_1 : i32, i32, i32
  }
  func.func @transform_6(%arg0: i32) -> (i32, i32) {
    %c0_i32 = arith.constant 0 : i32
    %c0_i32_0 = arith.constant 0 : i32
    %c0_i32_1 = arith.constant 0 : i32
    return %c0_i32, %c0_i32_0 : i32, i32
  }
  func.func @transform_7(%arg0: i32) -> (i32, i32) {
    %c0_i32 = arith.constant 0 : i32
    %c0_i32_0 = arith.constant 0 : i32
    %c0_i32_1 = arith.constant 0 : i32
    return %c0_i32, %c0_i32_0 : i32, i32
  }
  func.func @transform_8(%arg0: i32) -> (i32, i32) {
    %c0_i32 = arith.constant 0 : i32
    %c0_i32_0 = arith.constant 0 : i32
    %c0_i32_1 = arith.constant 0 : i32
    return %c0_i32, %c0_i32_0 : i32, i32
  }
}

module attributes {stable_mosaic.version = 11 : i64} {
  func.func @_head_kernel(%arg0: i32, %arg1: memref<8x128xf32, #tpu.memory_space<vmem>>, %arg2: memref<1x128xf32, #tpu.memory_space<vmem>>, %arg3: memref<1x128xf32, #tpu.memory_space<vmem>>, %arg4: memref<8x8xf32, #tpu.memory_space<vmem>>, %arg5: memref<128x128xbf16, #tpu.memory_space<vmem>>, %arg6: memref<1x128xf32, #tpu.memory_space<vmem>>, %arg7: memref<8x128xf32, #tpu.memory_space<vmem>>) attributes {dimension_semantics = [#tpu.dimension_semantics<arbitrary>], iteration_bounds = array<i64: 1>, scalar_prefetch = 0 : i64, scratch_operands = 0 : i64, tpu.core_type = #tpu.core_type<tc>, window_params = [{pipeline_mode = #tpu.pipeline_mode<synchronous>, transform_indices = @transform_0, window_bounds = array<i64: 8, 128>}, {pipeline_mode = #tpu.pipeline_mode<synchronous>, transform_indices = @transform_1, window_bounds = array<i64: 1, 128>}, {pipeline_mode = #tpu.pipeline_mode<synchronous>, transform_indices = @transform_2, window_bounds = array<i64: 1, 128>}, {pipeline_mode = #tpu.pipeline_mode<synchronous>, transform_indices = @transform_3, window_bounds = array<i64: 8, 8>}, {pipeline_mode = #tpu.pipeline_mode<synchronous>, transform_indices = @transform_4, window_bounds = array<i64: 128, 128>}, {pipeline_mode = #tpu.pipeline_mode<synchronous>, transform_indices = @transform_5, window_bounds = array<i64: 1, 128>}, {pipeline_mode = #tpu.pipeline_mode<synchronous>, transform_indices = @transform_6, window_bounds = array<i64: 8, 128>}]} {
    %c0 = arith.constant 0 : index
    %c0_0 = arith.constant 0 : index
    %0 = vector.load %arg1[%c0, %c0_0] : memref<8x128xf32, #tpu.memory_space<vmem>>, vector<8x128xf32>
    %c0_1 = arith.constant 0 : index
    %c0_2 = arith.constant 0 : index
    %1 = vector.load %arg2[%c0_1, %c0_2] : memref<1x128xf32, #tpu.memory_space<vmem>>, vector<1x128xf32>
    %2 = vector.broadcast %1 : vector<1x128xf32> to vector<8x128xf32>
    %3 = arith.mulf %0, %2 : vector<8x128xf32>
    %c0_3 = arith.constant 0 : index
    %c0_4 = arith.constant 0 : index
    %4 = vector.load %arg3[%c0_3, %c0_4] : memref<1x128xf32, #tpu.memory_space<vmem>>, vector<1x128xf32>
    %5 = vector.broadcast %4 : vector<1x128xf32> to vector<8x128xf32>
    %6 = arith.addf %3, %5 : vector<8x128xf32>
    %cst = arith.constant 0.000000e+00 : f32
    %7 = vector.broadcast %cst : f32 to vector<8x128xf32>
    %8 = arith.maximumf %6, %7 : vector<8x128xf32>
    %c0_5 = arith.constant 0 : index
    %c0_6 = arith.constant 0 : index
    %9 = vector.load %arg4[%c0_5, %c0_6] : memref<8x8xf32, #tpu.memory_space<vmem>>, vector<8x8xf32>
    %cst_7 = arith.constant dense<0.000000e+00> : vector<8x128xf32>
    %10 = tpu.matmul %9, %8, %cst_7 {dimension_numbers = #tpu.dot_dimension_numbers<[1], [0], [0], [1], [0, 0, 1, 1], [], []>} : vector<8x8xf32>, vector<8x128xf32>, vector<8x128xf32> -> vector<8x128xf32>
    %11 = arith.truncf %10 : vector<8x128xf32> to vector<8x128xbf16>
    %c0_8 = arith.constant 0 : index
    %c0_9 = arith.constant 0 : index
    %12 = vector.load %arg5[%c0_8, %c0_9] : memref<128x128xbf16, #tpu.memory_space<vmem>>, vector<128x128xbf16>
    %cst_10 = arith.constant dense<0.000000e+00> : vector<8x128xf32>
    %13 = tpu.matmul %11, %12, %cst_10 {dimension_numbers = #tpu.dot_dimension_numbers<[1], [0], [0], [1], [0, 0, 1, 1], [], []>} : vector<8x128xbf16>, vector<128x128xbf16>, vector<8x128xf32> -> vector<8x128xf32>
    %c0_11 = arith.constant 0 : index
    %c0_12 = arith.constant 0 : index
    %14 = vector.load %arg6[%c0_11, %c0_12] : memref<1x128xf32, #tpu.memory_space<vmem>>, vector<1x128xf32>
    %15 = vector.broadcast %14 : vector<1x128xf32> to vector<8x128xf32>
    %16 = arith.addf %13, %15 : vector<8x128xf32>
    %c0_13 = arith.constant 0 : index
    %c0_14 = arith.constant 0 : index
    %17 = vector.load %arg7[%c0_13, %c0_14] : memref<8x128xf32, #tpu.memory_space<vmem>>, vector<8x128xf32>
    tpu.vector_store %arg7[%c0_13, %c0_14], %16 {strides = array<i32>} : memref<8x128xf32, #tpu.memory_space<vmem>>, vector<8x128xf32>,
    return
  }
  func.func @transform_0(%arg0: i32) -> (i32, i32) {
    %c0_i32 = arith.constant 0 : i32
    %c0_i32_0 = arith.constant 0 : i32
    %c0_i32_1 = arith.constant 0 : i32
    return %c0_i32, %c0_i32_0 : i32, i32
  }
  func.func @transform_1(%arg0: i32) -> (i32, i32) {
    %c0_i32 = arith.constant 0 : i32
    %c0_i32_0 = arith.constant 0 : i32
    %c0_i32_1 = arith.constant 0 : i32
    return %c0_i32, %c0_i32_0 : i32, i32
  }
  func.func @transform_2(%arg0: i32) -> (i32, i32) {
    %c0_i32 = arith.constant 0 : i32
    %c0_i32_0 = arith.constant 0 : i32
    %c0_i32_1 = arith.constant 0 : i32
    return %c0_i32, %c0_i32_0 : i32, i32
  }
  func.func @transform_3(%arg0: i32) -> (i32, i32) {
    %c0_i32 = arith.constant 0 : i32
    %c0_i32_0 = arith.constant 0 : i32
    %c0_i32_1 = arith.constant 0 : i32
    return %c0_i32, %c0_i32_0 : i32, i32
  }
  func.func @transform_4(%arg0: i32) -> (i32, i32) {
    %c0_i32 = arith.constant 0 : i32
    %c0_i32_0 = arith.constant 0 : i32
    %c0_i32_1 = arith.constant 0 : i32
    return %c0_i32, %c0_i32_0 : i32, i32
  }
  func.func @transform_5(%arg0: i32) -> (i32, i32) {
    %c0_i32 = arith.constant 0 : i32
    %c0_i32_0 = arith.constant 0 : i32
    %c0_i32_1 = arith.constant 0 : i32
    return %c0_i32, %c0_i32_0 : i32, i32
  }
  func.func @transform_6(%arg0: i32) -> (i32, i32) {
    %c0_i32 = arith.constant 0 : i32
    %c0_i32_0 = arith.constant 0 : i32
    %c0_i32_1 = arith.constant 0 : i32
    return %c0_i32, %c0_i32_0 : i32, i32
  }
}

</mosaic_0001>

<llo_original>
// kernel: dndqn_forward.12
$region0: #{dndqn_forward.12}
  #allocation0 [shape = 'u32[]', space=smem, size = 0x4, offset = 0x4, fixed_abs, tag = 'smem constant byte address 0x4 - core index']
  #allocation1 [shape = 'u32[144,128]{1,0:T(1,128)}', space=vmem, size = 0x12000, scoped, tag = 'internal scratch']
  %s0 = inlined_call_operand.vmem [shape: f32[128,256], index: 0, kind: input, shape index: {}]
  %s1 = inlined_call_operand.vmem [shape: f32[1,256], index: 1, kind: input, shape index: {}]
  %s2 = inlined_call_operand.vmem [shape: f32[1,256], index: 2, kind: input, shape index: {}]
  %s3 = inlined_call_operand.vmem [shape: bf16[256,128], index: 3, kind: input, shape index: {}]
  %s4 = inlined_call_operand.vmem [shape: f32[128,128], index: 4, kind: output, shape index: {0}]
  %s5 = inlined_call_operand.vmem [shape: f32[1,128], index: 5, kind: output, shape index: {1}]
  %s6 = inlined_call_operand.vmem [shape: f32[1,128], index: 6, kind: output, shape index: {2}]
  %7 = xla_tuple %s4, %s5, %s6
  %s8 = sld [smem:[#allocation0]]
  $region50: #{dndqn_forward.12} parent=0
    _
  %s10 = ssub.s32 1, %s8
  %s11 = scalar_select 0, %s10, %s8
  // Predicated region
  $region2: #{dndqn_forward.12} parent=0 // pred_check
    _
  $region3: #{dndqn_forward.12} parent=0 // pred_check_branch
    %13 = sbr.rel (0) target = $region5
  $region4: #{dndqn_forward.12} parent=0 // pred_region
    _
  $region5: #{dndqn_forward.12} parent=0 // pred_fallthru
    _
  // Predicated region
  $region6: #{dndqn_forward.12} parent=0 // pred_check
    _
  $region7: #{dndqn_forward.12} parent=0 // pred_check_branch
    %15 = sbr.rel (0) target = $region9
  $region8: #{dndqn_forward.12} parent=0 // pred_region
    _
  $region9: #{dndqn_forward.12} parent=0 // pred_fallthru
    _
  // Predicated region
  $region10: #{dndqn_forward.12} parent=0 // pred_check
    _
  $region11: #{dndqn_forward.12} parent=0 // pred_check_branch
    %17 = sbr.rel (0) target = $region13
  $region12: #{dndqn_forward.12} parent=0 // pred_region
    _
  $region13: #{dndqn_forward.12} parent=0 // pred_fallthru
    _
  // Predicated region
  $region14: #{dndqn_forward.12} parent=0 // pred_check
    _
  $region15: #{dndqn_forward.12} parent=0 // pred_check_branch
    %19 = sbr.rel (0) target = $region17
  $region16: #{dndqn_forward.12} parent=0 // pred_region
    _
  $region17: #{dndqn_forward.12} parent=0 // pred_fallthru
    _
  %p21 = scmp.eq.s32.totalorder 0, 0
  // Predicated region
  $region18: #{dndqn_forward.12} parent=0 // pred_check
    %p22 = pneg %p21
  $region19: #{dndqn_forward.12} parent=0 // pred_check_branch
    %24 = sbr.rel (%p22) target = $region21
  $region20: #{dndqn_forward.12} parent=0 // pred_region
    %25 = vst [vmem:[%s4] sm:$0xff] 0.0
    %26 = vst [vmem:[%s4 + $0x8] sm:$0xff] 0.0
    %27 = vst [vmem:[%s4 + $0x10] sm:$0xff] 0.0
    %28 = vst [vmem:[%s4 + $0x18] sm:$0xff] 0.0
    %29 = vst [vmem:[%s4 + $0x20] sm:$0xff] 0.0
    %30 = vst [vmem:[%s4 + $0x28] sm:$0xff] 0.0
    %31 = vst [vmem:[%s4 + $0x30] sm:$0xff] 0.0
    %32 = vst [vmem:[%s4 + $0x38] sm:$0xff] 0.0
    %33 = vst [vmem:[%s4 + $0x40] sm:$0xff] 0.0
    %34 = vst [vmem:[%s4 + $0x48] sm:$0xff] 0.0
    %35 = vst [vmem:[%s4 + $0x50] sm:$0xff] 0.0
    %36 = vst [vmem:[%s4 + $0x58] sm:$0xff] 0.0
    %37 = vst [vmem:[%s4 + $0x60] sm:$0xff] 0.0
    %38 = vst [vmem:[%s4 + $0x68] sm:$0xff] 0.0
    %39 = vst [vmem:[%s4 + $0x70] sm:$0xff] 0.0
    %40 = vst [vmem:[%s4 + $0x78] sm:$0xff] 0.0
  $region21: #{dndqn_forward.12} parent=0 // pred_fallthru
    _
  %v41 = vld [vmem:[%s0] sm:$0xff]
  %v42 = vld [vmem:[%s0 + $0x8] sm:$0xff]
  %v43 = vld [vmem:[%s0 + $0x10] sm:$0xff]
  %v44 = vld [vmem:[%s0 + $0x18] sm:$0xff]
  %v45 = vld [vmem:[%s0 + $0x20] sm:$0xff]
  %v46 = vld [vmem:[%s0 + $0x28] sm:$0xff]
  %v47 = vld [vmem:[%s0 + $0x30] sm:$0xff]
  %v48 = vld [vmem:[%s0 + $0x38] sm:$0xff]
  %v49 = vld [vmem:[%s0 + $0x40] sm:$0xff]
  %v50 = vld [vmem:[%s0 + $0x48] sm:$0xff]
  %v51 = vld [vmem:[%s0 + $0x50] sm:$0xff]
  %v52 = vld [vmem:[%s0 + $0x58] sm:$0xff]
  %v53 = vld [vmem:[%s0 + $0x60] sm:$0xff]
  %v54 = vld [vmem:[%s0 + $0x68] sm:$0xff]
  %v55 = vld [vmem:[%s0 + $0x70] sm:$0xff]
  %v56 = vld [vmem:[%s0 + $0x78] sm:$0xff]
  %v57 = vld [vmem:[%s0 + $0x80] sm:$0xff]
  %v58 = vld [vmem:[%s0 + $0x88] sm:$0xff]
  %v59 = vld [vmem:[%s0 + $0x90] sm:$0xff]
  %v60 = vld [vmem:[%s0 + $0x98] sm:$0xff]
  %v61 = vld [vmem:[%s0 + $0xa0] sm:$0xff]
  %v62 = vld [vmem:[%s0 + $0xa8] sm:$0xff]
  %v63 = vld [vmem:[%s0 + $0xb0] sm:$0xff]
  %v64 = vld [vmem:[%s0 + $0xb8] sm:$0xff]
  %v65 = vld [vmem:[%s0 + $0xc0] sm:$0xff]
  %v66 = vld [vmem:[%s0 + $0xc8] sm:$0xff]
  %v67 = vld [vmem:[%s0 + $0xd0] sm:$0xff]
  %v68 = vld [vmem:[%s0 + $0xd8] sm:$0xff]
  %v69 = vld [vmem:[%s0 + $0xe0] sm:$0xff]
  %v70 = vld [vmem:[%s0 + $0xe8] sm:$0xff]
  %v71 = vld [vmem:[%s0 + $0xf0] sm:$0xff]
  %v72 = vld [vmem:[%s0 + $0xf8] sm:$0xff]
  %v73 = vld [vmem:[%s1] sm:$0x3]
  %v75 = vlaneseq
  %v76 = vshrl.u32 %v75, 7
  %v77 = vsub.s32 0, %v76
  %v78 = vrot.slane %v73, %v77
  %v79 = vlaneseq
  %v80 = vshrl.u32 %v79, 7
  %v81 = vsub.s32 1, %v80
  %v82 = vrot.slane %v73, %v81
  %v85 = vmul.f32 %v41, %v78
  %v86 = vmul.f32 %v42, %v82
  %v87 = vmul.f32 %v43, %v78
  %v88 = vmul.f32 %v44, %v82
  %v89 = vmul.f32 %v45, %v78
  %v90 = vmul.f32 %v46, %v82
  %v91 = vmul.f32 %v47, %v78
  %v92 = vmul.f32 %v48, %v82
  %v93 = vmul.f32 %v49, %v78
  %v94 = vmul.f32 %v50, %v82
  %v95 = vmul.f32 %v51, %v78
  %v96 = vmul.f32 %v52, %v82
  %v97 = vmul.f32 %v53, %v78
  %v98 = vmul.f32 %v54, %v82
  %v99 = vmul.f32 %v55, %v78
  %v100 = vmul.f32 %v56, %v82
  %v101 = vmul.f32 %v57, %v78
  %v102 = vmul.f32 %v58, %v82
  %v103 = vmul.f32 %v59, %v78
  %v104 = vmul.f32 %v60, %v82
  %v105 = vmul.f32 %v61, %v78
  %v106 = vmul.f32 %v62, %v82
  %v107 = vmul.f32 %v63, %v78
  %v108 = vmul.f32 %v64, %v82
  %v109 = vmul.f32 %v65, %v78
  %v110 = vmul.f32 %v66, %v82
  %v111 = vmul.f32 %v67, %v78
  %v112 = vmul.f32 %v68, %v82
  %v113 = vmul.f32 %v69, %v78
  %v114 = vmul.f32 %v70, %v82
  %v115 = vmul.f32 %v71, %v78
  %v116 = vmul.f32 %v72, %v82
  %v117 = vld [vmem:[%s2] sm:$0x3]
  %v119 = vlaneseq
  %v120 = vshrl.u32 %v119, 7
  %v121 = vsub.s32 0, %v120
  %v122 = vrot.slane %v117, %v121
  %v123 = vlaneseq
  %v124 = vshrl.u32 %v123, 7
  %v125 = vsub.s32 1, %v124
  %v126 = vrot.slane %v117, %v125
  %v129 = vadd.f32 %v85, %v122
  %v130 = vadd.f32 %v86, %v126
  %v131 = vadd.f32 %v87, %v122
  %v132 = vadd.f32 %v88, %v126
  %v133 = vadd.f32 %v89, %v122
  %v134 = vadd.f32 %v90, %v126
  %v135 = vadd.f32 %v91, %v122
  %v136 = vadd.f32 %v92, %v126
  %v137 = vadd.f32 %v93, %v122
  %v138 = vadd.f32 %v94, %v126
  %v139 = vadd.f32 %v95, %v122
  %v140 = vadd.f32 %v96, %v126
  %v141 = vadd.f32 %v97, %v122
  %v142 = vadd.f32 %v98, %v126
  %v143 = vadd.f32 %v99, %v122
  %v144 = vadd.f32 %v100, %v126
  %v145 = vadd.f32 %v101, %v122
  %v146 = vadd.f32 %v102, %v126
  %v147 = vadd.f32 %v103, %v122
  %v148 = vadd.f32 %v104, %v126
  %v149 = vadd.f32 %v105, %v122
  %v150 = vadd.f32 %v106, %v126
  %v151 = vadd.f32 %v107, %v122
  %v152 = vadd.f32 %v108, %v126
  %v153 = vadd.f32 %v109, %v122
  %v154 = vadd.f32 %v110, %v126
  %v155 = vadd.f32 %v111, %v122
  %v156 = vadd.f32 %v112, %v126
  %v157 = vadd.f32 %v113, %v122
  %v158 = vadd.f32 %v114, %v126
  %v159 = vadd.f32 %v115, %v122
  %v160 = vadd.f32 %v116, %v126
  %v161 = vld [vmem:[%s4] sm:$0xff]
  %v162 = vld [vmem:[%s4 + $0x8] sm:$0xff]
  %v163 = vld [vmem:[%s4 + $0x10] sm:$0xff]
  %v164 = vld [vmem:[%s4 + $0x18] sm:$0xff]
  %v165 = vld [vmem:[%s4 + $0x20] sm:$0xff]
  %v166 = vld [vmem:[%s4 + $0x28] sm:$0xff]
  %v167 = vld [vmem:[%s4 + $0x30] sm:$0xff]
  %v168 = vld [vmem:[%s4 + $0x38] sm:$0xff]
  %v169 = vld [vmem:[%s4 + $0x40] sm:$0xff]
  %v170 = vld [vmem:[%s4 + $0x48] sm:$0xff]
  %v171 = vld [vmem:[%s4 + $0x50] sm:$0xff]
  %v172 = vld [vmem:[%s4 + $0x58] sm:$0xff]
  %v173 = vld [vmem:[%s4 + $0x60] sm:$0xff]
  %v174 = vld [vmem:[%s4 + $0x68] sm:$0xff]
  %v175 = vld [vmem:[%s4 + $0x70] sm:$0xff]
  %v176 = vld [vmem:[%s4 + $0x78] sm:$0xff]
  %v177 = vpack.c.bf16 %v131, %v129
  %v178 = vpack.c.bf16 %v132, %v130
  %v179 = vpack.c.bf16 %v135, %v133
  %v180 = vpack.c.bf16 %v136, %v134
  %v181 = vpack.c.bf16 %v139, %v137
  %v182 = vpack.c.bf16 %v140, %v138
  %v183 = vpack.c.bf16 %v143, %v141
  %v184 = vpack.c.bf16 %v144, %v142
  %v185 = vpack.c.bf16 %v147, %v145
  %v186 = vpack.c.bf16 %v148, %v146
  %v187 = vpack.c.bf16 %v151, %v149
  %v188 = vpack.c.bf16 %v152, %v150
  %v189 = vpack.c.bf16 %v155, %v153
  %v190 = vpack.c.bf16 %v156, %v154
  %v191 = vpack.c.bf16 %v159, %v157
  %v192 = vpack.c.bf16 %v160, %v158
  %v193 = vld [vmem:[%s3] sm:$0xf]
  %v194 = vld [vmem:[%s3 + $0x4] sm:$0xf]
  %v195 = vld [vmem:[%s3 + $0x8] sm:$0xf]
  %v196 = vld [vmem:[%s3 + $0xc] sm:$0xf]
  %v197 = vld [vmem:[%s3 + $0x10] sm:$0xf]
  %v198 = vld [vmem:[%s3 + $0x14] sm:$0xf]
  %v199 = vld [vmem:[%s3 + $0x18] sm:$0xf]
  %v200 = vld [vmem:[%s3 + $0x1c] sm:$0xf]
  %v201 = vld [vmem:[%s3 + $0x20] sm:$0xf]
  %v202 = vld [vmem:[%s3 + $0x24] sm:$0xf]
  %v203 = vld [vmem:[%s3 + $0x28] sm:$0xf]
  %v204 = vld [vmem:[%s3 + $0x2c] sm:$0xf]
  %v205 = vld [vmem:[%s3 + $0x30] sm:$0xf]
  %v206 = vld [vmem:[%s3 + $0x34] sm:$0xf]
  %v207 = vld [vmem:[%s3 + $0x38] sm:$0xf]
  %v208 = vld [vmem:[%s3 + $0x3c] sm:$0xf]
  %v209 = vld [vmem:[%s3 + $0x40] sm:$0xf]
  %v210 = vld [vmem:[%s3 + $0x44] sm:$0xf]
  %v211 = vld [vmem:[%s3 + $0x48] sm:$0xf]
  %v212 = vld [vmem:[%s3 + $0x4c] sm:$0xf]
  %v213 = vld [vmem:[%s3 + $0x50] sm:$0xf]
  %v214 = vld [vmem:[%s3 + $0x54] sm:$0xf]
  %v215 = vld [vmem:[%s3 + $0x58] sm:$0xf]
  %v216 = vld [vmem:[%s3 + $0x5c] sm:$0xf]
  %v217 = vld [vmem:[%s3 + $0x60] sm:$0xf]
  %v218 = vld [vmem:[%s3 + $0x64] sm:$0xf]
  %v219 = vld [vmem:[%s3 + $0x68] sm:$0xf]
  %v220 = vld [vmem:[%s3 + $0x6c] sm:$0xf]
  %v221 = vld [vmem:[%s3 + $0x70] sm:$0xf]
  %v222 = vld [vmem:[%s3 + $0x74] sm:$0xf]
  %v223 = vld [vmem:[%s3 + $0x78] sm:$0xf]
  %v224 = vld [vmem:[%s3 + $0x7c] sm:$0xf]
  %v257 = vunpack.c.l.b16 %v193
  %v258 = vunpack.c.l.b16 %v194
  %v259 = vunpack.c.l.b16 %v195
  %v260 = vunpack.c.l.b16 %v196
  %v261 = vunpack.c.l.b16 %v197
  %v262 = vunpack.c.l.b16 %v198
  %v263 = vunpack.c.l.b16 %v199
  %v264 = vunpack.c.l.b16 %v200
  %v265 = vunpack.c.l.b16 %v201
  %v266 = vunpack.c.l.b16 %v202
  %v267 = vunpack.c.l.b16 %v203
  %v268 = vunpack.c.l.b16 %v204
  %v269 = vunpack.c.l.b16 %v205
  %v270 = vunpack.c.l.b16 %v206
  %v271 = vunpack.c.l.b16 %v207
  %v272 = vunpack.c.l.b16 %v208
  %v273 = vunpack.c.l.b16 %v209
  %v274 = vunpack.c.l.b16 %v210
  %v275 = vunpack.c.l.b16 %v211
  %v276 = vunpack.c.l.b16 %v212
  %v277 = vunpack.c.l.b16 %v213
  %v278 = vunpack.c.l.b16 %v214
  %v279 = vunpack.c.l.b16 %v215
  %v280 = vunpack.c.l.b16 %v216
  %v281 = vunpack.c.l.b16 %v217
  %v282 = vunpack.c.l.b16 %v218
  %v283 = vunpack.c.l.b16 %v219
  %v284 = vunpack.c.l.b16 %v220
  %v285 = vunpack.c.l.b16 %v221
  %v286 = vunpack.c.l.b16 %v222
  %v287 = vunpack.c.l.b16 %v223
  %v288 = vunpack.c.l.b16 %v224
  %v289 = vpack.c.b16 %v258, %v257
  %v290 = vpack.c.b16 %v260, %v259
  %v291 = vpack.c.b16 %v262, %v261
  %v292 = vpack.c.b16 %v264, %v263
  %v293 = vpack.c.b16 %v266, %v265
  %v294 = vpack.c.b16 %v268, %v267
  %v295 = vpack.c.b16 %v270, %v269
  %v296 = vpack.c.b16 %v272, %v271
  %v297 = vpack.c.b16 %v274, %v273
  %v298 = vpack.c.b16 %v276, %v275
  %v299 = vpack.c.b16 %v278, %v277
  %v300 = vpack.c.b16 %v280, %v279
  %v301 = vpack.c.b16 %v282, %v281
  %v302 = vpack.c.b16 %v284, %v283
  %v303 = vpack.c.b16 %v286, %v285
  %v304 = vpack.c.b16 %v288, %v287
  %321 = vmatprep.subr.bf16.mxu0 0
  %322 = vmatpush1.bf16.msra.mxu0 %v296
  %323 = vmatprep.subr.bf16.mxu0 0
  %324 = vmatpush1.bf16.msra.mxu0 %v295
  %325 = vmatprep.subr.bf16.mxu0 0
  %326 = vmatpush1.bf16.msra.mxu0 %v294
  %327 = vmatprep.subr.bf16.mxu0 0
  %328 = vmatpush1.bf16.msra.mxu0 %v293
  %329 = vmatprep.subr.bf16.mxu0 0
  %330 = vmatpush1.bf16.msra.mxu0 %v292
  %331 = vmatprep.subr.bf16.mxu0 0
  %332 = vmatpush1.bf16.msra.mxu0 %v291
  %333 = vmatprep.subr.bf16.mxu0 0
  %334 = vmatpush1.bf16.msra.mxu0 %v290
  %335 = vmatprep.subr.bf16.mxu0 0
  %336 = vmatpush1.bf16.msra.mxu0 %v289
  %337 = vmatprep.subr.bf16.mxu0 0
  %338 = vmatpush2.bf16.msra.mxu0 %v304
  %339 = vmatprep.subr.bf16.mxu0 0
  %340 = vmatpush2.bf16.msra.mxu0 %v303
  %341 = vmatprep.subr.bf16.mxu0 0
  %342 = vmatpush2.bf16.msra.mxu0 %v302
  %343 = vmatprep.subr.bf16.mxu0 0
  %344 = vmatpush2.bf16.msra.mxu0 %v301
  %345 = vmatprep.subr.bf16.mxu0 0
  %346 = vmatpush2.bf16.msra.mxu0 %v300
  %347 = vmatprep.subr.bf16.mxu0 0
  %348 = vmatpush2.bf16.msra.mxu0 %v299
  %349 = vmatprep.subr.bf16.mxu0 0
  %350 = vmatpush2.bf16.msra.mxu0 %v298
  %351 = vmatprep.subr.bf16.mxu0 0
  %352 = vmatpush2.bf16.msra.mxu0 %v297
  %353 = vmatprep.mubr.bf16.mxu0 %v178
  %354 = vmatmul.mubr.bf16.gmra.mxu0 %v177
  %v355 = vpop.f32.mrf.mxu0
  %v356 = vadd.f32 0.0, %v355
  %v357 = vpop.f32.mrf.mxu0
  %v358 = vpop.f32.mrf.mxu0
  %v359 = vadd.f32 0.0, %v358
  %v360 = vpop.f32.mrf.mxu0
  %361 = vmatprep.mubr.bf16.mxu0 %v180
  %362 = vmatmul.mubr.bf16.gmra.mxu0 %v179
  %v363 = vpop.f32.mrf.mxu0
  %v364 = vadd.f32 0.0, %v363
  %v365 = vpop.f32.mrf.mxu0
  %v366 = vpop.f32.mrf.mxu0
  %v367 = vadd.f32 0.0, %v366
  %v368 = vpop.f32.mrf.mxu0
  %369 = vmatprep.mubr.bf16.mxu0 %v182
  %370 = vmatmul.mubr.bf16.gmra.mxu0 %v181
  %v371 = vpop.f32.mrf.mxu0
  %v372 = vadd.f32 0.0, %v371
  %v373 = vpop.f32.mrf.mxu0
  %v374 = vpop.f32.mrf.mxu0
  %v375 = vadd.f32 0.0, %v374
  %v376 = vpop.f32.mrf.mxu0
  %377 = vmatprep.mubr.bf16.mxu0 %v184
  %378 = vmatmul.mubr.bf16.gmra.mxu0 %v183
  %v379 = vpop.f32.mrf.mxu0
  %v380 = vadd.f32 0.0, %v379
  %v381 = vpop.f32.mrf.mxu0
  %v382 = vpop.f32.mrf.mxu0
  %v383 = vadd.f32 0.0, %v382
  %v384 = vpop.f32.mrf.mxu0
  %385 = vmatprep.mubr.bf16.mxu0 %v186
  %386 = vmatmul.mubr.bf16.gmra.mxu0 %v185
  %v387 = vpop.f32.mrf.mxu0
  %v388 = vadd.f32 0.0, %v387
  %v389 = vpop.f32.mrf.mxu0
  %v390 = vpop.f32.mrf.mxu0
  %v391 = vadd.f32 0.0, %v390
  %v392 = vpop.f32.mrf.mxu0
  %393 = vmatprep.mubr.bf16.mxu0 %v188
  %394 = vmatmul.mubr.bf16.gmra.mxu0 %v187
  %v395 = vpop.f32.mrf.mxu0
  %v396 = vadd.f32 0.0, %v395
  %v397 = vpop.f32.mrf.mxu0
  %v398 = vpop.f32.mrf.mxu0
  %v399 = vadd.f32 0.0, %v398
  %v400 = vpop.f32.mrf.mxu0
  %401 = vmatprep.mubr.bf16.mxu0 %v190
  %402 = vmatmul.mubr.bf16.gmra.mxu0 %v189
  %v403 = vpop.f32.mrf.mxu0
  %v404 = vadd.f32 0.0, %v403
  %v405 = vpop.f32.mrf.mxu0
  %v406 = vpop.f32.mrf.mxu0
  %v407 = vadd.f32 0.0, %v406
  %v408 = vpop.f32.mrf.mxu0
  %409 = vmatprep.mubr.bf16.mxu0 %v192
  %410 = vmatmul.mubr.bf16.gmra.mxu0 %v191
  %v411 = vpop.f32.mrf.mxu0
  %v412 = vadd.f32 0.0, %v411
  %v413 = vpop.f32.mrf.mxu0
  %v414 = vpop.f32.mrf.mxu0
  %v415 = vadd.f32 0.0, %v414
  %v416 = vpop.f32.mrf.mxu0
  %417 = vdwg.mxu0
  %v418 = vadd.f32 %v161, %v356
  %v419 = vadd.f32 %v162, %v359
  %v420 = vadd.f32 %v163, %v364
  %v421 = vadd.f32 %v164, %v367
  %v422 = vadd.f32 %v165, %v372
  %v423 = vadd.f32 %v166, %v375
  %v424 = vadd.f32 %v167, %v380
  %v425 = vadd.f32 %v168, %v383
  %v426 = vadd.f32 %v169, %v388
  %v427 = vadd.f32 %v170, %v391
  %v428 = vadd.f32 %v171, %v396
  %v429 = vadd.f32 %v172, %v399
  %v430 = vadd.f32 %v173, %v404
  %v431 = vadd.f32 %v174, %v407
  %v432 = vadd.f32 %v175, %v412
  %v433 = vadd.f32 %v176, %v415
  %434 = vst [vmem:[%s4] sm:$0xff] %v418
  %435 = vst [vmem:[%s4 + $0x8] sm:$0xff] %v419
  %436 = vst [vmem:[%s4 + $0x10] sm:$0xff] %v420
  %437 = vst [vmem:[%s4 + $0x18] sm:$0xff] %v421
  %438 = vst [vmem:[%s4 + $0x20] sm:$0xff] %v422
  %439 = vst [vmem:[%s4 + $0x28] sm:$0xff] %v423
  %440 = vst [vmem:[%s4 + $0x30] sm:$0xff] %v424
  %441 = vst [vmem:[%s4 + $0x38] sm:$0xff] %v425
  %442 = vst [vmem:[%s4 + $0x40] sm:$0xff] %v426
  %443 = vst [vmem:[%s4 + $0x48] sm:$0xff] %v427
  %444 = vst [vmem:[%s4 + $0x50] sm:$0xff] %v428
  %445 = vst [vmem:[%s4 + $0x58] sm:$0xff] %v429
  %446 = vst [vmem:[%s4 + $0x60] sm:$0xff] %v430
  %447 = vst [vmem:[%s4 + $0x68] sm:$0xff] %v431
  %448 = vst [vmem:[%s4 + $0x70] sm:$0xff] %v432
  %449 = vst [vmem:[%s4 + $0x78] sm:$0xff] %v433
  // Predicated region
  $region22: #{dndqn_forward.12} parent=0 // pred_check
    %p450 = pneg %p21
  $region23: #{dndqn_forward.12} parent=0 // pred_check_branch
    %452 = sbr.rel (%p450) target = $region25
  $region24: #{dndqn_forward.12} parent=0 // pred_region
    %v453 = vld [vmem:[%s4] sm:$0xff]
    %v454 = vld [vmem:[%s4 + $0x8] sm:$0xff]
    %v455 = vld [vmem:[%s4 + $0x10] sm:$0xff]
    %v456 = vld [vmem:[%s4 + $0x18] sm:$0xff]
    %v457 = vld [vmem:[%s4 + $0x20] sm:$0xff]
    %v458 = vld [vmem:[%s4 + $0x28] sm:$0xff]
    %v459 = vld [vmem:[%s4 + $0x30] sm:$0xff]
    %v460 = vld [vmem:[%s4 + $0x38] sm:$0xff]
    %v461 = vld [vmem:[%s4 + $0x40] sm:$0xff]
    %v462 = vld [vmem:[%s4 + $0x48] sm:$0xff]
    %v463 = vld [vmem:[%s4 + $0x50] sm:$0xff]
    %v464 = vld [vmem:[%s4 + $0x58] sm:$0xff]
    %v465 = vld [vmem:[%s4 + $0x60] sm:$0xff]
    %v466 = vld [vmem:[%s4 + $0x68] sm:$0xff]
    %v467 = vld [vmem:[%s4 + $0x70] sm:$0xff]
    %v468 = vld [vmem:[%s4 + $0x78] sm:$0xff]
    %v469 = vadd.f32 %v453, %v454
    %v470 = vadd.f32 %v469, %v455
    %v471 = vadd.f32 %v470, %v456
    %v472 = vadd.f32 %v471, %v457
    %v473 = vadd.f32 %v472, %v458
    %v474 = vadd.f32 %v473, %v459
    %v475 = vadd.f32 %v474, %v460
    %v476 = vadd.f32 %v475, %v461
    %v477 = vadd.f32 %v476, %v462
    %v478 = vadd.f32 %v477, %v463
    %v479 = vadd.f32 %v478, %v464
    %v480 = vadd.f32 %v479, %v465
    %v481 = vadd.f32 %v480, %v466
    %v482 = vadd.f32 %v481, %v467
    %v483 = vadd.f32 %v482, %v468
    %v484 = vrot.slane %v483, 4
    %v485 = vadd.f32 %v483, %v484
    %v486 = vrot.slane %v485, 2
    %v487 = vadd.f32 %v485, %v486
    %v488 = vrot.slane %v487, 1
    %v489 = vadd.f32 %v487, %v488
    %490 = vst [vmem:[%s5] sm:$0x1] %v489
    %v491 = vmul.f32 %v453, %v453
    %v492 = vmul.f32 %v454, %v454
    %v493 = vmul.f32 %v455, %v455
    %v494 = vmul.f32 %v456, %v456
    %v495 = vmul.f32 %v457, %v457
    %v496 = vmul.f32 %v458, %v458
    %v497 = vmul.f32 %v459, %v459
    %v498 = vmul.f32 %v460, %v460
    %v499 = vmul.f32 %v461, %v461
    %v500 = vmul.f32 %v462, %v462
    %v501 = vmul.f32 %v463, %v463
    %v502 = vmul.f32 %v464, %v464
    %v503 = vmul.f32 %v465, %v465
    %v504 = vmul.f32 %v466, %v466
    %v505 = vmul.f32 %v467, %v467
    %v506 = vmul.f32 %v468, %v468
    %v507 = vadd.f32 %v491, %v492
    %v508 = vadd.f32 %v507, %v493
    %v509 = vadd.f32 %v508, %v494
    %v510 = vadd.f32 %v509, %v495
    %v511 = vadd.f32 %v510, %v496
    %v512 = vadd.f32 %v511, %v497
    %v513 = vadd.f32 %v512, %v498
    %v514 = vadd.f32 %v513, %v499
    %v515 = vadd.f32 %v514, %v500
    %v516 = vadd.f32 %v515, %v501
    %v517 = vadd.f32 %v516, %v502
    %v518 = vadd.f32 %v517, %v503
    %v519 = vadd.f32 %v518, %v504
    %v520 = vadd.f32 %v519, %v505
    %v521 = vadd.f32 %v520, %v506
    %v522 = vrot.slane %v521, 4
    %v523 = vadd.f32 %v521, %v522
    %v524 = vrot.slane %v523, 2
    %v525 = vadd.f32 %v523, %v524
    %v526 = vrot.slane %v525, 1
    %v527 = vadd.f32 %v525, %v526
    %528 = vst [vmem:[%s6] sm:$0x1] %v527
  $region25: #{dndqn_forward.12} parent=0 // pred_fallthru
    _
  // Predicated region
  $region26: #{dndqn_forward.12} parent=0 // pred_check
    _
  $region27: #{dndqn_forward.12} parent=0 // pred_check_branch
    %530 = sbr.rel (0) target = $region29
  $region28: #{dndqn_forward.12} parent=0 // pred_region
    _
  $region29: #{dndqn_forward.12} parent=0 // pred_fallthru
    _
  // Predicated region
  $region30: #{dndqn_forward.12} parent=0 // pred_check
    _
  $region31: #{dndqn_forward.12} parent=0 // pred_check_branch
    %532 = sbr.rel (0) target = $region33
  $region32: #{dndqn_forward.12} parent=0 // pred_region
    _
  $region33: #{dndqn_forward.12} parent=0 // pred_fallthru
    _
  // Predicated region
  $region34: #{dndqn_forward.12} parent=0 // pred_check
    _
  $region35: #{dndqn_forward.12} parent=0 // pred_check_branch
    %534 = sbr.rel (0) target = $region37
  $region36: #{dndqn_forward.12} parent=0 // pred_region
    _
  $region37: #{dndqn_forward.12} parent=0 // pred_fallthru
    _
  // Predicated region
  $region38: #{dndqn_forward.12} parent=0 // pred_check
    _
  $region39: #{dndqn_forward.12} parent=0 // pred_check_branch
    %536 = sbr.rel (0) target = $region41
  $region40: #{dndqn_forward.12} parent=0 // pred_region
    _
  $region41: #{dndqn_forward.12} parent=0 // pred_fallthru
    _
  // Predicated region
  $region42: #{dndqn_forward.12} parent=0 // pred_check
    _
  $region43: #{dndqn_forward.12} parent=0 // pred_check_branch
    %538 = sbr.rel (0) target = $region45
  $region44: #{dndqn_forward.12} parent=0 // pred_region
    _
  $region45: #{dndqn_forward.12} parent=0 // pred_fallthru
    _
  // Predicated region
  $region46: #{dndqn_forward.12} parent=0 // pred_check
    _
  $region47: #{dndqn_forward.12} parent=0 // pred_check_branch
    %540 = sbr.rel (0) target = $region49
  $region48: #{dndqn_forward.12} parent=0 // pred_region
    _
  $region49: #{dndqn_forward.12} parent=0 // pred_fallthru
    _

// kernel: dndqn_forward.13
$region0: #{dndqn_forward.13}
  #allocation0 [shape = 'u32[]', space=smem, size = 0x4, offset = 0x4, fixed_abs, tag = 'smem constant byte address 0x4 - core index']
  #allocation1 [shape = 'u32[144,128]{1,0:T(1,128)}', space=vmem, size = 0x12000, scoped, tag = 'internal scratch']
  %s0 = inlined_call_operand.vmem [shape: f32[224,128], index: 0, kind: input, shape index: {}]
  %s1 = inlined_call_operand.vmem [shape: f32[224,1], index: 1, kind: input, shape index: {}]
  %s2 = inlined_call_operand.vmem [shape: f32[200,1], index: 2, kind: input, shape index: {}]
  %s3 = inlined_call_operand.vmem [shape: f32[1,128], index: 3, kind: input, shape index: {}]
  %s4 = inlined_call_operand.vmem [shape: f32[1,128], index: 4, kind: input, shape index: {}]
  %s5 = inlined_call_operand.vmem [shape: f32[200,128], index: 5, kind: output, shape index: {0}]
  %s6 = inlined_call_operand.vmem [shape: f32[1,128], index: 6, kind: output, shape index: {1}]
  %s7 = inlined_call_operand.vmem [shape: f32[1,128], index: 7, kind: output, shape index: {2}]
  %8 = xla_tuple %s5, %s6, %s7
  %s9 = sld [smem:[#allocation0]]
  $region46: #{dndqn_forward.13} parent=0
    _
  %s11 = ssub.s32 1, %s9
  %s12 = scalar_select 0, %s11, %s9
  // Predicated region
  $region2: #{dndqn_forward.13} parent=0 // pred_check
    _
  $region3: #{dndqn_forward.13} parent=0 // pred_check_branch
    %14 = sbr.rel (0) target = $region5
  $region4: #{dndqn_forward.13} parent=0 // pred_region
    _
  $region5: #{dndqn_forward.13} parent=0 // pred_fallthru
    _
  // Predicated region
  $region6: #{dndqn_forward.13} parent=0 // pred_check
    _
  $region7: #{dndqn_forward.13} parent=0 // pred_check_branch
    %16 = sbr.rel (0) target = $region9
  $region8: #{dndqn_forward.13} parent=0 // pred_region
    _
  $region9: #{dndqn_forward.13} parent=0 // pred_fallthru
    _
  // Predicated region
  $region10: #{dndqn_forward.13} parent=0 // pred_check
    _
  $region11: #{dndqn_forward.13} parent=0 // pred_check_branch
    %18 = sbr.rel (0) target = $region13
  $region12: #{dndqn_forward.13} parent=0 // pred_region
    _
  $region13: #{dndqn_forward.13} parent=0 // pred_fallthru
    _
  // Predicated region
  $region14: #{dndqn_forward.13} parent=0 // pred_check
    _
  $region15: #{dndqn_forward.13} parent=0 // pred_check_branch
    %20 = sbr.rel (0) target = $region17
  $region16: #{dndqn_forward.13} parent=0 // pred_region
    _
  $region17: #{dndqn_forward.13} parent=0 // pred_fallthru
    _
  // Predicated region
  $region18: #{dndqn_forward.13} parent=0 // pred_check
    _
  $region19: #{dndqn_forward.13} parent=0 // pred_check_branch
    %22 = sbr.rel (0) target = $region21
  $region20: #{dndqn_forward.13} parent=0 // pred_region
    _
  $region21: #{dndqn_forward.13} parent=0 // pred_fallthru
    _
  %v23 = vld [vmem:[%s0] sm:$0xff]
  %v24 = vld [vmem:[%s0 + $0x8] sm:$0xff]
  %v25 = vld [vmem:[%s0 + $0x10] sm:$0xff]
  %v26 = vld [vmem:[%s0 + $0x18] sm:$0xff]
  %v27 = vld [vmem:[%s0 + $0x20] sm:$0xff]
  %v28 = vld [vmem:[%s0 + $0x28] sm:$0xff]
  %v29 = vld [vmem:[%s0 + $0x30] sm:$0xff]
  %v30 = vld [vmem:[%s0 + $0x38] sm:$0xff]
  %v31 = vld [vmem:[%s0 + $0x40] sm:$0xff]
  %v32 = vld [vmem:[%s0 + $0x48] sm:$0xff]
  %v33 = vld [vmem:[%s0 + $0x50] sm:$0xff]
  %v34 = vld [vmem:[%s0 + $0x58] sm:$0xff]
  %v35 = vld [vmem:[%s0 + $0x60] sm:$0xff]
  %v36 = vld [vmem:[%s0 + $0x68] sm:$0xff]
  %v37 = vld [vmem:[%s0 + $0x70] sm:$0xff]
  %v38 = vld [vmem:[%s0 + $0x78] sm:$0xff]
  %v39 = vld [vmem:[%s0 + $0x80] sm:$0xff]
  %v40 = vld [vmem:[%s0 + $0x88] sm:$0xff]
  %v41 = vld [vmem:[%s0 + $0x90] sm:$0xff]
  %v42 = vld [vmem:[%s0 + $0x98] sm:$0xff]
  %v43 = vld [vmem:[%s0 + $0xa0] sm:$0xff]
  %v44 = vld [vmem:[%s0 + $0xa8] sm:$0xff]
  %v45 = vld [vmem:[%s0 + $0xb0] sm:$0xff]
  %v46 = vld [vmem:[%s0 + $0xb8] sm:$0xff]
  %v47 = vld [vmem:[%s0 + $0xc0] sm:$0xff]
  %v48 = vld [vmem:[%s0 + $0xc8] sm:$0xff]
  %v49 = vld [vmem:[%s0 + $0xd0] sm:$0xff]
  %v50 = vld [vmem:[%s0 + $0xd8] sm:$0xff]
  %v51 = vld [vmem:[%s3] sm:$0x1]
  %v53 = vlaneseq
  %v54 = vshrl.u32 %v53, 7
  %v55 = vsub.s32 0, %v54
  %v56 = vrot.slane %v51, %v55
  %v58 = vmul.f32 %v23, %v56
  %v59 = vmul.f32 %v24, %v56
  %v60 = vmul.f32 %v25, %v56
  %v61 = vmul.f32 %v26, %v56
  %v62 = vmul.f32 %v27, %v56
  %v63 = vmul.f32 %v28, %v56
  %v64 = vmul.f32 %v29, %v56
  %v65 = vmul.f32 %v30, %v56
  %v66 = vmul.f32 %v31, %v56
  %v67 = vmul.f32 %v32, %v56
  %v68 = vmul.f32 %v33, %v56
  %v69 = vmul.f32 %v34, %v56
  %v70 = vmul.f32 %v35, %v56
  %v71 = vmul.f32 %v36, %v56
  %v72 = vmul.f32 %v37, %v56
  %v73 = vmul.f32 %v38, %v56
  %v74 = vmul.f32 %v39, %v56
  %v75 = vmul.f32 %v40, %v56
  %v76 = vmul.f32 %v41, %v56
  %v77 = vmul.f32 %v42, %v56
  %v78 = vmul.f32 %v43, %v56
  %v79 = vmul.f32 %v44, %v56
  %v80 = vmul.f32 %v45, %v56
  %v81 = vmul.f32 %v46, %v56
  %v82 = vmul.f32 %v47, %v56
  %v83 = vmul.f32 %v48, %v56
  %v84 = vmul.f32 %v49, %v56
  %v85 = vmul.f32 %v50, %v56
  %v86 = vld [vmem:[%s4] sm:$0x1]
  %v88 = vlaneseq
  %v89 = vshrl.u32 %v88, 7
  %v90 = vsub.s32 0, %v89
  %v91 = vrot.slane %v86, %v90
  %v93 = vadd.f32 %v58, %v91
  %v94 = vadd.f32 %v59, %v91
  %v95 = vadd.f32 %v60, %v91
  %v96 = vadd.f32 %v61, %v91
  %v97 = vadd.f32 %v62, %v91
  %v98 = vadd.f32 %v63, %v91
  %v99 = vadd.f32 %v64, %v91
  %v100 = vadd.f32 %v65, %v91
  %v101 = vadd.f32 %v66, %v91
  %v102 = vadd.f32 %v67, %v91
  %v103 = vadd.f32 %v68, %v91
  %v104 = vadd.f32 %v69, %v91
  %v105 = vadd.f32 %v70, %v91
  %v106 = vadd.f32 %v71, %v91
  %v107 = vadd.f32 %v72, %v91
  %v108 = vadd.f32 %v73, %v91
  %v109 = vadd.f32 %v74, %v91
  %v110 = vadd.f32 %v75, %v91
  %v111 = vadd.f32 %v76, %v91
  %v112 = vadd.f32 %v77, %v91
  %v113 = vadd.f32 %v78, %v91
  %v114 = vadd.f32 %v79, %v91
  %v115 = vadd.f32 %v80, %v91
  %v116 = vadd.f32 %v81, %v91
  %v117 = vadd.f32 %v82, %v91
  %v118 = vadd.f32 %v83, %v91
  %v119 = vadd.f32 %v84, %v91
  %v120 = vadd.f32 %v85, %v91
  %v121 = vmax.f32 %v93, 0.0
  %v122 = vmax.f32 %v94, 0.0
  %v123 = vmax.f32 %v95, 0.0
  %v124 = vmax.f32 %v96, 0.0
  %v125 = vmax.f32 %v97, 0.0
  %v126 = vmax.f32 %v98, 0.0
  %v127 = vmax.f32 %v99, 0.0
  %v128 = vmax.f32 %v100, 0.0
  %v129 = vmax.f32 %v101, 0.0
  %v130 = vmax.f32 %v102, 0.0
  %v131 = vmax.f32 %v103, 0.0
  %v132 = vmax.f32 %v104, 0.0
  %v133 = vmax.f32 %v105, 0.0
  %v134 = vmax.f32 %v106, 0.0
  %v135 = vmax.f32 %v107, 0.0
  %v136 = vmax.f32 %v108, 0.0
  %v137 = vmax.f32 %v109, 0.0
  %v138 = vmax.f32 %v110, 0.0
  %v139 = vmax.f32 %v111, 0.0
  %v140 = vmax.f32 %v112, 0.0
  %v141 = vmax.f32 %v113, 0.0
  %v142 = vmax.f32 %v114, 0.0
  %v143 = vmax.f32 %v115, 0.0
  %v144 = vmax.f32 %v116, 0.0
  %v145 = vmax.f32 %v117, 0.0
  %v146 = vmax.f32 %v118, 0.0
  %v147 = vmax.f32 %v119, 0.0
  %v148 = vmax.f32 %v120, 0.0
  %v149 = vld [vmem:[%s1] sm:$0xff]
  %v150 = vld [vmem:[%s1 + $0x8] sm:$0xff]
  %v151 = vld [vmem:[%s1 + $0x10] sm:$0xff]
  %v152 = vld [vmem:[%s1 + $0x18] sm:$0xff]
  %v153 = vld [vmem:[%s1 + $0x20] sm:$0xff]
  %v154 = vld [vmem:[%s1 + $0x28] sm:$0xff]
  %v155 = vld [vmem:[%s1 + $0x30] sm:$0xff]
  %v156 = vld [vmem:[%s1 + $0x38] sm:$0xff]
  %v157 = vld [vmem:[%s1 + $0x40] sm:$0xff]
  %v158 = vld [vmem:[%s1 + $0x48] sm:$0xff]
  %v159 = vld [vmem:[%s1 + $0x50] sm:$0xff]
  %v160 = vld [vmem:[%s1 + $0x58] sm:$0xff]
  %v161 = vld [vmem:[%s1 + $0x60] sm:$0xff]
  %v162 = vld [vmem:[%s1 + $0x68] sm:$0xff]
  %v163 = vld [vmem:[%s1 + $0x70] sm:$0xff]
  %v164 = vld [vmem:[%s1 + $0x78] sm:$0xff]
  %v165 = vld [vmem:[%s1 + $0x80] sm:$0xff]
  %v166 = vld [vmem:[%s1 + $0x88] sm:$0xff]
  %v167 = vld [vmem:[%s1 + $0x90] sm:$0xff]
  %v168 = vld [vmem:[%s1 + $0x98] sm:$0xff]
  %v169 = vld [vmem:[%s1 + $0xa0] sm:$0xff]
  %v170 = vld [vmem:[%s1 + $0xa8] sm:$0xff]
  %v171 = vld [vmem:[%s1 + $0xb0] sm:$0xff]
  %v172 = vld [vmem:[%s1 + $0xb8] sm:$0xff]
  %v173 = vld [vmem:[%s1 + $0xc0] sm:$0xff]
  %v174 = vld [vmem:[%s1 + $0xc8] sm:$0xff]
  %v175 = vld [vmem:[%s1 + $0xd0] sm:$0xff]
  %v176 = vld [vmem:[%s1 + $0xd8] sm:$0xff]
  %178 = vset.pattern.permute.xlu0 0
  %179 = vperm.xlu0 %178, %v149
  %v180 = vpop.permute.xlu0 %179
  %183 = vset.pattern.permute.xlu0 0
  %184 = vperm.xlu0 %183, %v150
  %v185 = vpop.permute.xlu0 %184
  %188 = vset.pattern.permute.xlu0 0
  %189 = vperm.xlu0 %188, %v151
  %v190 = vpop.permute.xlu0 %189
  %193 = vset.pattern.permute.xlu0 0
  %194 = vperm.xlu0 %193, %v152
  %v195 = vpop.permute.xlu0 %194
  %198 = vset.pattern.permute.xlu0 0
  %199 = vperm.xlu0 %198, %v153
  %v200 = vpop.permute.xlu0 %199
  %203 = vset.pattern.permute.xlu0 0
  %204 = vperm.xlu0 %203, %v154
  %v205 = vpop.permute.xlu0 %204
  %208 = vset.pattern.permute.xlu0 0
  %209 = vperm.xlu0 %208, %v155
  %v210 = vpop.permute.xlu0 %209
  %213 = vset.pattern.permute.xlu0 0
  %214 = vperm.xlu0 %213, %v156
  %v215 = vpop.permute.xlu0 %214
  %218 = vset.pattern.permute.xlu0 0
  %219 = vperm.xlu0 %218, %v157
  %v220 = vpop.permute.xlu0 %219
  %223 = vset.pattern.permute.xlu0 0
  %224 = vperm.xlu0 %223, %v158
  %v225 = vpop.permute.xlu0 %224
  %228 = vset.pattern.permute.xlu0 0
  %229 = vperm.xlu0 %228, %v159
  %v230 = vpop.permute.xlu0 %229
  %233 = vset.pattern.permute.xlu0 0
  %234 = vperm.xlu0 %233, %v160
  %v235 = vpop.permute.xlu0 %234
  %238 = vset.pattern.permute.xlu0 0
  %239 = vperm.xlu0 %238, %v161
  %v240 = vpop.permute.xlu0 %239
  %243 = vset.pattern.permute.xlu0 0
  %244 = vperm.xlu0 %243, %v162
  %v245 = vpop.permute.xlu0 %244
  %248 = vset.pattern.permute.xlu0 0
  %249 = vperm.xlu0 %248, %v163
  %v250 = vpop.permute.xlu0 %249
  %253 = vset.pattern.permute.xlu0 0
  %254 = vperm.xlu0 %253, %v164
  %v255 = vpop.permute.xlu0 %254
  %258 = vset.pattern.permute.xlu0 0
  %259 = vperm.xlu0 %258, %v165
  %v260 = vpop.permute.xlu0 %259
  %263 = vset.pattern.permute.xlu0 0
  %264 = vperm.xlu0 %263, %v166
  %v265 = vpop.permute.xlu0 %264
  %268 = vset.pattern.permute.xlu0 0
  %269 = vperm.xlu0 %268, %v167
  %v270 = vpop.permute.xlu0 %269
  %273 = vset.pattern.permute.xlu0 0
  %274 = vperm.xlu0 %273, %v168
  %v275 = vpop.permute.xlu0 %274
  %278 = vset.pattern.permute.xlu0 0
  %279 = vperm.xlu0 %278, %v169
  %v280 = vpop.permute.xlu0 %279
  %283 = vset.pattern.permute.xlu0 0
  %284 = vperm.xlu0 %283, %v170
  %v285 = vpop.permute.xlu0 %284
  %288 = vset.pattern.permute.xlu0 0
  %289 = vperm.xlu0 %288, %v171
  %v290 = vpop.permute.xlu0 %289
  %293 = vset.pattern.permute.xlu0 0
  %294 = vperm.xlu0 %293, %v172
  %v295 = vpop.permute.xlu0 %294
  %298 = vset.pattern.permute.xlu0 0
  %299 = vperm.xlu0 %298, %v173
  %v300 = vpop.permute.xlu0 %299
  %303 = vset.pattern.permute.xlu0 0
  %304 = vperm.xlu0 %303, %v174
  %v305 = vpop.permute.xlu0 %304
  %308 = vset.pattern.permute.xlu0 0
  %309 = vperm.xlu0 %308, %v175
  %v310 = vpop.permute.xlu0 %309
  %313 = vset.pattern.permute.xlu0 0
  %314 = vperm.xlu0 %313, %v176
  %v315 = vpop.permute.xlu0 %314
  %v317 = vmul.f32 %v121, %v180
  %v318 = vmul.f32 %v122, %v185
  %v319 = vmul.f32 %v123, %v190
  %v320 = vmul.f32 %v124, %v195
  %v321 = vmul.f32 %v125, %v200
  %v322 = vmul.f32 %v126, %v205
  %v323 = vmul.f32 %v127, %v210
  %v324 = vmul.f32 %v128, %v215
  %v325 = vmul.f32 %v129, %v220
  %v326 = vmul.f32 %v130, %v225
  %v327 = vmul.f32 %v131, %v230
  %v328 = vmul.f32 %v132, %v235
  %v329 = vmul.f32 %v133, %v240
  %v330 = vmul.f32 %v134, %v245
  %v331 = vmul.f32 %v135, %v250
  %v332 = vmul.f32 %v136, %v255
  %v333 = vmul.f32 %v137, %v260
  %v334 = vmul.f32 %v138, %v265
  %v335 = vmul.f32 %v139, %v270
  %v336 = vmul.f32 %v140, %v275
  %v337 = vmul.f32 %v141, %v280
  %v338 = vmul.f32 %v142, %v285
  %v339 = vmul.f32 %v143, %v290
  %v340 = vmul.f32 %v144, %v295
  %v341 = vmul.f32 %v145, %v300
  %v342 = vmul.f32 %v146, %v305
  %v343 = vmul.f32 %v147, %v310
  %v344 = vmul.f32 %v148, %v315
  %v345 = vrot.slane %v317, 1
  %v346 = vrot.slane %v318, 1
  %v347 = vrot.slane %v319, 1
  %v348 = vrot.slane %v320, 1
  %v349 = vrot.slane %v321, 1
  %v350 = vrot.slane %v322, 1
  %v351 = vrot.slane %v323, 1
  %v352 = vrot.slane %v324, 1
  %v353 = vrot.slane %v325, 1
  %v354 = vrot.slane %v326, 1
  %v355 = vrot.slane %v327, 1
  %v356 = vrot.slane %v328, 1
  %v357 = vrot.slane %v329, 1
  %v358 = vrot.slane %v330, 1
  %v359 = vrot.slane %v331, 1
  %v360 = vrot.slane %v332, 1
  %v361 = vrot.slane %v333, 1
  %v362 = vrot.slane %v334, 1
  %v363 = vrot.slane %v335, 1
  %v364 = vrot.slane %v336, 1
  %v365 = vrot.slane %v337, 1
  %v366 = vrot.slane %v338, 1
  %v367 = vrot.slane %v339, 1
  %v368 = vrot.slane %v340, 1
  %v369 = vrot.slane %v341, 1
  %v370 = vrot.slane %v342, 1
  %v371 = vlaneseq
  %v372 = vshrl.u32 %v371, 7
  %vm373 = vcmp.lt.s32.totalorder %v372, 7
  %v374 = vsel %vm373, %v369, %v370
  %v375 = vsel %vm373, %v368, %v369
  %v376 = vsel %vm373, %v367, %v368
  %v377 = vsel %vm373, %v366, %v367
  %v378 = vsel %vm373, %v365, %v366
  %v379 = vsel %vm373, %v364, %v365
  %v380 = vsel %vm373, %v363, %v364
  %v381 = vsel %vm373, %v362, %v363
  %v382 = vsel %vm373, %v361, %v362
  %v383 = vsel %vm373, %v360, %v361
  %v384 = vsel %vm373, %v359, %v360
  %v385 = vsel %vm373, %v358, %v359
  %v386 = vsel %vm373, %v357, %v358
  %v387 = vsel %vm373, %v356, %v357
  %v388 = vsel %vm373, %v355, %v356
  %v389 = vsel %vm373, %v354, %v355
  %v390 = vsel %vm373, %v353, %v354
  %v391 = vsel %vm373, %v352, %v353
  %v392 = vsel %vm373, %v351, %v352
  %v393 = vsel %vm373, %v350, %v351
  %v394 = vsel %vm373, %v349, %v350
  %v395 = vsel %vm373, %v348, %v349
  %v396 = vsel %vm373, %v347, %v348
  %v397 = vsel %vm373, %v346, %v347
  %v398 = vsel %vm373, %v345, %v346
  %v399 = vmax.f32 %v317, %v398
  %v400 = vmax.f32 %v318, %v397
  %v401 = vmax.f32 %v319, %v396
  %v402 = vmax.f32 %v320, %v395
  %v403 = vmax.f32 %v321, %v394
  %v404 = vmax.f32 %v322, %v393
  %v405 = vmax.f32 %v323, %v392
  %v406 = vmax.f32 %v324, %v391
  %v407 = vmax.f32 %v325, %v390
  %v408 = vmax.f32 %v326, %v389
  %v409 = vmax.f32 %v327, %v388
  %v410 = vmax.f32 %v328, %v387
  %v411 = vmax.f32 %v329, %v386
  %v412 = vmax.f32 %v330, %v385
  %v413 = vmax.f32 %v331, %v384
  %v414 = vmax.f32 %v332, %v383
  %v415 = vmax.f32 %v333, %v382
  %v416 = vmax.f32 %v334, %v381
  %v417 = vmax.f32 %v335, %v380
  %v418 = vmax.f32 %v336, %v379
  %v419 = vmax.f32 %v337, %v378
  %v420 = vmax.f32 %v338, %v377
  %v421 = vmax.f32 %v339, %v376
  %v422 = vmax.f32 %v340, %v375
  %v423 = vmax.f32 %v341, %v374
  %v424 = vrot.slane %v317, 2
  %v425 = vrot.slane %v318, 2
  %v426 = vrot.slane %v319, 2
  %v427 = vrot.slane %v320, 2
  %v428 = vrot.slane %v321, 2
  %v429 = vrot.slane %v322, 2
  %v430 = vrot.slane %v323, 2
  %v431 = vrot.slane %v324, 2
  %v432 = vrot.slane %v325, 2
  %v433 = vrot.slane %v326, 2
  %v434 = vrot.slane %v327, 2
  %v435 = vrot.slane %v328, 2
  %v436 = vrot.slane %v329, 2
  %v437 = vrot.slane %v330, 2
  %v438 = vrot.slane %v331, 2
  %v439 = vrot.slane %v332, 2
  %v440 = vrot.slane %v333, 2
  %v441 = vrot.slane %v334, 2
  %v442 = vrot.slane %v335, 2
  %v443 = vrot.slane %v336, 2
  %v444 = vrot.slane %v337, 2
  %v445 = vrot.slane %v338, 2
  %v446 = vrot.slane %v339, 2
  %v447 = vrot.slane %v340, 2
  %v448 = vrot.slane %v341, 2
  %v449 = vrot.slane %v342, 2
  %vm450 = vcmp.lt.s32.totalorder %v372, 6
  %v451 = vsel %vm450, %v448, %v449
  %v452 = vsel %vm450, %v447, %v448
  %v453 = vsel %vm450, %v446, %v447
  %v454 = vsel %vm450, %v445, %v446
  %v455 = vsel %vm450, %v444, %v445
  %v456 = vsel %vm450, %v443, %v444
  %v457 = vsel %vm450, %v442, %v443
  %v458 = vsel %vm450, %v441, %v442
  %v459 = vsel %vm450, %v440, %v441
  %v460 = vsel %vm450, %v439, %v440
  %v461 = vsel %vm450, %v438, %v439
  %v462 = vsel %vm450, %v437, %v438
  %v463 = vsel %vm450, %v436, %v437
  %v464 = vsel %vm450, %v435, %v436
  %v465 = vsel %vm450, %v434, %v435
  %v466 = vsel %vm450, %v433, %v434
  %v467 = vsel %vm450, %v432, %v433
  %v468 = vsel %vm450, %v431, %v432
  %v469 = vsel %vm450, %v430, %v431
  %v470 = vsel %vm450, %v429, %v430
  %v471 = vsel %vm450, %v428, %v429
  %v472 = vsel %vm450, %v427, %v428
  %v473 = vsel %vm450, %v426, %v427
  %v474 = vsel %vm450, %v425, %v426
  %v475 = vsel %vm450, %v424, %v425
  %v476 = vmax.f32 %v399, %v475
  %v477 = vmax.f32 %v400, %v474
  %v478 = vmax.f32 %v401, %v473
  %v479 = vmax.f32 %v402, %v472
  %v480 = vmax.f32 %v403, %v471
  %v481 = vmax.f32 %v404, %v470
  %v482 = vmax.f32 %v405, %v469
  %v483 = vmax.f32 %v406, %v468
  %v484 = vmax.f32 %v407, %v467
  %v485 = vmax.f32 %v408, %v466
  %v486 = vmax.f32 %v409, %v465
  %v487 = vmax.f32 %v410, %v464
  %v488 = vmax.f32 %v411, %v463
  %v489 = vmax.f32 %v412, %v462
  %v490 = vmax.f32 %v413, %v461
  %v491 = vmax.f32 %v414, %v460
  %v492 = vmax.f32 %v415, %v459
  %v493 = vmax.f32 %v416, %v458
  %v494 = vmax.f32 %v417, %v457
  %v495 = vmax.f32 %v418, %v456
  %v496 = vmax.f32 %v419, %v455
  %v497 = vmax.f32 %v420, %v454
  %v498 = vmax.f32 %v421, %v453
  %v499 = vmax.f32 %v422, %v452
  %v500 = vmax.f32 %v423, %v451
  %v501 = vrot.slane %v343, 2
  %v502 = vsel %vm450, %v449, %v501
  %v503 = vmax.f32 %v476, %v474
  %v504 = vmax.f32 %v477, %v473
  %v505 = vmax.f32 %v478, %v472
  %v506 = vmax.f32 %v479, %v471
  %v507 = vmax.f32 %v480, %v470
  %v508 = vmax.f32 %v481, %v469
  %v509 = vmax.f32 %v482, %v468
  %v510 = vmax.f32 %v483, %v467
  %v511 = vmax.f32 %v484, %v466
  %v512 = vmax.f32 %v485, %v465
  %v513 = vmax.f32 %v486, %v464
  %v514 = vmax.f32 %v487, %v463
  %v515 = vmax.f32 %v488, %v462
  %v516 = vmax.f32 %v489, %v461
  %v517 = vmax.f32 %v490, %v460
  %v518 = vmax.f32 %v491, %v459
  %v519 = vmax.f32 %v492, %v458
  %v520 = vmax.f32 %v493, %v457
  %v521 = vmax.f32 %v494, %v456
  %v522 = vmax.f32 %v495, %v455
  %v523 = vmax.f32 %v496, %v454
  %v524 = vmax.f32 %v497, %v453
  %v525 = vmax.f32 %v498, %v452
  %v526 = vmax.f32 %v499, %v451
  %v527 = vmax.f32 %v500, %v502
  %v528 = vrot.slane %v318, 3
  %v529 = vrot.slane %v319, 3
  %v530 = vrot.slane %v320, 3
  %v531 = vrot.slane %v321, 3
  %v532 = vrot.slane %v322, 3
  %v533 = vrot.slane %v323, 3
  %v534 = vrot.slane %v324, 3
  %v535 = vrot.slane %v325, 3
  %v536 = vrot.slane %v326, 3
  %v537 = vrot.slane %v327, 3
  %v538 = vrot.slane %v328, 3
  %v539 = vrot.slane %v329, 3
  %v540 = vrot.slane %v330, 3
  %v541 = vrot.slane %v331, 3
  %v542 = vrot.slane %v332, 3
  %v543 = vrot.slane %v333, 3
  %v544 = vrot.slane %v334, 3
  %v545 = vrot.slane %v335, 3
  %v546 = vrot.slane %v336, 3
  %v547 = vrot.slane %v337, 3
  %v548 = vrot.slane %v338, 3
  %v549 = vrot.slane %v339, 3
  %v550 = vrot.slane %v340, 3
  %v551 = vrot.slane %v341, 3
  %v552 = vrot.slane %v342, 3
  %v553 = vrot.slane %v343, 3
  %vm554 = vcmp.lt.s32.totalorder %v372, 5
  %v555 = vsel %vm554, %v552, %v553
  %v556 = vsel %vm554, %v551, %v552
  %v557 = vsel %vm554, %v550, %v551
  %v558 = vsel %vm554, %v549, %v550
  %v559 = vsel %vm554, %v548, %v549
  %v560 = vsel %vm554, %v547, %v548
  %v561 = vsel %vm554, %v546, %v547
  %v562 = vsel %vm554, %v545, %v546
  %v563 = vsel %vm554, %v544, %v545
  %v564 = vsel %vm554, %v543, %v544
  %v565 = vsel %vm554, %v542, %v543
  %v566 = vsel %vm554, %v541, %v542
  %v567 = vsel %vm554, %v540, %v541
  %v568 = vsel %vm554, %v539, %v540
  %v569 = vsel %vm554, %v538, %v539
  %v570 = vsel %vm554, %v537, %v538
  %v571 = vsel %vm554, %v536, %v537
  %v572 = vsel %vm554, %v535, %v536
  %v573 = vsel %vm554, %v534, %v535
  %v574 = vsel %vm554, %v533, %v534
  %v575 = vsel %vm554, %v532, %v533
  %v576 = vsel %vm554, %v531, %v532
  %v577 = vsel %vm554, %v530, %v531
  %v578 = vsel %vm554, %v529, %v530
  %v579 = vsel %vm554, %v528, %v529
  %v580 = vmax.f32 %v503, %v579
  %v581 = vmax.f32 %v504, %v578
  %v582 = vmax.f32 %v505, %v577
  %v583 = vmax.f32 %v506, %v576
  %v584 = vmax.f32 %v507, %v575
  %v585 = vmax.f32 %v508, %v574
  %v586 = vmax.f32 %v509, %v573
  %v587 = vmax.f32 %v510, %v572
  %v588 = vmax.f32 %v511, %v571
  %v589 = vmax.f32 %v512, %v570
  %v590 = vmax.f32 %v513, %v569
  %v591 = vmax.f32 %v514, %v568
  %v592 = vmax.f32 %v515, %v567
  %v593 = vmax.f32 %v516, %v566
  %v594 = vmax.f32 %v517, %v565
  %v595 = vmax.f32 %v518, %v564
  %v596 = vmax.f32 %v519, %v563
  %v597 = vmax.f32 %v520, %v562
  %v598 = vmax.f32 %v521, %v561
  %v599 = vmax.f32 %v522, %v560
  %v600 = vmax.f32 %v523, %v559
  %v601 = vmax.f32 %v524, %v558
  %v602 = vmax.f32 %v525, %v557
  %v603 = vmax.f32 %v526, %v556
  %v604 = vmax.f32 %v527, %v555
  %v605 = vrot.slane %v318, 4
  %v606 = vrot.slane %v319, 4
  %v607 = vrot.slane %v320, 4
  %v608 = vrot.slane %v321, 4
  %v609 = vrot.slane %v322, 4
  %v610 = vrot.slane %v323, 4
  %v611 = vrot.slane %v324, 4
  %v612 = vrot.slane %v325, 4
  %v613 = vrot.slane %v326, 4
  %v614 = vrot.slane %v327, 4
  %v615 = vrot.slane %v328, 4
  %v616 = vrot.slane %v329, 4
  %v617 = vrot.slane %v330, 4
  %v618 = vrot.slane %v331, 4
  %v619 = vrot.slane %v332, 4
  %v620 = vrot.slane %v333, 4
  %v621 = vrot.slane %v334, 4
  %v622 = vrot.slane %v335, 4
  %v623 = vrot.slane %v336, 4
  %v624 = vrot.slane %v337, 4
  %v625 = vrot.slane %v338, 4
  %v626 = vrot.slane %v339, 4
  %v627 = vrot.slane %v340, 4
  %v628 = vrot.slane %v341, 4
  %v629 = vrot.slane %v342, 4
  %v630 = vrot.slane %v343, 4
  %vm631 = vcmp.lt.s32.totalorder %v372, 4
  %v632 = vsel %vm631, %v629, %v630
  %v633 = vsel %vm631, %v628, %v629
  %v634 = vsel %vm631, %v627, %v628
  %v635 = vsel %vm631, %v626, %v627
  %v636 = vsel %vm631, %v625, %v626
  %v637 = vsel %vm631, %v624, %v625
  %v638 = vsel %vm631, %v623, %v624
  %v639 = vsel %vm631, %v622, %v623
  %v640 = vsel %vm631, %v621, %v622
  %v641 = vsel %vm631, %v620, %v621
  %v642 = vsel %vm631, %v619, %v620
  %v643 = vsel %vm631, %v618, %v619
  %v644 = vsel %vm631, %v617, %v618
  %v645 = vsel %vm631, %v616, %v617
  %v646 = vsel %vm631, %v615, %v616
  %v647 = vsel %vm631, %v614, %v615
  %v648 = vsel %vm631, %v613, %v614
  %v649 = vsel %vm631, %v612, %v613
  %v650 = vsel %vm631, %v611, %v612
  %v651 = vsel %vm631, %v610, %v611
  %v652 = vsel %vm631, %v609, %v610
  %v653 = vsel %vm631, %v608, %v609
  %v654 = vsel %vm631, %v607, %v608
  %v655 = vsel %vm631, %v606, %v607
  %v656 = vsel %vm631, %v605, %v606
  %v657 = vmax.f32 %v580, %v656
  %v658 = vmax.f32 %v581, %v655
  %v659 = vmax.f32 %v582, %v654
  %v660 = vmax.f32 %v583, %v653
  %v661 = vmax.f32 %v584, %v652
  %v662 = vmax.f32 %v585, %v651
  %v663 = vmax.f32 %v586, %v650
  %v664 = vmax.f32 %v587, %v649
  %v665 = vmax.f32 %v588, %v648
  %v666 = vmax.f32 %v589, %v647
  %v667 = vmax.f32 %v590, %v646
  %v668 = vmax.f32 %v591, %v645
  %v669 = vmax.f32 %v592, %v644
  %v670 = vmax.f32 %v593, %v643
  %v671 = vmax.f32 %v594, %v642
  %v672 = vmax.f32 %v595, %v641
  %v673 = vmax.f32 %v596, %v640
  %v674 = vmax.f32 %v597, %v639
  %v675 = vmax.f32 %v598, %v638
  %v676 = vmax.f32 %v599, %v637
  %v677 = vmax.f32 %v600, %v636
  %v678 = vmax.f32 %v601, %v635
  %v679 = vmax.f32 %v602, %v634
  %v680 = vmax.f32 %v603, %v633
  %v681 = vmax.f32 %v604, %v632
  %v682 = vrot.slane %v344, 4
  %v683 = vsel %vm631, %v630, %v682
  %v684 = vmax.f32 %v657, %v655
  %v685 = vmax.f32 %v658, %v654
  %v686 = vmax.f32 %v659, %v653
  %v687 = vmax.f32 %v660, %v652
  %v688 = vmax.f32 %v661, %v651
  %v689 = vmax.f32 %v662, %v650
  %v690 = vmax.f32 %v663, %v649
  %v691 = vmax.f32 %v664, %v648
  %v692 = vmax.f32 %v665, %v647
  %v693 = vmax.f32 %v666, %v646
  %v694 = vmax.f32 %v667, %v645
  %v695 = vmax.f32 %v668, %v644
  %v696 = vmax.f32 %v669, %v643
  %v697 = vmax.f32 %v670, %v642
  %v698 = vmax.f32 %v671, %v641
  %v699 = vmax.f32 %v672, %v640
  %v700 = vmax.f32 %v673, %v639
  %v701 = vmax.f32 %v674, %v638
  %v702 = vmax.f32 %v675, %v637
  %v703 = vmax.f32 %v676, %v636
  %v704 = vmax.f32 %v677, %v635
  %v705 = vmax.f32 %v678, %v634
  %v706 = vmax.f32 %v679, %v633
  %v707 = vmax.f32 %v680, %v632
  %v708 = vmax.f32 %v681, %v683
  %v709 = vrot.slane %v319, 5
  %v710 = vrot.slane %v320, 5
  %v711 = vrot.slane %v321, 5
  %v712 = vrot.slane %v322, 5
  %v713 = vrot.slane %v323, 5
  %v714 = vrot.slane %v324, 5
  %v715 = vrot.slane %v325, 5
  %v716 = vrot.slane %v326, 5
  %v717 = vrot.slane %v327, 5
  %v718 = vrot.slane %v328, 5
  %v719 = vrot.slane %v329, 5
  %v720 = vrot.slane %v330, 5
  %v721 = vrot.slane %v331, 5
  %v722 = vrot.slane %v332, 5
  %v723 = vrot.slane %v333, 5
  %v724 = vrot.slane %v334, 5
  %v725 = vrot.slane %v335, 5
  %v726 = vrot.slane %v336, 5
  %v727 = vrot.slane %v337, 5
  %v728 = vrot.slane %v338, 5
  %v729 = vrot.slane %v339, 5
  %v730 = vrot.slane %v340, 5
  %v731 = vrot.slane %v341, 5
  %v732 = vrot.slane %v342, 5
  %v733 = vrot.slane %v343, 5
  %v734 = vrot.slane %v344, 5
  %vm735 = vcmp.lt.s32.totalorder %v372, 3
  %v736 = vsel %vm735, %v733, %v734
  %v737 = vsel %vm735, %v732, %v733
  %v738 = vsel %vm735, %v731, %v732
  %v739 = vsel %vm735, %v730, %v731
  %v740 = vsel %vm735, %v729, %v730
  %v741 = vsel %vm735, %v728, %v729
  %v742 = vsel %vm735, %v727, %v728
  %v743 = vsel %vm735, %v726, %v727
  %v744 = vsel %vm735, %v725, %v726
  %v745 = vsel %vm735, %v724, %v725
  %v746 = vsel %vm735, %v723, %v724
  %v747 = vsel %vm735, %v722, %v723
  %v748 = vsel %vm735, %v721, %v722
  %v749 = vsel %vm735, %v720, %v721
  %v750 = vsel %vm735, %v719, %v720
  %v751 = vsel %vm735, %v718, %v719
  %v752 = vsel %vm735, %v717, %v718
  %v753 = vsel %vm735, %v716, %v717
  %v754 = vsel %vm735, %v715, %v716
  %v755 = vsel %vm735, %v714, %v715
  %v756 = vsel %vm735, %v713, %v714
  %v757 = vsel %vm735, %v712, %v713
  %v758 = vsel %vm735, %v711, %v712
  %v759 = vsel %vm735, %v710, %v711
  %v760 = vsel %vm735, %v709, %v710
  %v761 = vmax.f32 %v684, %v760
  %v762 = vmax.f32 %v685, %v759
  %v763 = vmax.f32 %v686, %v758
  %v764 = vmax.f32 %v687, %v757
  %v765 = vmax.f32 %v688, %v756
  %v766 = vmax.f32 %v689, %v755
  %v767 = vmax.f32 %v690, %v754
  %v768 = vmax.f32 %v691, %v753
  %v769 = vmax.f32 %v692, %v752
  %v770 = vmax.f32 %v693, %v751
  %v771 = vmax.f32 %v694, %v750
  %v772 = vmax.f32 %v695, %v749
  %v773 = vmax.f32 %v696, %v748
  %v774 = vmax.f32 %v697, %v747
  %v775 = vmax.f32 %v698, %v746
  %v776 = vmax.f32 %v699, %v745
  %v777 = vmax.f32 %v700, %v744
  %v778 = vmax.f32 %v701, %v743
  %v779 = vmax.f32 %v702, %v742
  %v780 = vmax.f32 %v703, %v741
  %v781 = vmax.f32 %v704, %v740
  %v782 = vmax.f32 %v705, %v739
  %v783 = vmax.f32 %v706, %v738
  %v784 = vmax.f32 %v707, %v737
  %v785 = vmax.f32 %v708, %v736
  %v786 = vrot.slane %v319, 6
  %v787 = vrot.slane %v320, 6
  %v788 = vrot.slane %v321, 6
  %v789 = vrot.slane %v322, 6
  %v790 = vrot.slane %v323, 6
  %v791 = vrot.slane %v324, 6
  %v792 = vrot.slane %v325, 6
  %v793 = vrot.slane %v326, 6
  %v794 = vrot.slane %v327, 6
  %v795 = vrot.slane %v328, 6
  %v796 = vrot.slane %v329, 6
  %v797 = vrot.slane %v330, 6
  %v798 = vrot.slane %v331, 6
  %v799 = vrot.slane %v332, 6
  %v800 = vrot.slane %v333, 6
  %v801 = vrot.slane %v334, 6
  %v802 = vrot.slane %v335, 6
  %v803 = vrot.slane %v336, 6
  %v804 = vrot.slane %v337, 6
  %v805 = vrot.slane %v338, 6
  %v806 = vrot.slane %v339, 6
  %v807 = vrot.slane %v340, 6
  %v808 = vrot.slane %v341, 6
  %v809 = vrot.slane %v342, 6
  %v810 = vrot.slane %v343, 6
  %v811 = vrot.slane %v344, 6
  %vm812 = vcmp.lt.s32.totalorder %v372, 2
  %v813 = vsel %vm812, %v810, %v811
  %v814 = vsel %vm812, %v809, %v810
  %v815 = vsel %vm812, %v808, %v809
  %v816 = vsel %vm812, %v807, %v808
  %v817 = vsel %vm812, %v806, %v807
  %v818 = vsel %vm812, %v805, %v806
  %v819 = vsel %vm812, %v804, %v805
  %v820 = vsel %vm812, %v803, %v804
  %v821 = vsel %vm812, %v802, %v803
  %v822 = vsel %vm812, %v801, %v802
  %v823 = vsel %vm812, %v800, %v801
  %v824 = vsel %vm812, %v799, %v800
  %v825 = vsel %vm812, %v798, %v799
  %v826 = vsel %vm812, %v797, %v798
  %v827 = vsel %vm812, %v796, %v797
  %v828 = vsel %vm812, %v795, %v796
  %v829 = vsel %vm812, %v794, %v795
  %v830 = vsel %vm812, %v793, %v794
  %v831 = vsel %vm812, %v792, %v793
  %v832 = vsel %vm812, %v791, %v792
  %v833 = vsel %vm812, %v790, %v791
  %v834 = vsel %vm812, %v789, %v790
  %v835 = vsel %vm812, %v788, %v789
  %v836 = vsel %vm812, %v787, %v788
  %v837 = vsel %vm812, %v786, %v787
  %v838 = vmax.f32 %v761, %v837
  %v839 = vmax.f32 %v762, %v836
  %v840 = vmax.f32 %v763, %v835
  %v841 = vmax.f32 %v764, %v834
  %v842 = vmax.f32 %v765, %v833
  %v843 = vmax.f32 %v766, %v832
  %v844 = vmax.f32 %v767, %v831
  %v845 = vmax.f32 %v768, %v830
  %v846 = vmax.f32 %v769, %v829
  %v847 = vmax.f32 %v770, %v828
  %v848 = vmax.f32 %v771, %v827
  %v849 = vmax.f32 %v772, %v826
  %v850 = vmax.f32 %v773, %v825
  %v851 = vmax.f32 %v774, %v824
  %v852 = vmax.f32 %v775, %v823
  %v853 = vmax.f32 %v776, %v822
  %v854 = vmax.f32 %v777, %v821
  %v855 = vmax.f32 %v778, %v820
  %v856 = vmax.f32 %v779, %v819
  %v857 = vmax.f32 %v780, %v818
  %v858 = vmax.f32 %v781, %v817
  %v859 = vmax.f32 %v782, %v816
  %v860 = vmax.f32 %v783, %v815
  %v861 = vmax.f32 %v784, %v814
  %v862 = vmax.f32 %v785, %v813
  %863 = vst [vmem:[%s5] sm:$0xff] %v838
  %864 = vst [vmem:[%s5 + $0x8] sm:$0xff] %v839
  %865 = vst [vmem:[%s5 + $0x10] sm:$0xff] %v840
  %866 = vst [vmem:[%s5 + $0x18] sm:$0xff] %v841
  %867 = vst [vmem:[%s5 + $0x20] sm:$0xff] %v842
  %868 = vst [vmem:[%s5 + $0x28] sm:$0xff] %v843
  %869 = vst [vmem:[%s5 + $0x30] sm:$0xff] %v844
  %870 = vst [vmem:[%s5 + $0x38] sm:$0xff] %v845
  %871 = vst [vmem:[%s5 + $0x40] sm:$0xff] %v846
  %872 = vst [vmem:[%s5 + $0x48] sm:$0xff] %v847
  %873 = vst [vmem:[%s5 + $0x50] sm:$0xff] %v848
  %874 = vst [vmem:[%s5 + $0x58] sm:$0xff] %v849
  %875 = vst [vmem:[%s5 + $0x60] sm:$0xff] %v850
  %876 = vst [vmem:[%s5 + $0x68] sm:$0xff] %v851
  %877 = vst [vmem:[%s5 + $0x70] sm:$0xff] %v852
  %878 = vst [vmem:[%s5 + $0x78] sm:$0xff] %v853
  %879 = vst [vmem:[%s5 + $0x80] sm:$0xff] %v854
  %880 = vst [vmem:[%s5 + $0x88] sm:$0xff] %v855
  %881 = vst [vmem:[%s5 + $0x90] sm:$0xff] %v856
  %882 = vst [vmem:[%s5 + $0x98] sm:$0xff] %v857
  %883 = vst [vmem:[%s5 + $0xa0] sm:$0xff] %v858
  %884 = vst [vmem:[%s5 + $0xa8] sm:$0xff] %v859
  %885 = vst [vmem:[%s5 + $0xb0] sm:$0xff] %v860
  %886 = vst [vmem:[%s5 + $0xb8] sm:$0xff] %v861
  %887 = vst [vmem:[%s5 + $0xc0] sm:$0xff] %v862
  %v888 = vld [vmem:[%s2] sm:$0xff]
  %v889 = vld [vmem:[%s2 + $0x8] sm:$0xff]
  %v890 = vld [vmem:[%s2 + $0x10] sm:$0xff]
  %v891 = vld [vmem:[%s2 + $0x18] sm:$0xff]
  %v892 = vld [vmem:[%s2 + $0x20] sm:$0xff]
  %v893 = vld [vmem:[%s2 + $0x28] sm:$0xff]
  %v894 = vld [vmem:[%s2 + $0x30] sm:$0xff]
  %v895 = vld [vmem:[%s2 + $0x38] sm:$0xff]
  %v896 = vld [vmem:[%s2 + $0x40] sm:$0xff]
  %v897 = vld [vmem:[%s2 + $0x48] sm:$0xff]
  %v898 = vld [vmem:[%s2 + $0x50] sm:$0xff]
  %v899 = vld [vmem:[%s2 + $0x58] sm:$0xff]
  %v900 = vld [vmem:[%s2 + $0x60] sm:$0xff]
  %v901 = vld [vmem:[%s2 + $0x68] sm:$0xff]
  %v902 = vld [vmem:[%s2 + $0x70] sm:$0xff]
  %v903 = vld [vmem:[%s2 + $0x78] sm:$0xff]
  %v904 = vld [vmem:[%s2 + $0x80] sm:$0xff]
  %v905 = vld [vmem:[%s2 + $0x88] sm:$0xff]
  %v906 = vld [vmem:[%s2 + $0x90] sm:$0xff]
  %v907 = vld [vmem:[%s2 + $0x98] sm:$0xff]
  %v908 = vld [vmem:[%s2 + $0xa0] sm:$0xff]
  %v909 = vld [vmem:[%s2 + $0xa8] sm:$0xff]
  %v910 = vld [vmem:[%s2 + $0xb0] sm:$0xff]
  %v911 = vld [vmem:[%s2 + $0xb8] sm:$0xff]
  %v912 = vld [vmem:[%s2 + $0xc0] sm:$0xff]
  %914 = vset.pattern.permute.xlu0 0
  %915 = vperm.xlu0 %914, %v888
  %v916 = vpop.permute.xlu0 %915
  %919 = vset.pattern.permute.xlu0 0
  %920 = vperm.xlu0 %919, %v889
  %v921 = vpop.permute.xlu0 %920
  %924 = vset.pattern.permute.xlu0 0
  %925 = vperm.xlu0 %924, %v890
  %v926 = vpop.permute.xlu0 %925
  %929 = vset.pattern.permute.xlu0 0
  %930 = vperm.xlu0 %929, %v891
  %v931 = vpop.permute.xlu0 %930
  %934 = vset.pattern.permute.xlu0 0
  %935 = vperm.xlu0 %934, %v892
  %v936 = vpop.permute.xlu0 %935
  %939 = vset.pattern.permute.xlu0 0
  %940 = vperm.xlu0 %939, %v893
  %v941 = vpop.permute.xlu0 %940
  %944 = vset.pattern.permute.xlu0 0
  %945 = vperm.xlu0 %944, %v894
  %v946 = vpop.permute.xlu0 %945
  %949 = vset.pattern.permute.xlu0 0
  %950 = vperm.xlu0 %949, %v895
  %v951 = vpop.permute.xlu0 %950
  %954 = vset.pattern.permute.xlu0 0
  %955 = vperm.xlu0 %954, %v896
  %v956 = vpop.permute.xlu0 %955
  %959 = vset.pattern.permute.xlu0 0
  %960 = vperm.xlu0 %959, %v897
  %v961 = vpop.permute.xlu0 %960
  %964 = vset.pattern.permute.xlu0 0
  %965 = vperm.xlu0 %964, %v898
  %v966 = vpop.permute.xlu0 %965
  %969 = vset.pattern.permute.xlu0 0
  %970 = vperm.xlu0 %969, %v899
  %v971 = vpop.permute.xlu0 %970
  %974 = vset.pattern.permute.xlu0 0
  %975 = vperm.xlu0 %974, %v900
  %v976 = vpop.permute.xlu0 %975
  %979 = vset.pattern.permute.xlu0 0
  %980 = vperm.xlu0 %979, %v901
  %v981 = vpop.permute.xlu0 %980
  %984 = vset.pattern.permute.xlu0 0
  %985 = vperm.xlu0 %984, %v902
  %v986 = vpop.permute.xlu0 %985
  %989 = vset.pattern.permute.xlu0 0
  %990 = vperm.xlu0 %989, %v903
  %v991 = vpop.permute.xlu0 %990
  %994 = vset.pattern.permute.xlu0 0
  %995 = vperm.xlu0 %994, %v904
  %v996 = vpop.permute.xlu0 %995
  %999 = vset.pattern.permute.xlu0 0
  %1000 = vperm.xlu0 %999, %v905
  %v1001 = vpop.permute.xlu0 %1000
  %1004 = vset.pattern.permute.xlu0 0
  %1005 = vperm.xlu0 %1004, %v906
  %v1006 = vpop.permute.xlu0 %1005
  %1009 = vset.pattern.permute.xlu0 0
  %1010 = vperm.xlu0 %1009, %v907
  %v1011 = vpop.permute.xlu0 %1010
  %1014 = vset.pattern.permute.xlu0 0
  %1015 = vperm.xlu0 %1014, %v908
  %v1016 = vpop.permute.xlu0 %1015
  %1019 = vset.pattern.permute.xlu0 0
  %1020 = vperm.xlu0 %1019, %v909
  %v1021 = vpop.permute.xlu0 %1020
  %1024 = vset.pattern.permute.xlu0 0
  %1025 = vperm.xlu0 %1024, %v910
  %v1026 = vpop.permute.xlu0 %1025
  %1029 = vset.pattern.permute.xlu0 0
  %1030 = vperm.xlu0 %1029, %v911
  %v1031 = vpop.permute.xlu0 %1030
  %1034 = vset.pattern.permute.xlu0 0
  %1035 = vperm.xlu0 %1034, %v912
  %v1036 = vpop.permute.xlu0 %1035
  %v1038 = vmul.f32 %v838, %v916
  %v1039 = vmul.f32 %v839, %v921
  %v1040 = vmul.f32 %v840, %v926
  %v1041 = vmul.f32 %v841, %v931
  %v1042 = vmul.f32 %v842, %v936
  %v1043 = vmul.f32 %v843, %v941
  %v1044 = vmul.f32 %v844, %v946
  %v1045 = vmul.f32 %v845, %v951
  %v1046 = vmul.f32 %v846, %v956
  %v1047 = vmul.f32 %v847, %v961
  %v1048 = vmul.f32 %v848, %v966
  %v1049 = vmul.f32 %v849, %v971
  %v1050 = vmul.f32 %v850, %v976
  %v1051 = vmul.f32 %v851, %v981
  %v1052 = vmul.f32 %v852, %v986
  %v1053 = vmul.f32 %v853, %v991
  %v1054 = vmul.f32 %v854, %v996
  %v1055 = vmul.f32 %v855, %v1001
  %v1056 = vmul.f32 %v856, %v1006
  %v1057 = vmul.f32 %v857, %v1011
  %v1058 = vmul.f32 %v858, %v1016
  %v1059 = vmul.f32 %v859, %v1021
  %v1060 = vmul.f32 %v860, %v1026
  %v1061 = vmul.f32 %v861, %v1031
  %v1062 = vmul.f32 %v862, %v1036
  %v1063 = vadd.f32 %v1038, %v1039
  %v1064 = vadd.f32 %v1063, %v1040
  %v1065 = vadd.f32 %v1064, %v1041
  %v1066 = vadd.f32 %v1065, %v1042
  %v1067 = vadd.f32 %v1066, %v1043
  %v1068 = vadd.f32 %v1067, %v1044
  %v1069 = vadd.f32 %v1068, %v1045
  %v1070 = vadd.f32 %v1069, %v1046
  %v1071 = vadd.f32 %v1070, %v1047
  %v1072 = vadd.f32 %v1071, %v1048
  %v1073 = vadd.f32 %v1072, %v1049
  %v1074 = vadd.f32 %v1073, %v1050
  %v1075 = vadd.f32 %v1074, %v1051
  %v1076 = vadd.f32 %v1075, %v1052
  %v1077 = vadd.f32 %v1076, %v1053
  %v1078 = vadd.f32 %v1077, %v1054
  %v1079 = vadd.f32 %v1078, %v1055
  %v1080 = vadd.f32 %v1079, %v1056
  %v1081 = vadd.f32 %v1080, %v1057
  %v1082 = vadd.f32 %v1081, %v1058
  %v1083 = vadd.f32 %v1082, %v1059
  %v1084 = vadd.f32 %v1083, %v1060
  %v1085 = vadd.f32 %v1084, %v1061
  %v1086 = vadd.f32 %v1085, %v1062
  %v1087 = vrot.slane %v1086, 4
  %v1088 = vadd.f32 %v1086, %v1087
  %v1089 = vrot.slane %v1088, 2
  %v1090 = vadd.f32 %v1088, %v1089
  %v1091 = vrot.slane %v1090, 1
  %v1092 = vadd.f32 %v1090, %v1091
  %1093 = vst [vmem:[%s6] sm:$0x1] %v1092
  %v1094 = vmul.f32 %v1038, %v1038
  %v1095 = vmul.f32 %v1039, %v1039
  %v1096 = vmul.f32 %v1040, %v1040
  %v1097 = vmul.f32 %v1041, %v1041
  %v1098 = vmul.f32 %v1042, %v1042
  %v1099 = vmul.f32 %v1043, %v1043
  %v1100 = vmul.f32 %v1044, %v1044
  %v1101 = vmul.f32 %v1045, %v1045
  %v1102 = vmul.f32 %v1046, %v1046
  %v1103 = vmul.f32 %v1047, %v1047
  %v1104 = vmul.f32 %v1048, %v1048
  %v1105 = vmul.f32 %v1049, %v1049
  %v1106 = vmul.f32 %v1050, %v1050
  %v1107 = vmul.f32 %v1051, %v1051
  %v1108 = vmul.f32 %v1052, %v1052
  %v1109 = vmul.f32 %v1053, %v1053
  %v1110 = vmul.f32 %v1054, %v1054
  %v1111 = vmul.f32 %v1055, %v1055
  %v1112 = vmul.f32 %v1056, %v1056
  %v1113 = vmul.f32 %v1057, %v1057
  %v1114 = vmul.f32 %v1058, %v1058
  %v1115 = vmul.f32 %v1059, %v1059
  %v1116 = vmul.f32 %v1060, %v1060
  %v1117 = vmul.f32 %v1061, %v1061
  %v1118 = vmul.f32 %v1062, %v1062
  %v1119 = vadd.f32 %v1094, %v1095
  %v1120 = vadd.f32 %v1119, %v1096
  %v1121 = vadd.f32 %v1120, %v1097
  %v1122 = vadd.f32 %v1121, %v1098
  %v1123 = vadd.f32 %v1122, %v1099
  %v1124 = vadd.f32 %v1123, %v1100
  %v1125 = vadd.f32 %v1124, %v1101
  %v1126 = vadd.f32 %v1125, %v1102
  %v1127 = vadd.f32 %v1126, %v1103
  %v1128 = vadd.f32 %v1127, %v1104
  %v1129 = vadd.f32 %v1128, %v1105
  %v1130 = vadd.f32 %v1129, %v1106
  %v1131 = vadd.f32 %v1130, %v1107
  %v1132 = vadd.f32 %v1131, %v1108
  %v1133 = vadd.f32 %v1132, %v1109
  %v1134 = vadd.f32 %v1133, %v1110
  %v1135 = vadd.f32 %v1134, %v1111
  %v1136 = vadd.f32 %v1135, %v1112
  %v1137 = vadd.f32 %v1136, %v1113
  %v1138 = vadd.f32 %v1137, %v1114
  %v1139 = vadd.f32 %v1138, %v1115
  %v1140 = vadd.f32 %v1139, %v1116
  %v1141 = vadd.f32 %v1140, %v1117
  %v1142 = vadd.f32 %v1141, %v1118
  %v1143 = vrot.slane %v1142, 4
  %v1144 = vadd.f32 %v1142, %v1143
  %v1145 = vrot.slane %v1144, 2
  %v1146 = vadd.f32 %v1144, %v1145
  %v1147 = vrot.slane %v1146, 1
  %v1148 = vadd.f32 %v1146, %v1147
  %1149 = vst [vmem:[%s7] sm:$0x1] %v1148
  // Predicated region
  $region22: #{dndqn_forward.13} parent=0 // pred_check
    _
  $region23: #{dndqn_forward.13} parent=0 // pred_check_branch
    %1151 = sbr.rel (0) target = $region25
  $region24: #{dndqn_forward.13} parent=0 // pred_region
    _
  $region25: #{dndqn_forward.13} parent=0 // pred_fallthru
    _
  // Predicated region
  $region26: #{dndqn_forward.13} parent=0 // pred_check
    _
  $region27: #{dndqn_forward.13} parent=0 // pred_check_branch
    %1153 = sbr.rel (0) target = $region29
  $region28: #{dndqn_forward.13} parent=0 // pred_region
    _
  $region29: #{dndqn_forward.13} parent=0 // pred_fallthru
    _
  // Predicated region
  $region30: #{dndqn_forward.13} parent=0 // pred_check
    _
  $region31: #{dndqn_forward.13} parent=0 // pred_check_branch
    %1155 = sbr.rel (0) target = $region33
  $region32: #{dndqn_forward.13} parent=0 // pred_region
    _
  $region33: #{dndqn_forward.13} parent=0 // pred_fallthru
    _
  // Predicated region
  $region34: #{dndqn_forward.13} parent=0 // pred_check
    _
  $region35: #{dndqn_forward.13} parent=0 // pred_check_branch
    %1157 = sbr.rel (0) target = $region37
  $region36: #{dndqn_forward.13} parent=0 // pred_region
    _
  $region37: #{dndqn_forward.13} parent=0 // pred_fallthru
    _
  // Predicated region
  $region38: #{dndqn_forward.13} parent=0 // pred_check
    _
  $region39: #{dndqn_forward.13} parent=0 // pred_check_branch
    %1159 = sbr.rel (0) target = $region41
  $region40: #{dndqn_forward.13} parent=0 // pred_region
    _
  $region41: #{dndqn_forward.13} parent=0 // pred_fallthru
    _
  // Predicated region
  $region42: #{dndqn_forward.13} parent=0 // pred_check
    _
  $region43: #{dndqn_forward.13} parent=0 // pred_check_branch
    %1161 = sbr.rel (0) target = $region45
  $region44: #{dndqn_forward.13} parent=0 // pred_region
    _
  $region45: #{dndqn_forward.13} parent=0 // pred_fallthru
    _

// kernel: dndqn_forward.14
$region0: #{dndqn_forward.14}
  #allocation0 [shape = 'u32[]', space=smem, size = 0x4, offset = 0x4, fixed_abs, tag = 'smem constant byte address 0x4 - core index']
  #allocation1 [shape = 'u32[144,128]{1,0:T(1,128)}', space=vmem, size = 0x12000, scoped, tag = 'internal scratch']
  %s0 = inlined_call_operand.vmem [shape: f32[32,128], index: 0, kind: input, shape index: {}]
  %s1 = inlined_call_operand.vmem [shape: f32[1,128], index: 1, kind: input, shape index: {}]
  %s2 = inlined_call_operand.vmem [shape: f32[1,128], index: 2, kind: input, shape index: {}]
  %s3 = inlined_call_operand.vmem [shape: bf16[128,128], index: 3, kind: input, shape index: {}]
  %s4 = inlined_call_operand.vmem [shape: f32[32,128], index: 4, kind: output, shape index: {0}]
  %s5 = inlined_call_operand.vmem [shape: f32[1,128], index: 5, kind: output, shape index: {1}]
  %s6 = inlined_call_operand.vmem [shape: f32[1,128], index: 6, kind: output, shape index: {2}]
  %7 = xla_tuple %s4, %s5, %s6
  %s8 = sld [smem:[#allocation0]]
  $region50: #{dndqn_forward.14} parent=0
    _
  %s10 = ssub.s32 1, %s8
  %s11 = scalar_select 0, %s10, %s8
  // Predicated region
  $region2: #{dndqn_forward.14} parent=0 // pred_check
    _
  $region3: #{dndqn_forward.14} parent=0 // pred_check_branch
    %13 = sbr.rel (0) target = $region5
  $region4: #{dndqn_forward.14} parent=0 // pred_region
    _
  $region5: #{dndqn_forward.14} parent=0 // pred_fallthru
    _
  // Predicated region
  $region6: #{dndqn_forward.14} parent=0 // pred_check
    _
  $region7: #{dndqn_forward.14} parent=0 // pred_check_branch
    %15 = sbr.rel (0) target = $region9
  $region8: #{dndqn_forward.14} parent=0 // pred_region
    _
  $region9: #{dndqn_forward.14} parent=0 // pred_fallthru
    _
  // Predicated region
  $region10: #{dndqn_forward.14} parent=0 // pred_check
    _
  $region11: #{dndqn_forward.14} parent=0 // pred_check_branch
    %17 = sbr.rel (0) target = $region13
  $region12: #{dndqn_forward.14} parent=0 // pred_region
    _
  $region13: #{dndqn_forward.14} parent=0 // pred_fallthru
    _
  // Predicated region
  $region14: #{dndqn_forward.14} parent=0 // pred_check
    _
  $region15: #{dndqn_forward.14} parent=0 // pred_check_branch
    %19 = sbr.rel (0) target = $region17
  $region16: #{dndqn_forward.14} parent=0 // pred_region
    _
  $region17: #{dndqn_forward.14} parent=0 // pred_fallthru
    _
  %p21 = scmp.eq.s32.totalorder 0, 0
  // Predicated region
  $region18: #{dndqn_forward.14} parent=0 // pred_check
    %p22 = pneg %p21
  $region19: #{dndqn_forward.14} parent=0 // pred_check_branch
    %24 = sbr.rel (%p22) target = $region21
  $region20: #{dndqn_forward.14} parent=0 // pred_region
    %25 = vst [vmem:[%s4] sm:$0xff] 0.0
    %26 = vst [vmem:[%s4 + $0x8] sm:$0xff] 0.0
    %27 = vst [vmem:[%s4 + $0x10] sm:$0xff] 0.0
    %28 = vst [vmem:[%s4 + $0x18] sm:$0xff] 0.0
  $region21: #{dndqn_forward.14} parent=0 // pred_fallthru
    _
  %v29 = vld [vmem:[%s0] sm:$0xff]
  %v30 = vld [vmem:[%s0 + $0x8] sm:$0xff]
  %v31 = vld [vmem:[%s0 + $0x10] sm:$0xff]
  %v32 = vld [vmem:[%s0 + $0x18] sm:$0xff]
  %v33 = vld [vmem:[%s1] sm:$0x1]
  %v35 = vlaneseq
  %v36 = vshrl.u32 %v35, 7
  %v37 = vsub.s32 0, %v36
  %v38 = vrot.slane %v33, %v37
  %v40 = vmul.f32 %v29, %v38
  %v41 = vmul.f32 %v30, %v38
  %v42 = vmul.f32 %v31, %v38
  %v43 = vmul.f32 %v32, %v38
  %v44 = vld [vmem:[%s2] sm:$0x1]
  %v46 = vlaneseq
  %v47 = vshrl.u32 %v46, 7
  %v48 = vsub.s32 0, %v47
  %v49 = vrot.slane %v44, %v48
  %v51 = vadd.f32 %v40, %v49
  %v52 = vadd.f32 %v41, %v49
  %v53 = vadd.f32 %v42, %v49
  %v54 = vadd.f32 %v43, %v49
  %v55 = vmax.f32 %v51, 0.0
  %v56 = vmax.f32 %v52, 0.0
  %v57 = vmax.f32 %v53, 0.0
  %v58 = vmax.f32 %v54, 0.0
  %v59 = vld [vmem:[%s4] sm:$0xff]
  %v60 = vld [vmem:[%s4 + $0x8] sm:$0xff]
  %v61 = vld [vmem:[%s4 + $0x10] sm:$0xff]
  %v62 = vld [vmem:[%s4 + $0x18] sm:$0xff]
  %v63 = vpack.c.bf16 %v56, %v55
  %v64 = vpack.c.bf16 %v58, %v57
  %v65 = vld [vmem:[%s3] sm:$0xf]
  %v66 = vld [vmem:[%s3 + $0x4] sm:$0xf]
  %v67 = vld [vmem:[%s3 + $0x8] sm:$0xf]
  %v68 = vld [vmem:[%s3 + $0xc] sm:$0xf]
  %v69 = vld [vmem:[%s3 + $0x10] sm:$0xf]
  %v70 = vld [vmem:[%s3 + $0x14] sm:$0xf]
  %v71 = vld [vmem:[%s3 + $0x18] sm:$0xf]
  %v72 = vld [vmem:[%s3 + $0x1c] sm:$0xf]
  %v73 = vld [vmem:[%s3 + $0x20] sm:$0xf]
  %v74 = vld [vmem:[%s3 + $0x24] sm:$0xf]
  %v75 = vld [vmem:[%s3 + $0x28] sm:$0xf]
  %v76 = vld [vmem:[%s3 + $0x2c] sm:$0xf]
  %v77 = vld [vmem:[%s3 + $0x30] sm:$0xf]
  %v78 = vld [vmem:[%s3 + $0x34] sm:$0xf]
  %v79 = vld [vmem:[%s3 + $0x38] sm:$0xf]
  %v80 = vld [vmem:[%s3 + $0x3c] sm:$0xf]
  %v97 = vunpack.c.l.b16 %v65
  %v98 = vunpack.c.l.b16 %v66
  %v99 = vunpack.c.l.b16 %v67
  %v100 = vunpack.c.l.b16 %v68
  %v101 = vunpack.c.l.b16 %v69
  %v102 = vunpack.c.l.b16 %v70
  %v103 = vunpack.c.l.b16 %v71
  %v104 = vunpack.c.l.b16 %v72
  %v105 = vunpack.c.l.b16 %v73
  %v106 = vunpack.c.l.b16 %v74
  %v107 = vunpack.c.l.b16 %v75
  %v108 = vunpack.c.l.b16 %v76
  %v109 = vunpack.c.l.b16 %v77
  %v110 = vunpack.c.l.b16 %v78
  %v111 = vunpack.c.l.b16 %v79
  %v112 = vunpack.c.l.b16 %v80
  %v113 = vpack.c.b16 %v98, %v97
  %v114 = vpack.c.b16 %v100, %v99
  %v115 = vpack.c.b16 %v102, %v101
  %v116 = vpack.c.b16 %v104, %v103
  %v117 = vpack.c.b16 %v106, %v105
  %v118 = vpack.c.b16 %v108, %v107
  %v119 = vpack.c.b16 %v110, %v109
  %v120 = vpack.c.b16 %v112, %v111
  %129 = vmatprep.subr.bf16.mxu0 0
  %130 = vmatpush1.bf16.msra.mxu0 %v120
  %131 = vmatprep.subr.bf16.mxu0 0
  %132 = vmatpush1.bf16.msra.mxu0 %v119
  %133 = vmatprep.subr.bf16.mxu0 0
  %134 = vmatpush1.bf16.msra.mxu0 %v118
  %135 = vmatprep.subr.bf16.mxu0 0
  %136 = vmatpush1.bf16.msra.mxu0 %v117
  %137 = vmatprep.subr.bf16.mxu0 0
  %138 = vmatpush1.bf16.msra.mxu0 %v116
  %139 = vmatprep.subr.bf16.mxu0 0
  %140 = vmatpush1.bf16.msra.mxu0 %v115
  %141 = vmatprep.subr.bf16.mxu0 0
  %142 = vmatpush1.bf16.msra.mxu0 %v114
  %143 = vmatprep.subr.bf16.mxu0 0
  %144 = vmatpush1.bf16.msra.mxu0 %v113
  %145 = vmatprep.subr.bf16.mxu0 0
  %146 = vmatpush2.bf16.msra.mxu0 0
  %147 = vmatprep.subr.bf16.mxu0 0
  %148 = vmatpush2.bf16.msra.mxu0 0
  %149 = vmatprep.subr.bf16.mxu0 0
  %150 = vmatpush2.bf16.msra.mxu0 0
  %151 = vmatprep.subr.bf16.mxu0 0
  %152 = vmatpush2.bf16.msra.mxu0 0
  %153 = vmatprep.subr.bf16.mxu0 0
  %154 = vmatpush2.bf16.msra.mxu0 0
  %155 = vmatprep.subr.bf16.mxu0 0
  %156 = vmatpush2.bf16.msra.mxu0 0
  %157 = vmatprep.subr.bf16.mxu0 0
  %158 = vmatpush2.bf16.msra.mxu0 0
  %159 = vmatprep.subr.bf16.mxu0 0
  %160 = vmatpush2.bf16.msra.mxu0 0
  %161 = vmatprep.mubr.bf16.mxu0 0
  %162 = vmatmul.mubr.bf16.gmra.mxu0 %v63
  %v163 = vpop.f32.mrf.mxu0
  %v164 = vadd.f32 0.0, %v163
  %v165 = vpop.f32.mrf.mxu0
  %v166 = vpop.f32.mrf.mxu0
  %v167 = vadd.f32 0.0, %v166
  %v168 = vpop.f32.mrf.mxu0
  %169 = vmatprep.mubr.bf16.mxu0 0
  %170 = vmatmul.mubr.bf16.gmra.mxu0 %v64
  %v171 = vpop.f32.mrf.mxu0
  %v172 = vadd.f32 0.0, %v171
  %v173 = vpop.f32.mrf.mxu0
  %v174 = vpop.f32.mrf.mxu0
  %v175 = vadd.f32 0.0, %v174
  %v176 = vpop.f32.mrf.mxu0
  %177 = vdwg.mxu0
  %v178 = vadd.f32 %v59, %v164
  %v179 = vadd.f32 %v60, %v167
  %v180 = vadd.f32 %v61, %v172
  %v181 = vadd.f32 %v62, %v175
  %182 = vst [vmem:[%s4] sm:$0xff] %v178
  %183 = vst [vmem:[%s4 + $0x8] sm:$0xff] %v179
  %184 = vst [vmem:[%s4 + $0x10] sm:$0xff] %v180
  %185 = vst [vmem:[%s4 + $0x18] sm:$0xff] %v181
  // Predicated region
  $region22: #{dndqn_forward.14} parent=0 // pred_check
    %p186 = pneg %p21
  $region23: #{dndqn_forward.14} parent=0 // pred_check_branch
    %188 = sbr.rel (%p186) target = $region25
  $region24: #{dndqn_forward.14} parent=0 // pred_region
    %v189 = vld [vmem:[%s4] sm:$0xff]
    %v190 = vld [vmem:[%s4 + $0x8] sm:$0xff]
    %v191 = vld [vmem:[%s4 + $0x10] sm:$0xff]
    %v192 = vld [vmem:[%s4 + $0x18] sm:$0xff]
    %v193 = vadd.f32 %v189, %v190
    %v194 = vadd.f32 %v193, %v191
    %v195 = vadd.f32 %v194, %v192
    %v196 = vrot.slane %v195, 4
    %v197 = vadd.f32 %v195, %v196
    %v198 = vrot.slane %v197, 2
    %v199 = vadd.f32 %v197, %v198
    %v200 = vrot.slane %v199, 1
    %v201 = vadd.f32 %v199, %v200
    %202 = vst [vmem:[%s5] sm:$0x1] %v201
    %v203 = vmul.f32 %v189, %v189
    %v204 = vmul.f32 %v190, %v190
    %v205 = vmul.f32 %v191, %v191
    %v206 = vmul.f32 %v192, %v192
    %v207 = vadd.f32 %v203, %v204
    %v208 = vadd.f32 %v207, %v205
    %v209 = vadd.f32 %v208, %v206
    %v210 = vrot.slane %v209, 4
    %v211 = vadd.f32 %v209, %v210
    %v212 = vrot.slane %v211, 2
    %v213 = vadd.f32 %v211, %v212
    %v214 = vrot.slane %v213, 1
    %v215 = vadd.f32 %v213, %v214
    %216 = vst [vmem:[%s6] sm:$0x1] %v215
  $region25: #{dndqn_forward.14} parent=0 // pred_fallthru
    _
  // Predicated region
  $region26: #{dndqn_forward.14} parent=0 // pred_check
    _
  $region27: #{dndqn_forward.14} parent=0 // pred_check_branch
    %218 = sbr.rel (0) target = $region29
  $region28: #{dndqn_forward.14} parent=0 // pred_region
    _
  $region29: #{dndqn_forward.14} parent=0 // pred_fallthru
    _
  // Predicated region
  $region30: #{dndqn_forward.14} parent=0 // pred_check
    _
  $region31: #{dndqn_forward.14} parent=0 // pred_check_branch
    %220 = sbr.rel (0) target = $region33
  $region32: #{dndqn_forward.14} parent=0 // pred_region
    _
  $region33: #{dndqn_forward.14} parent=0 // pred_fallthru
    _
  // Predicated region
  $region34: #{dndqn_forward.14} parent=0 // pred_check
    _
  $region35: #{dndqn_forward.14} parent=0 // pred_check_branch
    %222 = sbr.rel (0) target = $region37
  $region36: #{dndqn_forward.14} parent=0 // pred_region
    _
  $region37: #{dndqn_forward.14} parent=0 // pred_fallthru
    _
  // Predicated region
  $region38: #{dndqn_forward.14} parent=0 // pred_check
    _
  $region39: #{dndqn_forward.14} parent=0 // pred_check_branch
    %224 = sbr.rel (0) target = $region41
  $region40: #{dndqn_forward.14} parent=0 // pred_region
    _
  $region41: #{dndqn_forward.14} parent=0 // pred_fallthru
    _
  // Predicated region
  $region42: #{dndqn_forward.14} parent=0 // pred_check
    _
  $region43: #{dndqn_forward.14} parent=0 // pred_check_branch
    %226 = sbr.rel (0) target = $region45
  $region44: #{dndqn_forward.14} parent=0 // pred_region
    _
  $region45: #{dndqn_forward.14} parent=0 // pred_fallthru
    _
  // Predicated region
  $region46: #{dndqn_forward.14} parent=0 // pred_check
    _
  $region47: #{dndqn_forward.14} parent=0 // pred_check_branch
    %228 = sbr.rel (0) target = $region49
  $region48: #{dndqn_forward.14} parent=0 // pred_region
    _
  $region49: #{dndqn_forward.14} parent=0 // pred_fallthru
    _

// kernel: dndqn_forward.18
$region0: #{dndqn_forward.18}
  #allocation0 [shape = 'u32[]', space=smem, size = 0x4, offset = 0x4, fixed_abs, tag = 'smem constant byte address 0x4 - core index']
  #allocation1 [shape = 'u32[144,128]{1,0:T(1,128)}', space=vmem, size = 0x12000, scoped, tag = 'internal scratch']
  %s0 = inlined_call_operand.vmem [shape: f32[32,128], index: 0, kind: input, shape index: {}]
  %s1 = inlined_call_operand.vmem [shape: f32[1,128], index: 1, kind: input, shape index: {}]
  %s2 = inlined_call_operand.vmem [shape: f32[1,128], index: 2, kind: input, shape index: {}]
  %s3 = inlined_call_operand.vmem [shape: f32[8,32], index: 3, kind: input, shape index: {}]
  %s4 = inlined_call_operand.vmem [shape: bf16[128,128], index: 4, kind: input, shape index: {}]
  %s5 = inlined_call_operand.vmem [shape: f32[8,128], index: 5, kind: output, shape index: {0}]
  %s6 = inlined_call_operand.vmem [shape: f32[1,128], index: 6, kind: output, shape index: {1}]
  %s7 = inlined_call_operand.vmem [shape: f32[1,128], index: 7, kind: output, shape index: {2}]
  %8 = xla_tuple %s5, %s6, %s7
  %s9 = sld [smem:[#allocation0]]
  $region46: #{dndqn_forward.18} parent=0
    _
  %s11 = ssub.s32 1, %s9
  %s12 = scalar_select 0, %s11, %s9
  // Predicated region
  $region2: #{dndqn_forward.18} parent=0 // pred_check
    _
  $region3: #{dndqn_forward.18} parent=0 // pred_check_branch
    %14 = sbr.rel (0) target = $region5
  $region4: #{dndqn_forward.18} parent=0 // pred_region
    _
  $region5: #{dndqn_forward.18} parent=0 // pred_fallthru
    _
  // Predicated region
  $region6: #{dndqn_forward.18} parent=0 // pred_check
    _
  $region7: #{dndqn_forward.18} parent=0 // pred_check_branch
    %16 = sbr.rel (0) target = $region9
  $region8: #{dndqn_forward.18} parent=0 // pred_region
    _
  $region9: #{dndqn_forward.18} parent=0 // pred_fallthru
    _
  // Predicated region
  $region10: #{dndqn_forward.18} parent=0 // pred_check
    _
  $region11: #{dndqn_forward.18} parent=0 // pred_check_branch
    %18 = sbr.rel (0) target = $region13
  $region12: #{dndqn_forward.18} parent=0 // pred_region
    _
  $region13: #{dndqn_forward.18} parent=0 // pred_fallthru
    _
  // Predicated region
  $region14: #{dndqn_forward.18} parent=0 // pred_check
    _
  $region15: #{dndqn_forward.18} parent=0 // pred_check_branch
    %20 = sbr.rel (0) target = $region17
  $region16: #{dndqn_forward.18} parent=0 // pred_region
    _
  $region17: #{dndqn_forward.18} parent=0 // pred_fallthru
    _
  // Predicated region
  $region18: #{dndqn_forward.18} parent=0 // pred_check
    _
  $region19: #{dndqn_forward.18} parent=0 // pred_check_branch
    %22 = sbr.rel (0) target = $region21
  $region20: #{dndqn_forward.18} parent=0 // pred_region
    _
  $region21: #{dndqn_forward.18} parent=0 // pred_fallthru
    _
  %v24 = vld [vmem:[%s0] sm:$0xff]
  %v25 = vld [vmem:[%s0 + $0x8] sm:$0xff]
  %v26 = vld [vmem:[%s0 + $0x10] sm:$0xff]
  %v27 = vld [vmem:[%s0 + $0x18] sm:$0xff]
  %v28 = vld [vmem:[%s1] sm:$0x1]
  %v30 = vlaneseq
  %v31 = vshrl.u32 %v30, 7
  %v32 = vsub.s32 0, %v31
  %v33 = vrot.slane %v28, %v32
  %v35 = vmul.f32 %v24, %v33
  %v36 = vmul.f32 %v25, %v33
  %v37 = vmul.f32 %v26, %v33
  %v38 = vmul.f32 %v27, %v33
  %v39 = vld [vmem:[%s2] sm:$0x1]
  %v41 = vlaneseq
  %v42 = vshrl.u32 %v41, 7
  %v43 = vsub.s32 0, %v42
  %v44 = vrot.slane %v39, %v43
  %v46 = vadd.f32 %v35, %v44
  %v47 = vadd.f32 %v36, %v44
  %v48 = vadd.f32 %v37, %v44
  %v49 = vadd.f32 %v38, %v44
  %v50 = vmax.f32 %v46, 0.0
  %v51 = vmax.f32 %v47, 0.0
  %v52 = vmax.f32 %v48, 0.0
  %v53 = vmax.f32 %v49, 0.0
  %v54 = vld [vmem:[%s3] sm:$0xff]
  %vm55 = vcmask 261120
  %v57 = vsel %vm55, %v54, 0
  %59 = vmatprep.subr.mxu0 0.0
  %60 = vmatpush1.msra.mxu0 0.0
  %61 = vmatprep.subr.mxu0 0.0
  %62 = vmatpush1.msra.mxu0 0.0
  %63 = vmatprep.subr.mxu0 0.0
  %64 = vmatpush1.msra.mxu0 0.0
  %65 = vmatprep.subr.mxu0 0.0
  %66 = vmatpush1.msra.mxu0 0.0
  %67 = vmatprep.subr.mxu0 0.0
  %68 = vmatpush1.msra.mxu0 0.0
  %69 = vmatprep.subr.mxu0 0.0
  %70 = vmatpush1.msra.mxu0 0.0
  %71 = vmatprep.subr.mxu0 0.0
  %72 = vmatpush1.msra.mxu0 0.0
  %73 = vmatprep.subr.mxu0 0.0
  %74 = vmatpush1.msra.mxu0 0.0
  %75 = vmatprep.subr.mxu0 0.0
  %76 = vmatpush1.msra.mxu0 0.0
  %77 = vmatprep.subr.mxu0 0.0
  %78 = vmatpush1.msra.mxu0 0.0
  %79 = vmatprep.subr.mxu0 0.0
  %80 = vmatpush1.msra.mxu0 0.0
  %81 = vmatprep.subr.mxu0 0.0
  %82 = vmatpush1.msra.mxu0 0.0
  %83 = vmatprep.subr.mxu0 0.0
  %84 = vmatpush1.msra.mxu0 %v53
  %85 = vmatprep.subr.mxu0 0.0
  %86 = vmatpush1.msra.mxu0 %v52
  %87 = vmatprep.subr.mxu0 0.0
  %88 = vmatpush1.msra.mxu0 %v51
  %89 = vmatprep.subr.mxu0 0.0
  %90 = vmatpush1.msra.mxu0 %v50
  %91 = vmatprep.subr.mxu0 0.0
  %92 = vmatpush2.msra.mxu0 0.0
  %93 = vmatprep.subr.mxu0 0.0
  %94 = vmatpush2.msra.mxu0 0.0
  %95 = vmatprep.subr.mxu0 0.0
  %96 = vmatpush2.msra.mxu0 0.0
  %97 = vmatprep.subr.mxu0 0.0
  %98 = vmatpush2.msra.mxu0 0.0
  %99 = vmatprep.subr.mxu0 0.0
  %100 = vmatpush2.msra.mxu0 0.0
  %101 = vmatprep.subr.mxu0 0.0
  %102 = vmatpush2.msra.mxu0 0.0
  %103 = vmatprep.subr.mxu0 0.0
  %104 = vmatpush2.msra.mxu0 0.0
  %105 = vmatprep.subr.mxu0 0.0
  %106 = vmatpush2.msra.mxu0 0.0
  %107 = vmatprep.subr.mxu0 0.0
  %108 = vmatpush2.msra.mxu0 0.0
  %109 = vmatprep.subr.mxu0 0.0
  %110 = vmatpush2.msra.mxu0 0.0
  %111 = vmatprep.subr.mxu0 0.0
  %112 = vmatpush2.msra.mxu0 0.0
  %113 = vmatprep.subr.mxu0 0.0
  %114 = vmatpush2.msra.mxu0 0.0
  %115 = vmatprep.subr.mxu0 0.0
  %116 = vmatpush2.msra.mxu0 0.0
  %117 = vmatprep.subr.mxu0 0.0
  %118 = vmatpush2.msra.mxu0 0.0
  %119 = vmatprep.subr.mxu0 0.0
  %120 = vmatpush2.msra.mxu0 0.0
  %121 = vmatprep.subr.mxu0 0.0
  %122 = vmatpush2.msra.mxu0 0.0
  %123 = vmatprep.mubr.f32.mxu0 0.0
  %124 = vmatmul.mubr.f32.gmra.mxu0 %v57
  %v125 = vpop.f32.mrf.mxu0
  %v126 = vadd.f32 0.0, %v125
  %v127 = vpop.f32.mrf.mxu0
  %128 = vdwg.mxu0
  %v129 = vpack.c.bf16 %v126, %v126
  %v130 = vld [vmem:[%s4] sm:$0xf]
  %v131 = vld [vmem:[%s4 + $0x4] sm:$0xf]
  %v132 = vld [vmem:[%s4 + $0x8] sm:$0xf]
  %v133 = vld [vmem:[%s4 + $0xc] sm:$0xf]
  %v134 = vld [vmem:[%s4 + $0x10] sm:$0xf]
  %v135 = vld [vmem:[%s4 + $0x14] sm:$0xf]
  %v136 = vld [vmem:[%s4 + $0x18] sm:$0xf]
  %v137 = vld [vmem:[%s4 + $0x1c] sm:$0xf]
  %v138 = vld [vmem:[%s4 + $0x20] sm:$0xf]
  %v139 = vld [vmem:[%s4 + $0x24] sm:$0xf]
  %v140 = vld [vmem:[%s4 + $0x28] sm:$0xf]
  %v141 = vld [vmem:[%s4 + $0x2c] sm:$0xf]
  %v142 = vld [vmem:[%s4 + $0x30] sm:$0xf]
  %v143 = vld [vmem:[%s4 + $0x34] sm:$0xf]
  %v144 = vld [vmem:[%s4 + $0x38] sm:$0xf]
  %v145 = vld [vmem:[%s4 + $0x3c] sm:$0xf]
  %v162 = vunpack.c.l.b16 %v130
  %v163 = vunpack.c.l.b16 %v131
  %v164 = vunpack.c.l.b16 %v132
  %v165 = vunpack.c.l.b16 %v133
  %v166 = vunpack.c.l.b16 %v134
  %v167 = vunpack.c.l.b16 %v135
  %v168 = vunpack.c.l.b16 %v136
  %v169 = vunpack.c.l.b16 %v137
  %v170 = vunpack.c.l.b16 %v138
  %v171 = vunpack.c.l.b16 %v139
  %v172 = vunpack.c.l.b16 %v140
  %v173 = vunpack.c.l.b16 %v141
  %v174 = vunpack.c.l.b16 %v142
  %v175 = vunpack.c.l.b16 %v143
  %v176 = vunpack.c.l.b16 %v144
  %v177 = vunpack.c.l.b16 %v145
  %v178 = vpack.c.b16 %v163, %v162
  %v179 = vpack.c.b16 %v165, %v164
  %v180 = vpack.c.b16 %v167, %v166
  %v181 = vpack.c.b16 %v169, %v168
  %v182 = vpack.c.b16 %v171, %v170
  %v183 = vpack.c.b16 %v173, %v172
  %v184 = vpack.c.b16 %v175, %v174
  %v185 = vpack.c.b16 %v177, %v176
  %194 = vmatprep.subr.bf16.mxu0 0
  %195 = vmatpush1.bf16.msra.mxu0 %v185
  %196 = vmatprep.subr.bf16.mxu0 0
  %197 = vmatpush1.bf16.msra.mxu0 %v184
  %198 = vmatprep.subr.bf16.mxu0 0
  %199 = vmatpush1.bf16.msra.mxu0 %v183
  %200 = vmatprep.subr.bf16.mxu0 0
  %201 = vmatpush1.bf16.msra.mxu0 %v182
  %202 = vmatprep.subr.bf16.mxu0 0
  %203 = vmatpush1.bf16.msra.mxu0 %v181
  %204 = vmatprep.subr.bf16.mxu0 0
  %205 = vmatpush1.bf16.msra.mxu0 %v180
  %206 = vmatprep.subr.bf16.mxu0 0
  %207 = vmatpush1.bf16.msra.mxu0 %v179
  %208 = vmatprep.subr.bf16.mxu0 0
  %209 = vmatpush1.bf16.msra.mxu0 %v178
  %210 = vmatprep.subr.bf16.mxu0 0
  %211 = vmatpush2.bf16.msra.mxu0 0
  %212 = vmatprep.subr.bf16.mxu0 0
  %213 = vmatpush2.bf16.msra.mxu0 0
  %214 = vmatprep.subr.bf16.mxu0 0
  %215 = vmatpush2.bf16.msra.mxu0 0
  %216 = vmatprep.subr.bf16.mxu0 0
  %217 = vmatpush2.bf16.msra.mxu0 0
  %218 = vmatprep.subr.bf16.mxu0 0
  %219 = vmatpush2.bf16.msra.mxu0 0
  %220 = vmatprep.subr.bf16.mxu0 0
  %221 = vmatpush2.bf16.msra.mxu0 0
  %222 = vmatprep.subr.bf16.mxu0 0
  %223 = vmatpush2.bf16.msra.mxu0 0
  %224 = vmatprep.subr.bf16.mxu0 0
  %225 = vmatpush2.bf16.msra.mxu0 0
  %226 = vmatprep.mubr.bf16.mxu0 0
  %227 = vmatmul.mubr.bf16.gmra.mxu0 %v129
  %v228 = vpop.f32.mrf.mxu0
  %v229 = vadd.f32 0.0, %v228
  %v230 = vpop.f32.mrf.mxu0
  %v231 = vpop.f32.mrf.mxu0
  %v232 = vpop.f32.mrf.mxu0
  %233 = vdwg.mxu0
  %234 = vst [vmem:[%s5] sm:$0xff] %v229
  %v235 = vrot.slane %v229, 4
  %v236 = vadd.f32 %v229, %v235
  %v237 = vrot.slane %v236, 2
  %v238 = vadd.f32 %v236, %v237
  %v239 = vrot.slane %v238, 1
  %v240 = vadd.f32 %v238, %v239
  %241 = vst [vmem:[%s6] sm:$0x1] %v240
  %v242 = vmul.f32 %v229, %v229
  %v243 = vrot.slane %v242, 4
  %v244 = vadd.f32 %v242, %v243
  %v245 = vrot.slane %v244, 2
  %v246 = vadd.f32 %v244, %v245
  %v247 = vrot.slane %v246, 1
  %v248 = vadd.f32 %v246, %v247
  %249 = vst [vmem:[%s7] sm:$0x1] %v248
  // Predicated region
  $region22: #{dndqn_forward.18} parent=0 // pred_check
    _
  $region23: #{dndqn_forward.18} parent=0 // pred_check_branch
    %251 = sbr.rel (0) target = $region25
  $region24: #{dndqn_forward.18} parent=0 // pred_region
    _
  $region25: #{dndqn_forward.18} parent=0 // pred_fallthru
    _
  // Predicated region
  $region26: #{dndqn_forward.18} parent=0 // pred_check
    _
  $region27: #{dndqn_forward.18} parent=0 // pred_check_branch
    %253 = sbr.rel (0) target = $region29
  $region28: #{dndqn_forward.18} parent=0 // pred_region
    _
  $region29: #{dndqn_forward.18} parent=0 // pred_fallthru
    _
  // Predicated region
  $region30: #{dndqn_forward.18} parent=0 // pred_check
    _
  $region31: #{dndqn_forward.18} parent=0 // pred_check_branch
    %255 = sbr.rel (0) target = $region33
  $region32: #{dndqn_forward.18} parent=0 // pred_region
    _
  $region33: #{dndqn_forward.18} parent=0 // pred_fallthru
    _
  // Predicated region
  $region34: #{dndqn_forward.18} parent=0 // pred_check
    _
  $region35: #{dndqn_forward.18} parent=0 // pred_check_branch
    %257 = sbr.rel (0) target = $region37
  $region36: #{dndqn_forward.18} parent=0 // pred_region
    _
  $region37: #{dndqn_forward.18} parent=0 // pred_fallthru
    _
  // Predicated region
  $region38: #{dndqn_forward.18} parent=0 // pred_check
    _
  $region39: #{dndqn_forward.18} parent=0 // pred_check_branch
    %259 = sbr.rel (0) target = $region41
  $region40: #{dndqn_forward.18} parent=0 // pred_region
    _
  $region41: #{dndqn_forward.18} parent=0 // pred_fallthru
    _
  // Predicated region
  $region42: #{dndqn_forward.18} parent=0 // pred_check
    _
  $region43: #{dndqn_forward.18} parent=0 // pred_check_branch
    %261 = sbr.rel (0) target = $region45
  $region44: #{dndqn_forward.18} parent=0 // pred_region
    _
  $region45: #{dndqn_forward.18} parent=0 // pred_fallthru
    _

// kernel: dndqn_forward.19
$region0: #{dndqn_forward.19}
  #allocation0 [shape = 'u32[]', space=smem, size = 0x4, offset = 0x4, fixed_abs, tag = 'smem constant byte address 0x4 - core index']
  #allocation1 [shape = 'u32[144,128]{1,0:T(1,128)}', space=vmem, size = 0x12000, scoped, tag = 'internal scratch']
  %s0 = inlined_call_operand.vmem [shape: f32[8,128], index: 0, kind: input, shape index: {}]
  %s1 = inlined_call_operand.vmem [shape: f32[1,128], index: 1, kind: input, shape index: {}]
  %s2 = inlined_call_operand.vmem [shape: f32[1,128], index: 2, kind: input, shape index: {}]
  %s3 = inlined_call_operand.vmem [shape: bf16[128,128], index: 3, kind: input, shape index: {}]
  %s4 = inlined_call_operand.vmem [shape: f32[8,128], index: 4, kind: output, shape index: {0}]
  %s5 = inlined_call_operand.vmem [shape: f32[1,128], index: 5, kind: output, shape index: {1}]
  %s6 = inlined_call_operand.vmem [shape: f32[1,128], index: 6, kind: output, shape index: {2}]
  %7 = xla_tuple %s4, %s5, %s6
  %s8 = sld [smem:[#allocation0]]
  $region50: #{dndqn_forward.19} parent=0
    _
  %s10 = ssub.s32 1, %s8
  %s11 = scalar_select 0, %s10, %s8
  // Predicated region
  $region2: #{dndqn_forward.19} parent=0 // pred_check
    _
  $region3: #{dndqn_forward.19} parent=0 // pred_check_branch
    %13 = sbr.rel (0) target = $region5
  $region4: #{dndqn_forward.19} parent=0 // pred_region
    _
  $region5: #{dndqn_forward.19} parent=0 // pred_fallthru
    _
  // Predicated region
  $region6: #{dndqn_forward.19} parent=0 // pred_check
    _
  $region7: #{dndqn_forward.19} parent=0 // pred_check_branch
    %15 = sbr.rel (0) target = $region9
  $region8: #{dndqn_forward.19} parent=0 // pred_region
    _
  $region9: #{dndqn_forward.19} parent=0 // pred_fallthru
    _
  // Predicated region
  $region10: #{dndqn_forward.19} parent=0 // pred_check
    _
  $region11: #{dndqn_forward.19} parent=0 // pred_check_branch
    %17 = sbr.rel (0) target = $region13
  $region12: #{dndqn_forward.19} parent=0 // pred_region
    _
  $region13: #{dndqn_forward.19} parent=0 // pred_fallthru
    _
  // Predicated region
  $region14: #{dndqn_forward.19} parent=0 // pred_check
    _
  $region15: #{dndqn_forward.19} parent=0 // pred_check_branch
    %19 = sbr.rel (0) target = $region17
  $region16: #{dndqn_forward.19} parent=0 // pred_region
    _
  $region17: #{dndqn_forward.19} parent=0 // pred_fallthru
    _
  %p21 = scmp.eq.s32.totalorder 0, 0
  // Predicated region
  $region18: #{dndqn_forward.19} parent=0 // pred_check
    %p22 = pneg %p21
  $region19: #{dndqn_forward.19} parent=0 // pred_check_branch
    %24 = sbr.rel (%p22) target = $region21
  $region20: #{dndqn_forward.19} parent=0 // pred_region
    %25 = vst [vmem:[%s4] sm:$0xff] 0.0
  $region21: #{dndqn_forward.19} parent=0 // pred_fallthru
    _
  %v26 = vld [vmem:[%s0] sm:$0xff]
  %v27 = vld [vmem:[%s1] sm:$0x1]
  %v29 = vlaneseq
  %v30 = vshrl.u32 %v29, 7
  %v31 = vsub.s32 0, %v30
  %v32 = vrot.slane %v27, %v31
  %v34 = vmul.f32 %v26, %v32
  %v35 = vld [vmem:[%s2] sm:$0x1]
  %v37 = vlaneseq
  %v38 = vshrl.u32 %v37, 7
  %v39 = vsub.s32 0, %v38
  %v40 = vrot.slane %v35, %v39
  %v42 = vadd.f32 %v34, %v40
  %v43 = vmax.f32 %v42, 0.0
  %v44 = vld [vmem:[%s4] sm:$0xff]
  %v45 = vpack.c.bf16 %v43, %v43
  %v46 = vld [vmem:[%s3] sm:$0xf]
  %v47 = vld [vmem:[%s3 + $0x4] sm:$0xf]
  %v48 = vld [vmem:[%s3 + $0x8] sm:$0xf]
  %v49 = vld [vmem:[%s3 + $0xc] sm:$0xf]
  %v50 = vld [vmem:[%s3 + $0x10] sm:$0xf]
  %v51 = vld [vmem:[%s3 + $0x14] sm:$0xf]
  %v52 = vld [vmem:[%s3 + $0x18] sm:$0xf]
  %v53 = vld [vmem:[%s3 + $0x1c] sm:$0xf]
  %v54 = vld [vmem:[%s3 + $0x20] sm:$0xf]
  %v55 = vld [vmem:[%s3 + $0x24] sm:$0xf]
  %v56 = vld [vmem:[%s3 + $0x28] sm:$0xf]
  %v57 = vld [vmem:[%s3 + $0x2c] sm:$0xf]
  %v58 = vld [vmem:[%s3 + $0x30] sm:$0xf]
  %v59 = vld [vmem:[%s3 + $0x34] sm:$0xf]
  %v60 = vld [vmem:[%s3 + $0x38] sm:$0xf]
  %v61 = vld [vmem:[%s3 + $0x3c] sm:$0xf]
  %v78 = vunpack.c.l.b16 %v46
  %v79 = vunpack.c.l.b16 %v47
  %v80 = vunpack.c.l.b16 %v48
  %v81 = vunpack.c.l.b16 %v49
  %v82 = vunpack.c.l.b16 %v50
  %v83 = vunpack.c.l.b16 %v51
  %v84 = vunpack.c.l.b16 %v52
  %v85 = vunpack.c.l.b16 %v53
  %v86 = vunpack.c.l.b16 %v54
  %v87 = vunpack.c.l.b16 %v55
  %v88 = vunpack.c.l.b16 %v56
  %v89 = vunpack.c.l.b16 %v57
  %v90 = vunpack.c.l.b16 %v58
  %v91 = vunpack.c.l.b16 %v59
  %v92 = vunpack.c.l.b16 %v60
  %v93 = vunpack.c.l.b16 %v61
  %v94 = vpack.c.b16 %v79, %v78
  %v95 = vpack.c.b16 %v81, %v80
  %v96 = vpack.c.b16 %v83, %v82
  %v97 = vpack.c.b16 %v85, %v84
  %v98 = vpack.c.b16 %v87, %v86
  %v99 = vpack.c.b16 %v89, %v88
  %v100 = vpack.c.b16 %v91, %v90
  %v101 = vpack.c.b16 %v93, %v92
  %110 = vmatprep.subr.bf16.mxu0 0
  %111 = vmatpush1.bf16.msra.mxu0 %v101
  %112 = vmatprep.subr.bf16.mxu0 0
  %113 = vmatpush1.bf16.msra.mxu0 %v100
  %114 = vmatprep.subr.bf16.mxu0 0
  %115 = vmatpush1.bf16.msra.mxu0 %v99
  %116 = vmatprep.subr.bf16.mxu0 0
  %117 = vmatpush1.bf16.msra.mxu0 %v98
  %118 = vmatprep.subr.bf16.mxu0 0
  %119 = vmatpush1.bf16.msra.mxu0 %v97
  %120 = vmatprep.subr.bf16.mxu0 0
  %121 = vmatpush1.bf16.msra.mxu0 %v96
  %122 = vmatprep.subr.bf16.mxu0 0
  %123 = vmatpush1.bf16.msra.mxu0 %v95
  %124 = vmatprep.subr.bf16.mxu0 0
  %125 = vmatpush1.bf16.msra.mxu0 %v94
  %126 = vmatprep.subr.bf16.mxu0 0
  %127 = vmatpush2.bf16.msra.mxu0 0
  %128 = vmatprep.subr.bf16.mxu0 0
  %129 = vmatpush2.bf16.msra.mxu0 0
  %130 = vmatprep.subr.bf16.mxu0 0
  %131 = vmatpush2.bf16.msra.mxu0 0
  %132 = vmatprep.subr.bf16.mxu0 0
  %133 = vmatpush2.bf16.msra.mxu0 0
  %134 = vmatprep.subr.bf16.mxu0 0
  %135 = vmatpush2.bf16.msra.mxu0 0
  %136 = vmatprep.subr.bf16.mxu0 0
  %137 = vmatpush2.bf16.msra.mxu0 0
  %138 = vmatprep.subr.bf16.mxu0 0
  %139 = vmatpush2.bf16.msra.mxu0 0
  %140 = vmatprep.subr.bf16.mxu0 0
  %141 = vmatpush2.bf16.msra.mxu0 0
  %142 = vmatprep.mubr.bf16.mxu0 0
  %143 = vmatmul.mubr.bf16.gmra.mxu0 %v45
  %v144 = vpop.f32.mrf.mxu0
  %v145 = vadd.f32 0.0, %v144
  %v146 = vpop.f32.mrf.mxu0
  %v147 = vpop.f32.mrf.mxu0
  %v148 = vpop.f32.mrf.mxu0
  %149 = vdwg.mxu0
  %v150 = vadd.f32 %v44, %v145
  %151 = vst [vmem:[%s4] sm:$0xff] %v150
  // Predicated region
  $region22: #{dndqn_forward.19} parent=0 // pred_check
    %p152 = pneg %p21
  $region23: #{dndqn_forward.19} parent=0 // pred_check_branch
    %154 = sbr.rel (%p152) target = $region25
  $region24: #{dndqn_forward.19} parent=0 // pred_region
    %v155 = vld [vmem:[%s4] sm:$0xff]
    %v156 = vrot.slane %v155, 4
    %v157 = vadd.f32 %v155, %v156
    %v158 = vrot.slane %v157, 2
    %v159 = vadd.f32 %v157, %v158
    %v160 = vrot.slane %v159, 1
    %v161 = vadd.f32 %v159, %v160
    %162 = vst [vmem:[%s5] sm:$0x1] %v161
    %v163 = vmul.f32 %v155, %v155
    %v164 = vrot.slane %v163, 4
    %v165 = vadd.f32 %v163, %v164
    %v166 = vrot.slane %v165, 2
    %v167 = vadd.f32 %v165, %v166
    %v168 = vrot.slane %v167, 1
    %v169 = vadd.f32 %v167, %v168
    %170 = vst [vmem:[%s6] sm:$0x1] %v169
  $region25: #{dndqn_forward.19} parent=0 // pred_fallthru
    _
  // Predicated region
  $region26: #{dndqn_forward.19} parent=0 // pred_check
    _
  $region27: #{dndqn_forward.19} parent=0 // pred_check_branch
    %172 = sbr.rel (0) target = $region29
  $region28: #{dndqn_forward.19} parent=0 // pred_region
    _
  $region29: #{dndqn_forward.19} parent=0 // pred_fallthru
    _
  // Predicated region
  $region30: #{dndqn_forward.19} parent=0 // pred_check
    _
  $region31: #{dndqn_forward.19} parent=0 // pred_check_branch
    %174 = sbr.rel (0) target = $region33
  $region32: #{dndqn_forward.19} parent=0 // pred_region
    _
  $region33: #{dndqn_forward.19} parent=0 // pred_fallthru
    _
  // Predicated region
  $region34: #{dndqn_forward.19} parent=0 // pred_check
    _
  $region35: #{dndqn_forward.19} parent=0 // pred_check_branch
    %176 = sbr.rel (0) target = $region37
  $region36: #{dndqn_forward.19} parent=0 // pred_region
    _
  $region37: #{dndqn_forward.19} parent=0 // pred_fallthru
    _
  // Predicated region
  $region38: #{dndqn_forward.19} parent=0 // pred_check
    _
  $region39: #{dndqn_forward.19} parent=0 // pred_check_branch
    %178 = sbr.rel (0) target = $region41
  $region40: #{dndqn_forward.19} parent=0 // pred_region
    _
  $region41: #{dndqn_forward.19} parent=0 // pred_fallthru
    _
  // Predicated region
  $region42: #{dndqn_forward.19} parent=0 // pred_check
    _
  $region43: #{dndqn_forward.19} parent=0 // pred_check_branch
    %180 = sbr.rel (0) target = $region45
  $region44: #{dndqn_forward.19} parent=0 // pred_region
    _
  $region45: #{dndqn_forward.19} parent=0 // pred_fallthru
    _
  // Predicated region
  $region46: #{dndqn_forward.19} parent=0 // pred_check
    _
  $region47: #{dndqn_forward.19} parent=0 // pred_check_branch
    %182 = sbr.rel (0) target = $region49
  $region48: #{dndqn_forward.19} parent=0 // pred_region
    _
  $region49: #{dndqn_forward.19} parent=0 // pred_fallthru
    _

// kernel: dndqn_forward.15
$region0: #{dndqn_forward.15}
  #allocation0 [shape = 'u32[]', space=smem, size = 0x4, offset = 0x4, fixed_abs, tag = 'smem constant byte address 0x4 - core index']
  #allocation1 [shape = 'u32[144,128]{1,0:T(1,128)}', space=vmem, size = 0x12000, scoped, tag = 'internal scratch']
  %s0 = inlined_call_operand.vmem [shape: f32[88,128], index: 0, kind: input, shape index: {}]
  %s1 = inlined_call_operand.vmem [shape: f32[88,1], index: 1, kind: input, shape index: {}]
  %s2 = inlined_call_operand.vmem [shape: f32[72,1], index: 2, kind: input, shape index: {}]
  %s3 = inlined_call_operand.vmem [shape: f32[1,128], index: 3, kind: input, shape index: {}]
  %s4 = inlined_call_operand.vmem [shape: f32[1,128], index: 4, kind: input, shape index: {}]
  %s5 = inlined_call_operand.vmem [shape: bf16[9,128,128], index: 5, kind: input, shape index: {}]
  %s6 = inlined_call_operand.vmem [shape: f32[72,128], index: 6, kind: output, shape index: {0}]
  %s7 = inlined_call_operand.vmem [shape: f32[1,128], index: 7, kind: output, shape index: {1}]
  %s8 = inlined_call_operand.vmem [shape: f32[1,128], index: 8, kind: output, shape index: {2}]
  %9 = xla_tuple %s6, %s7, %s8
  %s10 = sld [smem:[#allocation0]]
  $region50: #{dndqn_forward.15} parent=0
    _
  %s12 = ssub.s32 1, %s10
  %s13 = scalar_select 0, %s12, %s10
  // Predicated region
  $region2: #{dndqn_forward.15} parent=0 // pred_check
    _
  $region3: #{dndqn_forward.15} parent=0 // pred_check_branch
    %15 = sbr.rel (0) target = $region5
  $region4: #{dndqn_forward.15} parent=0 // pred_region
    _
  $region5: #{dndqn_forward.15} parent=0 // pred_fallthru
    _
  // Predicated region
  $region6: #{dndqn_forward.15} parent=0 // pred_check
    _
  $region7: #{dndqn_forward.15} parent=0 // pred_check_branch
    %17 = sbr.rel (0) target = $region9
  $region8: #{dndqn_forward.15} parent=0 // pred_region
    _
  $region9: #{dndqn_forward.15} parent=0 // pred_fallthru
    _
  // Predicated region
  $region10: #{dndqn_forward.15} parent=0 // pred_check
    _
  $region11: #{dndqn_forward.15} parent=0 // pred_check_branch
    %19 = sbr.rel (0) target = $region13
  $region12: #{dndqn_forward.15} parent=0 // pred_region
    _
  $region13: #{dndqn_forward.15} parent=0 // pred_fallthru
    _
  // Predicated region
  $region14: #{dndqn_forward.15} parent=0 // pred_check
    _
  $region15: #{dndqn_forward.15} parent=0 // pred_check_branch
    %21 = sbr.rel (0) target = $region17
  $region16: #{dndqn_forward.15} parent=0 // pred_region
    _
  $region17: #{dndqn_forward.15} parent=0 // pred_fallthru
    _
  // Predicated region
  $region18: #{dndqn_forward.15} parent=0 // pred_check
    _
  $region19: #{dndqn_forward.15} parent=0 // pred_check_branch
    %23 = sbr.rel (0) target = $region21
  $region20: #{dndqn_forward.15} parent=0 // pred_region
    _
  $region21: #{dndqn_forward.15} parent=0 // pred_fallthru
    _
  // Predicated region
  $region22: #{dndqn_forward.15} parent=0 // pred_check
    _
  $region23: #{dndqn_forward.15} parent=0 // pred_check_branch
    %25 = sbr.rel (0) target = $region25
  $region24: #{dndqn_forward.15} parent=0 // pred_region
    _
  $region25: #{dndqn_forward.15} parent=0 // pred_fallthru
    _
  %v27 = vld [vmem:[%s0] sm:$0xff]
  %v28 = vld [vmem:[%s0 + $0x8] sm:$0xff]
  %v29 = vld [vmem:[%s0 + $0x10] sm:$0xff]
  %v30 = vld [vmem:[%s0 + $0x18] sm:$0xff]
  %v31 = vld [vmem:[%s0 + $0x20] sm:$0xff]
  %v32 = vld [vmem:[%s0 + $0x28] sm:$0xff]
  %v33 = vld [vmem:[%s0 + $0x30] sm:$0xff]
  %v34 = vld [vmem:[%s0 + $0x38] sm:$0xff]
  %v35 = vld [vmem:[%s0 + $0x40] sm:$0xff]
  %v36 = vld [vmem:[%s0 + $0x48] sm:$0xff]
  %v37 = vld [vmem:[%s0 + $0x50] sm:$0xff]
  %v38 = vld [vmem:[%s3] sm:$0x1]
  %v40 = vlaneseq
  %v41 = vshrl.u32 %v40, 7
  %v42 = vsub.s32 0, %v41
  %v43 = vrot.slane %v38, %v42
  %v45 = vmul.f32 %v27, %v43
  %v46 = vmul.f32 %v28, %v43
  %v47 = vmul.f32 %v29, %v43
  %v48 = vmul.f32 %v30, %v43
  %v49 = vmul.f32 %v31, %v43
  %v50 = vmul.f32 %v32, %v43
  %v51 = vmul.f32 %v33, %v43
  %v52 = vmul.f32 %v34, %v43
  %v53 = vmul.f32 %v35, %v43
  %v54 = vmul.f32 %v36, %v43
  %v55 = vmul.f32 %v37, %v43
  %v56 = vld [vmem:[%s4] sm:$0x1]
  %v58 = vlaneseq
  %v59 = vshrl.u32 %v58, 7
  %v60 = vsub.s32 0, %v59
  %v61 = vrot.slane %v56, %v60
  %v63 = vadd.f32 %v45, %v61
  %v64 = vadd.f32 %v46, %v61
  %v65 = vadd.f32 %v47, %v61
  %v66 = vadd.f32 %v48, %v61
  %v67 = vadd.f32 %v49, %v61
  %v68 = vadd.f32 %v50, %v61
  %v69 = vadd.f32 %v51, %v61
  %v70 = vadd.f32 %v52, %v61
  %v71 = vadd.f32 %v53, %v61
  %v72 = vadd.f32 %v54, %v61
  %v73 = vadd.f32 %v55, %v61
  %v74 = vmax.f32 %v63, 0.0
  %v75 = vmax.f32 %v64, 0.0
  %v76 = vmax.f32 %v65, 0.0
  %v77 = vmax.f32 %v66, 0.0
  %v78 = vmax.f32 %v67, 0.0
  %v79 = vmax.f32 %v68, 0.0
  %v80 = vmax.f32 %v69, 0.0
  %v81 = vmax.f32 %v70, 0.0
  %v82 = vmax.f32 %v71, 0.0
  %v83 = vmax.f32 %v72, 0.0
  %v84 = vmax.f32 %v73, 0.0
  %v85 = vld [vmem:[%s1] sm:$0xff]
  %v86 = vld [vmem:[%s1 + $0x8] sm:$0xff]
  %v87 = vld [vmem:[%s1 + $0x10] sm:$0xff]
  %v88 = vld [vmem:[%s1 + $0x18] sm:$0xff]
  %v89 = vld [vmem:[%s1 + $0x20] sm:$0xff]
  %v90 = vld [vmem:[%s1 + $0x28] sm:$0xff]
  %v91 = vld [vmem:[%s1 + $0x30] sm:$0xff]
  %v92 = vld [vmem:[%s1 + $0x38] sm:$0xff]
  %v93 = vld [vmem:[%s1 + $0x40] sm:$0xff]
  %v94 = vld [vmem:[%s1 + $0x48] sm:$0xff]
  %v95 = vld [vmem:[%s1 + $0x50] sm:$0xff]
  %97 = vset.pattern.permute.xlu0 0
  %98 = vperm.xlu0 %97, %v85
  %v99 = vpop.permute.xlu0 %98
  %102 = vset.pattern.permute.xlu0 0
  %103 = vperm.xlu0 %102, %v86
  %v104 = vpop.permute.xlu0 %103
  %107 = vset.pattern.permute.xlu0 0
  %108 = vperm.xlu0 %107, %v87
  %v109 = vpop.permute.xlu0 %108
  %112 = vset.pattern.permute.xlu0 0
  %113 = vperm.xlu0 %112, %v88
  %v114 = vpop.permute.xlu0 %113
  %117 = vset.pattern.permute.xlu0 0
  %118 = vperm.xlu0 %117, %v89
  %v119 = vpop.permute.xlu0 %118
  %122 = vset.pattern.permute.xlu0 0
  %123 = vperm.xlu0 %122, %v90
  %v124 = vpop.permute.xlu0 %123
  %127 = vset.pattern.permute.xlu0 0
  %128 = vperm.xlu0 %127, %v91
  %v129 = vpop.permute.xlu0 %128
  %132 = vset.pattern.permute.xlu0 0
  %133 = vperm.xlu0 %132, %v92
  %v134 = vpop.permute.xlu0 %133
  %137 = vset.pattern.permute.xlu0 0
  %138 = vperm.xlu0 %137, %v93
  %v139 = vpop.permute.xlu0 %138
  %142 = vset.pattern.permute.xlu0 0
  %143 = vperm.xlu0 %142, %v94
  %v144 = vpop.permute.xlu0 %143
  %147 = vset.pattern.permute.xlu0 0
  %148 = vperm.xlu0 %147, %v95
  %v149 = vpop.permute.xlu0 %148
  %v151 = vmul.f32 %v74, %v99
  %v152 = vmul.f32 %v75, %v104
  %v153 = vmul.f32 %v76, %v109
  %v154 = vmul.f32 %v77, %v114
  %v155 = vmul.f32 %v78, %v119
  %v156 = vmul.f32 %v79, %v124
  %v157 = vmul.f32 %v80, %v129
  %v158 = vmul.f32 %v81, %v134
  %v159 = vmul.f32 %v82, %v139
  %v160 = vmul.f32 %v83, %v144
  %v161 = vmul.f32 %v84, %v149
  %v162 = vpack.c.bf16 %v152, %v151
  %v163 = vpack.c.bf16 %v154, %v153
  %v164 = vpack.c.bf16 %v156, %v155
  %v165 = vpack.c.bf16 %v158, %v157
  %v166 = vpack.c.bf16 %v159, %v159
  %v167 = vld [vmem:[%s5] sm:$0xf]
  %v168 = vld [vmem:[%s5 + $0x4] sm:$0xf]
  %v169 = vld [vmem:[%s5 + $0x8] sm:$0xf]
  %v170 = vld [vmem:[%s5 + $0xc] sm:$0xf]
  %v171 = vld [vmem:[%s5 + $0x10] sm:$0xf]
  %v172 = vld [vmem:[%s5 + $0x14] sm:$0xf]
  %v173 = vld [vmem:[%s5 + $0x18] sm:$0xf]
  %v174 = vld [vmem:[%s5 + $0x1c] sm:$0xf]
  %v175 = vld [vmem:[%s5 + $0x20] sm:$0xf]
  %v176 = vld [vmem:[%s5 + $0x24] sm:$0xf]
  %v177 = vld [vmem:[%s5 + $0x28] sm:$0xf]
  %v178 = vld [vmem:[%s5 + $0x2c] sm:$0xf]
  %v179 = vld [vmem:[%s5 + $0x30] sm:$0xf]
  %v180 = vld [vmem:[%s5 + $0x34] sm:$0xf]
  %v181 = vld [vmem:[%s5 + $0x38] sm:$0xf]
  %v182 = vld [vmem:[%s5 + $0x3c] sm:$0xf]
  %v183 = vrot.slane %v151, 1
  %v184 = vrot.slane %v152, 1
  %v185 = vrot.slane %v153, 1
  %v186 = vrot.slane %v154, 1
  %v187 = vrot.slane %v155, 1
  %v188 = vrot.slane %v156, 1
  %v189 = vrot.slane %v157, 1
  %v190 = vrot.slane %v158, 1
  %v191 = vrot.slane %v159, 1
  %v192 = vrot.slane %v160, 1
  %v193 = vlaneseq
  %v194 = vshrl.u32 %v193, 7
  %vm195 = vcmp.lt.s32.totalorder %v194, 7
  %v196 = vsel %vm195, %v191, %v192
  %v197 = vsel %vm195, %v190, %v191
  %v198 = vsel %vm195, %v189, %v190
  %v199 = vsel %vm195, %v188, %v189
  %v200 = vsel %vm195, %v187, %v188
  %v201 = vsel %vm195, %v186, %v187
  %v202 = vsel %vm195, %v185, %v186
  %v203 = vsel %vm195, %v184, %v185
  %v204 = vsel %vm195, %v183, %v184
  %v205 = vpack.c.bf16 %v203, %v204
  %v206 = vpack.c.bf16 %v201, %v202
  %v207 = vpack.c.bf16 %v199, %v200
  %v208 = vpack.c.bf16 %v197, %v198
  %v209 = vpack.c.bf16 %v196, %v196
  %s210 = scalar_lea.vmem %s5, 64
  %v211 = vld [vmem:[%s210] sm:$0xf]
  %v212 = vld [vmem:[%s210 + $0x4] sm:$0xf]
  %v213 = vld [vmem:[%s210 + $0x8] sm:$0xf]
  %v214 = vld [vmem:[%s210 + $0xc] sm:$0xf]
  %v215 = vld [vmem:[%s210 + $0x10] sm:$0xf]
  %v216 = vld [vmem:[%s210 + $0x14] sm:$0xf]
  %v217 = vld [vmem:[%s210 + $0x18] sm:$0xf]
  %v218 = vld [vmem:[%s210 + $0x1c] sm:$0xf]
  %v219 = vld [vmem:[%s210 + $0x20] sm:$0xf]
  %v220 = vld [vmem:[%s210 + $0x24] sm:$0xf]
  %v221 = vld [vmem:[%s210 + $0x28] sm:$0xf]
  %v222 = vld [vmem:[%s210 + $0x2c] sm:$0xf]
  %v223 = vld [vmem:[%s210 + $0x30] sm:$0xf]
  %v224 = vld [vmem:[%s210 + $0x34] sm:$0xf]
  %v225 = vld [vmem:[%s210 + $0x38] sm:$0xf]
  %v226 = vld [vmem:[%s210 + $0x3c] sm:$0xf]
  %v243 = vunpack.c.l.b16 %v211
  %v244 = vunpack.c.l.b16 %v212
  %v245 = vunpack.c.l.b16 %v213
  %v246 = vunpack.c.l.b16 %v214
  %v247 = vunpack.c.l.b16 %v215
  %v248 = vunpack.c.l.b16 %v216
  %v249 = vunpack.c.l.b16 %v217
  %v250 = vunpack.c.l.b16 %v218
  %v251 = vunpack.c.l.b16 %v219
  %v252 = vunpack.c.l.b16 %v220
  %v253 = vunpack.c.l.b16 %v221
  %v254 = vunpack.c.l.b16 %v222
  %v255 = vunpack.c.l.b16 %v223
  %v256 = vunpack.c.l.b16 %v224
  %v257 = vunpack.c.l.b16 %v225
  %v258 = vunpack.c.l.b16 %v226
  %v259 = vpack.c.b16 %v244, %v243
  %v260 = vpack.c.b16 %v246, %v245
  %v261 = vpack.c.b16 %v248, %v247
  %v262 = vpack.c.b16 %v250, %v249
  %v263 = vpack.c.b16 %v252, %v251
  %v264 = vpack.c.b16 %v254, %v253
  %v265 = vpack.c.b16 %v256, %v255
  %v266 = vpack.c.b16 %v258, %v257
  %275 = vmatprep.subr.bf16.mxu0 0
  %276 = vmatpush1.bf16.msra.mxu0 %v266
  %277 = vmatprep.subr.bf16.mxu0 0
  %278 = vmatpush1.bf16.msra.mxu0 %v265
  %279 = vmatprep.subr.bf16.mxu0 0
  %280 = vmatpush1.bf16.msra.mxu0 %v264
  %281 = vmatprep.subr.bf16.mxu0 0
  %282 = vmatpush1.bf16.msra.mxu0 %v263
  %283 = vmatprep.subr.bf16.mxu0 0
  %284 = vmatpush1.bf16.msra.mxu0 %v262
  %285 = vmatprep.subr.bf16.mxu0 0
  %286 = vmatpush1.bf16.msra.mxu0 %v261
  %287 = vmatprep.subr.bf16.mxu0 0
  %288 = vmatpush1.bf16.msra.mxu0 %v260
  %289 = vmatprep.subr.bf16.mxu0 0
  %290 = vmatpush1.bf16.msra.mxu0 %v259
  %291 = vmatprep.subr.bf16.mxu0 0
  %292 = vmatpush2.bf16.msra.mxu0 0
  %293 = vmatprep.subr.bf16.mxu0 0
  %294 = vmatpush2.bf16.msra.mxu0 0
  %295 = vmatprep.subr.bf16.mxu0 0
  %296 = vmatpush2.bf16.msra.mxu0 0
  %297 = vmatprep.subr.bf16.mxu0 0
  %298 = vmatpush2.bf16.msra.mxu0 0
  %299 = vmatprep.subr.bf16.mxu0 0
  %300 = vmatpush2.bf16.msra.mxu0 0
  %301 = vmatprep.subr.bf16.mxu0 0
  %302 = vmatpush2.bf16.msra.mxu0 0
  %303 = vmatprep.subr.bf16.mxu0 0
  %304 = vmatpush2.bf16.msra.mxu0 0
  %305 = vmatprep.subr.bf16.mxu0 0
  %306 = vmatpush2.bf16.msra.mxu0 0
  %307 = vmatprep.mubr.bf16.mxu0 0
  %308 = vmatmul.mubr.bf16.gmra.mxu0 %v205
  %v309 = vpop.f32.mrf.mxu0
  %v310 = vadd.f32 0.0, %v309
  %v311 = vpop.f32.mrf.mxu0
  %v312 = vpop.f32.mrf.mxu0
  %v313 = vadd.f32 0.0, %v312
  %v314 = vpop.f32.mrf.mxu0
  %315 = vmatprep.mubr.bf16.mxu0 0
  %316 = vmatmul.mubr.bf16.gmra.mxu0 %v206
  %v317 = vpop.f32.mrf.mxu0
  %v318 = vadd.f32 0.0, %v317
  %v319 = vpop.f32.mrf.mxu0
  %v320 = vpop.f32.mrf.mxu0
  %v321 = vadd.f32 0.0, %v320
  %v322 = vpop.f32.mrf.mxu0
  %323 = vmatprep.mubr.bf16.mxu0 0
  %324 = vmatmul.mubr.bf16.gmra.mxu0 %v207
  %v325 = vpop.f32.mrf.mxu0
  %v326 = vadd.f32 0.0, %v325
  %v327 = vpop.f32.mrf.mxu0
  %v328 = vpop.f32.mrf.mxu0
  %v329 = vadd.f32 0.0, %v328
  %v330 = vpop.f32.mrf.mxu0
  %331 = vmatprep.mubr.bf16.mxu0 0
  %332 = vmatmul.mubr.bf16.gmra.mxu0 %v208
  %v333 = vpop.f32.mrf.mxu0
  %v334 = vadd.f32 0.0, %v333
  %v335 = vpop.f32.mrf.mxu0
  %v336 = vpop.f32.mrf.mxu0
  %v337 = vadd.f32 0.0, %v336
  %v338 = vpop.f32.mrf.mxu0
  %339 = vmatprep.mubr.bf16.mxu0 0
  %340 = vmatmul.mubr.bf16.gmra.mxu0 %v209
  %v341 = vpop.f32.mrf.mxu0
  %v342 = vadd.f32 0.0, %v341
  %v343 = vpop.f32.mrf.mxu0
  %v344 = vpop.f32.mrf.mxu0
  %v345 = vpop.f32.mrf.mxu0
  %346 = vdwg.mxu0
  %v363 = vunpack.c.l.b16 %v167
  %v364 = vunpack.c.l.b16 %v168
  %v365 = vunpack.c.l.b16 %v169
  %v366 = vunpack.c.l.b16 %v170
  %v367 = vunpack.c.l.b16 %v171
  %v368 = vunpack.c.l.b16 %v172
  %v369 = vunpack.c.l.b16 %v173
  %v370 = vunpack.c.l.b16 %v174
  %v371 = vunpack.c.l.b16 %v175
  %v372 = vunpack.c.l.b16 %v176
  %v373 = vunpack.c.l.b16 %v177
  %v374 = vunpack.c.l.b16 %v178
  %v375 = vunpack.c.l.b16 %v179
  %v376 = vunpack.c.l.b16 %v180
  %v377 = vunpack.c.l.b16 %v181
  %v378 = vunpack.c.l.b16 %v182
  %v379 = vpack.c.b16 %v364, %v363
  %v380 = vpack.c.b16 %v366, %v365
  %v381 = vpack.c.b16 %v368, %v367
  %v382 = vpack.c.b16 %v370, %v369
  %v383 = vpack.c.b16 %v372, %v371
  %v384 = vpack.c.b16 %v374, %v373
  %v385 = vpack.c.b16 %v376, %v375
  %v386 = vpack.c.b16 %v378, %v377
  %395 = vmatprep.subr.bf16.mxu0 0
  %396 = vmatpush1.bf16.msra.mxu0 %v386
  %397 = vmatprep.subr.bf16.mxu0 0
  %398 = vmatpush1.bf16.msra.mxu0 %v385
  %399 = vmatprep.subr.bf16.mxu0 0
  %400 = vmatpush1.bf16.msra.mxu0 %v384
  %401 = vmatprep.subr.bf16.mxu0 0
  %402 = vmatpush1.bf16.msra.mxu0 %v383
  %403 = vmatprep.subr.bf16.mxu0 0
  %404 = vmatpush1.bf16.msra.mxu0 %v382
  %405 = vmatprep.subr.bf16.mxu0 0
  %406 = vmatpush1.bf16.msra.mxu0 %v381
  %407 = vmatprep.subr.bf16.mxu0 0
  %408 = vmatpush1.bf16.msra.mxu0 %v380
  %409 = vmatprep.subr.bf16.mxu0 0
  %410 = vmatpush1.bf16.msra.mxu0 %v379
  %411 = vmatprep.subr.bf16.mxu0 0
  %412 = vmatpush2.bf16.msra.mxu0 0
  %413 = vmatprep.subr.bf16.mxu0 0
  %414 = vmatpush2.bf16.msra.mxu0 0
  %415 = vmatprep.subr.bf16.mxu0 0
  %416 = vmatpush2.bf16.msra.mxu0 0
  %417 = vmatprep.subr.bf16.mxu0 0
  %418 = vmatpush2.bf16.msra.mxu0 0
  %419 = vmatprep.subr.bf16.mxu0 0
  %420 = vmatpush2.bf16.msra.mxu0 0
  %421 = vmatprep.subr.bf16.mxu0 0
  %422 = vmatpush2.bf16.msra.mxu0 0
  %423 = vmatprep.subr.bf16.mxu0 0
  %424 = vmatpush2.bf16.msra.mxu0 0
  %425 = vmatprep.subr.bf16.mxu0 0
  %426 = vmatpush2.bf16.msra.mxu0 0
  %427 = vmatprep.mubr.bf16.mxu0 0
  %428 = vmatmul.mubr.bf16.gmra.mxu0 %v162
  %v429 = vpop.f32.mrf.mxu0
  %v430 = vadd.f32 %v310, %v429
  %v431 = vpop.f32.mrf.mxu0
  %v432 = vpop.f32.mrf.mxu0
  %v433 = vadd.f32 %v313, %v432
  %v434 = vpop.f32.mrf.mxu0
  %435 = vmatprep.mubr.bf16.mxu0 0
  %436 = vmatmul.mubr.bf16.gmra.mxu0 %v163
  %v437 = vpop.f32.mrf.mxu0
  %v438 = vadd.f32 %v318, %v437
  %v439 = vpop.f32.mrf.mxu0
  %v440 = vpop.f32.mrf.mxu0
  %v441 = vadd.f32 %v321, %v440
  %v442 = vpop.f32.mrf.mxu0
  %443 = vmatprep.mubr.bf16.mxu0 0
  %444 = vmatmul.mubr.bf16.gmra.mxu0 %v164
  %v445 = vpop.f32.mrf.mxu0
  %v446 = vadd.f32 %v326, %v445
  %v447 = vpop.f32.mrf.mxu0
  %v448 = vpop.f32.mrf.mxu0
  %v449 = vadd.f32 %v329, %v448
  %v450 = vpop.f32.mrf.mxu0
  %451 = vmatprep.mubr.bf16.mxu0 0
  %452 = vmatmul.mubr.bf16.gmra.mxu0 %v165
  %v453 = vpop.f32.mrf.mxu0
  %v454 = vadd.f32 %v334, %v453
  %v455 = vpop.f32.mrf.mxu0
  %v456 = vpop.f32.mrf.mxu0
  %v457 = vadd.f32 %v337, %v456
  %v458 = vpop.f32.mrf.mxu0
  %459 = vmatprep.mubr.bf16.mxu0 0
  %460 = vmatmul.mubr.bf16.gmra.mxu0 %v166
  %v461 = vpop.f32.mrf.mxu0
  %v462 = vadd.f32 %v342, %v461
  %v463 = vpop.f32.mrf.mxu0
  %v464 = vpop.f32.mrf.mxu0
  %v465 = vpop.f32.mrf.mxu0
  %466 = vdwg.mxu0
  %v467 = vrot.slane %v151, 2
  %v468 = vrot.slane %v152, 2
  %v469 = vrot.slane %v153, 2
  %v470 = vrot.slane %v154, 2
  %v471 = vrot.slane %v155, 2
  %v472 = vrot.slane %v156, 2
  %v473 = vrot.slane %v157, 2
  %v474 = vrot.slane %v158, 2
  %v475 = vrot.slane %v159, 2
  %v476 = vrot.slane %v160, 2
  %vm477 = vcmp.lt.s32.totalorder %v194, 6
  %v478 = vsel %vm477, %v475, %v476
  %v479 = vsel %vm477, %v474, %v475
  %v480 = vsel %vm477, %v473, %v474
  %v481 = vsel %vm477, %v472, %v473
  %v482 = vsel %vm477, %v471, %v472
  %v483 = vsel %vm477, %v470, %v471
  %v484 = vsel %vm477, %v469, %v470
  %v485 = vsel %vm477, %v468, %v469
  %v486 = vsel %vm477, %v467, %v468
  %v487 = vpack.c.bf16 %v485, %v486
  %v488 = vpack.c.bf16 %v483, %v484
  %v489 = vpack.c.bf16 %v481, %v482
  %v490 = vpack.c.bf16 %v479, %v480
  %v491 = vpack.c.bf16 %v478, %v478
  %s492 = scalar_lea.vmem %s5, 128
  %v493 = vld [vmem:[%s492] sm:$0xf]
  %v494 = vld [vmem:[%s492 + $0x4] sm:$0xf]
  %v495 = vld [vmem:[%s492 + $0x8] sm:$0xf]
  %v496 = vld [vmem:[%s492 + $0xc] sm:$0xf]
  %v497 = vld [vmem:[%s492 + $0x10] sm:$0xf]
  %v498 = vld [vmem:[%s492 + $0x14] sm:$0xf]
  %v499 = vld [vmem:[%s492 + $0x18] sm:$0xf]
  %v500 = vld [vmem:[%s492 + $0x1c] sm:$0xf]
  %v501 = vld [vmem:[%s492 + $0x20] sm:$0xf]
  %v502 = vld [vmem:[%s492 + $0x24] sm:$0xf]
  %v503 = vld [vmem:[%s492 + $0x28] sm:$0xf]
  %v504 = vld [vmem:[%s492 + $0x2c] sm:$0xf]
  %v505 = vld [vmem:[%s492 + $0x30] sm:$0xf]
  %v506 = vld [vmem:[%s492 + $0x34] sm:$0xf]
  %v507 = vld [vmem:[%s492 + $0x38] sm:$0xf]
  %v508 = vld [vmem:[%s492 + $0x3c] sm:$0xf]
  %v525 = vunpack.c.l.b16 %v493
  %v526 = vunpack.c.l.b16 %v494
  %v527 = vunpack.c.l.b16 %v495
  %v528 = vunpack.c.l.b16 %v496
  %v529 = vunpack.c.l.b16 %v497
  %v530 = vunpack.c.l.b16 %v498
  %v531 = vunpack.c.l.b16 %v499
  %v532 = vunpack.c.l.b16 %v500
  %v533 = vunpack.c.l.b16 %v501
  %v534 = vunpack.c.l.b16 %v502
  %v535 = vunpack.c.l.b16 %v503
  %v536 = vunpack.c.l.b16 %v504
  %v537 = vunpack.c.l.b16 %v505
  %v538 = vunpack.c.l.b16 %v506
  %v539 = vunpack.c.l.b16 %v507
  %v540 = vunpack.c.l.b16 %v508
  %v541 = vpack.c.b16 %v526, %v525
  %v542 = vpack.c.b16 %v528, %v527
  %v543 = vpack.c.b16 %v530, %v529
  %v544 = vpack.c.b16 %v532, %v531
  %v545 = vpack.c.b16 %v534, %v533
  %v546 = vpack.c.b16 %v536, %v535
  %v547 = vpack.c.b16 %v538, %v537
  %v548 = vpack.c.b16 %v540, %v539
  %557 = vmatprep.subr.bf16.mxu0 0
  %558 = vmatpush1.bf16.msra.mxu0 %v548
  %559 = vmatprep.subr.bf16.mxu0 0
  %560 = vmatpush1.bf16.msra.mxu0 %v547
  %561 = vmatprep.subr.bf16.mxu0 0
  %562 = vmatpush1.bf16.msra.mxu0 %v546
  %563 = vmatprep.subr.bf16.mxu0 0
  %564 = vmatpush1.bf16.msra.mxu0 %v545
  %565 = vmatprep.subr.bf16.mxu0 0
  %566 = vmatpush1.bf16.msra.mxu0 %v544
  %567 = vmatprep.subr.bf16.mxu0 0
  %568 = vmatpush1.bf16.msra.mxu0 %v543
  %569 = vmatprep.subr.bf16.mxu0 0
  %570 = vmatpush1.bf16.msra.mxu0 %v542
  %571 = vmatprep.subr.bf16.mxu0 0
  %572 = vmatpush1.bf16.msra.mxu0 %v541
  %573 = vmatprep.subr.bf16.mxu0 0
  %574 = vmatpush2.bf16.msra.mxu0 0
  %575 = vmatprep.subr.bf16.mxu0 0
  %576 = vmatpush2.bf16.msra.mxu0 0
  %577 = vmatprep.subr.bf16.mxu0 0
  %578 = vmatpush2.bf16.msra.mxu0 0
  %579 = vmatprep.subr.bf16.mxu0 0
  %580 = vmatpush2.bf16.msra.mxu0 0
  %581 = vmatprep.subr.bf16.mxu0 0
  %582 = vmatpush2.bf16.msra.mxu0 0
  %583 = vmatprep.subr.bf16.mxu0 0
  %584 = vmatpush2.bf16.msra.mxu0 0
  %585 = vmatprep.subr.bf16.mxu0 0
  %586 = vmatpush2.bf16.msra.mxu0 0
  %587 = vmatprep.subr.bf16.mxu0 0
  %588 = vmatpush2.bf16.msra.mxu0 0
  %589 = vmatprep.mubr.bf16.mxu0 0
  %590 = vmatmul.mubr.bf16.gmra.mxu0 %v487
  %v591 = vpop.f32.mrf.mxu0
  %v592 = vadd.f32 0.0, %v591
  %v593 = vpop.f32.mrf.mxu0
  %v594 = vpop.f32.mrf.mxu0
  %v595 = vadd.f32 0.0, %v594
  %v596 = vpop.f32.mrf.mxu0
  %597 = vmatprep.mubr.bf16.mxu0 0
  %598 = vmatmul.mubr.bf16.gmra.mxu0 %v488
  %v599 = vpop.f32.mrf.mxu0
  %v600 = vadd.f32 0.0, %v599
  %v601 = vpop.f32.mrf.mxu0
  %v602 = vpop.f32.mrf.mxu0
  %v603 = vadd.f32 0.0, %v602
  %v604 = vpop.f32.mrf.mxu0
  %605 = vmatprep.mubr.bf16.mxu0 0
  %606 = vmatmul.mubr.bf16.gmra.mxu0 %v489
  %v607 = vpop.f32.mrf.mxu0
  %v608 = vadd.f32 0.0, %v607
  %v609 = vpop.f32.mrf.mxu0
  %v610 = vpop.f32.mrf.mxu0
  %v611 = vadd.f32 0.0, %v610
  %v612 = vpop.f32.mrf.mxu0
  %613 = vmatprep.mubr.bf16.mxu0 0
  %614 = vmatmul.mubr.bf16.gmra.mxu0 %v490
  %v615 = vpop.f32.mrf.mxu0
  %v616 = vadd.f32 0.0, %v615
  %v617 = vpop.f32.mrf.mxu0
  %v618 = vpop.f32.mrf.mxu0
  %v619 = vadd.f32 0.0, %v618
  %v620 = vpop.f32.mrf.mxu0
  %621 = vmatprep.mubr.bf16.mxu0 0
  %622 = vmatmul.mubr.bf16.gmra.mxu0 %v491
  %v623 = vpop.f32.mrf.mxu0
  %v624 = vadd.f32 0.0, %v623
  %v625 = vpop.f32.mrf.mxu0
  %v626 = vpop.f32.mrf.mxu0
  %v627 = vpop.f32.mrf.mxu0
  %628 = vdwg.mxu0
  %v629 = vadd.f32 %v430, %v592
  %v630 = vadd.f32 %v433, %v595
  %v631 = vadd.f32 %v438, %v600
  %v632 = vadd.f32 %v441, %v603
  %v633 = vadd.f32 %v446, %v608
  %v634 = vadd.f32 %v449, %v611
  %v635 = vadd.f32 %v454, %v616
  %v636 = vadd.f32 %v457, %v619
  %v637 = vadd.f32 %v462, %v624
  %v638 = vrot.slane %v151, 6
  %v639 = vrot.slane %v152, 6
  %v640 = vrot.slane %v153, 6
  %v641 = vrot.slane %v154, 6
  %v642 = vrot.slane %v155, 6
  %v643 = vrot.slane %v156, 6
  %v644 = vrot.slane %v157, 6
  %v645 = vrot.slane %v158, 6
  %v646 = vrot.slane %v159, 6
  %v647 = vrot.slane %v160, 6
  %vm648 = vcmp.lt.s32.totalorder %v194, 2
  %v649 = vsel %vm648, %v646, %v647
  %v650 = vsel %vm648, %v645, %v646
  %v651 = vsel %vm648, %v644, %v645
  %v652 = vsel %vm648, %v643, %v644
  %v653 = vsel %vm648, %v642, %v643
  %v654 = vsel %vm648, %v641, %v642
  %v655 = vsel %vm648, %v640, %v641
  %v656 = vsel %vm648, %v639, %v640
  %v657 = vsel %vm648, %v638, %v639
  %v658 = vpack.c.bf16 %v656, %v657
  %v659 = vpack.c.bf16 %v654, %v655
  %v660 = vpack.c.bf16 %v652, %v653
  %v661 = vpack.c.bf16 %v650, %v651
  %v662 = vpack.c.bf16 %v649, %v649
  %s663 = scalar_lea.vmem %s5, 192
  %v664 = vld [vmem:[%s663] sm:$0xf]
  %v665 = vld [vmem:[%s663 + $0x4] sm:$0xf]
  %v666 = vld [vmem:[%s663 + $0x8] sm:$0xf]
  %v667 = vld [vmem:[%s663 + $0xc] sm:$0xf]
  %v668 = vld [vmem:[%s663 + $0x10] sm:$0xf]
  %v669 = vld [vmem:[%s663 + $0x14] sm:$0xf]
  %v670 = vld [vmem:[%s663 + $0x18] sm:$0xf]
  %v671 = vld [vmem:[%s663 + $0x1c] sm:$0xf]
  %v672 = vld [vmem:[%s663 + $0x20] sm:$0xf]
  %v673 = vld [vmem:[%s663 + $0x24] sm:$0xf]
  %v674 = vld [vmem:[%s663 + $0x28] sm:$0xf]
  %v675 = vld [vmem:[%s663 + $0x2c] sm:$0xf]
  %v676 = vld [vmem:[%s663 + $0x30] sm:$0xf]
  %v677 = vld [vmem:[%s663 + $0x34] sm:$0xf]
  %v678 = vld [vmem:[%s663 + $0x38] sm:$0xf]
  %v679 = vld [vmem:[%s663 + $0x3c] sm:$0xf]
  %v696 = vunpack.c.l.b16 %v664
  %v697 = vunpack.c.l.b16 %v665
  %v698 = vunpack.c.l.b16 %v666
  %v699 = vunpack.c.l.b16 %v667
  %v700 = vunpack.c.l.b16 %v668
  %v701 = vunpack.c.l.b16 %v669
  %v702 = vunpack.c.l.b16 %v670
  %v703 = vunpack.c.l.b16 %v671
  %v704 = vunpack.c.l.b16 %v672
  %v705 = vunpack.c.l.b16 %v673
  %v706 = vunpack.c.l.b16 %v674
  %v707 = vunpack.c.l.b16 %v675
  %v708 = vunpack.c.l.b16 %v676
  %v709 = vunpack.c.l.b16 %v677
  %v710 = vunpack.c.l.b16 %v678
  %v711 = vunpack.c.l.b16 %v679
  %v712 = vpack.c.b16 %v697, %v696
  %v713 = vpack.c.b16 %v699, %v698
  %v714 = vpack.c.b16 %v701, %v700
  %v715 = vpack.c.b16 %v703, %v702
  %v716 = vpack.c.b16 %v705, %v704
  %v717 = vpack.c.b16 %v707, %v706
  %v718 = vpack.c.b16 %v709, %v708
  %v719 = vpack.c.b16 %v711, %v710
  %728 = vmatprep.subr.bf16.mxu0 0
  %729 = vmatpush1.bf16.msra.mxu0 %v719
  %730 = vmatprep.subr.bf16.mxu0 0
  %731 = vmatpush1.bf16.msra.mxu0 %v718
  %732 = vmatprep.subr.bf16.mxu0 0
  %733 = vmatpush1.bf16.msra.mxu0 %v717
  %734 = vmatprep.subr.bf16.mxu0 0
  %735 = vmatpush1.bf16.msra.mxu0 %v716
  %736 = vmatprep.subr.bf16.mxu0 0
  %737 = vmatpush1.bf16.msra.mxu0 %v715
  %738 = vmatprep.subr.bf16.mxu0 0
  %739 = vmatpush1.bf16.msra.mxu0 %v714
  %740 = vmatprep.subr.bf16.mxu0 0
  %741 = vmatpush1.bf16.msra.mxu0 %v713
  %742 = vmatprep.subr.bf16.mxu0 0
  %743 = vmatpush1.bf16.msra.mxu0 %v712
  %744 = vmatprep.subr.bf16.mxu0 0
  %745 = vmatpush2.bf16.msra.mxu0 0
  %746 = vmatprep.subr.bf16.mxu0 0
  %747 = vmatpush2.bf16.msra.mxu0 0
  %748 = vmatprep.subr.bf16.mxu0 0
  %749 = vmatpush2.bf16.msra.mxu0 0
  %750 = vmatprep.subr.bf16.mxu0 0
  %751 = vmatpush2.bf16.msra.mxu0 0
  %752 = vmatprep.subr.bf16.mxu0 0
  %753 = vmatpush2.bf16.msra.mxu0 0
  %754 = vmatprep.subr.bf16.mxu0 0
  %755 = vmatpush2.bf16.msra.mxu0 0
  %756 = vmatprep.subr.bf16.mxu0 0
  %757 = vmatpush2.bf16.msra.mxu0 0
  %758 = vmatprep.subr.bf16.mxu0 0
  %759 = vmatpush2.bf16.msra.mxu0 0
  %760 = vmatprep.mubr.bf16.mxu0 0
  %761 = vmatmul.mubr.bf16.gmra.mxu0 %v658
  %v762 = vpop.f32.mrf.mxu0
  %v763 = vadd.f32 0.0, %v762
  %v764 = vpop.f32.mrf.mxu0
  %v765 = vpop.f32.mrf.mxu0
  %v766 = vadd.f32 0.0, %v765
  %v767 = vpop.f32.mrf.mxu0
  %768 = vmatprep.mubr.bf16.mxu0 0
  %769 = vmatmul.mubr.bf16.gmra.mxu0 %v659
  %v770 = vpop.f32.mrf.mxu0
  %v771 = vadd.f32 0.0, %v770
  %v772 = vpop.f32.mrf.mxu0
  %v773 = vpop.f32.mrf.mxu0
  %v774 = vadd.f32 0.0, %v773
  %v775 = vpop.f32.mrf.mxu0
  %776 = vmatprep.mubr.bf16.mxu0 0
  %777 = vmatmul.mubr.bf16.gmra.mxu0 %v660
  %v778 = vpop.f32.mrf.mxu0
  %v779 = vadd.f32 0.0, %v778
  %v780 = vpop.f32.mrf.mxu0
  %v781 = vpop.f32.mrf.mxu0
  %v782 = vadd.f32 0.0, %v781
  %v783 = vpop.f32.mrf.mxu0
  %784 = vmatprep.mubr.bf16.mxu0 0
  %785 = vmatmul.mubr.bf16.gmra.mxu0 %v661
  %v786 = vpop.f32.mrf.mxu0
  %v787 = vadd.f32 0.0, %v786
  %v788 = vpop.f32.mrf.mxu0
  %v789 = vpop.f32.mrf.mxu0
  %v790 = vadd.f32 0.0, %v789
  %v791 = vpop.f32.mrf.mxu0
  %792 = vmatprep.mubr.bf16.mxu0 0
  %793 = vmatmul.mubr.bf16.gmra.mxu0 %v662
  %v794 = vpop.f32.mrf.mxu0
  %v795 = vadd.f32 0.0, %v794
  %v796 = vpop.f32.mrf.mxu0
  %v797 = vpop.f32.mrf.mxu0
  %v798 = vpop.f32.mrf.mxu0
  %799 = vdwg.mxu0
  %v800 = vadd.f32 %v629, %v763
  %v801 = vadd.f32 %v630, %v766
  %v802 = vadd.f32 %v631, %v771
  %v803 = vadd.f32 %v632, %v774
  %v804 = vadd.f32 %v633, %v779
  %v805 = vadd.f32 %v634, %v782
  %v806 = vadd.f32 %v635, %v787
  %v807 = vadd.f32 %v636, %v790
  %v808 = vadd.f32 %v637, %v795
  %v809 = vrot.slane %v151, 7
  %v810 = vrot.slane %v152, 7
  %v811 = vrot.slane %v153, 7
  %v812 = vrot.slane %v154, 7
  %v813 = vrot.slane %v155, 7
  %v814 = vrot.slane %v156, 7
  %v815 = vrot.slane %v157, 7
  %v816 = vrot.slane %v158, 7
  %v817 = vrot.slane %v159, 7
  %v818 = vrot.slane %v160, 7
  %vm819 = vcmp.lt.s32.totalorder %v194, 1
  %v820 = vsel %vm819, %v817, %v818
  %v821 = vsel %vm819, %v816, %v817
  %v822 = vsel %vm819, %v815, %v816
  %v823 = vsel %vm819, %v814, %v815
  %v824 = vsel %vm819, %v813, %v814
  %v825 = vsel %vm819, %v812, %v813
  %v826 = vsel %vm819, %v811, %v812
  %v827 = vsel %vm819, %v810, %v811
  %v828 = vsel %vm819, %v809, %v810
  %v829 = vpack.c.bf16 %v827, %v828
  %v830 = vpack.c.bf16 %v825, %v826
  %v831 = vpack.c.bf16 %v823, %v824
  %v832 = vpack.c.bf16 %v821, %v822
  %v833 = vpack.c.bf16 %v820, %v820
  %s834 = scalar_lea.vmem %s5, 256
  %v835 = vld [vmem:[%s834] sm:$0xf]
  %v836 = vld [vmem:[%s834 + $0x4] sm:$0xf]
  %v837 = vld [vmem:[%s834 + $0x8] sm:$0xf]
  %v838 = vld [vmem:[%s834 + $0xc] sm:$0xf]
  %v839 = vld [vmem:[%s834 + $0x10] sm:$0xf]
  %v840 = vld [vmem:[%s834 + $0x14] sm:$0xf]
  %v841 = vld [vmem:[%s834 + $0x18] sm:$0xf]
  %v842 = vld [vmem:[%s834 + $0x1c] sm:$0xf]
  %v843 = vld [vmem:[%s834 + $0x20] sm:$0xf]
  %v844 = vld [vmem:[%s834 + $0x24] sm:$0xf]
  %v845 = vld [vmem:[%s834 + $0x28] sm:$0xf]
  %v846 = vld [vmem:[%s834 + $0x2c] sm:$0xf]
  %v847 = vld [vmem:[%s834 + $0x30] sm:$0xf]
  %v848 = vld [vmem:[%s834 + $0x34] sm:$0xf]
  %v849 = vld [vmem:[%s834 + $0x38] sm:$0xf]
  %v850 = vld [vmem:[%s834 + $0x3c] sm:$0xf]
  %v867 = vunpack.c.l.b16 %v835
  %v868 = vunpack.c.l.b16 %v836
  %v869 = vunpack.c.l.b16 %v837
  %v870 = vunpack.c.l.b16 %v838
  %v871 = vunpack.c.l.b16 %v839
  %v872 = vunpack.c.l.b16 %v840
  %v873 = vunpack.c.l.b16 %v841
  %v874 = vunpack.c.l.b16 %v842
  %v875 = vunpack.c.l.b16 %v843
  %v876 = vunpack.c.l.b16 %v844
  %v877 = vunpack.c.l.b16 %v845
  %v878 = vunpack.c.l.b16 %v846
  %v879 = vunpack.c.l.b16 %v847
  %v880 = vunpack.c.l.b16 %v848
  %v881 = vunpack.c.l.b16 %v849
  %v882 = vunpack.c.l.b16 %v850
  %v883 = vpack.c.b16 %v868, %v867
  %v884 = vpack.c.b16 %v870, %v869
  %v885 = vpack.c.b16 %v872, %v871
  %v886 = vpack.c.b16 %v874, %v873
  %v887 = vpack.c.b16 %v876, %v875
  %v888 = vpack.c.b16 %v878, %v877
  %v889 = vpack.c.b16 %v880, %v879
  %v890 = vpack.c.b16 %v882, %v881
  %899 = vmatprep.subr.bf16.mxu0 0
  %900 = vmatpush1.bf16.msra.mxu0 %v890
  %901 = vmatprep.subr.bf16.mxu0 0
  %902 = vmatpush1.bf16.msra.mxu0 %v889
  %903 = vmatprep.subr.bf16.mxu0 0
  %904 = vmatpush1.bf16.msra.mxu0 %v888
  %905 = vmatprep.subr.bf16.mxu0 0
  %906 = vmatpush1.bf16.msra.mxu0 %v887
  %907 = vmatprep.subr.bf16.mxu0 0
  %908 = vmatpush1.bf16.msra.mxu0 %v886
  %909 = vmatprep.subr.bf16.mxu0 0
  %910 = vmatpush1.bf16.msra.mxu0 %v885
  %911 = vmatprep.subr.bf16.mxu0 0
  %912 = vmatpush1.bf16.msra.mxu0 %v884
  %913 = vmatprep.subr.bf16.mxu0 0
  %914 = vmatpush1.bf16.msra.mxu0 %v883
  %915 = vmatprep.subr.bf16.mxu0 0
  %916 = vmatpush2.bf16.msra.mxu0 0
  %917 = vmatprep.subr.bf16.mxu0 0
  %918 = vmatpush2.bf16.msra.mxu0 0
  %919 = vmatprep.subr.bf16.mxu0 0
  %920 = vmatpush2.bf16.msra.mxu0 0
  %921 = vmatprep.subr.bf16.mxu0 0
  %922 = vmatpush2.bf16.msra.mxu0 0
  %923 = vmatprep.subr.bf16.mxu0 0
  %924 = vmatpush2.bf16.msra.mxu0 0
  %925 = vmatprep.subr.bf16.mxu0 0
  %926 = vmatpush2.bf16.msra.mxu0 0
  %927 = vmatprep.subr.bf16.mxu0 0
  %928 = vmatpush2.bf16.msra.mxu0 0
  %929 = vmatprep.subr.bf16.mxu0 0
  %930 = vmatpush2.bf16.msra.mxu0 0
  %931 = vmatprep.mubr.bf16.mxu0 0
  %932 = vmatmul.mubr.bf16.gmra.mxu0 %v829
  %v933 = vpop.f32.mrf.mxu0
  %v934 = vadd.f32 0.0, %v933
  %v935 = vpop.f32.mrf.mxu0
  %v936 = vpop.f32.mrf.mxu0
  %v937 = vadd.f32 0.0, %v936
  %v938 = vpop.f32.mrf.mxu0
  %939 = vmatprep.mubr.bf16.mxu0 0
  %940 = vmatmul.mubr.bf16.gmra.mxu0 %v830
  %v941 = vpop.f32.mrf.mxu0
  %v942 = vadd.f32 0.0, %v941
  %v943 = vpop.f32.mrf.mxu0
  %v944 = vpop.f32.mrf.mxu0
  %v945 = vadd.f32 0.0, %v944
  %v946 = vpop.f32.mrf.mxu0
  %947 = vmatprep.mubr.bf16.mxu0 0
  %948 = vmatmul.mubr.bf16.gmra.mxu0 %v831
  %v949 = vpop.f32.mrf.mxu0
  %v950 = vadd.f32 0.0, %v949
  %v951 = vpop.f32.mrf.mxu0
  %v952 = vpop.f32.mrf.mxu0
  %v953 = vadd.f32 0.0, %v952
  %v954 = vpop.f32.mrf.mxu0
  %955 = vmatprep.mubr.bf16.mxu0 0
  %956 = vmatmul.mubr.bf16.gmra.mxu0 %v832
  %v957 = vpop.f32.mrf.mxu0
  %v958 = vadd.f32 0.0, %v957
  %v959 = vpop.f32.mrf.mxu0
  %v960 = vpop.f32.mrf.mxu0
  %v961 = vadd.f32 0.0, %v960
  %v962 = vpop.f32.mrf.mxu0
  %963 = vmatprep.mubr.bf16.mxu0 0
  %964 = vmatmul.mubr.bf16.gmra.mxu0 %v833
  %v965 = vpop.f32.mrf.mxu0
  %v966 = vadd.f32 0.0, %v965
  %v967 = vpop.f32.mrf.mxu0
  %v968 = vpop.f32.mrf.mxu0
  %v969 = vpop.f32.mrf.mxu0
  %970 = vdwg.mxu0
  %v971 = vadd.f32 %v800, %v934
  %v972 = vadd.f32 %v801, %v937
  %v973 = vadd.f32 %v802, %v942
  %v974 = vadd.f32 %v803, %v945
  %v975 = vadd.f32 %v804, %v950
  %v976 = vadd.f32 %v805, %v953
  %v977 = vadd.f32 %v806, %v958
  %v978 = vadd.f32 %v807, %v961
  %v979 = vadd.f32 %v808, %v966
  %v980 = vpack.c.bf16 %v153, %v152
  %v981 = vpack.c.bf16 %v155, %v154
  %v982 = vpack.c.bf16 %v157, %v156
  %v983 = vpack.c.bf16 %v159, %v158
  %v984 = vpack.c.bf16 %v160, %v160
  %s985 = scalar_lea.vmem %s5, 320
  %v986 = vld [vmem:[%s985] sm:$0xf]
  %v987 = vld [vmem:[%s985 + $0x4] sm:$0xf]
  %v988 = vld [vmem:[%s985 + $0x8] sm:$0xf]
  %v989 = vld [vmem:[%s985 + $0xc] sm:$0xf]
  %v990 = vld [vmem:[%s985 + $0x10] sm:$0xf]
  %v991 = vld [vmem:[%s985 + $0x14] sm:$0xf]
  %v992 = vld [vmem:[%s985 + $0x18] sm:$0xf]
  %v993 = vld [vmem:[%s985 + $0x1c] sm:$0xf]
  %v994 = vld [vmem:[%s985 + $0x20] sm:$0xf]
  %v995 = vld [vmem:[%s985 + $0x24] sm:$0xf]
  %v996 = vld [vmem:[%s985 + $0x28] sm:$0xf]
  %v997 = vld [vmem:[%s985 + $0x2c] sm:$0xf]
  %v998 = vld [vmem:[%s985 + $0x30] sm:$0xf]
  %v999 = vld [vmem:[%s985 + $0x34] sm:$0xf]
  %v1000 = vld [vmem:[%s985 + $0x38] sm:$0xf]
  %v1001 = vld [vmem:[%s985 + $0x3c] sm:$0xf]
  %v1018 = vunpack.c.l.b16 %v986
  %v1019 = vunpack.c.l.b16 %v987
  %v1020 = vunpack.c.l.b16 %v988
  %v1021 = vunpack.c.l.b16 %v989
  %v1022 = vunpack.c.l.b16 %v990
  %v1023 = vunpack.c.l.b16 %v991
  %v1024 = vunpack.c.l.b16 %v992
  %v1025 = vunpack.c.l.b16 %v993
  %v1026 = vunpack.c.l.b16 %v994
  %v1027 = vunpack.c.l.b16 %v995
  %v1028 = vunpack.c.l.b16 %v996
  %v1029 = vunpack.c.l.b16 %v997
  %v1030 = vunpack.c.l.b16 %v998
  %v1031 = vunpack.c.l.b16 %v999
  %v1032 = vunpack.c.l.b16 %v1000
  %v1033 = vunpack.c.l.b16 %v1001
  %v1034 = vpack.c.b16 %v1019, %v1018
  %v1035 = vpack.c.b16 %v1021, %v1020
  %v1036 = vpack.c.b16 %v1023, %v1022
  %v1037 = vpack.c.b16 %v1025, %v1024
  %v1038 = vpack.c.b16 %v1027, %v1026
  %v1039 = vpack.c.b16 %v1029, %v1028
  %v1040 = vpack.c.b16 %v1031, %v1030
  %v1041 = vpack.c.b16 %v1033, %v1032
  %1050 = vmatprep.subr.bf16.mxu0 0
  %1051 = vmatpush1.bf16.msra.mxu0 %v1041
  %1052 = vmatprep.subr.bf16.mxu0 0
  %1053 = vmatpush1.bf16.msra.mxu0 %v1040
  %1054 = vmatprep.subr.bf16.mxu0 0
  %1055 = vmatpush1.bf16.msra.mxu0 %v1039
  %1056 = vmatprep.subr.bf16.mxu0 0
  %1057 = vmatpush1.bf16.msra.mxu0 %v1038
  %1058 = vmatprep.subr.bf16.mxu0 0
  %1059 = vmatpush1.bf16.msra.mxu0 %v1037
  %1060 = vmatprep.subr.bf16.mxu0 0
  %1061 = vmatpush1.bf16.msra.mxu0 %v1036
  %1062 = vmatprep.subr.bf16.mxu0 0
  %1063 = vmatpush1.bf16.msra.mxu0 %v1035
  %1064 = vmatprep.subr.bf16.mxu0 0
  %1065 = vmatpush1.bf16.msra.mxu0 %v1034
  %1066 = vmatprep.subr.bf16.mxu0 0
  %1067 = vmatpush2.bf16.msra.mxu0 0
  %1068 = vmatprep.subr.bf16.mxu0 0
  %1069 = vmatpush2.bf16.msra.mxu0 0
  %1070 = vmatprep.subr.bf16.mxu0 0
  %1071 = vmatpush2.bf16.msra.mxu0 0
  %1072 = vmatprep.subr.bf16.mxu0 0
  %1073 = vmatpush2.bf16.msra.mxu0 0
  %1074 = vmatprep.subr.bf16.mxu0 0
  %1075 = vmatpush2.bf16.msra.mxu0 0
  %1076 = vmatprep.subr.bf16.mxu0 0
  %1077 = vmatpush2.bf16.msra.mxu0 0
  %1078 = vmatprep.subr.bf16.mxu0 0
  %1079 = vmatpush2.bf16.msra.mxu0 0
  %1080 = vmatprep.subr.bf16.mxu0 0
  %1081 = vmatpush2.bf16.msra.mxu0 0
  %1082 = vmatprep.mubr.bf16.mxu0 0
  %1083 = vmatmul.mubr.bf16.gmra.mxu0 %v980
  %v1084 = vpop.f32.mrf.mxu0
  %v1085 = vadd.f32 0.0, %v1084
  %v1086 = vpop.f32.mrf.mxu0
  %v1087 = vpop.f32.mrf.mxu0
  %v1088 = vadd.f32 0.0, %v1087
  %v1089 = vpop.f32.mrf.mxu0
  %1090 = vmatprep.mubr.bf16.mxu0 0
  %1091 = vmatmul.mubr.bf16.gmra.mxu0 %v981
  %v1092 = vpop.f32.mrf.mxu0
  %v1093 = vadd.f32 0.0, %v1092
  %v1094 = vpop.f32.mrf.mxu0
  %v1095 = vpop.f32.mrf.mxu0
  %v1096 = vadd.f32 0.0, %v1095
  %v1097 = vpop.f32.mrf.mxu0
  %1098 = vmatprep.mubr.bf16.mxu0 0
  %1099 = vmatmul.mubr.bf16.gmra.mxu0 %v982
  %v1100 = vpop.f32.mrf.mxu0
  %v1101 = vadd.f32 0.0, %v1100
  %v1102 = vpop.f32.mrf.mxu0
  %v1103 = vpop.f32.mrf.mxu0
  %v1104 = vadd.f32 0.0, %v1103
  %v1105 = vpop.f32.mrf.mxu0
  %1106 = vmatprep.mubr.bf16.mxu0 0
  %1107 = vmatmul.mubr.bf16.gmra.mxu0 %v983
  %v1108 = vpop.f32.mrf.mxu0
  %v1109 = vadd.f32 0.0, %v1108
  %v1110 = vpop.f32.mrf.mxu0
  %v1111 = vpop.f32.mrf.mxu0
  %v1112 = vadd.f32 0.0, %v1111
  %v1113 = vpop.f32.mrf.mxu0
  %1114 = vmatprep.mubr.bf16.mxu0 0
  %1115 = vmatmul.mubr.bf16.gmra.mxu0 %v984
  %v1116 = vpop.f32.mrf.mxu0
  %v1117 = vadd.f32 0.0, %v1116
  %v1118 = vpop.f32.mrf.mxu0
  %v1119 = vpop.f32.mrf.mxu0
  %v1120 = vpop.f32.mrf.mxu0
  %1121 = vdwg.mxu0
  %v1122 = vadd.f32 %v971, %v1085
  %v1123 = vadd.f32 %v972, %v1088
  %v1124 = vadd.f32 %v973, %v1093
  %v1125 = vadd.f32 %v974, %v1096
  %v1126 = vadd.f32 %v975, %v1101
  %v1127 = vadd.f32 %v976, %v1104
  %v1128 = vadd.f32 %v977, %v1109
  %v1129 = vadd.f32 %v978, %v1112
  %v1130 = vadd.f32 %v979, %v1117
  %v1131 = vrot.slane %v152, 4
  %v1132 = vrot.slane %v153, 4
  %v1133 = vrot.slane %v154, 4
  %v1134 = vrot.slane %v155, 4
  %v1135 = vrot.slane %v156, 4
  %v1136 = vrot.slane %v157, 4
  %v1137 = vrot.slane %v158, 4
  %v1138 = vrot.slane %v159, 4
  %v1139 = vrot.slane %v160, 4
  %v1140 = vrot.slane %v161, 4
  %vm1141 = vcmp.lt.s32.totalorder %v194, 4
  %v1142 = vsel %vm1141, %v1139, %v1140
  %v1143 = vsel %vm1141, %v1138, %v1139
  %v1144 = vsel %vm1141, %v1137, %v1138
  %v1145 = vsel %vm1141, %v1136, %v1137
  %v1146 = vsel %vm1141, %v1135, %v1136
  %v1147 = vsel %vm1141, %v1134, %v1135
  %v1148 = vsel %vm1141, %v1133, %v1134
  %v1149 = vsel %vm1141, %v1132, %v1133
  %v1150 = vsel %vm1141, %v1131, %v1132
  %v1151 = vpack.c.bf16 %v1149, %v1150
  %v1152 = vpack.c.bf16 %v1147, %v1148
  %v1153 = vpack.c.bf16 %v1145, %v1146
  %v1154 = vpack.c.bf16 %v1143, %v1144
  %v1155 = vpack.c.bf16 %v1142, %v1142
  %s1156 = scalar_lea.vmem %s5, 384
  %v1157 = vld [vmem:[%s1156] sm:$0xf]
  %v1158 = vld [vmem:[%s1156 + $0x4] sm:$0xf]
  %v1159 = vld [vmem:[%s1156 + $0x8] sm:$0xf]
  %v1160 = vld [vmem:[%s1156 + $0xc] sm:$0xf]
  %v1161 = vld [vmem:[%s1156 + $0x10] sm:$0xf]
  %v1162 = vld [vmem:[%s1156 + $0x14] sm:$0xf]
  %v1163 = vld [vmem:[%s1156 + $0x18] sm:$0xf]
  %v1164 = vld [vmem:[%s1156 + $0x1c] sm:$0xf]
  %v1165 = vld [vmem:[%s1156 + $0x20] sm:$0xf]
  %v1166 = vld [vmem:[%s1156 + $0x24] sm:$0xf]
  %v1167 = vld [vmem:[%s1156 + $0x28] sm:$0xf]
  %v1168 = vld [vmem:[%s1156 + $0x2c] sm:$0xf]
  %v1169 = vld [vmem:[%s1156 + $0x30] sm:$0xf]
  %v1170 = vld [vmem:[%s1156 + $0x34] sm:$0xf]
  %v1171 = vld [vmem:[%s1156 + $0x38] sm:$0xf]
  %v1172 = vld [vmem:[%s1156 + $0x3c] sm:$0xf]
  %v1189 = vunpack.c.l.b16 %v1157
  %v1190 = vunpack.c.l.b16 %v1158
  %v1191 = vunpack.c.l.b16 %v1159
  %v1192 = vunpack.c.l.b16 %v1160
  %v1193 = vunpack.c.l.b16 %v1161
  %v1194 = vunpack.c.l.b16 %v1162
  %v1195 = vunpack.c.l.b16 %v1163
  %v1196 = vunpack.c.l.b16 %v1164
  %v1197 = vunpack.c.l.b16 %v1165
  %v1198 = vunpack.c.l.b16 %v1166
  %v1199 = vunpack.c.l.b16 %v1167
  %v1200 = vunpack.c.l.b16 %v1168
  %v1201 = vunpack.c.l.b16 %v1169
  %v1202 = vunpack.c.l.b16 %v1170
  %v1203 = vunpack.c.l.b16 %v1171
  %v1204 = vunpack.c.l.b16 %v1172
  %v1205 = vpack.c.b16 %v1190, %v1189
  %v1206 = vpack.c.b16 %v1192, %v1191
  %v1207 = vpack.c.b16 %v1194, %v1193
  %v1208 = vpack.c.b16 %v1196, %v1195
  %v1209 = vpack.c.b16 %v1198, %v1197
  %v1210 = vpack.c.b16 %v1200, %v1199
  %v1211 = vpack.c.b16 %v1202, %v1201
  %v1212 = vpack.c.b16 %v1204, %v1203
  %1221 = vmatprep.subr.bf16.mxu0 0
  %1222 = vmatpush1.bf16.msra.mxu0 %v1212
  %1223 = vmatprep.subr.bf16.mxu0 0
  %1224 = vmatpush1.bf16.msra.mxu0 %v1211
  %1225 = vmatprep.subr.bf16.mxu0 0
  %1226 = vmatpush1.bf16.msra.mxu0 %v1210
  %1227 = vmatprep.subr.bf16.mxu0 0
  %1228 = vmatpush1.bf16.msra.mxu0 %v1209
  %1229 = vmatprep.subr.bf16.mxu0 0
  %1230 = vmatpush1.bf16.msra.mxu0 %v1208
  %1231 = vmatprep.subr.bf16.mxu0 0
  %1232 = vmatpush1.bf16.msra.mxu0 %v1207
  %1233 = vmatprep.subr.bf16.mxu0 0
  %1234 = vmatpush1.bf16.msra.mxu0 %v1206
  %1235 = vmatprep.subr.bf16.mxu0 0
  %1236 = vmatpush1.bf16.msra.mxu0 %v1205
  %1237 = vmatprep.subr.bf16.mxu0 0
  %1238 = vmatpush2.bf16.msra.mxu0 0
  %1239 = vmatprep.subr.bf16.mxu0 0
  %1240 = vmatpush2.bf16.msra.mxu0 0
  %1241 = vmatprep.subr.bf16.mxu0 0
  %1242 = vmatpush2.bf16.msra.mxu0 0
  %1243 = vmatprep.subr.bf16.mxu0 0
  %1244 = vmatpush2.bf16.msra.mxu0 0
  %1245 = vmatprep.subr.bf16.mxu0 0
  %1246 = vmatpush2.bf16.msra.mxu0 0
  %1247 = vmatprep.subr.bf16.mxu0 0
  %1248 = vmatpush2.bf16.msra.mxu0 0
  %1249 = vmatprep.subr.bf16.mxu0 0
  %1250 = vmatpush2.bf16.msra.mxu0 0
  %1251 = vmatprep.subr.bf16.mxu0 0
  %1252 = vmatpush2.bf16.msra.mxu0 0
  %1253 = vmatprep.mubr.bf16.mxu0 0
  %1254 = vmatmul.mubr.bf16.gmra.mxu0 %v1151
  %v1255 = vpop.f32.mrf.mxu0
  %v1256 = vadd.f32 0.0, %v1255
  %v1257 = vpop.f32.mrf.mxu0
  %v1258 = vpop.f32.mrf.mxu0
  %v1259 = vadd.f32 0.0, %v1258
  %v1260 = vpop.f32.mrf.mxu0
  %1261 = vmatprep.mubr.bf16.mxu0 0
  %1262 = vmatmul.mubr.bf16.gmra.mxu0 %v1152
  %v1263 = vpop.f32.mrf.mxu0
  %v1264 = vadd.f32 0.0, %v1263
  %v1265 = vpop.f32.mrf.mxu0
  %v1266 = vpop.f32.mrf.mxu0
  %v1267 = vadd.f32 0.0, %v1266
  %v1268 = vpop.f32.mrf.mxu0
  %1269 = vmatprep.mubr.bf16.mxu0 0
  %1270 = vmatmul.mubr.bf16.gmra.mxu0 %v1153
  %v1271 = vpop.f32.mrf.mxu0
  %v1272 = vadd.f32 0.0, %v1271
  %v1273 = vpop.f32.mrf.mxu0
  %v1274 = vpop.f32.mrf.mxu0
  %v1275 = vadd.f32 0.0, %v1274
  %v1276 = vpop.f32.mrf.mxu0
  %1277 = vmatprep.mubr.bf16.mxu0 0
  %1278 = vmatmul.mubr.bf16.gmra.mxu0 %v1154
  %v1279 = vpop.f32.mrf.mxu0
  %v1280 = vadd.f32 0.0, %v1279
  %v1281 = vpop.f32.mrf.mxu0
  %v1282 = vpop.f32.mrf.mxu0
  %v1283 = vadd.f32 0.0, %v1282
  %v1284 = vpop.f32.mrf.mxu0
  %1285 = vmatprep.mubr.bf16.mxu0 0
  %1286 = vmatmul.mubr.bf16.gmra.mxu0 %v1155
  %v1287 = vpop.f32.mrf.mxu0
  %v1288 = vadd.f32 0.0, %v1287
  %v1289 = vpop.f32.mrf.mxu0
  %v1290 = vpop.f32.mrf.mxu0
  %v1291 = vpop.f32.mrf.mxu0
  %1292 = vdwg.mxu0
  %v1293 = vadd.f32 %v1122, %v1256
  %v1294 = vadd.f32 %v1123, %v1259
  %v1295 = vadd.f32 %v1124, %v1264
  %v1296 = vadd.f32 %v1125, %v1267
  %v1297 = vadd.f32 %v1126, %v1272
  %v1298 = vadd.f32 %v1127, %v1275
  %v1299 = vadd.f32 %v1128, %v1280
  %v1300 = vadd.f32 %v1129, %v1283
  %v1301 = vadd.f32 %v1130, %v1288
  %v1302 = vrot.slane %v152, 5
  %v1303 = vrot.slane %v153, 5
  %v1304 = vrot.slane %v154, 5
  %v1305 = vrot.slane %v155, 5
  %v1306 = vrot.slane %v156, 5
  %v1307 = vrot.slane %v157, 5
  %v1308 = vrot.slane %v158, 5
  %v1309 = vrot.slane %v159, 5
  %v1310 = vrot.slane %v160, 5
  %v1311 = vrot.slane %v161, 5
  %vm1312 = vcmp.lt.s32.totalorder %v194, 3
  %v1313 = vsel %vm1312, %v1310, %v1311
  %v1314 = vsel %vm1312, %v1309, %v1310
  %v1315 = vsel %vm1312, %v1308, %v1309
  %v1316 = vsel %vm1312, %v1307, %v1308
  %v1317 = vsel %vm1312, %v1306, %v1307
  %v1318 = vsel %vm1312, %v1305, %v1306
  %v1319 = vsel %vm1312, %v1304, %v1305
  %v1320 = vsel %vm1312, %v1303, %v1304
  %v1321 = vsel %vm1312, %v1302, %v1303
  %v1322 = vpack.c.bf16 %v1320, %v1321
  %v1323 = vpack.c.bf16 %v1318, %v1319
  %v1324 = vpack.c.bf16 %v1316, %v1317
  %v1325 = vpack.c.bf16 %v1314, %v1315
  %v1326 = vpack.c.bf16 %v1313, %v1313
  %s1327 = scalar_lea.vmem %s5, 448
  %v1328 = vld [vmem:[%s1327] sm:$0xf]
  %v1329 = vld [vmem:[%s1327 + $0x4] sm:$0xf]
  %v1330 = vld [vmem:[%s1327 + $0x8] sm:$0xf]
  %v1331 = vld [vmem:[%s1327 + $0xc] sm:$0xf]
  %v1332 = vld [vmem:[%s1327 + $0x10] sm:$0xf]
  %v1333 = vld [vmem:[%s1327 + $0x14] sm:$0xf]
  %v1334 = vld [vmem:[%s1327 + $0x18] sm:$0xf]
  %v1335 = vld [vmem:[%s1327 + $0x1c] sm:$0xf]
  %v1336 = vld [vmem:[%s1327 + $0x20] sm:$0xf]
  %v1337 = vld [vmem:[%s1327 + $0x24] sm:$0xf]
  %v1338 = vld [vmem:[%s1327 + $0x28] sm:$0xf]
  %v1339 = vld [vmem:[%s1327 + $0x2c] sm:$0xf]
  %v1340 = vld [vmem:[%s1327 + $0x30] sm:$0xf]
  %v1341 = vld [vmem:[%s1327 + $0x34] sm:$0xf]
  %v1342 = vld [vmem:[%s1327 + $0x38] sm:$0xf]
  %v1343 = vld [vmem:[%s1327 + $0x3c] sm:$0xf]
  %v1360 = vunpack.c.l.b16 %v1328
  %v1361 = vunpack.c.l.b16 %v1329
  %v1362 = vunpack.c.l.b16 %v1330
  %v1363 = vunpack.c.l.b16 %v1331
  %v1364 = vunpack.c.l.b16 %v1332
  %v1365 = vunpack.c.l.b16 %v1333
  %v1366 = vunpack.c.l.b16 %v1334
  %v1367 = vunpack.c.l.b16 %v1335
  %v1368 = vunpack.c.l.b16 %v1336
  %v1369 = vunpack.c.l.b16 %v1337
  %v1370 = vunpack.c.l.b16 %v1338
  %v1371 = vunpack.c.l.b16 %v1339
  %v1372 = vunpack.c.l.b16 %v1340
  %v1373 = vunpack.c.l.b16 %v1341
  %v1374 = vunpack.c.l.b16 %v1342
  %v1375 = vunpack.c.l.b16 %v1343
  %v1376 = vpack.c.b16 %v1361, %v1360
  %v1377 = vpack.c.b16 %v1363, %v1362
  %v1378 = vpack.c.b16 %v1365, %v1364
  %v1379 = vpack.c.b16 %v1367, %v1366
  %v1380 = vpack.c.b16 %v1369, %v1368
  %v1381 = vpack.c.b16 %v1371, %v1370
  %v1382 = vpack.c.b16 %v1373, %v1372
  %v1383 = vpack.c.b16 %v1375, %v1374
  %1392 = vmatprep.subr.bf16.mxu0 0
  %1393 = vmatpush1.bf16.msra.mxu0 %v1383
  %1394 = vmatprep.subr.bf16.mxu0 0
  %1395 = vmatpush1.bf16.msra.mxu0 %v1382
  %1396 = vmatprep.subr.bf16.mxu0 0
  %1397 = vmatpush1.bf16.msra.mxu0 %v1381
  %1398 = vmatprep.subr.bf16.mxu0 0
  %1399 = vmatpush1.bf16.msra.mxu0 %v1380
  %1400 = vmatprep.subr.bf16.mxu0 0
  %1401 = vmatpush1.bf16.msra.mxu0 %v1379
  %1402 = vmatprep.subr.bf16.mxu0 0
  %1403 = vmatpush1.bf16.msra.mxu0 %v1378
  %1404 = vmatprep.subr.bf16.mxu0 0
  %1405 = vmatpush1.bf16.msra.mxu0 %v1377
  %1406 = vmatprep.subr.bf16.mxu0 0
  %1407 = vmatpush1.bf16.msra.mxu0 %v1376
  %1408 = vmatprep.subr.bf16.mxu0 0
  %1409 = vmatpush2.bf16.msra.mxu0 0
  %1410 = vmatprep.subr.bf16.mxu0 0
  %1411 = vmatpush2.bf16.msra.mxu0 0
  %1412 = vmatprep.subr.bf16.mxu0 0
  %1413 = vmatpush2.bf16.msra.mxu0 0
  %1414 = vmatprep.subr.bf16.mxu0 0
  %1415 = vmatpush2.bf16.msra.mxu0 0
  %1416 = vmatprep.subr.bf16.mxu0 0
  %1417 = vmatpush2.bf16.msra.mxu0 0
  %1418 = vmatprep.subr.bf16.mxu0 0
  %1419 = vmatpush2.bf16.msra.mxu0 0
  %1420 = vmatprep.subr.bf16.mxu0 0
  %1421 = vmatpush2.bf16.msra.mxu0 0
  %1422 = vmatprep.subr.bf16.mxu0 0
  %1423 = vmatpush2.bf16.msra.mxu0 0
  %1424 = vmatprep.mubr.bf16.mxu0 0
  %1425 = vmatmul.mubr.bf16.gmra.mxu0 %v1322
  %v1426 = vpop.f32.mrf.mxu0
  %v1427 = vadd.f32 0.0, %v1426
  %v1428 = vpop.f32.mrf.mxu0
  %v1429 = vpop.f32.mrf.mxu0
  %v1430 = vadd.f32 0.0, %v1429
  %v1431 = vpop.f32.mrf.mxu0
  %1432 = vmatprep.mubr.bf16.mxu0 0
  %1433 = vmatmul.mubr.bf16.gmra.mxu0 %v1323
  %v1434 = vpop.f32.mrf.mxu0
  %v1435 = vadd.f32 0.0, %v1434
  %v1436 = vpop.f32.mrf.mxu0
  %v1437 = vpop.f32.mrf.mxu0
  %v1438 = vadd.f32 0.0, %v1437
  %v1439 = vpop.f32.mrf.mxu0
  %1440 = vmatprep.mubr.bf16.mxu0 0
  %1441 = vmatmul.mubr.bf16.gmra.mxu0 %v1324
  %v1442 = vpop.f32.mrf.mxu0
  %v1443 = vadd.f32 0.0, %v1442
  %v1444 = vpop.f32.mrf.mxu0
  %v1445 = vpop.f32.mrf.mxu0
  %v1446 = vadd.f32 0.0, %v1445
  %v1447 = vpop.f32.mrf.mxu0
  %1448 = vmatprep.mubr.bf16.mxu0 0
  %1449 = vmatmul.mubr.bf16.gmra.mxu0 %v1325
  %v1450 = vpop.f32.mrf.mxu0
  %v1451 = vadd.f32 0.0, %v1450
  %v1452 = vpop.f32.mrf.mxu0
  %v1453 = vpop.f32.mrf.mxu0
  %v1454 = vadd.f32 0.0, %v1453
  %v1455 = vpop.f32.mrf.mxu0
  %1456 = vmatprep.mubr.bf16.mxu0 0
  %1457 = vmatmul.mubr.bf16.gmra.mxu0 %v1326
  %v1458 = vpop.f32.mrf.mxu0
  %v1459 = vadd.f32 0.0, %v1458
  %v1460 = vpop.f32.mrf.mxu0
  %v1461 = vpop.f32.mrf.mxu0
  %v1462 = vpop.f32.mrf.mxu0
  %1463 = vdwg.mxu0
  %v1464 = vadd.f32 %v1293, %v1427
  %v1465 = vadd.f32 %v1294, %v1430
  %v1466 = vadd.f32 %v1295, %v1435
  %v1467 = vadd.f32 %v1296, %v1438
  %v1468 = vadd.f32 %v1297, %v1443
  %v1469 = vadd.f32 %v1298, %v1446
  %v1470 = vadd.f32 %v1299, %v1451
  %v1471 = vadd.f32 %v1300, %v1454
  %v1472 = vadd.f32 %v1301, %v1459
  %v1473 = vrot.slane %v161, 6
  %v1474 = vsel %vm648, %v647, %v1473
  %v1475 = vpack.c.bf16 %v655, %v656
  %v1476 = vpack.c.bf16 %v653, %v654
  %v1477 = vpack.c.bf16 %v651, %v652
  %v1478 = vpack.c.bf16 %v649, %v650
  %v1479 = vpack.c.bf16 %v1474, %v1474
  %s1480 = scalar_lea.vmem %s5, 512
  %v1481 = vld [vmem:[%s1480] sm:$0xf]
  %v1482 = vld [vmem:[%s1480 + $0x4] sm:$0xf]
  %v1483 = vld [vmem:[%s1480 + $0x8] sm:$0xf]
  %v1484 = vld [vmem:[%s1480 + $0xc] sm:$0xf]
  %v1485 = vld [vmem:[%s1480 + $0x10] sm:$0xf]
  %v1486 = vld [vmem:[%s1480 + $0x14] sm:$0xf]
  %v1487 = vld [vmem:[%s1480 + $0x18] sm:$0xf]
  %v1488 = vld [vmem:[%s1480 + $0x1c] sm:$0xf]
  %v1489 = vld [vmem:[%s1480 + $0x20] sm:$0xf]
  %v1490 = vld [vmem:[%s1480 + $0x24] sm:$0xf]
  %v1491 = vld [vmem:[%s1480 + $0x28] sm:$0xf]
  %v1492 = vld [vmem:[%s1480 + $0x2c] sm:$0xf]
  %v1493 = vld [vmem:[%s1480 + $0x30] sm:$0xf]
  %v1494 = vld [vmem:[%s1480 + $0x34] sm:$0xf]
  %v1495 = vld [vmem:[%s1480 + $0x38] sm:$0xf]
  %v1496 = vld [vmem:[%s1480 + $0x3c] sm:$0xf]
  %v1513 = vunpack.c.l.b16 %v1481
  %v1514 = vunpack.c.l.b16 %v1482
  %v1515 = vunpack.c.l.b16 %v1483
  %v1516 = vunpack.c.l.b16 %v1484
  %v1517 = vunpack.c.l.b16 %v1485
  %v1518 = vunpack.c.l.b16 %v1486
  %v1519 = vunpack.c.l.b16 %v1487
  %v1520 = vunpack.c.l.b16 %v1488
  %v1521 = vunpack.c.l.b16 %v1489
  %v1522 = vunpack.c.l.b16 %v1490
  %v1523 = vunpack.c.l.b16 %v1491
  %v1524 = vunpack.c.l.b16 %v1492
  %v1525 = vunpack.c.l.b16 %v1493
  %v1526 = vunpack.c.l.b16 %v1494
  %v1527 = vunpack.c.l.b16 %v1495
  %v1528 = vunpack.c.l.b16 %v1496
  %v1529 = vpack.c.b16 %v1514, %v1513
  %v1530 = vpack.c.b16 %v1516, %v1515
  %v1531 = vpack.c.b16 %v1518, %v1517
  %v1532 = vpack.c.b16 %v1520, %v1519
  %v1533 = vpack.c.b16 %v1522, %v1521
  %v1534 = vpack.c.b16 %v1524, %v1523
  %v1535 = vpack.c.b16 %v1526, %v1525
  %v1536 = vpack.c.b16 %v1528, %v1527
  %1545 = vmatprep.subr.bf16.mxu0 0
  %1546 = vmatpush1.bf16.msra.mxu0 %v1536
  %1547 = vmatprep.subr.bf16.mxu0 0
  %1548 = vmatpush1.bf16.msra.mxu0 %v1535
  %1549 = vmatprep.subr.bf16.mxu0 0
  %1550 = vmatpush1.bf16.msra.mxu0 %v1534
  %1551 = vmatprep.subr.bf16.mxu0 0
  %1552 = vmatpush1.bf16.msra.mxu0 %v1533
  %1553 = vmatprep.subr.bf16.mxu0 0
  %1554 = vmatpush1.bf16.msra.mxu0 %v1532
  %1555 = vmatprep.subr.bf16.mxu0 0
  %1556 = vmatpush1.bf16.msra.mxu0 %v1531
  %1557 = vmatprep.subr.bf16.mxu0 0
  %1558 = vmatpush1.bf16.msra.mxu0 %v1530
  %1559 = vmatprep.subr.bf16.mxu0 0
  %1560 = vmatpush1.bf16.msra.mxu0 %v1529
  %1561 = vmatprep.subr.bf16.mxu0 0
  %1562 = vmatpush2.bf16.msra.mxu0 0
  %1563 = vmatprep.subr.bf16.mxu0 0
  %1564 = vmatpush2.bf16.msra.mxu0 0
  %1565 = vmatprep.subr.bf16.mxu0 0
  %1566 = vmatpush2.bf16.msra.mxu0 0
  %1567 = vmatprep.subr.bf16.mxu0 0
  %1568 = vmatpush2.bf16.msra.mxu0 0
  %1569 = vmatprep.subr.bf16.mxu0 0
  %1570 = vmatpush2.bf16.msra.mxu0 0
  %1571 = vmatprep.subr.bf16.mxu0 0
  %1572 = vmatpush2.bf16.msra.mxu0 0
  %1573 = vmatprep.subr.bf16.mxu0 0
  %1574 = vmatpush2.bf16.msra.mxu0 0
  %1575 = vmatprep.subr.bf16.mxu0 0
  %1576 = vmatpush2.bf16.msra.mxu0 0
  %1577 = vmatprep.mubr.bf16.mxu0 0
  %1578 = vmatmul.mubr.bf16.gmra.mxu0 %v1475
  %v1579 = vpop.f32.mrf.mxu0
  %v1580 = vadd.f32 0.0, %v1579
  %v1581 = vpop.f32.mrf.mxu0
  %v1582 = vpop.f32.mrf.mxu0
  %v1583 = vadd.f32 0.0, %v1582
  %v1584 = vpop.f32.mrf.mxu0
  %1585 = vmatprep.mubr.bf16.mxu0 0
  %1586 = vmatmul.mubr.bf16.gmra.mxu0 %v1476
  %v1587 = vpop.f32.mrf.mxu0
  %v1588 = vadd.f32 0.0, %v1587
  %v1589 = vpop.f32.mrf.mxu0
  %v1590 = vpop.f32.mrf.mxu0
  %v1591 = vadd.f32 0.0, %v1590
  %v1592 = vpop.f32.mrf.mxu0
  %1593 = vmatprep.mubr.bf16.mxu0 0
  %1594 = vmatmul.mubr.bf16.gmra.mxu0 %v1477
  %v1595 = vpop.f32.mrf.mxu0
  %v1596 = vadd.f32 0.0, %v1595
  %v1597 = vpop.f32.mrf.mxu0
  %v1598 = vpop.f32.mrf.mxu0
  %v1599 = vadd.f32 0.0, %v1598
  %v1600 = vpop.f32.mrf.mxu0
  %1601 = vmatprep.mubr.bf16.mxu0 0
  %1602 = vmatmul.mubr.bf16.gmra.mxu0 %v1478
  %v1603 = vpop.f32.mrf.mxu0
  %v1604 = vadd.f32 0.0, %v1603
  %v1605 = vpop.f32.mrf.mxu0
  %v1606 = vpop.f32.mrf.mxu0
  %v1607 = vadd.f32 0.0, %v1606
  %v1608 = vpop.f32.mrf.mxu0
  %1609 = vmatprep.mubr.bf16.mxu0 0
  %1610 = vmatmul.mubr.bf16.gmra.mxu0 %v1479
  %v1611 = vpop.f32.mrf.mxu0
  %v1612 = vadd.f32 0.0, %v1611
  %v1613 = vpop.f32.mrf.mxu0
  %v1614 = vpop.f32.mrf.mxu0
  %v1615 = vpop.f32.mrf.mxu0
  %1616 = vdwg.mxu0
  %v1617 = vadd.f32 %v1464, %v1580
  %v1618 = vadd.f32 %v1465, %v1583
  %v1619 = vadd.f32 %v1466, %v1588
  %v1620 = vadd.f32 %v1467, %v1591
  %v1621 = vadd.f32 %v1468, %v1596
  %v1622 = vadd.f32 %v1469, %v1599
  %v1623 = vadd.f32 %v1470, %v1604
  %v1624 = vadd.f32 %v1471, %v1607
  %v1625 = vadd.f32 %v1472, %v1612
  %1626 = vst [vmem:[%s6] sm:$0xff] %v1617
  %1627 = vst [vmem:[%s6 + $0x8] sm:$0xff] %v1618
  %1628 = vst [vmem:[%s6 + $0x10] sm:$0xff] %v1619
  %1629 = vst [vmem:[%s6 + $0x18] sm:$0xff] %v1620
  %1630 = vst [vmem:[%s6 + $0x20] sm:$0xff] %v1621
  %1631 = vst [vmem:[%s6 + $0x28] sm:$0xff] %v1622
  %1632 = vst [vmem:[%s6 + $0x30] sm:$0xff] %v1623
  %1633 = vst [vmem:[%s6 + $0x38] sm:$0xff] %v1624
  %1634 = vst [vmem:[%s6 + $0x40] sm:$0xff] %v1625
  %v1635 = vld [vmem:[%s2] sm:$0xff]
  %v1636 = vld [vmem:[%s2 + $0x8] sm:$0xff]
  %v1637 = vld [vmem:[%s2 + $0x10] sm:$0xff]
  %v1638 = vld [vmem:[%s2 + $0x18] sm:$0xff]
  %v1639 = vld [vmem:[%s2 + $0x20] sm:$0xff]
  %v1640 = vld [vmem:[%s2 + $0x28] sm:$0xff]
  %v1641 = vld [vmem:[%s2 + $0x30] sm:$0xff]
  %v1642 = vld [vmem:[%s2 + $0x38] sm:$0xff]
  %v1643 = vld [vmem:[%s2 + $0x40] sm:$0xff]
  %1645 = vset.pattern.permute.xlu0 0
  %1646 = vperm.xlu0 %1645, %v1635
  %v1647 = vpop.permute.xlu0 %1646
  %1650 = vset.pattern.permute.xlu0 0
  %1651 = vperm.xlu0 %1650, %v1636
  %v1652 = vpop.permute.xlu0 %1651
  %1655 = vset.pattern.permute.xlu0 0
  %1656 = vperm.xlu0 %1655, %v1637
  %v1657 = vpop.permute.xlu0 %1656
  %1660 = vset.pattern.permute.xlu0 0
  %1661 = vperm.xlu0 %1660, %v1638
  %v1662 = vpop.permute.xlu0 %1661
  %1665 = vset.pattern.permute.xlu0 0
  %1666 = vperm.xlu0 %1665, %v1639
  %v1667 = vpop.permute.xlu0 %1666
  %1670 = vset.pattern.permute.xlu0 0
  %1671 = vperm.xlu0 %1670, %v1640
  %v1672 = vpop.permute.xlu0 %1671
  %1675 = vset.pattern.permute.xlu0 0
  %1676 = vperm.xlu0 %1675, %v1641
  %v1677 = vpop.permute.xlu0 %1676
  %1680 = vset.pattern.permute.xlu0 0
  %1681 = vperm.xlu0 %1680, %v1642
  %v1682 = vpop.permute.xlu0 %1681
  %1685 = vset.pattern.permute.xlu0 0
  %1686 = vperm.xlu0 %1685, %v1643
  %v1687 = vpop.permute.xlu0 %1686
  %v1689 = vmul.f32 %v1617, %v1647
  %v1690 = vmul.f32 %v1618, %v1652
  %v1691 = vmul.f32 %v1619, %v1657
  %v1692 = vmul.f32 %v1620, %v1662
  %v1693 = vmul.f32 %v1621, %v1667
  %v1694 = vmul.f32 %v1622, %v1672
  %v1695 = vmul.f32 %v1623, %v1677
  %v1696 = vmul.f32 %v1624, %v1682
  %v1697 = vmul.f32 %v1625, %v1687
  %v1698 = vadd.f32 %v1689, %v1690
  %v1699 = vadd.f32 %v1698, %v1691
  %v1700 = vadd.f32 %v1699, %v1692
  %v1701 = vadd.f32 %v1700, %v1693
  %v1702 = vadd.f32 %v1701, %v1694
  %v1703 = vadd.f32 %v1702, %v1695
  %v1704 = vadd.f32 %v1703, %v1696
  %v1705 = vadd.f32 %v1704, %v1697
  %v1706 = vrot.slane %v1705, 4
  %v1707 = vadd.f32 %v1705, %v1706
  %v1708 = vrot.slane %v1707, 2
  %v1709 = vadd.f32 %v1707, %v1708
  %v1710 = vrot.slane %v1709, 1
  %v1711 = vadd.f32 %v1709, %v1710
  %1712 = vst [vmem:[%s7] sm:$0x1] %v1711
  %v1713 = vmul.f32 %v1689, %v1689
  %v1714 = vmul.f32 %v1690, %v1690
  %v1715 = vmul.f32 %v1691, %v1691
  %v1716 = vmul.f32 %v1692, %v1692
  %v1717 = vmul.f32 %v1693, %v1693
  %v1718 = vmul.f32 %v1694, %v1694
  %v1719 = vmul.f32 %v1695, %v1695
  %v1720 = vmul.f32 %v1696, %v1696
  %v1721 = vmul.f32 %v1697, %v1697
  %v1722 = vadd.f32 %v1713, %v1714
  %v1723 = vadd.f32 %v1722, %v1715
  %v1724 = vadd.f32 %v1723, %v1716
  %v1725 = vadd.f32 %v1724, %v1717
  %v1726 = vadd.f32 %v1725, %v1718
  %v1727 = vadd.f32 %v1726, %v1719
  %v1728 = vadd.f32 %v1727, %v1720
  %v1729 = vadd.f32 %v1728, %v1721
  %v1730 = vrot.slane %v1729, 4
  %v1731 = vadd.f32 %v1729, %v1730
  %v1732 = vrot.slane %v1731, 2
  %v1733 = vadd.f32 %v1731, %v1732
  %v1734 = vrot.slane %v1733, 1
  %v1735 = vadd.f32 %v1733, %v1734
  %1736 = vst [vmem:[%s8] sm:$0x1] %v1735
  // Predicated region
  $region26: #{dndqn_forward.15} parent=0 // pred_check
    _
  $region27: #{dndqn_forward.15} parent=0 // pred_check_branch
    %1738 = sbr.rel (0) target = $region29
  $region28: #{dndqn_forward.15} parent=0 // pred_region
    _
  $region29: #{dndqn_forward.15} parent=0 // pred_fallthru
    _
  // Predicated region
  $region30: #{dndqn_forward.15} parent=0 // pred_check
    _
  $region31: #{dndqn_forward.15} parent=0 // pred_check_branch
    %1740 = sbr.rel (0) target = $region33
  $region32: #{dndqn_forward.15} parent=0 // pred_region
    _
  $region33: #{dndqn_forward.15} parent=0 // pred_fallthru
    _
  // Predicated region
  $region34: #{dndqn_forward.15} parent=0 // pred_check
    _
  $region35: #{dndqn_forward.15} parent=0 // pred_check_branch
    %1742 = sbr.rel (0) target = $region37
  $region36: #{dndqn_forward.15} parent=0 // pred_region
    _
  $region37: #{dndqn_forward.15} parent=0 // pred_fallthru
    _
  // Predicated region
  $region38: #{dndqn_forward.15} parent=0 // pred_check
    _
  $region39: #{dndqn_forward.15} parent=0 // pred_check_branch
    %1744 = sbr.rel (0) target = $region41
  $region40: #{dndqn_forward.15} parent=0 // pred_region
    _
  $region41: #{dndqn_forward.15} parent=0 // pred_fallthru
    _
  // Predicated region
  $region42: #{dndqn_forward.15} parent=0 // pred_check
    _
  $region43: #{dndqn_forward.15} parent=0 // pred_check_branch
    %1746 = sbr.rel (0) target = $region45
  $region44: #{dndqn_forward.15} parent=0 // pred_region
    _
  $region45: #{dndqn_forward.15} parent=0 // pred_fallthru
    _
  // Predicated region
  $region46: #{dndqn_forward.15} parent=0 // pred_check
    _
  $region47: #{dndqn_forward.15} parent=0 // pred_check_branch
    %1748 = sbr.rel (0) target = $region49
  $region48: #{dndqn_forward.15} parent=0 // pred_region
    _
  $region49: #{dndqn_forward.15} parent=0 // pred_fallthru
    _

// kernel: dndqn_forward.23
$region0: #{dndqn_forward.23}
  #allocation0 [shape = 'u32[]', space=smem, size = 0x4, offset = 0x4, fixed_abs, tag = 'smem constant byte address 0x4 - core index']
  #allocation1 [shape = 'u32[144,128]{1,0:T(1,128)}', space=vmem, size = 0x12000, scoped, tag = 'internal scratch']
  %s0 = inlined_call_operand.vmem [shape: f32[8,128], index: 0, kind: input, shape index: {}]
  %s1 = inlined_call_operand.vmem [shape: f32[1,128], index: 1, kind: input, shape index: {}]
  %s2 = inlined_call_operand.vmem [shape: f32[1,128], index: 2, kind: input, shape index: {}]
  %s3 = inlined_call_operand.vmem [shape: f32[8,8], index: 3, kind: input, shape index: {}]
  %s4 = inlined_call_operand.vmem [shape: bf16[128,128], index: 4, kind: input, shape index: {}]
  %s5 = inlined_call_operand.vmem [shape: f32[1,128], index: 5, kind: input, shape index: {}]
  %s6 = inlined_call_operand.vmem [shape: f32[8,128], index: 6, kind: output, shape index: {}]
  %s7 = sld [smem:[#allocation0]]
  $region34: #{dndqn_forward.23} parent=0
    _
  %s9 = ssub.s32 1, %s7
  %s10 = scalar_select 0, %s9, %s7
  // Predicated region
  $region2: #{dndqn_forward.23} parent=0 // pred_check
    _
  $region3: #{dndqn_forward.23} parent=0 // pred_check_branch
    %12 = sbr.rel (0) target = $region5
  $region4: #{dndqn_forward.23} parent=0 // pred_region
    _
  $region5: #{dndqn_forward.23} parent=0 // pred_fallthru
    _
  // Predicated region
  $region6: #{dndqn_forward.23} parent=0 // pred_check
    _
  $region7: #{dndqn_forward.23} parent=0 // pred_check_branch
    %14 = sbr.rel (0) target = $region9
  $region8: #{dndqn_forward.23} parent=0 // pred_region
    _
  $region9: #{dndqn_forward.23} parent=0 // pred_fallthru
    _
  // Predicated region
  $region10: #{dndqn_forward.23} parent=0 // pred_check
    _
  $region11: #{dndqn_forward.23} parent=0 // pred_check_branch
    %16 = sbr.rel (0) target = $region13
  $region12: #{dndqn_forward.23} parent=0 // pred_region
    _
  $region13: #{dndqn_forward.23} parent=0 // pred_fallthru
    _
  // Predicated region
  $region14: #{dndqn_forward.23} parent=0 // pred_check
    _
  $region15: #{dndqn_forward.23} parent=0 // pred_check_branch
    %18 = sbr.rel (0) target = $region17
  $region16: #{dndqn_forward.23} parent=0 // pred_region
    _
  $region17: #{dndqn_forward.23} parent=0 // pred_fallthru
    _
  // Predicated region
  $region18: #{dndqn_forward.23} parent=0 // pred_check
    _
  $region19: #{dndqn_forward.23} parent=0 // pred_check_branch
    %20 = sbr.rel (0) target = $region21
  $region20: #{dndqn_forward.23} parent=0 // pred_region
    _
  $region21: #{dndqn_forward.23} parent=0 // pred_fallthru
    _
  // Predicated region
  $region22: #{dndqn_forward.23} parent=0 // pred_check
    _
  $region23: #{dndqn_forward.23} parent=0 // pred_check_branch
    %22 = sbr.rel (0) target = $region25
  $region24: #{dndqn_forward.23} parent=0 // pred_region
    _
  $region25: #{dndqn_forward.23} parent=0 // pred_fallthru
    _
  %v24 = vld [vmem:[%s0] sm:$0xff]
  %v25 = vld [vmem:[%s1] sm:$0x1]
  %v27 = vlaneseq
  %v28 = vshrl.u32 %v27, 7
  %v29 = vsub.s32 0, %v28
  %v30 = vrot.slane %v25, %v29
  %v32 = vmul.f32 %v24, %v30
  %v33 = vld [vmem:[%s2] sm:$0x1]
  %v35 = vlaneseq
  %v36 = vshrl.u32 %v35, 7
  %v37 = vsub.s32 0, %v36
  %v38 = vrot.slane %v33, %v37
  %v40 = vadd.f32 %v32, %v38
  %v41 = vmax.f32 %v40, 0.0
  %v42 = vld [vmem:[%s3] sm:$0xff]
  %vm43 = vcmask 64512
  %v45 = vsel %vm43, %v42, 0
  %47 = vmatprep.subr.mxu0 0.0
  %48 = vmatpush1.msra.mxu0 0.0
  %49 = vmatprep.subr.mxu0 0.0
  %50 = vmatpush1.msra.mxu0 0.0
  %51 = vmatprep.subr.mxu0 0.0
  %52 = vmatpush1.msra.mxu0 0.0
  %53 = vmatprep.subr.mxu0 0.0
  %54 = vmatpush1.msra.mxu0 0.0
  %55 = vmatprep.subr.mxu0 0.0
  %56 = vmatpush1.msra.mxu0 0.0
  %57 = vmatprep.subr.mxu0 0.0
  %58 = vmatpush1.msra.mxu0 0.0
  %59 = vmatprep.subr.mxu0 0.0
  %60 = vmatpush1.msra.mxu0 0.0
  %61 = vmatprep.subr.mxu0 0.0
  %62 = vmatpush1.msra.mxu0 0.0
  %63 = vmatprep.subr.mxu0 0.0
  %64 = vmatpush1.msra.mxu0 0.0
  %65 = vmatprep.subr.mxu0 0.0
  %66 = vmatpush1.msra.mxu0 0.0
  %67 = vmatprep.subr.mxu0 0.0
  %68 = vmatpush1.msra.mxu0 0.0
  %69 = vmatprep.subr.mxu0 0.0
  %70 = vmatpush1.msra.mxu0 0.0
  %71 = vmatprep.subr.mxu0 0.0
  %72 = vmatpush1.msra.mxu0 0.0
  %73 = vmatprep.subr.mxu0 0.0
  %74 = vmatpush1.msra.mxu0 0.0
  %75 = vmatprep.subr.mxu0 0.0
  %76 = vmatpush1.msra.mxu0 0.0
  %77 = vmatprep.subr.mxu0 0.0
  %78 = vmatpush1.msra.mxu0 %v41
  %79 = vmatprep.subr.mxu0 0.0
  %80 = vmatpush2.msra.mxu0 0.0
  %81 = vmatprep.subr.mxu0 0.0
  %82 = vmatpush2.msra.mxu0 0.0
  %83 = vmatprep.subr.mxu0 0.0
  %84 = vmatpush2.msra.mxu0 0.0
  %85 = vmatprep.subr.mxu0 0.0
  %86 = vmatpush2.msra.mxu0 0.0
  %87 = vmatprep.subr.mxu0 0.0
  %88 = vmatpush2.msra.mxu0 0.0
  %89 = vmatprep.subr.mxu0 0.0
  %90 = vmatpush2.msra.mxu0 0.0
  %91 = vmatprep.subr.mxu0 0.0
  %92 = vmatpush2.msra.mxu0 0.0
  %93 = vmatprep.subr.mxu0 0.0
  %94 = vmatpush2.msra.mxu0 0.0
  %95 = vmatprep.subr.mxu0 0.0
  %96 = vmatpush2.msra.mxu0 0.0
  %97 = vmatprep.subr.mxu0 0.0
  %98 = vmatpush2.msra.mxu0 0.0
  %99 = vmatprep.subr.mxu0 0.0
  %100 = vmatpush2.msra.mxu0 0.0
  %101 = vmatprep.subr.mxu0 0.0
  %102 = vmatpush2.msra.mxu0 0.0
  %103 = vmatprep.subr.mxu0 0.0
  %104 = vmatpush2.msra.mxu0 0.0
  %105 = vmatprep.subr.mxu0 0.0
  %106 = vmatpush2.msra.mxu0 0.0
  %107 = vmatprep.subr.mxu0 0.0
  %108 = vmatpush2.msra.mxu0 0.0
  %109 = vmatprep.subr.mxu0 0.0
  %110 = vmatpush2.msra.mxu0 0.0
  %111 = vmatprep.mubr.f32.mxu0 0.0
  %112 = vmatmul.mubr.f32.gmra.mxu0 %v45
  %v113 = vpop.f32.mrf.mxu0
  %v114 = vadd.f32 0.0, %v113
  %v115 = vpop.f32.mrf.mxu0
  %116 = vdwg.mxu0
  %v117 = vpack.c.bf16 %v114, %v114
  %v118 = vld [vmem:[%s4] sm:$0xf]
  %v119 = vld [vmem:[%s4 + $0x4] sm:$0xf]
  %v120 = vld [vmem:[%s4 + $0x8] sm:$0xf]
  %v121 = vld [vmem:[%s4 + $0xc] sm:$0xf]
  %v122 = vld [vmem:[%s4 + $0x10] sm:$0xf]
  %v123 = vld [vmem:[%s4 + $0x14] sm:$0xf]
  %v124 = vld [vmem:[%s4 + $0x18] sm:$0xf]
  %v125 = vld [vmem:[%s4 + $0x1c] sm:$0xf]
  %v126 = vld [vmem:[%s4 + $0x20] sm:$0xf]
  %v127 = vld [vmem:[%s4 + $0x24] sm:$0xf]
  %v128 = vld [vmem:[%s4 + $0x28] sm:$0xf]
  %v129 = vld [vmem:[%s4 + $0x2c] sm:$0xf]
  %v130 = vld [vmem:[%s4 + $0x30] sm:$0xf]
  %v131 = vld [vmem:[%s4 + $0x34] sm:$0xf]
  %v132 = vld [vmem:[%s4 + $0x38] sm:$0xf]
  %v133 = vld [vmem:[%s4 + $0x3c] sm:$0xf]
  %v134 = vld [vmem:[%s5] sm:$0x1]
  %v136 = vlaneseq
  %v137 = vshrl.u32 %v136, 7
  %v138 = vsub.s32 0, %v137
  %v139 = vrot.slane %v134, %v138
  %v157 = vunpack.c.l.b16 %v118
  %v158 = vunpack.c.l.b16 %v119
  %v159 = vunpack.c.l.b16 %v120
  %v160 = vunpack.c.l.b16 %v121
  %v161 = vunpack.c.l.b16 %v122
  %v162 = vunpack.c.l.b16 %v123
  %v163 = vunpack.c.l.b16 %v124
  %v164 = vunpack.c.l.b16 %v125
  %v165 = vunpack.c.l.b16 %v126
  %v166 = vunpack.c.l.b16 %v127
  %v167 = vunpack.c.l.b16 %v128
  %v168 = vunpack.c.l.b16 %v129
  %v169 = vunpack.c.l.b16 %v130
  %v170 = vunpack.c.l.b16 %v131
  %v171 = vunpack.c.l.b16 %v132
  %v172 = vunpack.c.l.b16 %v133
  %v173 = vpack.c.b16 %v158, %v157
  %v174 = vpack.c.b16 %v160, %v159
  %v175 = vpack.c.b16 %v162, %v161
  %v176 = vpack.c.b16 %v164, %v163
  %v177 = vpack.c.b16 %v166, %v165
  %v178 = vpack.c.b16 %v168, %v167
  %v179 = vpack.c.b16 %v170, %v169
  %v180 = vpack.c.b16 %v172, %v171
  %189 = vmatprep.subr.bf16.mxu0 0
  %190 = vmatpush1.bf16.msra.mxu0 %v180
  %191 = vmatprep.subr.bf16.mxu0 0
  %192 = vmatpush1.bf16.msra.mxu0 %v179
  %193 = vmatprep.subr.bf16.mxu0 0
  %194 = vmatpush1.bf16.msra.mxu0 %v178
  %195 = vmatprep.subr.bf16.mxu0 0
  %196 = vmatpush1.bf16.msra.mxu0 %v177
  %197 = vmatprep.subr.bf16.mxu0 0
  %198 = vmatpush1.bf16.msra.mxu0 %v176
  %199 = vmatprep.subr.bf16.mxu0 0
  %200 = vmatpush1.bf16.msra.mxu0 %v175
  %201 = vmatprep.subr.bf16.mxu0 0
  %202 = vmatpush1.bf16.msra.mxu0 %v174
  %203 = vmatprep.subr.bf16.mxu0 0
  %204 = vmatpush1.bf16.msra.mxu0 %v173
  %205 = vmatprep.subr.bf16.mxu0 0
  %206 = vmatpush2.bf16.msra.mxu0 0
  %207 = vmatprep.subr.bf16.mxu0 0
  %208 = vmatpush2.bf16.msra.mxu0 0
  %209 = vmatprep.subr.bf16.mxu0 0
  %210 = vmatpush2.bf16.msra.mxu0 0
  %211 = vmatprep.subr.bf16.mxu0 0
  %212 = vmatpush2.bf16.msra.mxu0 0
  %213 = vmatprep.subr.bf16.mxu0 0
  %214 = vmatpush2.bf16.msra.mxu0 0
  %215 = vmatprep.subr.bf16.mxu0 0
  %216 = vmatpush2.bf16.msra.mxu0 0
  %217 = vmatprep.subr.bf16.mxu0 0
  %218 = vmatpush2.bf16.msra.mxu0 0
  %219 = vmatprep.subr.bf16.mxu0 0
  %220 = vmatpush2.bf16.msra.mxu0 0
  %221 = vmatprep.mubr.bf16.mxu0 0
  %222 = vmatmul.mubr.bf16.gmra.mxu0 %v117
  %v223 = vpop.f32.mrf.mxu0
  %v224 = vadd.f32 %v139, %v223
  %v225 = vpop.f32.mrf.mxu0
  %v226 = vpop.f32.mrf.mxu0
  %v227 = vpop.f32.mrf.mxu0
  %228 = vdwg.mxu0
  %229 = vst [vmem:[%s6] sm:$0xff] %v224
  // Predicated region
  $region26: #{dndqn_forward.23} parent=0 // pred_check
    _
  $region27: #{dndqn_forward.23} parent=0 // pred_check_branch
    %231 = sbr.rel (0) target = $region29
  $region28: #{dndqn_forward.23} parent=0 // pred_region
    _
  $region29: #{dndqn_forward.23} parent=0 // pred_fallthru
    _
  // Predicated region
  $region30: #{dndqn_forward.23} parent=0 // pred_check
    _
  $region31: #{dndqn_forward.23} parent=0 // pred_check_branch
    %233 = sbr.rel (0) target = $region33
  $region32: #{dndqn_forward.23} parent=0 // pred_region
    _
  $region33: #{dndqn_forward.23} parent=0 // pred_fallthru
    _

// kernel: dndqn_forward.20
$region0: #{dndqn_forward.20}
  #allocation0 [shape = 'u32[]', space=smem, size = 0x4, offset = 0x4, fixed_abs, tag = 'smem constant byte address 0x4 - core index']
  #allocation1 [shape = 'u32[144,128]{1,0:T(1,128)}', space=vmem, size = 0x12000, scoped, tag = 'internal scratch']
  %s0 = inlined_call_operand.vmem [shape: f32[48,128], index: 0, kind: input, shape index: {}]
  %s1 = inlined_call_operand.vmem [shape: f32[48,1], index: 1, kind: input, shape index: {}]
  %s2 = inlined_call_operand.vmem [shape: f32[32,1], index: 2, kind: input, shape index: {}]
  %s3 = inlined_call_operand.vmem [shape: f32[1,128], index: 3, kind: input, shape index: {}]
  %s4 = inlined_call_operand.vmem [shape: f32[1,128], index: 4, kind: input, shape index: {}]
  %s5 = inlined_call_operand.vmem [shape: bf16[9,128,128], index: 5, kind: input, shape index: {}]
  %s6 = inlined_call_operand.vmem [shape: f32[32,128], index: 6, kind: output, shape index: {0}]
  %s7 = inlined_call_operand.vmem [shape: f32[1,128], index: 7, kind: output, shape index: {1}]
  %s8 = inlined_call_operand.vmem [shape: f32[1,128], index: 8, kind: output, shape index: {2}]
  %9 = xla_tuple %s6, %s7, %s8
  %s10 = sld [smem:[#allocation0]]
  $region50: #{dndqn_forward.20} parent=0
    _
  %s12 = ssub.s32 1, %s10
  %s13 = scalar_select 0, %s12, %s10
  // Predicated region
  $region2: #{dndqn_forward.20} parent=0 // pred_check
    _
  $region3: #{dndqn_forward.20} parent=0 // pred_check_branch
    %15 = sbr.rel (0) target = $region5
  $region4: #{dndqn_forward.20} parent=0 // pred_region
    _
  $region5: #{dndqn_forward.20} parent=0 // pred_fallthru
    _
  // Predicated region
  $region6: #{dndqn_forward.20} parent=0 // pred_check
    _
  $region7: #{dndqn_forward.20} parent=0 // pred_check_branch
    %17 = sbr.rel (0) target = $region9
  $region8: #{dndqn_forward.20} parent=0 // pred_region
    _
  $region9: #{dndqn_forward.20} parent=0 // pred_fallthru
    _
  // Predicated region
  $region10: #{dndqn_forward.20} parent=0 // pred_check
    _
  $region11: #{dndqn_forward.20} parent=0 // pred_check_branch
    %19 = sbr.rel (0) target = $region13
  $region12: #{dndqn_forward.20} parent=0 // pred_region
    _
  $region13: #{dndqn_forward.20} parent=0 // pred_fallthru
    _
  // Predicated region
  $region14: #{dndqn_forward.20} parent=0 // pred_check
    _
  $region15: #{dndqn_forward.20} parent=0 // pred_check_branch
    %21 = sbr.rel (0) target = $region17
  $region16: #{dndqn_forward.20} parent=0 // pred_region
    _
  $region17: #{dndqn_forward.20} parent=0 // pred_fallthru
    _
  // Predicated region
  $region18: #{dndqn_forward.20} parent=0 // pred_check
    _
  $region19: #{dndqn_forward.20} parent=0 // pred_check_branch
    %23 = sbr.rel (0) target = $region21
  $region20: #{dndqn_forward.20} parent=0 // pred_region
    _
  $region21: #{dndqn_forward.20} parent=0 // pred_fallthru
    _
  // Predicated region
  $region22: #{dndqn_forward.20} parent=0 // pred_check
    _
  $region23: #{dndqn_forward.20} parent=0 // pred_check_branch
    %25 = sbr.rel (0) target = $region25
  $region24: #{dndqn_forward.20} parent=0 // pred_region
    _
  $region25: #{dndqn_forward.20} parent=0 // pred_fallthru
    _
  %v27 = vld [vmem:[%s0] sm:$0xff]
  %v28 = vld [vmem:[%s0 + $0x8] sm:$0xff]
  %v29 = vld [vmem:[%s0 + $0x10] sm:$0xff]
  %v30 = vld [vmem:[%s0 + $0x18] sm:$0xff]
  %v31 = vld [vmem:[%s0 + $0x20] sm:$0xff]
  %v32 = vld [vmem:[%s0 + $0x28] sm:$0xff]
  %v33 = vld [vmem:[%s3] sm:$0x1]
  %v35 = vlaneseq
  %v36 = vshrl.u32 %v35, 7
  %v37 = vsub.s32 0, %v36
  %v38 = vrot.slane %v33, %v37
  %v40 = vmul.f32 %v27, %v38
  %v41 = vmul.f32 %v28, %v38
  %v42 = vmul.f32 %v29, %v38
  %v43 = vmul.f32 %v30, %v38
  %v44 = vmul.f32 %v31, %v38
  %v45 = vmul.f32 %v32, %v38
  %v46 = vld [vmem:[%s4] sm:$0x1]
  %v48 = vlaneseq
  %v49 = vshrl.u32 %v48, 7
  %v50 = vsub.s32 0, %v49
  %v51 = vrot.slane %v46, %v50
  %v53 = vadd.f32 %v40, %v51
  %v54 = vadd.f32 %v41, %v51
  %v55 = vadd.f32 %v42, %v51
  %v56 = vadd.f32 %v43, %v51
  %v57 = vadd.f32 %v44, %v51
  %v58 = vadd.f32 %v45, %v51
  %v59 = vmax.f32 %v53, 0.0
  %v60 = vmax.f32 %v54, 0.0
  %v61 = vmax.f32 %v55, 0.0
  %v62 = vmax.f32 %v56, 0.0
  %v63 = vmax.f32 %v57, 0.0
  %v64 = vmax.f32 %v58, 0.0
  %v65 = vld [vmem:[%s1] sm:$0xff]
  %v66 = vld [vmem:[%s1 + $0x8] sm:$0xff]
  %v67 = vld [vmem:[%s1 + $0x10] sm:$0xff]
  %v68 = vld [vmem:[%s1 + $0x18] sm:$0xff]
  %v69 = vld [vmem:[%s1 + $0x20] sm:$0xff]
  %v70 = vld [vmem:[%s1 + $0x28] sm:$0xff]
  %72 = vset.pattern.permute.xlu0 0
  %73 = vperm.xlu0 %72, %v65
  %v74 = vpop.permute.xlu0 %73
  %77 = vset.pattern.permute.xlu0 0
  %78 = vperm.xlu0 %77, %v66
  %v79 = vpop.permute.xlu0 %78
  %82 = vset.pattern.permute.xlu0 0
  %83 = vperm.xlu0 %82, %v67
  %v84 = vpop.permute.xlu0 %83
  %87 = vset.pattern.permute.xlu0 0
  %88 = vperm.xlu0 %87, %v68
  %v89 = vpop.permute.xlu0 %88
  %92 = vset.pattern.permute.xlu0 0
  %93 = vperm.xlu0 %92, %v69
  %v94 = vpop.permute.xlu0 %93
  %97 = vset.pattern.permute.xlu0 0
  %98 = vperm.xlu0 %97, %v70
  %v99 = vpop.permute.xlu0 %98
  %v101 = vmul.f32 %v59, %v74
  %v102 = vmul.f32 %v60, %v79
  %v103 = vmul.f32 %v61, %v84
  %v104 = vmul.f32 %v62, %v89
  %v105 = vmul.f32 %v63, %v94
  %v106 = vmul.f32 %v64, %v99
  %v107 = vpack.c.bf16 %v102, %v101
  %v108 = vpack.c.bf16 %v104, %v103
  %v109 = vld [vmem:[%s5] sm:$0xf]
  %v110 = vld [vmem:[%s5 + $0x4] sm:$0xf]
  %v111 = vld [vmem:[%s5 + $0x8] sm:$0xf]
  %v112 = vld [vmem:[%s5 + $0xc] sm:$0xf]
  %v113 = vld [vmem:[%s5 + $0x10] sm:$0xf]
  %v114 = vld [vmem:[%s5 + $0x14] sm:$0xf]
  %v115 = vld [vmem:[%s5 + $0x18] sm:$0xf]
  %v116 = vld [vmem:[%s5 + $0x1c] sm:$0xf]
  %v117 = vld [vmem:[%s5 + $0x20] sm:$0xf]
  %v118 = vld [vmem:[%s5 + $0x24] sm:$0xf]
  %v119 = vld [vmem:[%s5 + $0x28] sm:$0xf]
  %v120 = vld [vmem:[%s5 + $0x2c] sm:$0xf]
  %v121 = vld [vmem:[%s5 + $0x30] sm:$0xf]
  %v122 = vld [vmem:[%s5 + $0x34] sm:$0xf]
  %v123 = vld [vmem:[%s5 + $0x38] sm:$0xf]
  %v124 = vld [vmem:[%s5 + $0x3c] sm:$0xf]
  %v125 = vrot.slane %v101, 1
  %v126 = vrot.slane %v102, 1
  %v127 = vrot.slane %v103, 1
  %v128 = vrot.slane %v104, 1
  %v129 = vrot.slane %v105, 1
  %v130 = vlaneseq
  %v131 = vshrl.u32 %v130, 7
  %vm132 = vcmp.lt.s32.totalorder %v131, 7
  %v133 = vsel %vm132, %v128, %v129
  %v134 = vsel %vm132, %v127, %v128
  %v135 = vsel %vm132, %v126, %v127
  %v136 = vsel %vm132, %v125, %v126
  %v137 = vpack.c.bf16 %v135, %v136
  %v138 = vpack.c.bf16 %v133, %v134
  %s139 = scalar_lea.vmem %s5, 64
  %v140 = vld [vmem:[%s139] sm:$0xf]
  %v141 = vld [vmem:[%s139 + $0x4] sm:$0xf]
  %v142 = vld [vmem:[%s139 + $0x8] sm:$0xf]
  %v143 = vld [vmem:[%s139 + $0xc] sm:$0xf]
  %v144 = vld [vmem:[%s139 + $0x10] sm:$0xf]
  %v145 = vld [vmem:[%s139 + $0x14] sm:$0xf]
  %v146 = vld [vmem:[%s139 + $0x18] sm:$0xf]
  %v147 = vld [vmem:[%s139 + $0x1c] sm:$0xf]
  %v148 = vld [vmem:[%s139 + $0x20] sm:$0xf]
  %v149 = vld [vmem:[%s139 + $0x24] sm:$0xf]
  %v150 = vld [vmem:[%s139 + $0x28] sm:$0xf]
  %v151 = vld [vmem:[%s139 + $0x2c] sm:$0xf]
  %v152 = vld [vmem:[%s139 + $0x30] sm:$0xf]
  %v153 = vld [vmem:[%s139 + $0x34] sm:$0xf]
  %v154 = vld [vmem:[%s139 + $0x38] sm:$0xf]
  %v155 = vld [vmem:[%s139 + $0x3c] sm:$0xf]
  %v172 = vunpack.c.l.b16 %v140
  %v173 = vunpack.c.l.b16 %v141
  %v174 = vunpack.c.l.b16 %v142
  %v175 = vunpack.c.l.b16 %v143
  %v176 = vunpack.c.l.b16 %v144
  %v177 = vunpack.c.l.b16 %v145
  %v178 = vunpack.c.l.b16 %v146
  %v179 = vunpack.c.l.b16 %v147
  %v180 = vunpack.c.l.b16 %v148
  %v181 = vunpack.c.l.b16 %v149
  %v182 = vunpack.c.l.b16 %v150
  %v183 = vunpack.c.l.b16 %v151
  %v184 = vunpack.c.l.b16 %v152
  %v185 = vunpack.c.l.b16 %v153
  %v186 = vunpack.c.l.b16 %v154
  %v187 = vunpack.c.l.b16 %v155
  %v188 = vpack.c.b16 %v173, %v172
  %v189 = vpack.c.b16 %v175, %v174
  %v190 = vpack.c.b16 %v177, %v176
  %v191 = vpack.c.b16 %v179, %v178
  %v192 = vpack.c.b16 %v181, %v180
  %v193 = vpack.c.b16 %v183, %v182
  %v194 = vpack.c.b16 %v185, %v184
  %v195 = vpack.c.b16 %v187, %v186
  %204 = vmatprep.subr.bf16.mxu0 0
  %205 = vmatpush1.bf16.msra.mxu0 %v195
  %206 = vmatprep.subr.bf16.mxu0 0
  %207 = vmatpush1.bf16.msra.mxu0 %v194
  %208 = vmatprep.subr.bf16.mxu0 0
  %209 = vmatpush1.bf16.msra.mxu0 %v193
  %210 = vmatprep.subr.bf16.mxu0 0
  %211 = vmatpush1.bf16.msra.mxu0 %v192
  %212 = vmatprep.subr.bf16.mxu0 0
  %213 = vmatpush1.bf16.msra.mxu0 %v191
  %214 = vmatprep.subr.bf16.mxu0 0
  %215 = vmatpush1.bf16.msra.mxu0 %v190
  %216 = vmatprep.subr.bf16.mxu0 0
  %217 = vmatpush1.bf16.msra.mxu0 %v189
  %218 = vmatprep.subr.bf16.mxu0 0
  %219 = vmatpush1.bf16.msra.mxu0 %v188
  %220 = vmatprep.subr.bf16.mxu0 0
  %221 = vmatpush2.bf16.msra.mxu0 0
  %222 = vmatprep.subr.bf16.mxu0 0
  %223 = vmatpush2.bf16.msra.mxu0 0
  %224 = vmatprep.subr.bf16.mxu0 0
  %225 = vmatpush2.bf16.msra.mxu0 0
  %226 = vmatprep.subr.bf16.mxu0 0
  %227 = vmatpush2.bf16.msra.mxu0 0
  %228 = vmatprep.subr.bf16.mxu0 0
  %229 = vmatpush2.bf16.msra.mxu0 0
  %230 = vmatprep.subr.bf16.mxu0 0
  %231 = vmatpush2.bf16.msra.mxu0 0
  %232 = vmatprep.subr.bf16.mxu0 0
  %233 = vmatpush2.bf16.msra.mxu0 0
  %234 = vmatprep.subr.bf16.mxu0 0
  %235 = vmatpush2.bf16.msra.mxu0 0
  %236 = vmatprep.mubr.bf16.mxu0 0
  %237 = vmatmul.mubr.bf16.gmra.mxu0 %v137
  %v238 = vpop.f32.mrf.mxu0
  %v239 = vadd.f32 0.0, %v238
  %v240 = vpop.f32.mrf.mxu0
  %v241 = vpop.f32.mrf.mxu0
  %v242 = vadd.f32 0.0, %v241
  %v243 = vpop.f32.mrf.mxu0
  %244 = vmatprep.mubr.bf16.mxu0 0
  %245 = vmatmul.mubr.bf16.gmra.mxu0 %v138
  %v246 = vpop.f32.mrf.mxu0
  %v247 = vadd.f32 0.0, %v246
  %v248 = vpop.f32.mrf.mxu0
  %v249 = vpop.f32.mrf.mxu0
  %v250 = vadd.f32 0.0, %v249
  %v251 = vpop.f32.mrf.mxu0
  %252 = vdwg.mxu0
  %v269 = vunpack.c.l.b16 %v109
  %v270 = vunpack.c.l.b16 %v110
  %v271 = vunpack.c.l.b16 %v111
  %v272 = vunpack.c.l.b16 %v112
  %v273 = vunpack.c.l.b16 %v113
  %v274 = vunpack.c.l.b16 %v114
  %v275 = vunpack.c.l.b16 %v115
  %v276 = vunpack.c.l.b16 %v116
  %v277 = vunpack.c.l.b16 %v117
  %v278 = vunpack.c.l.b16 %v118
  %v279 = vunpack.c.l.b16 %v119
  %v280 = vunpack.c.l.b16 %v120
  %v281 = vunpack.c.l.b16 %v121
  %v282 = vunpack.c.l.b16 %v122
  %v283 = vunpack.c.l.b16 %v123
  %v284 = vunpack.c.l.b16 %v124
  %v285 = vpack.c.b16 %v270, %v269
  %v286 = vpack.c.b16 %v272, %v271
  %v287 = vpack.c.b16 %v274, %v273
  %v288 = vpack.c.b16 %v276, %v275
  %v289 = vpack.c.b16 %v278, %v277
  %v290 = vpack.c.b16 %v280, %v279
  %v291 = vpack.c.b16 %v282, %v281
  %v292 = vpack.c.b16 %v284, %v283
  %301 = vmatprep.subr.bf16.mxu0 0
  %302 = vmatpush1.bf16.msra.mxu0 %v292
  %303 = vmatprep.subr.bf16.mxu0 0
  %304 = vmatpush1.bf16.msra.mxu0 %v291
  %305 = vmatprep.subr.bf16.mxu0 0
  %306 = vmatpush1.bf16.msra.mxu0 %v290
  %307 = vmatprep.subr.bf16.mxu0 0
  %308 = vmatpush1.bf16.msra.mxu0 %v289
  %309 = vmatprep.subr.bf16.mxu0 0
  %310 = vmatpush1.bf16.msra.mxu0 %v288
  %311 = vmatprep.subr.bf16.mxu0 0
  %312 = vmatpush1.bf16.msra.mxu0 %v287
  %313 = vmatprep.subr.bf16.mxu0 0
  %314 = vmatpush1.bf16.msra.mxu0 %v286
  %315 = vmatprep.subr.bf16.mxu0 0
  %316 = vmatpush1.bf16.msra.mxu0 %v285
  %317 = vmatprep.subr.bf16.mxu0 0
  %318 = vmatpush2.bf16.msra.mxu0 0
  %319 = vmatprep.subr.bf16.mxu0 0
  %320 = vmatpush2.bf16.msra.mxu0 0
  %321 = vmatprep.subr.bf16.mxu0 0
  %322 = vmatpush2.bf16.msra.mxu0 0
  %323 = vmatprep.subr.bf16.mxu0 0
  %324 = vmatpush2.bf16.msra.mxu0 0
  %325 = vmatprep.subr.bf16.mxu0 0
  %326 = vmatpush2.bf16.msra.mxu0 0
  %327 = vmatprep.subr.bf16.mxu0 0
  %328 = vmatpush2.bf16.msra.mxu0 0
  %329 = vmatprep.subr.bf16.mxu0 0
  %330 = vmatpush2.bf16.msra.mxu0 0
  %331 = vmatprep.subr.bf16.mxu0 0
  %332 = vmatpush2.bf16.msra.mxu0 0
  %333 = vmatprep.mubr.bf16.mxu0 0
  %334 = vmatmul.mubr.bf16.gmra.mxu0 %v107
  %v335 = vpop.f32.mrf.mxu0
  %v336 = vadd.f32 %v239, %v335
  %v337 = vpop.f32.mrf.mxu0
  %v338 = vpop.f32.mrf.mxu0
  %v339 = vadd.f32 %v242, %v338
  %v340 = vpop.f32.mrf.mxu0
  %341 = vmatprep.mubr.bf16.mxu0 0
  %342 = vmatmul.mubr.bf16.gmra.mxu0 %v108
  %v343 = vpop.f32.mrf.mxu0
  %v344 = vadd.f32 %v247, %v343
  %v345 = vpop.f32.mrf.mxu0
  %v346 = vpop.f32.mrf.mxu0
  %v347 = vadd.f32 %v250, %v346
  %v348 = vpop.f32.mrf.mxu0
  %349 = vdwg.mxu0
  %v350 = vrot.slane %v101, 2
  %v351 = vrot.slane %v102, 2
  %v352 = vrot.slane %v103, 2
  %v353 = vrot.slane %v104, 2
  %v354 = vrot.slane %v105, 2
  %vm355 = vcmp.lt.s32.totalorder %v131, 6
  %v356 = vsel %vm355, %v353, %v354
  %v357 = vsel %vm355, %v352, %v353
  %v358 = vsel %vm355, %v351, %v352
  %v359 = vsel %vm355, %v350, %v351
  %v360 = vpack.c.bf16 %v358, %v359
  %v361 = vpack.c.bf16 %v356, %v357
  %s362 = scalar_lea.vmem %s5, 128
  %v363 = vld [vmem:[%s362] sm:$0xf]
  %v364 = vld [vmem:[%s362 + $0x4] sm:$0xf]
  %v365 = vld [vmem:[%s362 + $0x8] sm:$0xf]
  %v366 = vld [vmem:[%s362 + $0xc] sm:$0xf]
  %v367 = vld [vmem:[%s362 + $0x10] sm:$0xf]
  %v368 = vld [vmem:[%s362 + $0x14] sm:$0xf]
  %v369 = vld [vmem:[%s362 + $0x18] sm:$0xf]
  %v370 = vld [vmem:[%s362 + $0x1c] sm:$0xf]
  %v371 = vld [vmem:[%s362 + $0x20] sm:$0xf]
  %v372 = vld [vmem:[%s362 + $0x24] sm:$0xf]
  %v373 = vld [vmem:[%s362 + $0x28] sm:$0xf]
  %v374 = vld [vmem:[%s362 + $0x2c] sm:$0xf]
  %v375 = vld [vmem:[%s362 + $0x30] sm:$0xf]
  %v376 = vld [vmem:[%s362 + $0x34] sm:$0xf]
  %v377 = vld [vmem:[%s362 + $0x38] sm:$0xf]
  %v378 = vld [vmem:[%s362 + $0x3c] sm:$0xf]
  %v395 = vunpack.c.l.b16 %v363
  %v396 = vunpack.c.l.b16 %v364
  %v397 = vunpack.c.l.b16 %v365
  %v398 = vunpack.c.l.b16 %v366
  %v399 = vunpack.c.l.b16 %v367
  %v400 = vunpack.c.l.b16 %v368
  %v401 = vunpack.c.l.b16 %v369
  %v402 = vunpack.c.l.b16 %v370
  %v403 = vunpack.c.l.b16 %v371
  %v404 = vunpack.c.l.b16 %v372
  %v405 = vunpack.c.l.b16 %v373
  %v406 = vunpack.c.l.b16 %v374
  %v407 = vunpack.c.l.b16 %v375
  %v408 = vunpack.c.l.b16 %v376
  %v409 = vunpack.c.l.b16 %v377
  %v410 = vunpack.c.l.b16 %v378
  %v411 = vpack.c.b16 %v396, %v395
  %v412 = vpack.c.b16 %v398, %v397
  %v413 = vpack.c.b16 %v400, %v399
  %v414 = vpack.c.b16 %v402, %v401
  %v415 = vpack.c.b16 %v404, %v403
  %v416 = vpack.c.b16 %v406, %v405
  %v417 = vpack.c.b16 %v408, %v407
  %v418 = vpack.c.b16 %v410, %v409
  %427 = vmatprep.subr.bf16.mxu0 0
  %428 = vmatpush1.bf16.msra.mxu0 %v418
  %429 = vmatprep.subr.bf16.mxu0 0
  %430 = vmatpush1.bf16.msra.mxu0 %v417
  %431 = vmatprep.subr.bf16.mxu0 0
  %432 = vmatpush1.bf16.msra.mxu0 %v416
  %433 = vmatprep.subr.bf16.mxu0 0
  %434 = vmatpush1.bf16.msra.mxu0 %v415
  %435 = vmatprep.subr.bf16.mxu0 0
  %436 = vmatpush1.bf16.msra.mxu0 %v414
  %437 = vmatprep.subr.bf16.mxu0 0
  %438 = vmatpush1.bf16.msra.mxu0 %v413
  %439 = vmatprep.subr.bf16.mxu0 0
  %440 = vmatpush1.bf16.msra.mxu0 %v412
  %441 = vmatprep.subr.bf16.mxu0 0
  %442 = vmatpush1.bf16.msra.mxu0 %v411
  %443 = vmatprep.subr.bf16.mxu0 0
  %444 = vmatpush2.bf16.msra.mxu0 0
  %445 = vmatprep.subr.bf16.mxu0 0
  %446 = vmatpush2.bf16.msra.mxu0 0
  %447 = vmatprep.subr.bf16.mxu0 0
  %448 = vmatpush2.bf16.msra.mxu0 0
  %449 = vmatprep.subr.bf16.mxu0 0
  %450 = vmatpush2.bf16.msra.mxu0 0
  %451 = vmatprep.subr.bf16.mxu0 0
  %452 = vmatpush2.bf16.msra.mxu0 0
  %453 = vmatprep.subr.bf16.mxu0 0
  %454 = vmatpush2.bf16.msra.mxu0 0
  %455 = vmatprep.subr.bf16.mxu0 0
  %456 = vmatpush2.bf16.msra.mxu0 0
  %457 = vmatprep.subr.bf16.mxu0 0
  %458 = vmatpush2.bf16.msra.mxu0 0
  %459 = vmatprep.mubr.bf16.mxu0 0
  %460 = vmatmul.mubr.bf16.gmra.mxu0 %v360
  %v461 = vpop.f32.mrf.mxu0
  %v462 = vadd.f32 0.0, %v461
  %v463 = vpop.f32.mrf.mxu0
  %v464 = vpop.f32.mrf.mxu0
  %v465 = vadd.f32 0.0, %v464
  %v466 = vpop.f32.mrf.mxu0
  %467 = vmatprep.mubr.bf16.mxu0 0
  %468 = vmatmul.mubr.bf16.gmra.mxu0 %v361
  %v469 = vpop.f32.mrf.mxu0
  %v470 = vadd.f32 0.0, %v469
  %v471 = vpop.f32.mrf.mxu0
  %v472 = vpop.f32.mrf.mxu0
  %v473 = vadd.f32 0.0, %v472
  %v474 = vpop.f32.mrf.mxu0
  %475 = vdwg.mxu0
  %v476 = vadd.f32 %v336, %v462
  %v477 = vadd.f32 %v339, %v465
  %v478 = vadd.f32 %v344, %v470
  %v479 = vadd.f32 %v347, %v473
  %v480 = vrot.slane %v101, 4
  %v481 = vrot.slane %v102, 4
  %v482 = vrot.slane %v103, 4
  %v483 = vrot.slane %v104, 4
  %v484 = vrot.slane %v105, 4
  %vm485 = vcmp.lt.s32.totalorder %v131, 4
  %v486 = vsel %vm485, %v483, %v484
  %v487 = vsel %vm485, %v482, %v483
  %v488 = vsel %vm485, %v481, %v482
  %v489 = vsel %vm485, %v480, %v481
  %v490 = vpack.c.bf16 %v488, %v489
  %v491 = vpack.c.bf16 %v486, %v487
  %s492 = scalar_lea.vmem %s5, 192
  %v493 = vld [vmem:[%s492] sm:$0xf]
  %v494 = vld [vmem:[%s492 + $0x4] sm:$0xf]
  %v495 = vld [vmem:[%s492 + $0x8] sm:$0xf]
  %v496 = vld [vmem:[%s492 + $0xc] sm:$0xf]
  %v497 = vld [vmem:[%s492 + $0x10] sm:$0xf]
  %v498 = vld [vmem:[%s492 + $0x14] sm:$0xf]
  %v499 = vld [vmem:[%s492 + $0x18] sm:$0xf]
  %v500 = vld [vmem:[%s492 + $0x1c] sm:$0xf]
  %v501 = vld [vmem:[%s492 + $0x20] sm:$0xf]
  %v502 = vld [vmem:[%s492 + $0x24] sm:$0xf]
  %v503 = vld [vmem:[%s492 + $0x28] sm:$0xf]
  %v504 = vld [vmem:[%s492 + $0x2c] sm:$0xf]
  %v505 = vld [vmem:[%s492 + $0x30] sm:$0xf]
  %v506 = vld [vmem:[%s492 + $0x34] sm:$0xf]
  %v507 = vld [vmem:[%s492 + $0x38] sm:$0xf]
  %v508 = vld [vmem:[%s492 + $0x3c] sm:$0xf]
  %v525 = vunpack.c.l.b16 %v493
  %v526 = vunpack.c.l.b16 %v494
  %v527 = vunpack.c.l.b16 %v495
  %v528 = vunpack.c.l.b16 %v496
  %v529 = vunpack.c.l.b16 %v497
  %v530 = vunpack.c.l.b16 %v498
  %v531 = vunpack.c.l.b16 %v499
  %v532 = vunpack.c.l.b16 %v500
  %v533 = vunpack.c.l.b16 %v501
  %v534 = vunpack.c.l.b16 %v502
  %v535 = vunpack.c.l.b16 %v503
  %v536 = vunpack.c.l.b16 %v504
  %v537 = vunpack.c.l.b16 %v505
  %v538 = vunpack.c.l.b16 %v506
  %v539 = vunpack.c.l.b16 %v507
  %v540 = vunpack.c.l.b16 %v508
  %v541 = vpack.c.b16 %v526, %v525
  %v542 = vpack.c.b16 %v528, %v527
  %v543 = vpack.c.b16 %v530, %v529
  %v544 = vpack.c.b16 %v532, %v531
  %v545 = vpack.c.b16 %v534, %v533
  %v546 = vpack.c.b16 %v536, %v535
  %v547 = vpack.c.b16 %v538, %v537
  %v548 = vpack.c.b16 %v540, %v539
  %557 = vmatprep.subr.bf16.mxu0 0
  %558 = vmatpush1.bf16.msra.mxu0 %v548
  %559 = vmatprep.subr.bf16.mxu0 0
  %560 = vmatpush1.bf16.msra.mxu0 %v547
  %561 = vmatprep.subr.bf16.mxu0 0
  %562 = vmatpush1.bf16.msra.mxu0 %v546
  %563 = vmatprep.subr.bf16.mxu0 0
  %564 = vmatpush1.bf16.msra.mxu0 %v545
  %565 = vmatprep.subr.bf16.mxu0 0
  %566 = vmatpush1.bf16.msra.mxu0 %v544
  %567 = vmatprep.subr.bf16.mxu0 0
  %568 = vmatpush1.bf16.msra.mxu0 %v543
  %569 = vmatprep.subr.bf16.mxu0 0
  %570 = vmatpush1.bf16.msra.mxu0 %v542
  %571 = vmatprep.subr.bf16.mxu0 0
  %572 = vmatpush1.bf16.msra.mxu0 %v541
  %573 = vmatprep.subr.bf16.mxu0 0
  %574 = vmatpush2.bf16.msra.mxu0 0
  %575 = vmatprep.subr.bf16.mxu0 0
  %576 = vmatpush2.bf16.msra.mxu0 0
  %577 = vmatprep.subr.bf16.mxu0 0
  %578 = vmatpush2.bf16.msra.mxu0 0
  %579 = vmatprep.subr.bf16.mxu0 0
  %580 = vmatpush2.bf16.msra.mxu0 0
  %581 = vmatprep.subr.bf16.mxu0 0
  %582 = vmatpush2.bf16.msra.mxu0 0
  %583 = vmatprep.subr.bf16.mxu0 0
  %584 = vmatpush2.bf16.msra.mxu0 0
  %585 = vmatprep.subr.bf16.mxu0 0
  %586 = vmatpush2.bf16.msra.mxu0 0
  %587 = vmatprep.subr.bf16.mxu0 0
  %588 = vmatpush2.bf16.msra.mxu0 0
  %589 = vmatprep.mubr.bf16.mxu0 0
  %590 = vmatmul.mubr.bf16.gmra.mxu0 %v490
  %v591 = vpop.f32.mrf.mxu0
  %v592 = vadd.f32 0.0, %v591
  %v593 = vpop.f32.mrf.mxu0
  %v594 = vpop.f32.mrf.mxu0
  %v595 = vadd.f32 0.0, %v594
  %v596 = vpop.f32.mrf.mxu0
  %597 = vmatprep.mubr.bf16.mxu0 0
  %598 = vmatmul.mubr.bf16.gmra.mxu0 %v491
  %v599 = vpop.f32.mrf.mxu0
  %v600 = vadd.f32 0.0, %v599
  %v601 = vpop.f32.mrf.mxu0
  %v602 = vpop.f32.mrf.mxu0
  %v603 = vadd.f32 0.0, %v602
  %v604 = vpop.f32.mrf.mxu0
  %605 = vdwg.mxu0
  %v606 = vadd.f32 %v476, %v592
  %v607 = vadd.f32 %v477, %v595
  %v608 = vadd.f32 %v478, %v600
  %v609 = vadd.f32 %v479, %v603
  %v610 = vrot.slane %v101, 5
  %v611 = vrot.slane %v102, 5
  %v612 = vrot.slane %v103, 5
  %v613 = vrot.slane %v104, 5
  %v614 = vrot.slane %v105, 5
  %vm615 = vcmp.lt.s32.totalorder %v131, 3
  %v616 = vsel %vm615, %v613, %v614
  %v617 = vsel %vm615, %v612, %v613
  %v618 = vsel %vm615, %v611, %v612
  %v619 = vsel %vm615, %v610, %v611
  %v620 = vpack.c.bf16 %v618, %v619
  %v621 = vpack.c.bf16 %v616, %v617
  %s622 = scalar_lea.vmem %s5, 256
  %v623 = vld [vmem:[%s622] sm:$0xf]
  %v624 = vld [vmem:[%s622 + $0x4] sm:$0xf]
  %v625 = vld [vmem:[%s622 + $0x8] sm:$0xf]
  %v626 = vld [vmem:[%s622 + $0xc] sm:$0xf]
  %v627 = vld [vmem:[%s622 + $0x10] sm:$0xf]
  %v628 = vld [vmem:[%s622 + $0x14] sm:$0xf]
  %v629 = vld [vmem:[%s622 + $0x18] sm:$0xf]
  %v630 = vld [vmem:[%s622 + $0x1c] sm:$0xf]
  %v631 = vld [vmem:[%s622 + $0x20] sm:$0xf]
  %v632 = vld [vmem:[%s622 + $0x24] sm:$0xf]
  %v633 = vld [vmem:[%s622 + $0x28] sm:$0xf]
  %v634 = vld [vmem:[%s622 + $0x2c] sm:$0xf]
  %v635 = vld [vmem:[%s622 + $0x30] sm:$0xf]
  %v636 = vld [vmem:[%s622 + $0x34] sm:$0xf]
  %v637 = vld [vmem:[%s622 + $0x38] sm:$0xf]
  %v638 = vld [vmem:[%s622 + $0x3c] sm:$0xf]
  %v655 = vunpack.c.l.b16 %v623
  %v656 = vunpack.c.l.b16 %v624
  %v657 = vunpack.c.l.b16 %v625
  %v658 = vunpack.c.l.b16 %v626
  %v659 = vunpack.c.l.b16 %v627
  %v660 = vunpack.c.l.b16 %v628
  %v661 = vunpack.c.l.b16 %v629
  %v662 = vunpack.c.l.b16 %v630
  %v663 = vunpack.c.l.b16 %v631
  %v664 = vunpack.c.l.b16 %v632
  %v665 = vunpack.c.l.b16 %v633
  %v666 = vunpack.c.l.b16 %v634
  %v667 = vunpack.c.l.b16 %v635
  %v668 = vunpack.c.l.b16 %v636
  %v669 = vunpack.c.l.b16 %v637
  %v670 = vunpack.c.l.b16 %v638
  %v671 = vpack.c.b16 %v656, %v655
  %v672 = vpack.c.b16 %v658, %v657
  %v673 = vpack.c.b16 %v660, %v659
  %v674 = vpack.c.b16 %v662, %v661
  %v675 = vpack.c.b16 %v664, %v663
  %v676 = vpack.c.b16 %v666, %v665
  %v677 = vpack.c.b16 %v668, %v667
  %v678 = vpack.c.b16 %v670, %v669
  %687 = vmatprep.subr.bf16.mxu0 0
  %688 = vmatpush1.bf16.msra.mxu0 %v678
  %689 = vmatprep.subr.bf16.mxu0 0
  %690 = vmatpush1.bf16.msra.mxu0 %v677
  %691 = vmatprep.subr.bf16.mxu0 0
  %692 = vmatpush1.bf16.msra.mxu0 %v676
  %693 = vmatprep.subr.bf16.mxu0 0
  %694 = vmatpush1.bf16.msra.mxu0 %v675
  %695 = vmatprep.subr.bf16.mxu0 0
  %696 = vmatpush1.bf16.msra.mxu0 %v674
  %697 = vmatprep.subr.bf16.mxu0 0
  %698 = vmatpush1.bf16.msra.mxu0 %v673
  %699 = vmatprep.subr.bf16.mxu0 0
  %700 = vmatpush1.bf16.msra.mxu0 %v672
  %701 = vmatprep.subr.bf16.mxu0 0
  %702 = vmatpush1.bf16.msra.mxu0 %v671
  %703 = vmatprep.subr.bf16.mxu0 0
  %704 = vmatpush2.bf16.msra.mxu0 0
  %705 = vmatprep.subr.bf16.mxu0 0
  %706 = vmatpush2.bf16.msra.mxu0 0
  %707 = vmatprep.subr.bf16.mxu0 0
  %708 = vmatpush2.bf16.msra.mxu0 0
  %709 = vmatprep.subr.bf16.mxu0 0
  %710 = vmatpush2.bf16.msra.mxu0 0
  %711 = vmatprep.subr.bf16.mxu0 0
  %712 = vmatpush2.bf16.msra.mxu0 0
  %713 = vmatprep.subr.bf16.mxu0 0
  %714 = vmatpush2.bf16.msra.mxu0 0
  %715 = vmatprep.subr.bf16.mxu0 0
  %716 = vmatpush2.bf16.msra.mxu0 0
  %717 = vmatprep.subr.bf16.mxu0 0
  %718 = vmatpush2.bf16.msra.mxu0 0
  %719 = vmatprep.mubr.bf16.mxu0 0
  %720 = vmatmul.mubr.bf16.gmra.mxu0 %v620
  %v721 = vpop.f32.mrf.mxu0
  %v722 = vadd.f32 0.0, %v721
  %v723 = vpop.f32.mrf.mxu0
  %v724 = vpop.f32.mrf.mxu0
  %v725 = vadd.f32 0.0, %v724
  %v726 = vpop.f32.mrf.mxu0
  %727 = vmatprep.mubr.bf16.mxu0 0
  %728 = vmatmul.mubr.bf16.gmra.mxu0 %v621
  %v729 = vpop.f32.mrf.mxu0
  %v730 = vadd.f32 0.0, %v729
  %v731 = vpop.f32.mrf.mxu0
  %v732 = vpop.f32.mrf.mxu0
  %v733 = vadd.f32 0.0, %v732
  %v734 = vpop.f32.mrf.mxu0
  %735 = vdwg.mxu0
  %v736 = vadd.f32 %v606, %v722
  %v737 = vadd.f32 %v607, %v725
  %v738 = vadd.f32 %v608, %v730
  %v739 = vadd.f32 %v609, %v733
  %v740 = vrot.slane %v101, 6
  %v741 = vrot.slane %v102, 6
  %v742 = vrot.slane %v103, 6
  %v743 = vrot.slane %v104, 6
  %v744 = vrot.slane %v105, 6
  %vm745 = vcmp.lt.s32.totalorder %v131, 2
  %v746 = vsel %vm745, %v743, %v744
  %v747 = vsel %vm745, %v742, %v743
  %v748 = vsel %vm745, %v741, %v742
  %v749 = vsel %vm745, %v740, %v741
  %v750 = vpack.c.bf16 %v748, %v749
  %v751 = vpack.c.bf16 %v746, %v747
  %s752 = scalar_lea.vmem %s5, 320
  %v753 = vld [vmem:[%s752] sm:$0xf]
  %v754 = vld [vmem:[%s752 + $0x4] sm:$0xf]
  %v755 = vld [vmem:[%s752 + $0x8] sm:$0xf]
  %v756 = vld [vmem:[%s752 + $0xc] sm:$0xf]
  %v757 = vld [vmem:[%s752 + $0x10] sm:$0xf]
  %v758 = vld [vmem:[%s752 + $0x14] sm:$0xf]
  %v759 = vld [vmem:[%s752 + $0x18] sm:$0xf]
  %v760 = vld [vmem:[%s752 + $0x1c] sm:$0xf]
  %v761 = vld [vmem:[%s752 + $0x20] sm:$0xf]
  %v762 = vld [vmem:[%s752 + $0x24] sm:$0xf]
  %v763 = vld [vmem:[%s752 + $0x28] sm:$0xf]
  %v764 = vld [vmem:[%s752 + $0x2c] sm:$0xf]
  %v765 = vld [vmem:[%s752 + $0x30] sm:$0xf]
  %v766 = vld [vmem:[%s752 + $0x34] sm:$0xf]
  %v767 = vld [vmem:[%s752 + $0x38] sm:$0xf]
  %v768 = vld [vmem:[%s752 + $0x3c] sm:$0xf]
  %v785 = vunpack.c.l.b16 %v753
  %v786 = vunpack.c.l.b16 %v754
  %v787 = vunpack.c.l.b16 %v755
  %v788 = vunpack.c.l.b16 %v756
  %v789 = vunpack.c.l.b16 %v757
  %v790 = vunpack.c.l.b16 %v758
  %v791 = vunpack.c.l.b16 %v759
  %v792 = vunpack.c.l.b16 %v760
  %v793 = vunpack.c.l.b16 %v761
  %v794 = vunpack.c.l.b16 %v762
  %v795 = vunpack.c.l.b16 %v763
  %v796 = vunpack.c.l.b16 %v764
  %v797 = vunpack.c.l.b16 %v765
  %v798 = vunpack.c.l.b16 %v766
  %v799 = vunpack.c.l.b16 %v767
  %v800 = vunpack.c.l.b16 %v768
  %v801 = vpack.c.b16 %v786, %v785
  %v802 = vpack.c.b16 %v788, %v787
  %v803 = vpack.c.b16 %v790, %v789
  %v804 = vpack.c.b16 %v792, %v791
  %v805 = vpack.c.b16 %v794, %v793
  %v806 = vpack.c.b16 %v796, %v795
  %v807 = vpack.c.b16 %v798, %v797
  %v808 = vpack.c.b16 %v800, %v799
  %817 = vmatprep.subr.bf16.mxu0 0
  %818 = vmatpush1.bf16.msra.mxu0 %v808
  %819 = vmatprep.subr.bf16.mxu0 0
  %820 = vmatpush1.bf16.msra.mxu0 %v807
  %821 = vmatprep.subr.bf16.mxu0 0
  %822 = vmatpush1.bf16.msra.mxu0 %v806
  %823 = vmatprep.subr.bf16.mxu0 0
  %824 = vmatpush1.bf16.msra.mxu0 %v805
  %825 = vmatprep.subr.bf16.mxu0 0
  %826 = vmatpush1.bf16.msra.mxu0 %v804
  %827 = vmatprep.subr.bf16.mxu0 0
  %828 = vmatpush1.bf16.msra.mxu0 %v803
  %829 = vmatprep.subr.bf16.mxu0 0
  %830 = vmatpush1.bf16.msra.mxu0 %v802
  %831 = vmatprep.subr.bf16.mxu0 0
  %832 = vmatpush1.bf16.msra.mxu0 %v801
  %833 = vmatprep.subr.bf16.mxu0 0
  %834 = vmatpush2.bf16.msra.mxu0 0
  %835 = vmatprep.subr.bf16.mxu0 0
  %836 = vmatpush2.bf16.msra.mxu0 0
  %837 = vmatprep.subr.bf16.mxu0 0
  %838 = vmatpush2.bf16.msra.mxu0 0
  %839 = vmatprep.subr.bf16.mxu0 0
  %840 = vmatpush2.bf16.msra.mxu0 0
  %841 = vmatprep.subr.bf16.mxu0 0
  %842 = vmatpush2.bf16.msra.mxu0 0
  %843 = vmatprep.subr.bf16.mxu0 0
  %844 = vmatpush2.bf16.msra.mxu0 0
  %845 = vmatprep.subr.bf16.mxu0 0
  %846 = vmatpush2.bf16.msra.mxu0 0
  %847 = vmatprep.subr.bf16.mxu0 0
  %848 = vmatpush2.bf16.msra.mxu0 0
  %849 = vmatprep.mubr.bf16.mxu0 0
  %850 = vmatmul.mubr.bf16.gmra.mxu0 %v750
  %v851 = vpop.f32.mrf.mxu0
  %v852 = vadd.f32 0.0, %v851
  %v853 = vpop.f32.mrf.mxu0
  %v854 = vpop.f32.mrf.mxu0
  %v855 = vadd.f32 0.0, %v854
  %v856 = vpop.f32.mrf.mxu0
  %857 = vmatprep.mubr.bf16.mxu0 0
  %858 = vmatmul.mubr.bf16.gmra.mxu0 %v751
  %v859 = vpop.f32.mrf.mxu0
  %v860 = vadd.f32 0.0, %v859
  %v861 = vpop.f32.mrf.mxu0
  %v862 = vpop.f32.mrf.mxu0
  %v863 = vadd.f32 0.0, %v862
  %v864 = vpop.f32.mrf.mxu0
  %865 = vdwg.mxu0
  %v866 = vadd.f32 %v736, %v852
  %v867 = vadd.f32 %v737, %v855
  %v868 = vadd.f32 %v738, %v860
  %v869 = vadd.f32 %v739, %v863
  %v870 = vpack.c.bf16 %v103, %v102
  %v871 = vpack.c.bf16 %v105, %v104
  %s872 = scalar_lea.vmem %s5, 384
  %v873 = vld [vmem:[%s872] sm:$0xf]
  %v874 = vld [vmem:[%s872 + $0x4] sm:$0xf]
  %v875 = vld [vmem:[%s872 + $0x8] sm:$0xf]
  %v876 = vld [vmem:[%s872 + $0xc] sm:$0xf]
  %v877 = vld [vmem:[%s872 + $0x10] sm:$0xf]
  %v878 = vld [vmem:[%s872 + $0x14] sm:$0xf]
  %v879 = vld [vmem:[%s872 + $0x18] sm:$0xf]
  %v880 = vld [vmem:[%s872 + $0x1c] sm:$0xf]
  %v881 = vld [vmem:[%s872 + $0x20] sm:$0xf]
  %v882 = vld [vmem:[%s872 + $0x24] sm:$0xf]
  %v883 = vld [vmem:[%s872 + $0x28] sm:$0xf]
  %v884 = vld [vmem:[%s872 + $0x2c] sm:$0xf]
  %v885 = vld [vmem:[%s872 + $0x30] sm:$0xf]
  %v886 = vld [vmem:[%s872 + $0x34] sm:$0xf]
  %v887 = vld [vmem:[%s872 + $0x38] sm:$0xf]
  %v888 = vld [vmem:[%s872 + $0x3c] sm:$0xf]
  %v905 = vunpack.c.l.b16 %v873
  %v906 = vunpack.c.l.b16 %v874
  %v907 = vunpack.c.l.b16 %v875
  %v908 = vunpack.c.l.b16 %v876
  %v909 = vunpack.c.l.b16 %v877
  %v910 = vunpack.c.l.b16 %v878
  %v911 = vunpack.c.l.b16 %v879
  %v912 = vunpack.c.l.b16 %v880
  %v913 = vunpack.c.l.b16 %v881
  %v914 = vunpack.c.l.b16 %v882
  %v915 = vunpack.c.l.b16 %v883
  %v916 = vunpack.c.l.b16 %v884
  %v917 = vunpack.c.l.b16 %v885
  %v918 = vunpack.c.l.b16 %v886
  %v919 = vunpack.c.l.b16 %v887
  %v920 = vunpack.c.l.b16 %v888
  %v921 = vpack.c.b16 %v906, %v905
  %v922 = vpack.c.b16 %v908, %v907
  %v923 = vpack.c.b16 %v910, %v909
  %v924 = vpack.c.b16 %v912, %v911
  %v925 = vpack.c.b16 %v914, %v913
  %v926 = vpack.c.b16 %v916, %v915
  %v927 = vpack.c.b16 %v918, %v917
  %v928 = vpack.c.b16 %v920, %v919
  %937 = vmatprep.subr.bf16.mxu0 0
  %938 = vmatpush1.bf16.msra.mxu0 %v928
  %939 = vmatprep.subr.bf16.mxu0 0
  %940 = vmatpush1.bf16.msra.mxu0 %v927
  %941 = vmatprep.subr.bf16.mxu0 0
  %942 = vmatpush1.bf16.msra.mxu0 %v926
  %943 = vmatprep.subr.bf16.mxu0 0
  %944 = vmatpush1.bf16.msra.mxu0 %v925
  %945 = vmatprep.subr.bf16.mxu0 0
  %946 = vmatpush1.bf16.msra.mxu0 %v924
  %947 = vmatprep.subr.bf16.mxu0 0
  %948 = vmatpush1.bf16.msra.mxu0 %v923
  %949 = vmatprep.subr.bf16.mxu0 0
  %950 = vmatpush1.bf16.msra.mxu0 %v922
  %951 = vmatprep.subr.bf16.mxu0 0
  %952 = vmatpush1.bf16.msra.mxu0 %v921
  %953 = vmatprep.subr.bf16.mxu0 0
  %954 = vmatpush2.bf16.msra.mxu0 0
  %955 = vmatprep.subr.bf16.mxu0 0
  %956 = vmatpush2.bf16.msra.mxu0 0
  %957 = vmatprep.subr.bf16.mxu0 0
  %958 = vmatpush2.bf16.msra.mxu0 0
  %959 = vmatprep.subr.bf16.mxu0 0
  %960 = vmatpush2.bf16.msra.mxu0 0
  %961 = vmatprep.subr.bf16.mxu0 0
  %962 = vmatpush2.bf16.msra.mxu0 0
  %963 = vmatprep.subr.bf16.mxu0 0
  %964 = vmatpush2.bf16.msra.mxu0 0
  %965 = vmatprep.subr.bf16.mxu0 0
  %966 = vmatpush2.bf16.msra.mxu0 0
  %967 = vmatprep.subr.bf16.mxu0 0
  %968 = vmatpush2.bf16.msra.mxu0 0
  %969 = vmatprep.mubr.bf16.mxu0 0
  %970 = vmatmul.mubr.bf16.gmra.mxu0 %v870
  %v971 = vpop.f32.mrf.mxu0
  %v972 = vadd.f32 0.0, %v971
  %v973 = vpop.f32.mrf.mxu0
  %v974 = vpop.f32.mrf.mxu0
  %v975 = vadd.f32 0.0, %v974
  %v976 = vpop.f32.mrf.mxu0
  %977 = vmatprep.mubr.bf16.mxu0 0
  %978 = vmatmul.mubr.bf16.gmra.mxu0 %v871
  %v979 = vpop.f32.mrf.mxu0
  %v980 = vadd.f32 0.0, %v979
  %v981 = vpop.f32.mrf.mxu0
  %v982 = vpop.f32.mrf.mxu0
  %v983 = vadd.f32 0.0, %v982
  %v984 = vpop.f32.mrf.mxu0
  %985 = vdwg.mxu0
  %v986 = vadd.f32 %v866, %v972
  %v987 = vadd.f32 %v867, %v975
  %v988 = vadd.f32 %v868, %v980
  %v989 = vadd.f32 %v869, %v983
  %v990 = vrot.slane %v106, 1
  %v991 = vsel %vm132, %v129, %v990
  %v992 = vpack.c.bf16 %v134, %v135
  %v993 = vpack.c.bf16 %v991, %v133
  %s994 = scalar_lea.vmem %s5, 448
  %v995 = vld [vmem:[%s994] sm:$0xf]
  %v996 = vld [vmem:[%s994 + $0x4] sm:$0xf]
  %v997 = vld [vmem:[%s994 + $0x8] sm:$0xf]
  %v998 = vld [vmem:[%s994 + $0xc] sm:$0xf]
  %v999 = vld [vmem:[%s994 + $0x10] sm:$0xf]
  %v1000 = vld [vmem:[%s994 + $0x14] sm:$0xf]
  %v1001 = vld [vmem:[%s994 + $0x18] sm:$0xf]
  %v1002 = vld [vmem:[%s994 + $0x1c] sm:$0xf]
  %v1003 = vld [vmem:[%s994 + $0x20] sm:$0xf]
  %v1004 = vld [vmem:[%s994 + $0x24] sm:$0xf]
  %v1005 = vld [vmem:[%s994 + $0x28] sm:$0xf]
  %v1006 = vld [vmem:[%s994 + $0x2c] sm:$0xf]
  %v1007 = vld [vmem:[%s994 + $0x30] sm:$0xf]
  %v1008 = vld [vmem:[%s994 + $0x34] sm:$0xf]
  %v1009 = vld [vmem:[%s994 + $0x38] sm:$0xf]
  %v1010 = vld [vmem:[%s994 + $0x3c] sm:$0xf]
  %v1027 = vunpack.c.l.b16 %v995
  %v1028 = vunpack.c.l.b16 %v996
  %v1029 = vunpack.c.l.b16 %v997
  %v1030 = vunpack.c.l.b16 %v998
  %v1031 = vunpack.c.l.b16 %v999
  %v1032 = vunpack.c.l.b16 %v1000
  %v1033 = vunpack.c.l.b16 %v1001
  %v1034 = vunpack.c.l.b16 %v1002
  %v1035 = vunpack.c.l.b16 %v1003
  %v1036 = vunpack.c.l.b16 %v1004
  %v1037 = vunpack.c.l.b16 %v1005
  %v1038 = vunpack.c.l.b16 %v1006
  %v1039 = vunpack.c.l.b16 %v1007
  %v1040 = vunpack.c.l.b16 %v1008
  %v1041 = vunpack.c.l.b16 %v1009
  %v1042 = vunpack.c.l.b16 %v1010
  %v1043 = vpack.c.b16 %v1028, %v1027
  %v1044 = vpack.c.b16 %v1030, %v1029
  %v1045 = vpack.c.b16 %v1032, %v1031
  %v1046 = vpack.c.b16 %v1034, %v1033
  %v1047 = vpack.c.b16 %v1036, %v1035
  %v1048 = vpack.c.b16 %v1038, %v1037
  %v1049 = vpack.c.b16 %v1040, %v1039
  %v1050 = vpack.c.b16 %v1042, %v1041
  %1059 = vmatprep.subr.bf16.mxu0 0
  %1060 = vmatpush1.bf16.msra.mxu0 %v1050
  %1061 = vmatprep.subr.bf16.mxu0 0
  %1062 = vmatpush1.bf16.msra.mxu0 %v1049
  %1063 = vmatprep.subr.bf16.mxu0 0
  %1064 = vmatpush1.bf16.msra.mxu0 %v1048
  %1065 = vmatprep.subr.bf16.mxu0 0
  %1066 = vmatpush1.bf16.msra.mxu0 %v1047
  %1067 = vmatprep.subr.bf16.mxu0 0
  %1068 = vmatpush1.bf16.msra.mxu0 %v1046
  %1069 = vmatprep.subr.bf16.mxu0 0
  %1070 = vmatpush1.bf16.msra.mxu0 %v1045
  %1071 = vmatprep.subr.bf16.mxu0 0
  %1072 = vmatpush1.bf16.msra.mxu0 %v1044
  %1073 = vmatprep.subr.bf16.mxu0 0
  %1074 = vmatpush1.bf16.msra.mxu0 %v1043
  %1075 = vmatprep.subr.bf16.mxu0 0
  %1076 = vmatpush2.bf16.msra.mxu0 0
  %1077 = vmatprep.subr.bf16.mxu0 0
  %1078 = vmatpush2.bf16.msra.mxu0 0
  %1079 = vmatprep.subr.bf16.mxu0 0
  %1080 = vmatpush2.bf16.msra.mxu0 0
  %1081 = vmatprep.subr.bf16.mxu0 0
  %1082 = vmatpush2.bf16.msra.mxu0 0
  %1083 = vmatprep.subr.bf16.mxu0 0
  %1084 = vmatpush2.bf16.msra.mxu0 0
  %1085 = vmatprep.subr.bf16.mxu0 0
  %1086 = vmatpush2.bf16.msra.mxu0 0
  %1087 = vmatprep.subr.bf16.mxu0 0
  %1088 = vmatpush2.bf16.msra.mxu0 0
  %1089 = vmatprep.subr.bf16.mxu0 0
  %1090 = vmatpush2.bf16.msra.mxu0 0
  %1091 = vmatprep.mubr.bf16.mxu0 0
  %1092 = vmatmul.mubr.bf16.gmra.mxu0 %v992
  %v1093 = vpop.f32.mrf.mxu0
  %v1094 = vadd.f32 0.0, %v1093
  %v1095 = vpop.f32.mrf.mxu0
  %v1096 = vpop.f32.mrf.mxu0
  %v1097 = vadd.f32 0.0, %v1096
  %v1098 = vpop.f32.mrf.mxu0
  %1099 = vmatprep.mubr.bf16.mxu0 0
  %1100 = vmatmul.mubr.bf16.gmra.mxu0 %v993
  %v1101 = vpop.f32.mrf.mxu0
  %v1102 = vadd.f32 0.0, %v1101
  %v1103 = vpop.f32.mrf.mxu0
  %v1104 = vpop.f32.mrf.mxu0
  %v1105 = vadd.f32 0.0, %v1104
  %v1106 = vpop.f32.mrf.mxu0
  %1107 = vdwg.mxu0
  %v1108 = vadd.f32 %v986, %v1094
  %v1109 = vadd.f32 %v987, %v1097
  %v1110 = vadd.f32 %v988, %v1102
  %v1111 = vadd.f32 %v989, %v1105
  %v1112 = vrot.slane %v106, 2
  %v1113 = vsel %vm355, %v354, %v1112
  %v1114 = vpack.c.bf16 %v357, %v358
  %v1115 = vpack.c.bf16 %v1113, %v356
  %s1116 = scalar_lea.vmem %s5, 512
  %v1117 = vld [vmem:[%s1116] sm:$0xf]
  %v1118 = vld [vmem:[%s1116 + $0x4] sm:$0xf]
  %v1119 = vld [vmem:[%s1116 + $0x8] sm:$0xf]
  %v1120 = vld [vmem:[%s1116 + $0xc] sm:$0xf]
  %v1121 = vld [vmem:[%s1116 + $0x10] sm:$0xf]
  %v1122 = vld [vmem:[%s1116 + $0x14] sm:$0xf]
  %v1123 = vld [vmem:[%s1116 + $0x18] sm:$0xf]
  %v1124 = vld [vmem:[%s1116 + $0x1c] sm:$0xf]
  %v1125 = vld [vmem:[%s1116 + $0x20] sm:$0xf]
  %v1126 = vld [vmem:[%s1116 + $0x24] sm:$0xf]
  %v1127 = vld [vmem:[%s1116 + $0x28] sm:$0xf]
  %v1128 = vld [vmem:[%s1116 + $0x2c] sm:$0xf]
  %v1129 = vld [vmem:[%s1116 + $0x30] sm:$0xf]
  %v1130 = vld [vmem:[%s1116 + $0x34] sm:$0xf]
  %v1131 = vld [vmem:[%s1116 + $0x38] sm:$0xf]
  %v1132 = vld [vmem:[%s1116 + $0x3c] sm:$0xf]
  %v1149 = vunpack.c.l.b16 %v1117
  %v1150 = vunpack.c.l.b16 %v1118
  %v1151 = vunpack.c.l.b16 %v1119
  %v1152 = vunpack.c.l.b16 %v1120
  %v1153 = vunpack.c.l.b16 %v1121
  %v1154 = vunpack.c.l.b16 %v1122
  %v1155 = vunpack.c.l.b16 %v1123
  %v1156 = vunpack.c.l.b16 %v1124
  %v1157 = vunpack.c.l.b16 %v1125
  %v1158 = vunpack.c.l.b16 %v1126
  %v1159 = vunpack.c.l.b16 %v1127
  %v1160 = vunpack.c.l.b16 %v1128
  %v1161 = vunpack.c.l.b16 %v1129
  %v1162 = vunpack.c.l.b16 %v1130
  %v1163 = vunpack.c.l.b16 %v1131
  %v1164 = vunpack.c.l.b16 %v1132
  %v1165 = vpack.c.b16 %v1150, %v1149
  %v1166 = vpack.c.b16 %v1152, %v1151
  %v1167 = vpack.c.b16 %v1154, %v1153
  %v1168 = vpack.c.b16 %v1156, %v1155
  %v1169 = vpack.c.b16 %v1158, %v1157
  %v1170 = vpack.c.b16 %v1160, %v1159
  %v1171 = vpack.c.b16 %v1162, %v1161
  %v1172 = vpack.c.b16 %v1164, %v1163
  %1181 = vmatprep.subr.bf16.mxu0 0
  %1182 = vmatpush1.bf16.msra.mxu0 %v1172
  %1183 = vmatprep.subr.bf16.mxu0 0
  %1184 = vmatpush1.bf16.msra.mxu0 %v1171
  %1185 = vmatprep.subr.bf16.mxu0 0
  %1186 = vmatpush1.bf16.msra.mxu0 %v1170
  %1187 = vmatprep.subr.bf16.mxu0 0
  %1188 = vmatpush1.bf16.msra.mxu0 %v1169
  %1189 = vmatprep.subr.bf16.mxu0 0
  %1190 = vmatpush1.bf16.msra.mxu0 %v1168
  %1191 = vmatprep.subr.bf16.mxu0 0
  %1192 = vmatpush1.bf16.msra.mxu0 %v1167
  %1193 = vmatprep.subr.bf16.mxu0 0
  %1194 = vmatpush1.bf16.msra.mxu0 %v1166
  %1195 = vmatprep.subr.bf16.mxu0 0
  %1196 = vmatpush1.bf16.msra.mxu0 %v1165
  %1197 = vmatprep.subr.bf16.mxu0 0
  %1198 = vmatpush2.bf16.msra.mxu0 0
  %1199 = vmatprep.subr.bf16.mxu0 0
  %1200 = vmatpush2.bf16.msra.mxu0 0
  %1201 = vmatprep.subr.bf16.mxu0 0
  %1202 = vmatpush2.bf16.msra.mxu0 0
  %1203 = vmatprep.subr.bf16.mxu0 0
  %1204 = vmatpush2.bf16.msra.mxu0 0
  %1205 = vmatprep.subr.bf16.mxu0 0
  %1206 = vmatpush2.bf16.msra.mxu0 0
  %1207 = vmatprep.subr.bf16.mxu0 0
  %1208 = vmatpush2.bf16.msra.mxu0 0
  %1209 = vmatprep.subr.bf16.mxu0 0
  %1210 = vmatpush2.bf16.msra.mxu0 0
  %1211 = vmatprep.subr.bf16.mxu0 0
  %1212 = vmatpush2.bf16.msra.mxu0 0
  %1213 = vmatprep.mubr.bf16.mxu0 0
  %1214 = vmatmul.mubr.bf16.gmra.mxu0 %v1114
  %v1215 = vpop.f32.mrf.mxu0
  %v1216 = vadd.f32 0.0, %v1215
  %v1217 = vpop.f32.mrf.mxu0
  %v1218 = vpop.f32.mrf.mxu0
  %v1219 = vadd.f32 0.0, %v1218
  %v1220 = vpop.f32.mrf.mxu0
  %1221 = vmatprep.mubr.bf16.mxu0 0
  %1222 = vmatmul.mubr.bf16.gmra.mxu0 %v1115
  %v1223 = vpop.f32.mrf.mxu0
  %v1224 = vadd.f32 0.0, %v1223
  %v1225 = vpop.f32.mrf.mxu0
  %v1226 = vpop.f32.mrf.mxu0
  %v1227 = vadd.f32 0.0, %v1226
  %v1228 = vpop.f32.mrf.mxu0
  %1229 = vdwg.mxu0
  %v1230 = vadd.f32 %v1108, %v1216
  %v1231 = vadd.f32 %v1109, %v1219
  %v1232 = vadd.f32 %v1110, %v1224
  %v1233 = vadd.f32 %v1111, %v1227
  %1234 = vst [vmem:[%s6] sm:$0xff] %v1230
  %1235 = vst [vmem:[%s6 + $0x8] sm:$0xff] %v1231
  %1236 = vst [vmem:[%s6 + $0x10] sm:$0xff] %v1232
  %1237 = vst [vmem:[%s6 + $0x18] sm:$0xff] %v1233
  %v1238 = vld [vmem:[%s2] sm:$0xff]
  %v1239 = vld [vmem:[%s2 + $0x8] sm:$0xff]
  %v1240 = vld [vmem:[%s2 + $0x10] sm:$0xff]
  %v1241 = vld [vmem:[%s2 + $0x18] sm:$0xff]
  %1243 = vset.pattern.permute.xlu0 0
  %1244 = vperm.xlu0 %1243, %v1238
  %v1245 = vpop.permute.xlu0 %1244
  %1248 = vset.pattern.permute.xlu0 0
  %1249 = vperm.xlu0 %1248, %v1239
  %v1250 = vpop.permute.xlu0 %1249
  %1253 = vset.pattern.permute.xlu0 0
  %1254 = vperm.xlu0 %1253, %v1240
  %v1255 = vpop.permute.xlu0 %1254
  %1258 = vset.pattern.permute.xlu0 0
  %1259 = vperm.xlu0 %1258, %v1241
  %v1260 = vpop.permute.xlu0 %1259
  %v1262 = vmul.f32 %v1230, %v1245
  %v1263 = vmul.f32 %v1231, %v1250
  %v1264 = vmul.f32 %v1232, %v1255
  %v1265 = vmul.f32 %v1233, %v1260
  %v1266 = vadd.f32 %v1262, %v1263
  %v1267 = vadd.f32 %v1266, %v1264
  %v1268 = vadd.f32 %v1267, %v1265
  %v1269 = vrot.slane %v1268, 4
  %v1270 = vadd.f32 %v1268, %v1269
  %v1271 = vrot.slane %v1270, 2
  %v1272 = vadd.f32 %v1270, %v1271
  %v1273 = vrot.slane %v1272, 1
  %v1274 = vadd.f32 %v1272, %v1273
  %1275 = vst [vmem:[%s7] sm:$0x1] %v1274
  %v1276 = vmul.f32 %v1262, %v1262
  %v1277 = vmul.f32 %v1263, %v1263
  %v1278 = vmul.f32 %v1264, %v1264
  %v1279 = vmul.f32 %v1265, %v1265
  %v1280 = vadd.f32 %v1276, %v1277
  %v1281 = vadd.f32 %v1280, %v1278
  %v1282 = vadd.f32 %v1281, %v1279
  %v1283 = vrot.slane %v1282, 4
  %v1284 = vadd.f32 %v1282, %v1283
  %v1285 = vrot.slane %v1284, 2
  %v1286 = vadd.f32 %v1284, %v1285
  %v1287 = vrot.slane %v1286, 1
  %v1288 = vadd.f32 %v1286, %v1287
  %1289 = vst [vmem:[%s8] sm:$0x1] %v1288
  // Predicated region
  $region26: #{dndqn_forward.20} parent=0 // pred_check
    _
  $region27: #{dndqn_forward.20} parent=0 // pred_check_branch
    %1291 = sbr.rel (0) target = $region29
  $region28: #{dndqn_forward.20} parent=0 // pred_region
    _
  $region29: #{dndqn_forward.20} parent=0 // pred_fallthru
    _
  // Predicated region
  $region30: #{dndqn_forward.20} parent=0 // pred_check
    _
  $region31: #{dndqn_forward.20} parent=0 // pred_check_branch
    %1293 = sbr.rel (0) target = $region33
  $region32: #{dndqn_forward.20} parent=0 // pred_region
    _
  $region33: #{dndqn_forward.20} parent=0 // pred_fallthru
    _
  // Predicated region
  $region34: #{dndqn_forward.20} parent=0 // pred_check
    _
  $region35: #{dndqn_forward.20} parent=0 // pred_check_branch
    %1295 = sbr.rel (0) target = $region37
  $region36: #{dndqn_forward.20} parent=0 // pred_region
    _
  $region37: #{dndqn_forward.20} parent=0 // pred_fallthru
    _
  // Predicated region
  $region38: #{dndqn_forward.20} parent=0 // pred_check
    _
  $region39: #{dndqn_forward.20} parent=0 // pred_check_branch
    %1297 = sbr.rel (0) target = $region41
  $region40: #{dndqn_forward.20} parent=0 // pred_region
    _
  $region41: #{dndqn_forward.20} parent=0 // pred_fallthru
    _
  // Predicated region
  $region42: #{dndqn_forward.20} parent=0 // pred_check
    _
  $region43: #{dndqn_forward.20} parent=0 // pred_check_branch
    %1299 = sbr.rel (0) target = $region45
  $region44: #{dndqn_forward.20} parent=0 // pred_region
    _
  $region45: #{dndqn_forward.20} parent=0 // pred_fallthru
    _
  // Predicated region
  $region46: #{dndqn_forward.20} parent=0 // pred_check
    _
  $region47: #{dndqn_forward.20} parent=0 // pred_check_branch
    %1301 = sbr.rel (0) target = $region49
  $region48: #{dndqn_forward.20} parent=0 // pred_region
    _
  $region49: #{dndqn_forward.20} parent=0 // pred_fallthru
    _

</llo_original>
